<compile_context>
chip_gen: v7x
topology: tpu7x:2x2x1
jax: 0.10.0
libtpu: 0.0.40
codegen_flags: <defaults>
</compile_context>

<pallas_src>
import functools
import math

import numpy as np
import jax
import jax.numpy as jnp
from jax.experimental import pallas as pl
from jax.experimental.pallas import tpu as pltpu

# ------------------------------------------------------------------ config
CHANNEL_IN = 3
CHANNEL_OUT = 3
E_BLOCKS = 5
V_BLOCKS = 3
DOWN_NUM = 2
CLAMP = 1.0

MXU_DTYPE = jnp.bfloat16          # MXU operand dtype (f32 accumulation everywhere)
VMEM_LIMIT_BYTES = 32 * 1024 * 1024
HAAR_ROW_BLOCK = 512              # row tile for the Haar kernel (multiple of 8)


def _block_compiler_params():
    return pltpu.CompilerParams(
        dimension_semantics=("parallel",),
        vmem_limit_bytes=VMEM_LIMIT_BYTES,
    )


# ------------------------------------------------------------------ conv helper (in-kernel)
def _conv3x3_flat(pad_ref, mask, x, w_ref, b_ref, width):
    """3x3 same-padding conv of one image whose spatial dims are flattened to rows.

    pad_ref : f32 VMEM scratch ((W+1) + H*W + (W+1), Cpad); halo rows hold zeros.
    mask    : (9, H*W, 1) f32 tap-validity mask (zero where the flat row shift
              crosses an image border -> replaces explicit 2-D zero padding).
    x       : (H*W, Cin) f32 activations.
    w_ref   : (9, Cin, Cout) weight ref (tap-major, HWIO order).
    b_ref   : (1, Cout) f32 bias ref.
    Returns (H*W, Cout) f32.
    """
    hw, cin = x.shape
    cout = w_ref.shape[2]
    halo = width + 1
    pad_ref[halo:halo + hw, 0:cin] = x
    w = w_ref[...].astype(MXU_DTYPE)          # hoisted out of the tap loop
    acc = jnp.zeros((hw, cout), jnp.float32)
    t = 0
    for dy in range(3):                       # unrolled 9-tap accumulation
        for dx in range(3):
            shift = (dy - 1) * width + (dx - 1)
            tap = pad_ref[halo + shift:halo + shift + hw, 0:cin]
            contrib = jnp.dot(tap.astype(MXU_DTYPE), w[t],
                              preferred_element_type=jnp.float32)
            # mask is per output row, so applying it post-dot is exact
            acc = acc + mask[t] * contrib
            t += 1
    return acc + b_ref[...]


# ------------------------------------------------------------------ block kernels
def _enhanced_block_kernel(width, s1, s2,
                           x_ref, mask_ref, wef_ref, bef_ref, whg_ref, bhg_ref,
                           out_ref, lr_ref, pad_ref):
    # zero the halo scratch; borders are never written afterwards
    pad_ref[...] = jnp.zeros(pad_ref.shape, pad_ref.dtype)
    mask = mask_ref[...]
    x1 = x_ref[0, :, 0:s1]                     # (HW, s1)
    x2 = x_ref[0, :, s1:s1 + s2]               # (HW, s2)

    # fused E|F conv on x2 + additive pre-coupling
    ef = _conv3x3_flat(pad_ref, mask, x2, wef_ref, bef_ref, width)   # (HW, 2*s1)
    lr = x1 + ef[:, 0:s1]                      # LR = x1 + E(x2)
    y1 = lr - ef[:, s1:2 * s1]                 # y1 = LR - F(x2)

    # fused H|G conv on y1 + affine coupling (f32 sigmoid/exp on the EUP)
    hg = _conv3x3_flat(pad_ref, mask, y1, whg_ref, bhg_ref, width)   # (HW, 2*s2)
    s = CLAMP * (jax.nn.sigmoid(hg[:, 0:s2]) * 2.0 - 1.0)
    y2 = x2 * jnp.exp(s) + hg[:, s2:2 * s2]

    out_ref[0, :, 0:s1] = y1
    out_ref[0, :, s1:s1 + s2] = y2
    lr_ref[0] = lr


def _vanilla_block_kernel(width, s1, s2,
                          x_ref, mask_ref, wf_ref, bf_ref, whg_ref, bhg_ref,
                          out_ref, pad_ref):
    pad_ref[...] = jnp.zeros(pad_ref.shape, pad_ref.dtype)
    mask = mask_ref[...]
    x1 = x_ref[0, :, 0:s1]
    x2 = x_ref[0, :, s1:s1 + s2]

    f = _conv3x3_flat(pad_ref, mask, x2, wf_ref, bf_ref, width)      # (HW, s1)
    y1 = x1 + f                                # y1 = x1 + F(x2)

    hg = _conv3x3_flat(pad_ref, mask, y1, whg_ref, bhg_ref, width)   # (HW, 2*s2)
    s = CLAMP * (jax.nn.sigmoid(hg[:, 0:s2]) * 2.0 - 1.0)
    y2 = x2 * jnp.exp(s) + hg[:, s2:2 * s2]

    out_ref[0, :, 0:s1] = y1
    out_ref[0, :, s1:s1 + s2] = y2


# ------------------------------------------------------------------ block wrappers
def enhanced_block(x3d, mask, p, width):
    n, hw, c = x3d.shape
    s1 = CHANNEL_OUT
    s2 = c - s1
    kernel = functools.partial(_enhanced_block_kernel, width, s1, s2)
    out, lr = pl.pallas_call(
        kernel,
        out_shape=(jax.ShapeDtypeStruct((n, hw, c), jnp.float32),
                   jax.ShapeDtypeStruct((n, hw, s1), jnp.float32)),
        grid=(n,),
        in_specs=[
            pl.BlockSpec((1, hw, c), lambda i: (i, 0, 0)),
            pl.BlockSpec((9, hw, 1), lambda i: (0, 0, 0)),
            pl.BlockSpec((9, s2, 2 * s1), lambda i: (0, 0, 0)),
            pl.BlockSpec((1, 2 * s1), lambda i: (0, 0)),
            pl.BlockSpec((9, s1, 2 * s2), lambda i: (0, 0, 0)),
            pl.BlockSpec((1, 2 * s2), lambda i: (0, 0)),
        ],
        out_specs=(
            pl.BlockSpec((1, hw, c), lambda i: (i, 0, 0)),
            pl.BlockSpec((1, hw, s1), lambda i: (i, 0, 0)),
        ),
        scratch_shapes=[pltpu.VMEM((hw + 2 * (width + 1), s2), jnp.float32)],
        compiler_params=_block_compiler_params(),
    )(x3d, mask, p["EF_w"], p["EF_b"], p["HG_w"], p["HG_b"])
    return out, lr


def vanilla_block(x3d, mask, p, width):
    n, hw, c = x3d.shape
    s1 = CHANNEL_OUT
    s2 = c - s1
    kernel = functools.partial(_vanilla_block_kernel, width, s1, s2)
    out = pl.pallas_call(
        kernel,
        out_shape=jax.ShapeDtypeStruct((n, hw, c), jnp.float32),
        grid=(n,),
        in_specs=[
            pl.BlockSpec((1, hw, c), lambda i: (i, 0, 0)),
            pl.BlockSpec((9, hw, 1), lambda i: (0, 0, 0)),
            pl.BlockSpec((9, s2, s1), lambda i: (0, 0, 0)),
            pl.BlockSpec((1, s1), lambda i: (0, 0)),
            pl.BlockSpec((9, s1, 2 * s2), lambda i: (0, 0, 0)),
            pl.BlockSpec((1, 2 * s2), lambda i: (0, 0)),
        ],
        out_specs=pl.BlockSpec((1, hw, c), lambda i: (i, 0, 0)),
        scratch_shapes=[pltpu.VMEM((hw + 2 * (width + 1), s2), jnp.float32)],
        compiler_params=_block_compiler_params(),
    )(x3d, mask, p["F_w"], p["F_b"], p["HG_w"], p["HG_b"])
    return out


# ------------------------------------------------------------------ Haar downsampling
def _haar_kernel(a_ref, b_ref, c_ref, d_ref, o_ref):
    # 2x2 patch (a b / c d); PyTorch layout after reshape/transpose is
    # filter-major: [f0*C | f1*C | f2*C | f3*C], everything divided by 4.
    a = a_ref[...]
    b = b_ref[...]
    c = c_ref[...]
    d = d_ref[...]
    cc = a.shape[1]
    o_ref[:, 0 * cc:1 * cc] = (a + b + c + d) * 0.25
    o_ref[:, 1 * cc:2 * cc] = (a - b + c - d) * 0.25
    o_ref[:, 2 * cc:3 * cc] = (a + b - c - d) * 0.25
    o_ref[:, 3 * cc:4 * cc] = (a - b - c + d) * 0.25


def pallas_haar(a, b, c, d):
    m, cc = a.shape
    bm = m if m <= HAAR_ROW_BLOCK else HAAR_ROW_BLOCK
    in_spec = pl.BlockSpec((bm, cc), lambda i: (i, 0))
    return pl.pallas_call(
        _haar_kernel,
        out_shape=jax.ShapeDtypeStruct((m, 4 * cc), jnp.float32),
        grid=(pl.cdiv(m, bm),),
        in_specs=[in_spec] * 4,
        out_specs=pl.BlockSpec((bm, 4 * cc), lambda i: (i, 0)),
        compiler_params=pltpu.CompilerParams(
            dimension_semantics=("parallel",),
            vmem_limit_bytes=VMEM_LIMIT_BYTES,
        ),
    )(a, b, c, d)


def haar_downsample(x):
    """x: NHWC -> NHWC with H/2, W/2, 4*C channels (PyTorch channel order)."""
    n, h, w, c = x.shape
    ho, wo = h // 2, w // 2
    p = x.reshape(n, ho, 2, wo, 2, c)
    m = n * ho * wo
    a = p[:, :, 0, :, 0, :].reshape(m, c)
    b = p[:, :, 0, :, 1, :].reshape(m, c)
    cq = p[:, :, 1, :, 0, :].reshape(m, c)
    d = p[:, :, 1, :, 1, :].reshape(m, c)
    out = pallas_haar(a, b, cq, d)
    return out.reshape(n, ho, wo, 4 * c)


# ------------------------------------------------------------------ host-side constants
def _conv_validity_mask(h, w):
    """(9, H*W, 1) f32; 1 where tap (dy, dx) stays inside the image for each
    flattened output row, 0 where the flat row-shift would wrap across an image
    border (this replaces explicit zero padding in the flattened layout)."""
    i = np.arange(h * w) // w
    j = np.arange(h * w) % w
    taps = []
    for dy in range(3):
        for dx in range(3):
            ii, jj = i + dy - 1, j + dx - 1
            taps.append(((ii >= 0) & (ii < h) & (jj >= 0) & (jj < w))
                        .astype(np.float32))
    return jnp.asarray(np.stack(taps, axis=0)[:, :, None])


# ------------------------------------------------------------------ parameters
def init_conv(key, cin, cout):
    kw, kb = jax.random.split(key)
    w = jax.random.normal(kw, (3, 3, cin, cout), jnp.float32) * (
        0.1 / math.sqrt(9 * cin)
    )
    b = jax.random.normal(kb, (cout,), jnp.float32) * 0.01
    return w, b


def init_params(key):
    current_channel = CHANNEL_IN * (4 ** DOWN_NUM)      # 48
    s1 = CHANNEL_OUT
    s2 = current_channel - s1
    params = {"enhanced": [], "vanilla": []}
    for _ in range(E_BLOCKS):
        key, ke, kf, kg, kh = jax.random.split(key, 5)
        e_w, e_b = init_conv(ke, s2, s1)
        f_w, f_b = init_conv(kf, s2, s1)
        g_w, g_b = init_conv(kg, s1, s2)
        h_w, h_b = init_conv(kh, s1, s2)
        params["enhanced"].append({
            # fused [E | F] and [H | G] along Cout, tap-major (9, Cin, Cout)
            "EF_w": jnp.concatenate([e_w, f_w], axis=-1)
                       .reshape(9, s2, 2 * s1).astype(MXU_DTYPE),
            "EF_b": jnp.concatenate([e_b, f_b]).reshape(1, 2 * s1),
            "HG_w": jnp.concatenate([h_w, g_w], axis=-1)
                       .reshape(9, s1, 2 * s2).astype(MXU_DTYPE),
            "HG_b": jnp.concatenate([h_b, g_b]).reshape(1, 2 * s2),
        })
    for _ in range(V_BLOCKS):
        key, kf, kg, kh = jax.random.split(key, 4)
        f_w, f_b = init_conv(kf, s2, s1)
        g_w, g_b = init_conv(kg, s1, s2)
        h_w, h_b = init_conv(kh, s1, s2)
        params["vanilla"].append({
            "F_w": f_w.reshape(9, s2, s1).astype(MXU_DTYPE),
            "F_b": f_b.reshape(1, s1),
            "HG_w": jnp.concatenate([h_w, g_w], axis=-1)
                       .reshape(9, s1, 2 * s2).astype(MXU_DTYPE),
            "HG_b": jnp.concatenate([h_b, g_b]).reshape(1, 2 * s2),
        })
    return params


# ------------------------------------------------------------------ full forward
def sainet_forward(x_nchw, params):
    """SAINet.forward(x, rev=False, cal_jacobian=False) -> (out, LR), both NCHW."""
    x = jnp.transpose(x_nchw, (0, 2, 3, 1)).astype(jnp.float32)   # NCHW -> NHWC
    for _ in range(DOWN_NUM):
        x = haar_downsample(x)
    n, h, w, c = x.shape
    mask = _conv_validity_mask(h, w)                 # static constant under jit
    x3d = x.reshape(n, h * w, c)                     # flatten spatial rows

    lr3d = None
    for blk in params["enhanced"]:
        x3d, lr3d = enhanced_block(x3d, mask, blk, w)
    for blk in params["vanilla"]:
        x3d = vanilla_block(x3d, mask, blk, w)

    out = jnp.transpose(x3d.reshape(n, h, w, c), (0, 3, 1, 2))            # NCHW
    lr = jnp.transpose(lr3d.reshape(n, h, w, CHANNEL_OUT), (0, 3, 1, 2))  # last LR
    return out, lr


# ------------------------------------------------------------------ main
if __name__ == "__main__":
    key = jax.random.PRNGKey(0)
    kx, kp = jax.random.split(key)
    # small NCHW input: batch=2, channels=3, spatial=16x16
    x = jax.random.normal(kx, (2, CHANNEL_IN, 16, 16), jnp.float32)
    params = init_params(kp)

    fwd = jax.jit(sainet_forward)
    out, lr = fwd(x, params)
    out = jax.block_until_ready(out)
    lr = jax.block_until_ready(lr)

    assert out.shape == (2, CHANNEL_IN * 16, 4, 4), out.shape    # (2, 48, 4, 4)
    assert lr.shape == (2, CHANNEL_OUT, 4, 4), lr.shape          # (2, 3, 4, 4)
    assert jnp.all(jnp.isfinite(out)) and jnp.all(jnp.isfinite(lr))
    print("KERNEL_OK")
</pallas_src>

<mosaic_0001>
module attributes {stable_mosaic.version = 11 : i64} {
  func.func @_haar_kernel(%arg0: i32, %arg1: memref<128x3xf32, #tpu.memory_space<vmem>>, %arg2: memref<128x3xf32, #tpu.memory_space<vmem>>, %arg3: memref<128x3xf32, #tpu.memory_space<vmem>>, %arg4: memref<128x3xf32, #tpu.memory_space<vmem>>, %arg5: memref<128x12xf32, #tpu.memory_space<vmem>>) attributes {dimension_semantics = [#tpu.dimension_semantics<parallel>], iteration_bounds = array<i64: 1>, scalar_prefetch = 0 : i64, scratch_operands = 0 : i64, tpu.core_type = #tpu.core_type<tc>, window_params = [{transform_indices = @transform_0, window_bounds = array<i64: 128, 3>}, {transform_indices = @transform_1, window_bounds = array<i64: 128, 3>}, {transform_indices = @transform_2, window_bounds = array<i64: 128, 3>}, {transform_indices = @transform_3, window_bounds = array<i64: 128, 3>}, {transform_indices = @transform_4, window_bounds = array<i64: 128, 12>}]} {
    %c0 = arith.constant 0 : index
    %c0_0 = arith.constant 0 : index
    %0 = vector.load %arg1[%c0, %c0_0] : memref<128x3xf32, #tpu.memory_space<vmem>>, vector<128x3xf32>
    %c0_1 = arith.constant 0 : index
    %c0_2 = arith.constant 0 : index
    %1 = vector.load %arg2[%c0_1, %c0_2] : memref<128x3xf32, #tpu.memory_space<vmem>>, vector<128x3xf32>
    %c0_3 = arith.constant 0 : index
    %c0_4 = arith.constant 0 : index
    %2 = vector.load %arg3[%c0_3, %c0_4] : memref<128x3xf32, #tpu.memory_space<vmem>>, vector<128x3xf32>
    %c0_5 = arith.constant 0 : index
    %c0_6 = arith.constant 0 : index
    %3 = vector.load %arg4[%c0_5, %c0_6] : memref<128x3xf32, #tpu.memory_space<vmem>>, vector<128x3xf32>
    %4 = arith.addf %0, %1 : vector<128x3xf32>
    %5 = arith.addf %4, %2 : vector<128x3xf32>
    %6 = arith.addf %5, %3 : vector<128x3xf32>
    %cst = arith.constant 2.500000e-01 : f32
    %7 = vector.broadcast %cst : f32 to vector<128x3xf32>
    %8 = arith.mulf %6, %7 : vector<128x3xf32>
    %c0_7 = arith.constant 0 : index
    %c0_8 = arith.constant 0 : index
    %9 = vector.load %arg5[%c0_7, %c0_8] : memref<128x12xf32, #tpu.memory_space<vmem>>, vector<128x3xf32>
    tpu.vector_store %arg5[%c0_7, %c0_8], %8 {strides = array<i32>} : memref<128x12xf32, #tpu.memory_space<vmem>>, vector<128x3xf32>,
    %10 = arith.subf %0, %1 : vector<128x3xf32>
    %11 = arith.addf %10, %2 : vector<128x3xf32>
    %12 = arith.subf %11, %3 : vector<128x3xf32>
    %cst_9 = arith.constant 2.500000e-01 : f32
    %13 = vector.broadcast %cst_9 : f32 to vector<128x3xf32>
    %14 = arith.mulf %12, %13 : vector<128x3xf32>
    %c0_10 = arith.constant 0 : index
    %c3 = arith.constant 3 : index
    %15 = vector.load %arg5[%c0_10, %c3] : memref<128x12xf32, #tpu.memory_space<vmem>>, vector<128x3xf32>
    tpu.vector_store %arg5[%c0_10, %c3], %14 {strides = array<i32>} : memref<128x12xf32, #tpu.memory_space<vmem>>, vector<128x3xf32>,
    %16 = arith.addf %0, %1 : vector<128x3xf32>
    %17 = arith.subf %16, %2 : vector<128x3xf32>
    %18 = arith.subf %17, %3 : vector<128x3xf32>
    %cst_11 = arith.constant 2.500000e-01 : f32
    %19 = vector.broadcast %cst_11 : f32 to vector<128x3xf32>
    %20 = arith.mulf %18, %19 : vector<128x3xf32>
    %c0_12 = arith.constant 0 : index
    %c6 = arith.constant 6 : index
    %21 = vector.load %arg5[%c0_12, %c6] : memref<128x12xf32, #tpu.memory_space<vmem>>, vector<128x3xf32>
    tpu.vector_store %arg5[%c0_12, %c6], %20 {strides = array<i32>} : memref<128x12xf32, #tpu.memory_space<vmem>>, vector<128x3xf32>,
    %22 = arith.subf %0, %1 : vector<128x3xf32>
    %23 = arith.subf %22, %2 : vector<128x3xf32>
    %24 = arith.addf %23, %3 : vector<128x3xf32>
    %cst_13 = arith.constant 2.500000e-01 : f32
    %25 = vector.broadcast %cst_13 : f32 to vector<128x3xf32>
    %26 = arith.mulf %24, %25 : vector<128x3xf32>
    %c0_14 = arith.constant 0 : index
    %c9 = arith.constant 9 : index
    %27 = vector.load %arg5[%c0_14, %c9] : memref<128x12xf32, #tpu.memory_space<vmem>>, vector<128x3xf32>
    tpu.vector_store %arg5[%c0_14, %c9], %26 {strides = array<i32>} : memref<128x12xf32, #tpu.memory_space<vmem>>, vector<128x3xf32>,
    return
  }
  func.func @transform_0(%arg0: i32) -> (i32, i32) {
    %c0_i32 = arith.constant 0 : i32
    %c0_i32_0 = arith.constant 0 : i32
    return %arg0, %c0_i32 : i32, i32
  }
  func.func @transform_1(%arg0: i32) -> (i32, i32) {
    %c0_i32 = arith.constant 0 : i32
    %c0_i32_0 = arith.constant 0 : i32
    return %arg0, %c0_i32 : i32, i32
  }
  func.func @transform_2(%arg0: i32) -> (i32, i32) {
    %c0_i32 = arith.constant 0 : i32
    %c0_i32_0 = arith.constant 0 : i32
    return %arg0, %c0_i32 : i32, i32
  }
  func.func @transform_3(%arg0: i32) -> (i32, i32) {
    %c0_i32 = arith.constant 0 : i32
    %c0_i32_0 = arith.constant 0 : i32
    return %arg0, %c0_i32 : i32, i32
  }
  func.func @transform_4(%arg0: i32) -> (i32, i32) {
    %c0_i32 = arith.constant 0 : i32
    %c0_i32_0 = arith.constant 0 : i32
    return %arg0, %c0_i32 : i32, i32
  }
}

module attributes {stable_mosaic.version = 11 : i64} {
  func.func @_haar_kernel(%arg0: i32, %arg1: memref<32x12xf32, #tpu.memory_space<vmem>>, %arg2: memref<32x12xf32, #tpu.memory_space<vmem>>, %arg3: memref<32x12xf32, #tpu.memory_space<vmem>>, %arg4: memref<32x12xf32, #tpu.memory_space<vmem>>, %arg5: memref<32x48xf32, #tpu.memory_space<vmem>>) attributes {dimension_semantics = [#tpu.dimension_semantics<parallel>], iteration_bounds = array<i64: 1>, scalar_prefetch = 0 : i64, scratch_operands = 0 : i64, tpu.core_type = #tpu.core_type<tc>, window_params = [{transform_indices = @transform_0, window_bounds = array<i64: 32, 12>}, {transform_indices = @transform_1, window_bounds = array<i64: 32, 12>}, {transform_indices = @transform_2, window_bounds = array<i64: 32, 12>}, {transform_indices = @transform_3, window_bounds = array<i64: 32, 12>}, {transform_indices = @transform_4, window_bounds = array<i64: 32, 48>}]} {
    %c0 = arith.constant 0 : index
    %c0_0 = arith.constant 0 : index
    %0 = vector.load %arg1[%c0, %c0_0] : memref<32x12xf32, #tpu.memory_space<vmem>>, vector<32x12xf32>
    %c0_1 = arith.constant 0 : index
    %c0_2 = arith.constant 0 : index
    %1 = vector.load %arg2[%c0_1, %c0_2] : memref<32x12xf32, #tpu.memory_space<vmem>>, vector<32x12xf32>
    %c0_3 = arith.constant 0 : index
    %c0_4 = arith.constant 0 : index
    %2 = vector.load %arg3[%c0_3, %c0_4] : memref<32x12xf32, #tpu.memory_space<vmem>>, vector<32x12xf32>
    %c0_5 = arith.constant 0 : index
    %c0_6 = arith.constant 0 : index
    %3 = vector.load %arg4[%c0_5, %c0_6] : memref<32x12xf32, #tpu.memory_space<vmem>>, vector<32x12xf32>
    %4 = arith.addf %0, %1 : vector<32x12xf32>
    %5 = arith.addf %4, %2 : vector<32x12xf32>
    %6 = arith.addf %5, %3 : vector<32x12xf32>
    %cst = arith.constant 2.500000e-01 : f32
    %7 = vector.broadcast %cst : f32 to vector<32x12xf32>
    %8 = arith.mulf %6, %7 : vector<32x12xf32>
    %c0_7 = arith.constant 0 : index
    %c0_8 = arith.constant 0 : index
    %9 = vector.load %arg5[%c0_7, %c0_8] : memref<32x48xf32, #tpu.memory_space<vmem>>, vector<32x12xf32>
    tpu.vector_store %arg5[%c0_7, %c0_8], %8 {strides = array<i32>} : memref<32x48xf32, #tpu.memory_space<vmem>>, vector<32x12xf32>,
    %10 = arith.subf %0, %1 : vector<32x12xf32>
    %11 = arith.addf %10, %2 : vector<32x12xf32>
    %12 = arith.subf %11, %3 : vector<32x12xf32>
    %cst_9 = arith.constant 2.500000e-01 : f32
    %13 = vector.broadcast %cst_9 : f32 to vector<32x12xf32>
    %14 = arith.mulf %12, %13 : vector<32x12xf32>
    %c0_10 = arith.constant 0 : index
    %c12 = arith.constant 12 : index
    %15 = vector.load %arg5[%c0_10, %c12] : memref<32x48xf32, #tpu.memory_space<vmem>>, vector<32x12xf32>
    tpu.vector_store %arg5[%c0_10, %c12], %14 {strides = array<i32>} : memref<32x48xf32, #tpu.memory_space<vmem>>, vector<32x12xf32>,
    %16 = arith.addf %0, %1 : vector<32x12xf32>
    %17 = arith.subf %16, %2 : vector<32x12xf32>
    %18 = arith.subf %17, %3 : vector<32x12xf32>
    %cst_11 = arith.constant 2.500000e-01 : f32
    %19 = vector.broadcast %cst_11 : f32 to vector<32x12xf32>
    %20 = arith.mulf %18, %19 : vector<32x12xf32>
    %c0_12 = arith.constant 0 : index
    %c24 = arith.constant 24 : index
    %21 = vector.load %arg5[%c0_12, %c24] : memref<32x48xf32, #tpu.memory_space<vmem>>, vector<32x12xf32>
    tpu.vector_store %arg5[%c0_12, %c24], %20 {strides = array<i32>} : memref<32x48xf32, #tpu.memory_space<vmem>>, vector<32x12xf32>,
    %22 = arith.subf %0, %1 : vector<32x12xf32>
    %23 = arith.subf %22, %2 : vector<32x12xf32>
    %24 = arith.addf %23, %3 : vector<32x12xf32>
    %cst_13 = arith.constant 2.500000e-01 : f32
    %25 = vector.broadcast %cst_13 : f32 to vector<32x12xf32>
    %26 = arith.mulf %24, %25 : vector<32x12xf32>
    %c0_14 = arith.constant 0 : index
    %c36 = arith.constant 36 : index
    %27 = vector.load %arg5[%c0_14, %c36] : memref<32x48xf32, #tpu.memory_space<vmem>>, vector<32x12xf32>
    tpu.vector_store %arg5[%c0_14, %c36], %26 {strides = array<i32>} : memref<32x48xf32, #tpu.memory_space<vmem>>, vector<32x12xf32>,
    return
  }
  func.func @transform_0(%arg0: i32) -> (i32, i32) {
    %c0_i32 = arith.constant 0 : i32
    %c0_i32_0 = arith.constant 0 : i32
    return %arg0, %c0_i32 : i32, i32
  }
  func.func @transform_1(%arg0: i32) -> (i32, i32) {
    %c0_i32 = arith.constant 0 : i32
    %c0_i32_0 = arith.constant 0 : i32
    return %arg0, %c0_i32 : i32, i32
  }
  func.func @transform_2(%arg0: i32) -> (i32, i32) {
    %c0_i32 = arith.constant 0 : i32
    %c0_i32_0 = arith.constant 0 : i32
    return %arg0, %c0_i32 : i32, i32
  }
  func.func @transform_3(%arg0: i32) -> (i32, i32) {
    %c0_i32 = arith.constant 0 : i32
    %c0_i32_0 = arith.constant 0 : i32
    return %arg0, %c0_i32 : i32, i32
  }
  func.func @transform_4(%arg0: i32) -> (i32, i32) {
    %c0_i32 = arith.constant 0 : i32
    %c0_i32_0 = arith.constant 0 : i32
    return %arg0, %c0_i32 : i32, i32
  }
}

module attributes {stable_mosaic.version = 11 : i64} {
  func.func @_enhanced_block_kernel(%arg0: i32, %arg1: memref<1x16x48xf32, #tpu.memory_space<vmem>>, %arg2: memref<9x16x1xf32, #tpu.memory_space<vmem>>, %arg3: memref<9x45x6xbf16, #tpu.memory_space<vmem>>, %arg4: memref<1x6xf32, #tpu.memory_space<vmem>>, %arg5: memref<9x3x90xbf16, #tpu.memory_space<vmem>>, %arg6: memref<1x90xf32, #tpu.memory_space<vmem>>, %arg7: memref<1x16x48xf32, #tpu.memory_space<vmem>>, %arg8: memref<1x16x3xf32, #tpu.memory_space<vmem>>, %arg9: memref<26x45xf32, #tpu.memory_space<vmem>>) attributes {dimension_semantics = [#tpu.dimension_semantics<parallel>], iteration_bounds = array<i64: 2>, scalar_prefetch = 0 : i64, scratch_operands = 1 : i64, tpu.core_type = #tpu.core_type<tc>, window_params = [{transform_indices = @transform_0, window_bounds = array<i64: 1, 16, 48>}, {pipeline_mode = #tpu.pipeline_mode<synchronous>, transform_indices = @transform_1, window_bounds = array<i64: 9, 16, 1>}, {pipeline_mode = #tpu.pipeline_mode<synchronous>, transform_indices = @transform_2, window_bounds = array<i64: 9, 45, 6>}, {pipeline_mode = #tpu.pipeline_mode<synchronous>, transform_indices = @transform_3, window_bounds = array<i64: 1, 6>}, {pipeline_mode = #tpu.pipeline_mode<synchronous>, transform_indices = @transform_4, window_bounds = array<i64: 9, 3, 90>}, {pipeline_mode = #tpu.pipeline_mode<synchronous>, transform_indices = @transform_5, window_bounds = array<i64: 1, 90>}, {transform_indices = @transform_6, window_bounds = array<i64: 1, 16, 48>}, {transform_indices = @transform_7, window_bounds = array<i64: 1, 16, 3>}]} {
    %cst = arith.constant 0.000000e+00 : f32
    %0 = vector.broadcast %cst : f32 to vector<26x45xf32>
    %c0 = arith.constant 0 : index
    %c0_0 = arith.constant 0 : index
    %1 = vector.load %arg9[%c0, %c0_0] : memref<26x45xf32, #tpu.memory_space<vmem>>, vector<26x45xf32>
    tpu.vector_store %arg9[%c0, %c0_0], %0 {strides = array<i32>} : memref<26x45xf32, #tpu.memory_space<vmem>>, vector<26x45xf32>,
    %c0_1 = arith.constant 0 : index
    %c0_2 = arith.constant 0 : index
    %c0_3 = arith.constant 0 : index
    %2 = vector.load %arg2[%c0_1, %c0_2, %c0_3] : memref<9x16x1xf32, #tpu.memory_space<vmem>>, vector<9x16x1xf32>
    %c0_4 = arith.constant 0 : index
    %c0_5 = arith.constant 0 : index
    %c0_6 = arith.constant 0 : index
    %3 = vector.load %arg1[%c0_4, %c0_5, %c0_6] : memref<1x16x48xf32, #tpu.memory_space<vmem>>, vector<1x16x3xf32>
    %4 = vector.shape_cast %3 : vector<1x16x3xf32> to vector<16x3xf32>
    %c0_7 = arith.constant 0 : index
    %c0_8 = arith.constant 0 : index
    %c3 = arith.constant 3 : index
    %5 = vector.load %arg1[%c0_7, %c0_8, %c3] : memref<1x16x48xf32, #tpu.memory_space<vmem>>, vector<1x16x45xf32>
    %6 = vector.shape_cast %5 : vector<1x16x45xf32> to vector<16x45xf32>
    %c5 = arith.constant 5 : index
    %c0_9 = arith.constant 0 : index
    %7 = vector.load %arg9[%c5, %c0_9] : memref<26x45xf32, #tpu.memory_space<vmem>>, vector<16x45xf32>
    tpu.vector_store %arg9[%c5, %c0_9], %6 {strides = array<i32>} : memref<26x45xf32, #tpu.memory_space<vmem>>, vector<16x45xf32>,
    %c0_10 = arith.constant 0 : index
    %c0_11 = arith.constant 0 : index
    %c0_12 = arith.constant 0 : index
    %8 = vector.load %arg3[%c0_10, %c0_11, %c0_12] : memref<9x45x6xbf16, #tpu.memory_space<vmem>>, vector<9x45x6xbf16>
    %cst_13 = arith.constant 0.000000e+00 : f32
    %9 = vector.broadcast %cst_13 : f32 to vector<16x6xf32>
    %c0_14 = arith.constant 0 : index
    %c0_15 = arith.constant 0 : index
    %10 = vector.load %arg9[%c0_14, %c0_15] : memref<26x45xf32, #tpu.memory_space<vmem>>, vector<16x45xf32>
    %11 = arith.truncf %10 : vector<16x45xf32> to vector<16x45xbf16>
    %12 = vector.extract_strided_slice %8 {offsets = [0, 0, 0], sizes = [1, 45, 6], strides = [1, 1, 1]} : vector<9x45x6xbf16> to vector<1x45x6xbf16>
    %13 = vector.shape_cast %12 : vector<1x45x6xbf16> to vector<45x6xbf16>
    %cst_16 = arith.constant dense<0.000000e+00> : vector<16x6xf32>
    %14 = tpu.matmul %11, %13, %cst_16 {dimension_numbers = #tpu.dot_dimension_numbers<[1], [0], [0], [1], [0, 0, 1, 1], [], []>} : vector<16x45xbf16>, vector<45x6xbf16>, vector<16x6xf32> -> vector<16x6xf32>
    %15 = vector.extract_strided_slice %2 {offsets = [0, 0, 0], sizes = [1, 16, 1], strides = [1, 1, 1]} : vector<9x16x1xf32> to vector<1x16x1xf32>
    %16 = vector.shape_cast %15 : vector<1x16x1xf32> to vector<16x1xf32>
    %17 = vector.broadcast %16 : vector<16x1xf32> to vector<16x6xf32>
    %18 = arith.mulf %17, %14 : vector<16x6xf32>
    %19 = arith.addf %9, %18 : vector<16x6xf32>
    %c1 = arith.constant 1 : index
    %c0_17 = arith.constant 0 : index
    %20 = vector.load %arg9[%c1, %c0_17] : memref<26x45xf32, #tpu.memory_space<vmem>>, vector<16x45xf32>
    %21 = arith.truncf %20 : vector<16x45xf32> to vector<16x45xbf16>
    %22 = vector.extract_strided_slice %8 {offsets = [1, 0, 0], sizes = [1, 45, 6], strides = [1, 1, 1]} : vector<9x45x6xbf16> to vector<1x45x6xbf16>
    %23 = vector.shape_cast %22 : vector<1x45x6xbf16> to vector<45x6xbf16>
    %cst_18 = arith.constant dense<0.000000e+00> : vector<16x6xf32>
    %24 = tpu.matmul %21, %23, %cst_18 {dimension_numbers = #tpu.dot_dimension_numbers<[1], [0], [0], [1], [0, 0, 1, 1], [], []>} : vector<16x45xbf16>, vector<45x6xbf16>, vector<16x6xf32> -> vector<16x6xf32>
    %25 = vector.extract_strided_slice %2 {offsets = [1, 0, 0], sizes = [1, 16, 1], strides = [1, 1, 1]} : vector<9x16x1xf32> to vector<1x16x1xf32>
    %26 = vector.shape_cast %25 : vector<1x16x1xf32> to vector<16x1xf32>
    %27 = vector.broadcast %26 : vector<16x1xf32> to vector<16x6xf32>
    %28 = arith.mulf %27, %24 : vector<16x6xf32>
    %29 = arith.addf %19, %28 : vector<16x6xf32>
    %c2 = arith.constant 2 : index
    %c0_19 = arith.constant 0 : index
    %30 = vector.load %arg9[%c2, %c0_19] : memref<26x45xf32, #tpu.memory_space<vmem>>, vector<16x45xf32>
    %31 = arith.truncf %30 : vector<16x45xf32> to vector<16x45xbf16>
    %32 = vector.extract_strided_slice %8 {offsets = [2, 0, 0], sizes = [1, 45, 6], strides = [1, 1, 1]} : vector<9x45x6xbf16> to vector<1x45x6xbf16>
    %33 = vector.shape_cast %32 : vector<1x45x6xbf16> to vector<45x6xbf16>
    %cst_20 = arith.constant dense<0.000000e+00> : vector<16x6xf32>
    %34 = tpu.matmul %31, %33, %cst_20 {dimension_numbers = #tpu.dot_dimension_numbers<[1], [0], [0], [1], [0, 0, 1, 1], [], []>} : vector<16x45xbf16>, vector<45x6xbf16>, vector<16x6xf32> -> vector<16x6xf32>
    %35 = vector.extract_strided_slice %2 {offsets = [2, 0, 0], sizes = [1, 16, 1], strides = [1, 1, 1]} : vector<9x16x1xf32> to vector<1x16x1xf32>
    %36 = vector.shape_cast %35 : vector<1x16x1xf32> to vector<16x1xf32>
    %37 = vector.broadcast %36 : vector<16x1xf32> to vector<16x6xf32>
    %38 = arith.mulf %37, %34 : vector<16x6xf32>
    %39 = arith.addf %29, %38 : vector<16x6xf32>
    %c4 = arith.constant 4 : index
    %c0_21 = arith.constant 0 : index
    %40 = vector.load %arg9[%c4, %c0_21] : memref<26x45xf32, #tpu.memory_space<vmem>>, vector<16x45xf32>
    %41 = arith.truncf %40 : vector<16x45xf32> to vector<16x45xbf16>
    %42 = vector.extract_strided_slice %8 {offsets = [3, 0, 0], sizes = [1, 45, 6], strides = [1, 1, 1]} : vector<9x45x6xbf16> to vector<1x45x6xbf16>
    %43 = vector.shape_cast %42 : vector<1x45x6xbf16> to vector<45x6xbf16>
    %cst_22 = arith.constant dense<0.000000e+00> : vector<16x6xf32>
    %44 = tpu.matmul %41, %43, %cst_22 {dimension_numbers = #tpu.dot_dimension_numbers<[1], [0], [0], [1], [0, 0, 1, 1], [], []>} : vector<16x45xbf16>, vector<45x6xbf16>, vector<16x6xf32> -> vector<16x6xf32>
    %45 = vector.extract_strided_slice %2 {offsets = [3, 0, 0], sizes = [1, 16, 1], strides = [1, 1, 1]} : vector<9x16x1xf32> to vector<1x16x1xf32>
    %46 = vector.shape_cast %45 : vector<1x16x1xf32> to vector<16x1xf32>
    %47 = vector.broadcast %46 : vector<16x1xf32> to vector<16x6xf32>
    %48 = arith.mulf %47, %44 : vector<16x6xf32>
    %49 = arith.addf %39, %48 : vector<16x6xf32>
    %c5_23 = arith.constant 5 : index
    %c0_24 = arith.constant 0 : index
    %50 = vector.load %arg9[%c5_23, %c0_24] : memref<26x45xf32, #tpu.memory_space<vmem>>, vector<16x45xf32>
    %51 = arith.truncf %50 : vector<16x45xf32> to vector<16x45xbf16>
    %52 = vector.extract_strided_slice %8 {offsets = [4, 0, 0], sizes = [1, 45, 6], strides = [1, 1, 1]} : vector<9x45x6xbf16> to vector<1x45x6xbf16>
    %53 = vector.shape_cast %52 : vector<1x45x6xbf16> to vector<45x6xbf16>
    %cst_25 = arith.constant dense<0.000000e+00> : vector<16x6xf32>
    %54 = tpu.matmul %51, %53, %cst_25 {dimension_numbers = #tpu.dot_dimension_numbers<[1], [0], [0], [1], [0, 0, 1, 1], [], []>} : vector<16x45xbf16>, vector<45x6xbf16>, vector<16x6xf32> -> vector<16x6xf32>
    %55 = vector.extract_strided_slice %2 {offsets = [4, 0, 0], sizes = [1, 16, 1], strides = [1, 1, 1]} : vector<9x16x1xf32> to vector<1x16x1xf32>
    %56 = vector.shape_cast %55 : vector<1x16x1xf32> to vector<16x1xf32>
    %57 = vector.broadcast %56 : vector<16x1xf32> to vector<16x6xf32>
    %58 = arith.mulf %57, %54 : vector<16x6xf32>
    %59 = arith.addf %49, %58 : vector<16x6xf32>
    %c6 = arith.constant 6 : index
    %c0_26 = arith.constant 0 : index
    %60 = vector.load %arg9[%c6, %c0_26] : memref<26x45xf32, #tpu.memory_space<vmem>>, vector<16x45xf32>
    %61 = arith.truncf %60 : vector<16x45xf32> to vector<16x45xbf16>
    %62 = vector.extract_strided_slice %8 {offsets = [5, 0, 0], sizes = [1, 45, 6], strides = [1, 1, 1]} : vector<9x45x6xbf16> to vector<1x45x6xbf16>
    %63 = vector.shape_cast %62 : vector<1x45x6xbf16> to vector<45x6xbf16>
    %cst_27 = arith.constant dense<0.000000e+00> : vector<16x6xf32>
    %64 = tpu.matmul %61, %63, %cst_27 {dimension_numbers = #tpu.dot_dimension_numbers<[1], [0], [0], [1], [0, 0, 1, 1], [], []>} : vector<16x45xbf16>, vector<45x6xbf16>, vector<16x6xf32> -> vector<16x6xf32>
    %65 = vector.extract_strided_slice %2 {offsets = [5, 0, 0], sizes = [1, 16, 1], strides = [1, 1, 1]} : vector<9x16x1xf32> to vector<1x16x1xf32>
    %66 = vector.shape_cast %65 : vector<1x16x1xf32> to vector<16x1xf32>
    %67 = vector.broadcast %66 : vector<16x1xf32> to vector<16x6xf32>
    %68 = arith.mulf %67, %64 : vector<16x6xf32>
    %69 = arith.addf %59, %68 : vector<16x6xf32>
    %c8 = arith.constant 8 : index
    %c0_28 = arith.constant 0 : index
    %70 = vector.load %arg9[%c8, %c0_28] : memref<26x45xf32, #tpu.memory_space<vmem>>, vector<16x45xf32>
    %71 = arith.truncf %70 : vector<16x45xf32> to vector<16x45xbf16>
    %72 = vector.extract_strided_slice %8 {offsets = [6, 0, 0], sizes = [1, 45, 6], strides = [1, 1, 1]} : vector<9x45x6xbf16> to vector<1x45x6xbf16>
    %73 = vector.shape_cast %72 : vector<1x45x6xbf16> to vector<45x6xbf16>
    %cst_29 = arith.constant dense<0.000000e+00> : vector<16x6xf32>
    %74 = tpu.matmul %71, %73, %cst_29 {dimension_numbers = #tpu.dot_dimension_numbers<[1], [0], [0], [1], [0, 0, 1, 1], [], []>} : vector<16x45xbf16>, vector<45x6xbf16>, vector<16x6xf32> -> vector<16x6xf32>
    %75 = vector.extract_strided_slice %2 {offsets = [6, 0, 0], sizes = [1, 16, 1], strides = [1, 1, 1]} : vector<9x16x1xf32> to vector<1x16x1xf32>
    %76 = vector.shape_cast %75 : vector<1x16x1xf32> to vector<16x1xf32>
    %77 = vector.broadcast %76 : vector<16x1xf32> to vector<16x6xf32>
    %78 = arith.mulf %77, %74 : vector<16x6xf32>
    %79 = arith.addf %69, %78 : vector<16x6xf32>
    %c9 = arith.constant 9 : index
    %c0_30 = arith.constant 0 : index
    %80 = vector.load %arg9[%c9, %c0_30] : memref<26x45xf32, #tpu.memory_space<vmem>>, vector<16x45xf32>
    %81 = arith.truncf %80 : vector<16x45xf32> to vector<16x45xbf16>
    %82 = vector.extract_strided_slice %8 {offsets = [7, 0, 0], sizes = [1, 45, 6], strides = [1, 1, 1]} : vector<9x45x6xbf16> to vector<1x45x6xbf16>
    %83 = vector.shape_cast %82 : vector<1x45x6xbf16> to vector<45x6xbf16>
    %cst_31 = arith.constant dense<0.000000e+00> : vector<16x6xf32>
    %84 = tpu.matmul %81, %83, %cst_31 {dimension_numbers = #tpu.dot_dimension_numbers<[1], [0], [0], [1], [0, 0, 1, 1], [], []>} : vector<16x45xbf16>, vector<45x6xbf16>, vector<16x6xf32> -> vector<16x6xf32>
    %85 = vector.extract_strided_slice %2 {offsets = [7, 0, 0], sizes = [1, 16, 1], strides = [1, 1, 1]} : vector<9x16x1xf32> to vector<1x16x1xf32>
    %86 = vector.shape_cast %85 : vector<1x16x1xf32> to vector<16x1xf32>
    %87 = vector.broadcast %86 : vector<16x1xf32> to vector<16x6xf32>
    %88 = arith.mulf %87, %84 : vector<16x6xf32>
    %89 = arith.addf %79, %88 : vector<16x6xf32>
    %c10 = arith.constant 10 : index
    %c0_32 = arith.constant 0 : index
    %90 = vector.load %arg9[%c10, %c0_32] : memref<26x45xf32, #tpu.memory_space<vmem>>, vector<16x45xf32>
    %91 = arith.truncf %90 : vector<16x45xf32> to vector<16x45xbf16>
    %92 = vector.extract_strided_slice %8 {offsets = [8, 0, 0], sizes = [1, 45, 6], strides = [1, 1, 1]} : vector<9x45x6xbf16> to vector<1x45x6xbf16>
    %93 = vector.shape_cast %92 : vector<1x45x6xbf16> to vector<45x6xbf16>
    %cst_33 = arith.constant dense<0.000000e+00> : vector<16x6xf32>
    %94 = tpu.matmul %91, %93, %cst_33 {dimension_numbers = #tpu.dot_dimension_numbers<[1], [0], [0], [1], [0, 0, 1, 1], [], []>} : vector<16x45xbf16>, vector<45x6xbf16>, vector<16x6xf32> -> vector<16x6xf32>
    %95 = vector.extract_strided_slice %2 {offsets = [8, 0, 0], sizes = [1, 16, 1], strides = [1, 1, 1]} : vector<9x16x1xf32> to vector<1x16x1xf32>
    %96 = vector.shape_cast %95 : vector<1x16x1xf32> to vector<16x1xf32>
    %97 = vector.broadcast %96 : vector<16x1xf32> to vector<16x6xf32>
    %98 = arith.mulf %97, %94 : vector<16x6xf32>
    %99 = arith.addf %89, %98 : vector<16x6xf32>
    %c0_34 = arith.constant 0 : index
    %c0_35 = arith.constant 0 : index
    %100 = vector.load %arg4[%c0_34, %c0_35] : memref<1x6xf32, #tpu.memory_space<vmem>>, vector<1x6xf32>
    %101 = vector.broadcast %100 : vector<1x6xf32> to vector<16x6xf32>
    %102 = arith.addf %99, %101 : vector<16x6xf32>
    %103 = vector.extract_strided_slice %102 {offsets = [0, 0], sizes = [16, 3], strides = [1, 1]} : vector<16x6xf32> to vector<16x3xf32>
    %104 = arith.addf %4, %103 : vector<16x3xf32>
    %105 = vector.extract_strided_slice %102 {offsets = [0, 3], sizes = [16, 3], strides = [1, 1]} : vector<16x6xf32> to vector<16x3xf32>
    %106 = arith.subf %104, %105 : vector<16x3xf32>
    %c5_36 = arith.constant 5 : index
    %c0_37 = arith.constant 0 : index
    %107 = vector.load %arg9[%c5_36, %c0_37] : memref<26x45xf32, #tpu.memory_space<vmem>>, vector<16x3xf32>
    tpu.vector_store %arg9[%c5_36, %c0_37], %106 {strides = array<i32>} : memref<26x45xf32, #tpu.memory_space<vmem>>, vector<16x3xf32>,
    %c0_38 = arith.constant 0 : index
    %c0_39 = arith.constant 0 : index
    %c0_40 = arith.constant 0 : index
    %108 = vector.load %arg5[%c0_38, %c0_39, %c0_40] : memref<9x3x90xbf16, #tpu.memory_space<vmem>>, vector<9x3x90xbf16>
    %cst_41 = arith.constant 0.000000e+00 : f32
    %109 = vector.broadcast %cst_41 : f32 to vector<16x90xf32>
    %c0_42 = arith.constant 0 : index
    %c0_43 = arith.constant 0 : index
    %110 = vector.load %arg9[%c0_42, %c0_43] : memref<26x45xf32, #tpu.memory_space<vmem>>, vector<16x3xf32>
    %111 = arith.truncf %110 : vector<16x3xf32> to vector<16x3xbf16>
    %112 = vector.extract_strided_slice %108 {offsets = [0, 0, 0], sizes = [1, 3, 90], strides = [1, 1, 1]} : vector<9x3x90xbf16> to vector<1x3x90xbf16>
    %113 = vector.shape_cast %112 : vector<1x3x90xbf16> to vector<3x90xbf16>
    %cst_44 = arith.constant dense<0.000000e+00> : vector<16x90xf32>
    %114 = tpu.matmul %111, %113, %cst_44 {dimension_numbers = #tpu.dot_dimension_numbers<[1], [0], [0], [1], [0, 0, 1, 1], [], []>} : vector<16x3xbf16>, vector<3x90xbf16>, vector<16x90xf32> -> vector<16x90xf32>
    %115 = vector.extract_strided_slice %2 {offsets = [0, 0, 0], sizes = [1, 16, 1], strides = [1, 1, 1]} : vector<9x16x1xf32> to vector<1x16x1xf32>
    %116 = vector.shape_cast %115 : vector<1x16x1xf32> to vector<16x1xf32>
    %117 = vector.broadcast %116 : vector<16x1xf32> to vector<16x90xf32>
    %118 = arith.mulf %117, %114 : vector<16x90xf32>
    %119 = arith.addf %109, %118 : vector<16x90xf32>
    %c1_45 = arith.constant 1 : index
    %c0_46 = arith.constant 0 : index
    %120 = vector.load %arg9[%c1_45, %c0_46] : memref<26x45xf32, #tpu.memory_space<vmem>>, vector<16x3xf32>
    %121 = arith.truncf %120 : vector<16x3xf32> to vector<16x3xbf16>
    %122 = vector.extract_strided_slice %108 {offsets = [1, 0, 0], sizes = [1, 3, 90], strides = [1, 1, 1]} : vector<9x3x90xbf16> to vector<1x3x90xbf16>
    %123 = vector.shape_cast %122 : vector<1x3x90xbf16> to vector<3x90xbf16>
    %cst_47 = arith.constant dense<0.000000e+00> : vector<16x90xf32>
    %124 = tpu.matmul %121, %123, %cst_47 {dimension_numbers = #tpu.dot_dimension_numbers<[1], [0], [0], [1], [0, 0, 1, 1], [], []>} : vector<16x3xbf16>, vector<3x90xbf16>, vector<16x90xf32> -> vector<16x90xf32>
    %125 = vector.extract_strided_slice %2 {offsets = [1, 0, 0], sizes = [1, 16, 1], strides = [1, 1, 1]} : vector<9x16x1xf32> to vector<1x16x1xf32>
    %126 = vector.shape_cast %125 : vector<1x16x1xf32> to vector<16x1xf32>
    %127 = vector.broadcast %126 : vector<16x1xf32> to vector<16x90xf32>
    %128 = arith.mulf %127, %124 : vector<16x90xf32>
    %129 = arith.addf %119, %128 : vector<16x90xf32>
    %c2_48 = arith.constant 2 : index
    %c0_49 = arith.constant 0 : index
    %130 = vector.load %arg9[%c2_48, %c0_49] : memref<26x45xf32, #tpu.memory_space<vmem>>, vector<16x3xf32>
    %131 = arith.truncf %130 : vector<16x3xf32> to vector<16x3xbf16>
    %132 = vector.extract_strided_slice %108 {offsets = [2, 0, 0], sizes = [1, 3, 90], strides = [1, 1, 1]} : vector<9x3x90xbf16> to vector<1x3x90xbf16>
    %133 = vector.shape_cast %132 : vector<1x3x90xbf16> to vector<3x90xbf16>
    %cst_50 = arith.constant dense<0.000000e+00> : vector<16x90xf32>
    %134 = tpu.matmul %131, %133, %cst_50 {dimension_numbers = #tpu.dot_dimension_numbers<[1], [0], [0], [1], [0, 0, 1, 1], [], []>} : vector<16x3xbf16>, vector<3x90xbf16>, vector<16x90xf32> -> vector<16x90xf32>
    %135 = vector.extract_strided_slice %2 {offsets = [2, 0, 0], sizes = [1, 16, 1], strides = [1, 1, 1]} : vector<9x16x1xf32> to vector<1x16x1xf32>
    %136 = vector.shape_cast %135 : vector<1x16x1xf32> to vector<16x1xf32>
    %137 = vector.broadcast %136 : vector<16x1xf32> to vector<16x90xf32>
    %138 = arith.mulf %137, %134 : vector<16x90xf32>
    %139 = arith.addf %129, %138 : vector<16x90xf32>
    %c4_51 = arith.constant 4 : index
    %c0_52 = arith.constant 0 : index
    %140 = vector.load %arg9[%c4_51, %c0_52] : memref<26x45xf32, #tpu.memory_space<vmem>>, vector<16x3xf32>
    %141 = arith.truncf %140 : vector<16x3xf32> to vector<16x3xbf16>
    %142 = vector.extract_strided_slice %108 {offsets = [3, 0, 0], sizes = [1, 3, 90], strides = [1, 1, 1]} : vector<9x3x90xbf16> to vector<1x3x90xbf16>
    %143 = vector.shape_cast %142 : vector<1x3x90xbf16> to vector<3x90xbf16>
    %cst_53 = arith.constant dense<0.000000e+00> : vector<16x90xf32>
    %144 = tpu.matmul %141, %143, %cst_53 {dimension_numbers = #tpu.dot_dimension_numbers<[1], [0], [0], [1], [0, 0, 1, 1], [], []>} : vector<16x3xbf16>, vector<3x90xbf16>, vector<16x90xf32> -> vector<16x90xf32>
    %145 = vector.extract_strided_slice %2 {offsets = [3, 0, 0], sizes = [1, 16, 1], strides = [1, 1, 1]} : vector<9x16x1xf32> to vector<1x16x1xf32>
    %146 = vector.shape_cast %145 : vector<1x16x1xf32> to vector<16x1xf32>
    %147 = vector.broadcast %146 : vector<16x1xf32> to vector<16x90xf32>
    %148 = arith.mulf %147, %144 : vector<16x90xf32>
    %149 = arith.addf %139, %148 : vector<16x90xf32>
    %c5_54 = arith.constant 5 : index
    %c0_55 = arith.constant 0 : index
    %150 = vector.load %arg9[%c5_54, %c0_55] : memref<26x45xf32, #tpu.memory_space<vmem>>, vector<16x3xf32>
    %151 = arith.truncf %150 : vector<16x3xf32> to vector<16x3xbf16>
    %152 = vector.extract_strided_slice %108 {offsets = [4, 0, 0], sizes = [1, 3, 90], strides = [1, 1, 1]} : vector<9x3x90xbf16> to vector<1x3x90xbf16>
    %153 = vector.shape_cast %152 : vector<1x3x90xbf16> to vector<3x90xbf16>
    %cst_56 = arith.constant dense<0.000000e+00> : vector<16x90xf32>
    %154 = tpu.matmul %151, %153, %cst_56 {dimension_numbers = #tpu.dot_dimension_numbers<[1], [0], [0], [1], [0, 0, 1, 1], [], []>} : vector<16x3xbf16>, vector<3x90xbf16>, vector<16x90xf32> -> vector<16x90xf32>
    %155 = vector.extract_strided_slice %2 {offsets = [4, 0, 0], sizes = [1, 16, 1], strides = [1, 1, 1]} : vector<9x16x1xf32> to vector<1x16x1xf32>
    %156 = vector.shape_cast %155 : vector<1x16x1xf32> to vector<16x1xf32>
    %157 = vector.broadcast %156 : vector<16x1xf32> to vector<16x90xf32>
    %158 = arith.mulf %157, %154 : vector<16x90xf32>
    %159 = arith.addf %149, %158 : vector<16x90xf32>
    %c6_57 = arith.constant 6 : index
    %c0_58 = arith.constant 0 : index
    %160 = vector.load %arg9[%c6_57, %c0_58] : memref<26x45xf32, #tpu.memory_space<vmem>>, vector<16x3xf32>
    %161 = arith.truncf %160 : vector<16x3xf32> to vector<16x3xbf16>
    %162 = vector.extract_strided_slice %108 {offsets = [5, 0, 0], sizes = [1, 3, 90], strides = [1, 1, 1]} : vector<9x3x90xbf16> to vector<1x3x90xbf16>
    %163 = vector.shape_cast %162 : vector<1x3x90xbf16> to vector<3x90xbf16>
    %cst_59 = arith.constant dense<0.000000e+00> : vector<16x90xf32>
    %164 = tpu.matmul %161, %163, %cst_59 {dimension_numbers = #tpu.dot_dimension_numbers<[1], [0], [0], [1], [0, 0, 1, 1], [], []>} : vector<16x3xbf16>, vector<3x90xbf16>, vector<16x90xf32> -> vector<16x90xf32>
    %165 = vector.extract_strided_slice %2 {offsets = [5, 0, 0], sizes = [1, 16, 1], strides = [1, 1, 1]} : vector<9x16x1xf32> to vector<1x16x1xf32>
    %166 = vector.shape_cast %165 : vector<1x16x1xf32> to vector<16x1xf32>
    %167 = vector.broadcast %166 : vector<16x1xf32> to vector<16x90xf32>
    %168 = arith.mulf %167, %164 : vector<16x90xf32>
    %169 = arith.addf %159, %168 : vector<16x90xf32>
    %c8_60 = arith.constant 8 : index
    %c0_61 = arith.constant 0 : index
    %170 = vector.load %arg9[%c8_60, %c0_61] : memref<26x45xf32, #tpu.memory_space<vmem>>, vector<16x3xf32>
    %171 = arith.truncf %170 : vector<16x3xf32> to vector<16x3xbf16>
    %172 = vector.extract_strided_slice %108 {offsets = [6, 0, 0], sizes = [1, 3, 90], strides = [1, 1, 1]} : vector<9x3x90xbf16> to vector<1x3x90xbf16>
    %173 = vector.shape_cast %172 : vector<1x3x90xbf16> to vector<3x90xbf16>
    %cst_62 = arith.constant dense<0.000000e+00> : vector<16x90xf32>
    %174 = tpu.matmul %171, %173, %cst_62 {dimension_numbers = #tpu.dot_dimension_numbers<[1], [0], [0], [1], [0, 0, 1, 1], [], []>} : vector<16x3xbf16>, vector<3x90xbf16>, vector<16x90xf32> -> vector<16x90xf32>
    %175 = vector.extract_strided_slice %2 {offsets = [6, 0, 0], sizes = [1, 16, 1], strides = [1, 1, 1]} : vector<9x16x1xf32> to vector<1x16x1xf32>
    %176 = vector.shape_cast %175 : vector<1x16x1xf32> to vector<16x1xf32>
    %177 = vector.broadcast %176 : vector<16x1xf32> to vector<16x90xf32>
    %178 = arith.mulf %177, %174 : vector<16x90xf32>
    %179 = arith.addf %169, %178 : vector<16x90xf32>
    %c9_63 = arith.constant 9 : index
    %c0_64 = arith.constant 0 : index
    %180 = vector.load %arg9[%c9_63, %c0_64] : memref<26x45xf32, #tpu.memory_space<vmem>>, vector<16x3xf32>
    %181 = arith.truncf %180 : vector<16x3xf32> to vector<16x3xbf16>
    %182 = vector.extract_strided_slice %108 {offsets = [7, 0, 0], sizes = [1, 3, 90], strides = [1, 1, 1]} : vector<9x3x90xbf16> to vector<1x3x90xbf16>
    %183 = vector.shape_cast %182 : vector<1x3x90xbf16> to vector<3x90xbf16>
    %cst_65 = arith.constant dense<0.000000e+00> : vector<16x90xf32>
    %184 = tpu.matmul %181, %183, %cst_65 {dimension_numbers = #tpu.dot_dimension_numbers<[1], [0], [0], [1], [0, 0, 1, 1], [], []>} : vector<16x3xbf16>, vector<3x90xbf16>, vector<16x90xf32> -> vector<16x90xf32>
    %185 = vector.extract_strided_slice %2 {offsets = [7, 0, 0], sizes = [1, 16, 1], strides = [1, 1, 1]} : vector<9x16x1xf32> to vector<1x16x1xf32>
    %186 = vector.shape_cast %185 : vector<1x16x1xf32> to vector<16x1xf32>
    %187 = vector.broadcast %186 : vector<16x1xf32> to vector<16x90xf32>
    %188 = arith.mulf %187, %184 : vector<16x90xf32>
    %189 = arith.addf %179, %188 : vector<16x90xf32>
    %c10_66 = arith.constant 10 : index
    %c0_67 = arith.constant 0 : index
    %190 = vector.load %arg9[%c10_66, %c0_67] : memref<26x45xf32, #tpu.memory_space<vmem>>, vector<16x3xf32>
    %191 = arith.truncf %190 : vector<16x3xf32> to vector<16x3xbf16>
    %192 = vector.extract_strided_slice %108 {offsets = [8, 0, 0], sizes = [1, 3, 90], strides = [1, 1, 1]} : vector<9x3x90xbf16> to vector<1x3x90xbf16>
    %193 = vector.shape_cast %192 : vector<1x3x90xbf16> to vector<3x90xbf16>
    %cst_68 = arith.constant dense<0.000000e+00> : vector<16x90xf32>
    %194 = tpu.matmul %191, %193, %cst_68 {dimension_numbers = #tpu.dot_dimension_numbers<[1], [0], [0], [1], [0, 0, 1, 1], [], []>} : vector<16x3xbf16>, vector<3x90xbf16>, vector<16x90xf32> -> vector<16x90xf32>
    %195 = vector.extract_strided_slice %2 {offsets = [8, 0, 0], sizes = [1, 16, 1], strides = [1, 1, 1]} : vector<9x16x1xf32> to vector<1x16x1xf32>
    %196 = vector.shape_cast %195 : vector<1x16x1xf32> to vector<16x1xf32>
    %197 = vector.broadcast %196 : vector<16x1xf32> to vector<16x90xf32>
    %198 = arith.mulf %197, %194 : vector<16x90xf32>
    %199 = arith.addf %189, %198 : vector<16x90xf32>
    %c0_69 = arith.constant 0 : index
    %c0_70 = arith.constant 0 : index
    %200 = vector.load %arg6[%c0_69, %c0_70] : memref<1x90xf32, #tpu.memory_space<vmem>>, vector<1x90xf32>
    %201 = vector.broadcast %200 : vector<1x90xf32> to vector<16x90xf32>
    %202 = arith.addf %199, %201 : vector<16x90xf32>
    %203 = vector.extract_strided_slice %202 {offsets = [0, 0], sizes = [16, 45], strides = [1, 1]} : vector<16x90xf32> to vector<16x45xf32>
    %204 = arith.negf %203 : vector<16x45xf32>
    %205 = math.exp %204 : vector<16x45xf32>
    %cst_71 = arith.constant 1.000000e+00 : f32
    %206 = vector.broadcast %cst_71 : f32 to vector<16x45xf32>
    %207 = arith.addf %206, %205 : vector<16x45xf32>
    %208 = arith.divf %206, %207 : vector<16x45xf32>
    %cst_72 = arith.constant 2.000000e+00 : f32
    %209 = vector.broadcast %cst_72 : f32 to vector<16x45xf32>
    %210 = arith.mulf %208, %209 : vector<16x45xf32>
    %cst_73 = arith.constant 1.000000e+00 : f32
    %211 = vector.broadcast %cst_73 : f32 to vector<16x45xf32>
    %212 = arith.subf %210, %211 : vector<16x45xf32>
    %cst_74 = arith.constant 1.000000e+00 : f32
    %213 = vector.broadcast %cst_74 : f32 to vector<16x45xf32>
    %214 = arith.mulf %213, %212 : vector<16x45xf32>
    %215 = math.exp %214 : vector<16x45xf32>
    %216 = arith.mulf %6, %215 : vector<16x45xf32>
    %217 = vector.extract_strided_slice %202 {offsets = [0, 45], sizes = [16, 45], strides = [1, 1]} : vector<16x90xf32> to vector<16x45xf32>
    %218 = arith.addf %216, %217 : vector<16x45xf32>
    %c0_75 = arith.constant 0 : index
    %c0_76 = arith.constant 0 : index
    %c0_77 = arith.constant 0 : index
    %219 = vector.load %arg7[%c0_75, %c0_76, %c0_77] : memref<1x16x48xf32, #tpu.memory_space<vmem>>, vector<1x16x3xf32>
    %220 = vector.shape_cast %219 : vector<1x16x3xf32> to vector<16x3xf32>
    %221 = vector.shape_cast %106 : vector<16x3xf32> to vector<1x16x3xf32>
    tpu.vector_store %arg7[%c0_75, %c0_76, %c0_77], %221 {strides = array<i32>} : memref<1x16x48xf32, #tpu.memory_space<vmem>>, vector<1x16x3xf32>,
    %c0_78 = arith.constant 0 : index
    %c0_79 = arith.constant 0 : index
    %c3_80 = arith.constant 3 : index
    %222 = vector.load %arg7[%c0_78, %c0_79, %c3_80] : memref<1x16x48xf32, #tpu.memory_space<vmem>>, vector<1x16x45xf32>
    %223 = vector.shape_cast %222 : vector<1x16x45xf32> to vector<16x45xf32>
    %224 = vector.shape_cast %218 : vector<16x45xf32> to vector<1x16x45xf32>
    tpu.vector_store %arg7[%c0_78, %c0_79, %c3_80], %224 {strides = array<i32>} : memref<1x16x48xf32, #tpu.memory_space<vmem>>, vector<1x16x45xf32>,
    %c0_81 = arith.constant 0 : index
    %c0_82 = arith.constant 0 : index
    %c0_83 = arith.constant 0 : index
    %225 = vector.load %arg8[%c0_81, %c0_82, %c0_83] : memref<1x16x3xf32, #tpu.memory_space<vmem>>, vector<1x16x3xf32>
    %226 = vector.shape_cast %225 : vector<1x16x3xf32> to vector<16x3xf32>
    %227 = vector.shape_cast %104 : vector<16x3xf32> to vector<1x16x3xf32>
    tpu.vector_store %arg8[%c0_81, %c0_82, %c0_83], %227 {strides = array<i32>} : memref<1x16x3xf32, #tpu.memory_space<vmem>>, vector<1x16x3xf32>,
    return
  }
  func.func @transform_0(%arg0: i32) -> (i32, i32, i32) {
    %c0_i32 = arith.constant 0 : i32
    %c0_i32_0 = arith.constant 0 : i32
    %c0_i32_1 = arith.constant 0 : i32
    return %arg0, %c0_i32, %c0_i32_0 : i32, i32, i32
  }
  func.func @transform_1(%arg0: i32) -> (i32, i32, i32) {
    %c0_i32 = arith.constant 0 : i32
    %c0_i32_0 = arith.constant 0 : i32
    %c0_i32_1 = arith.constant 0 : i32
    %c0_i32_2 = arith.constant 0 : i32
    return %c0_i32, %c0_i32_0, %c0_i32_1 : i32, i32, i32
  }
  func.func @transform_2(%arg0: i32) -> (i32, i32, i32) {
    %c0_i32 = arith.constant 0 : i32
    %c0_i32_0 = arith.constant 0 : i32
    %c0_i32_1 = arith.constant 0 : i32
    %c0_i32_2 = arith.constant 0 : i32
    return %c0_i32, %c0_i32_0, %c0_i32_1 : i32, i32, i32
  }
  func.func @transform_3(%arg0: i32) -> (i32, i32) {
    %c0_i32 = arith.constant 0 : i32
    %c0_i32_0 = arith.constant 0 : i32
    %c0_i32_1 = arith.constant 0 : i32
    return %c0_i32, %c0_i32_0 : i32, i32
  }
  func.func @transform_4(%arg0: i32) -> (i32, i32, i32) {
    %c0_i32 = arith.constant 0 : i32
    %c0_i32_0 = arith.constant 0 : i32
    %c0_i32_1 = arith.constant 0 : i32
    %c0_i32_2 = arith.constant 0 : i32
    return %c0_i32, %c0_i32_0, %c0_i32_1 : i32, i32, i32
  }
  func.func @transform_5(%arg0: i32) -> (i32, i32) {
    %c0_i32 = arith.constant 0 : i32
    %c0_i32_0 = arith.constant 0 : i32
    %c0_i32_1 = arith.constant 0 : i32
    return %c0_i32, %c0_i32_0 : i32, i32
  }
  func.func @transform_6(%arg0: i32) -> (i32, i32, i32) {
    %c0_i32 = arith.constant 0 : i32
    %c0_i32_0 = arith.constant 0 : i32
    %c0_i32_1 = arith.constant 0 : i32
    return %arg0, %c0_i32, %c0_i32_0 : i32, i32, i32
  }
  func.func @transform_7(%arg0: i32) -> (i32, i32, i32) {
    %c0_i32 = arith.constant 0 : i32
    %c0_i32_0 = arith.constant 0 : i32
    %c0_i32_1 = arith.constant 0 : i32
    return %arg0, %c0_i32, %c0_i32_0 : i32, i32, i32
  }
}

module attributes {stable_mosaic.version = 11 : i64} {
  func.func @_enhanced_block_kernel(%arg0: i32, %arg1: memref<1x16x48xf32, #tpu.memory_space<vmem>>, %arg2: memref<9x16x1xf32, #tpu.memory_space<vmem>>, %arg3: memref<9x45x6xbf16, #tpu.memory_space<vmem>>, %arg4: memref<1x6xf32, #tpu.memory_space<vmem>>, %arg5: memref<9x3x90xbf16, #tpu.memory_space<vmem>>, %arg6: memref<1x90xf32, #tpu.memory_space<vmem>>, %arg7: memref<1x16x48xf32, #tpu.memory_space<vmem>>, %arg8: memref<1x16x3xf32, #tpu.memory_space<vmem>>, %arg9: memref<26x45xf32, #tpu.memory_space<vmem>>) attributes {dimension_semantics = [#tpu.dimension_semantics<parallel>], iteration_bounds = array<i64: 2>, scalar_prefetch = 0 : i64, scratch_operands = 1 : i64, tpu.core_type = #tpu.core_type<tc>, window_params = [{transform_indices = @transform_0, window_bounds = array<i64: 1, 16, 48>}, {pipeline_mode = #tpu.pipeline_mode<synchronous>, transform_indices = @transform_1, window_bounds = array<i64: 9, 16, 1>}, {pipeline_mode = #tpu.pipeline_mode<synchronous>, transform_indices = @transform_2, window_bounds = array<i64: 9, 45, 6>}, {pipeline_mode = #tpu.pipeline_mode<synchronous>, transform_indices = @transform_3, window_bounds = array<i64: 1, 6>}, {pipeline_mode = #tpu.pipeline_mode<synchronous>, transform_indices = @transform_4, window_bounds = array<i64: 9, 3, 90>}, {pipeline_mode = #tpu.pipeline_mode<synchronous>, transform_indices = @transform_5, window_bounds = array<i64: 1, 90>}, {transform_indices = @transform_6, window_bounds = array<i64: 1, 16, 48>}, {transform_indices = @transform_7, window_bounds = array<i64: 1, 16, 3>}]} {
    %cst = arith.constant 0.000000e+00 : f32
    %0 = vector.broadcast %cst : f32 to vector<26x45xf32>
    %c0 = arith.constant 0 : index
    %c0_0 = arith.constant 0 : index
    %1 = vector.load %arg9[%c0, %c0_0] : memref<26x45xf32, #tpu.memory_space<vmem>>, vector<26x45xf32>
    tpu.vector_store %arg9[%c0, %c0_0], %0 {strides = array<i32>} : memref<26x45xf32, #tpu.memory_space<vmem>>, vector<26x45xf32>,
    %c0_1 = arith.constant 0 : index
    %c0_2 = arith.constant 0 : index
    %c0_3 = arith.constant 0 : index
    %2 = vector.load %arg2[%c0_1, %c0_2, %c0_3] : memref<9x16x1xf32, #tpu.memory_space<vmem>>, vector<9x16x1xf32>
    %c0_4 = arith.constant 0 : index
    %c0_5 = arith.constant 0 : index
    %c0_6 = arith.constant 0 : index
    %3 = vector.load %arg1[%c0_4, %c0_5, %c0_6] : memref<1x16x48xf32, #tpu.memory_space<vmem>>, vector<1x16x3xf32>
    %4 = vector.shape_cast %3 : vector<1x16x3xf32> to vector<16x3xf32>
    %c0_7 = arith.constant 0 : index
    %c0_8 = arith.constant 0 : index
    %c3 = arith.constant 3 : index
    %5 = vector.load %arg1[%c0_7, %c0_8, %c3] : memref<1x16x48xf32, #tpu.memory_space<vmem>>, vector<1x16x45xf32>
    %6 = vector.shape_cast %5 : vector<1x16x45xf32> to vector<16x45xf32>
    %c5 = arith.constant 5 : index
    %c0_9 = arith.constant 0 : index
    %7 = vector.load %arg9[%c5, %c0_9] : memref<26x45xf32, #tpu.memory_space<vmem>>, vector<16x45xf32>
    tpu.vector_store %arg9[%c5, %c0_9], %6 {strides = array<i32>} : memref<26x45xf32, #tpu.memory_space<vmem>>, vector<16x45xf32>,
    %c0_10 = arith.constant 0 : index
    %c0_11 = arith.constant 0 : index
    %c0_12 = arith.constant 0 : index
    %8 = vector.load %arg3[%c0_10, %c0_11, %c0_12] : memref<9x45x6xbf16, #tpu.memory_space<vmem>>, vector<9x45x6xbf16>
    %cst_13 = arith.constant 0.000000e+00 : f32
    %9 = vector.broadcast %cst_13 : f32 to vector<16x6xf32>
    %c0_14 = arith.constant 0 : index
    %c0_15 = arith.constant 0 : index
    %10 = vector.load %arg9[%c0_14, %c0_15] : memref<26x45xf32, #tpu.memory_space<vmem>>, vector<16x45xf32>
    %11 = arith.truncf %10 : vector<16x45xf32> to vector<16x45xbf16>
    %12 = vector.extract_strided_slice %8 {offsets = [0, 0, 0], sizes = [1, 45, 6], strides = [1, 1, 1]} : vector<9x45x6xbf16> to vector<1x45x6xbf16>
    %13 = vector.shape_cast %12 : vector<1x45x6xbf16> to vector<45x6xbf16>
    %cst_16 = arith.constant dense<0.000000e+00> : vector<16x6xf32>
    %14 = tpu.matmul %11, %13, %cst_16 {dimension_numbers = #tpu.dot_dimension_numbers<[1], [0], [0], [1], [0, 0, 1, 1], [], []>} : vector<16x45xbf16>, vector<45x6xbf16>, vector<16x6xf32> -> vector<16x6xf32>
    %15 = vector.extract_strided_slice %2 {offsets = [0, 0, 0], sizes = [1, 16, 1], strides = [1, 1, 1]} : vector<9x16x1xf32> to vector<1x16x1xf32>
    %16 = vector.shape_cast %15 : vector<1x16x1xf32> to vector<16x1xf32>
    %17 = vector.broadcast %16 : vector<16x1xf32> to vector<16x6xf32>
    %18 = arith.mulf %17, %14 : vector<16x6xf32>
    %19 = arith.addf %9, %18 : vector<16x6xf32>
    %c1 = arith.constant 1 : index
    %c0_17 = arith.constant 0 : index
    %20 = vector.load %arg9[%c1, %c0_17] : memref<26x45xf32, #tpu.memory_space<vmem>>, vector<16x45xf32>
    %21 = arith.truncf %20 : vector<16x45xf32> to vector<16x45xbf16>
    %22 = vector.extract_strided_slice %8 {offsets = [1, 0, 0], sizes = [1, 45, 6], strides = [1, 1, 1]} : vector<9x45x6xbf16> to vector<1x45x6xbf16>
    %23 = vector.shape_cast %22 : vector<1x45x6xbf16> to vector<45x6xbf16>
    %cst_18 = arith.constant dense<0.000000e+00> : vector<16x6xf32>
    %24 = tpu.matmul %21, %23, %cst_18 {dimension_numbers = #tpu.dot_dimension_numbers<[1], [0], [0], [1], [0, 0, 1, 1], [], []>} : vector<16x45xbf16>, vector<45x6xbf16>, vector<16x6xf32> -> vector<16x6xf32>
    %25 = vector.extract_strided_slice %2 {offsets = [1, 0, 0], sizes = [1, 16, 1], strides = [1, 1, 1]} : vector<9x16x1xf32> to vector<1x16x1xf32>
    %26 = vector.shape_cast %25 : vector<1x16x1xf32> to vector<16x1xf32>
    %27 = vector.broadcast %26 : vector<16x1xf32> to vector<16x6xf32>
    %28 = arith.mulf %27, %24 : vector<16x6xf32>
    %29 = arith.addf %19, %28 : vector<16x6xf32>
    %c2 = arith.constant 2 : index
    %c0_19 = arith.constant 0 : index
    %30 = vector.load %arg9[%c2, %c0_19] : memref<26x45xf32, #tpu.memory_space<vmem>>, vector<16x45xf32>
    %31 = arith.truncf %30 : vector<16x45xf32> to vector<16x45xbf16>
    %32 = vector.extract_strided_slice %8 {offsets = [2, 0, 0], sizes = [1, 45, 6], strides = [1, 1, 1]} : vector<9x45x6xbf16> to vector<1x45x6xbf16>
    %33 = vector.shape_cast %32 : vector<1x45x6xbf16> to vector<45x6xbf16>
    %cst_20 = arith.constant dense<0.000000e+00> : vector<16x6xf32>
    %34 = tpu.matmul %31, %33, %cst_20 {dimension_numbers = #tpu.dot_dimension_numbers<[1], [0], [0], [1], [0, 0, 1, 1], [], []>} : vector<16x45xbf16>, vector<45x6xbf16>, vector<16x6xf32> -> vector<16x6xf32>
    %35 = vector.extract_strided_slice %2 {offsets = [2, 0, 0], sizes = [1, 16, 1], strides = [1, 1, 1]} : vector<9x16x1xf32> to vector<1x16x1xf32>
    %36 = vector.shape_cast %35 : vector<1x16x1xf32> to vector<16x1xf32>
    %37 = vector.broadcast %36 : vector<16x1xf32> to vector<16x6xf32>
    %38 = arith.mulf %37, %34 : vector<16x6xf32>
    %39 = arith.addf %29, %38 : vector<16x6xf32>
    %c4 = arith.constant 4 : index
    %c0_21 = arith.constant 0 : index
    %40 = vector.load %arg9[%c4, %c0_21] : memref<26x45xf32, #tpu.memory_space<vmem>>, vector<16x45xf32>
    %41 = arith.truncf %40 : vector<16x45xf32> to vector<16x45xbf16>
    %42 = vector.extract_strided_slice %8 {offsets = [3, 0, 0], sizes = [1, 45, 6], strides = [1, 1, 1]} : vector<9x45x6xbf16> to vector<1x45x6xbf16>
    %43 = vector.shape_cast %42 : vector<1x45x6xbf16> to vector<45x6xbf16>
    %cst_22 = arith.constant dense<0.000000e+00> : vector<16x6xf32>
    %44 = tpu.matmul %41, %43, %cst_22 {dimension_numbers = #tpu.dot_dimension_numbers<[1], [0], [0], [1], [0, 0, 1, 1], [], []>} : vector<16x45xbf16>, vector<45x6xbf16>, vector<16x6xf32> -> vector<16x6xf32>
    %45 = vector.extract_strided_slice %2 {offsets = [3, 0, 0], sizes = [1, 16, 1], strides = [1, 1, 1]} : vector<9x16x1xf32> to vector<1x16x1xf32>
    %46 = vector.shape_cast %45 : vector<1x16x1xf32> to vector<16x1xf32>
    %47 = vector.broadcast %46 : vector<16x1xf32> to vector<16x6xf32>
    %48 = arith.mulf %47, %44 : vector<16x6xf32>
    %49 = arith.addf %39, %48 : vector<16x6xf32>
    %c5_23 = arith.constant 5 : index
    %c0_24 = arith.constant 0 : index
    %50 = vector.load %arg9[%c5_23, %c0_24] : memref<26x45xf32, #tpu.memory_space<vmem>>, vector<16x45xf32>
    %51 = arith.truncf %50 : vector<16x45xf32> to vector<16x45xbf16>
    %52 = vector.extract_strided_slice %8 {offsets = [4, 0, 0], sizes = [1, 45, 6], strides = [1, 1, 1]} : vector<9x45x6xbf16> to vector<1x45x6xbf16>
    %53 = vector.shape_cast %52 : vector<1x45x6xbf16> to vector<45x6xbf16>
    %cst_25 = arith.constant dense<0.000000e+00> : vector<16x6xf32>
    %54 = tpu.matmul %51, %53, %cst_25 {dimension_numbers = #tpu.dot_dimension_numbers<[1], [0], [0], [1], [0, 0, 1, 1], [], []>} : vector<16x45xbf16>, vector<45x6xbf16>, vector<16x6xf32> -> vector<16x6xf32>
    %55 = vector.extract_strided_slice %2 {offsets = [4, 0, 0], sizes = [1, 16, 1], strides = [1, 1, 1]} : vector<9x16x1xf32> to vector<1x16x1xf32>
    %56 = vector.shape_cast %55 : vector<1x16x1xf32> to vector<16x1xf32>
    %57 = vector.broadcast %56 : vector<16x1xf32> to vector<16x6xf32>
    %58 = arith.mulf %57, %54 : vector<16x6xf32>
    %59 = arith.addf %49, %58 : vector<16x6xf32>
    %c6 = arith.constant 6 : index
    %c0_26 = arith.constant 0 : index
    %60 = vector.load %arg9[%c6, %c0_26] : memref<26x45xf32, #tpu.memory_space<vmem>>, vector<16x45xf32>
    %61 = arith.truncf %60 : vector<16x45xf32> to vector<16x45xbf16>
    %62 = vector.extract_strided_slice %8 {offsets = [5, 0, 0], sizes = [1, 45, 6], strides = [1, 1, 1]} : vector<9x45x6xbf16> to vector<1x45x6xbf16>
    %63 = vector.shape_cast %62 : vector<1x45x6xbf16> to vector<45x6xbf16>
    %cst_27 = arith.constant dense<0.000000e+00> : vector<16x6xf32>
    %64 = tpu.matmul %61, %63, %cst_27 {dimension_numbers = #tpu.dot_dimension_numbers<[1], [0], [0], [1], [0, 0, 1, 1], [], []>} : vector<16x45xbf16>, vector<45x6xbf16>, vector<16x6xf32> -> vector<16x6xf32>
    %65 = vector.extract_strided_slice %2 {offsets = [5, 0, 0], sizes = [1, 16, 1], strides = [1, 1, 1]} : vector<9x16x1xf32> to vector<1x16x1xf32>
    %66 = vector.shape_cast %65 : vector<1x16x1xf32> to vector<16x1xf32>
    %67 = vector.broadcast %66 : vector<16x1xf32> to vector<16x6xf32>
    %68 = arith.mulf %67, %64 : vector<16x6xf32>
    %69 = arith.addf %59, %68 : vector<16x6xf32>
    %c8 = arith.constant 8 : index
    %c0_28 = arith.constant 0 : index
    %70 = vector.load %arg9[%c8, %c0_28] : memref<26x45xf32, #tpu.memory_space<vmem>>, vector<16x45xf32>
    %71 = arith.truncf %70 : vector<16x45xf32> to vector<16x45xbf16>
    %72 = vector.extract_strided_slice %8 {offsets = [6, 0, 0], sizes = [1, 45, 6], strides = [1, 1, 1]} : vector<9x45x6xbf16> to vector<1x45x6xbf16>
    %73 = vector.shape_cast %72 : vector<1x45x6xbf16> to vector<45x6xbf16>
    %cst_29 = arith.constant dense<0.000000e+00> : vector<16x6xf32>
    %74 = tpu.matmul %71, %73, %cst_29 {dimension_numbers = #tpu.dot_dimension_numbers<[1], [0], [0], [1], [0, 0, 1, 1], [], []>} : vector<16x45xbf16>, vector<45x6xbf16>, vector<16x6xf32> -> vector<16x6xf32>
    %75 = vector.extract_strided_slice %2 {offsets = [6, 0, 0], sizes = [1, 16, 1], strides = [1, 1, 1]} : vector<9x16x1xf32> to vector<1x16x1xf32>
    %76 = vector.shape_cast %75 : vector<1x16x1xf32> to vector<16x1xf32>
    %77 = vector.broadcast %76 : vector<16x1xf32> to vector<16x6xf32>
    %78 = arith.mulf %77, %74 : vector<16x6xf32>
    %79 = arith.addf %69, %78 : vector<16x6xf32>
    %c9 = arith.constant 9 : index
    %c0_30 = arith.constant 0 : index
    %80 = vector.load %arg9[%c9, %c0_30] : memref<26x45xf32, #tpu.memory_space<vmem>>, vector<16x45xf32>
    %81 = arith.truncf %80 : vector<16x45xf32> to vector<16x45xbf16>
    %82 = vector.extract_strided_slice %8 {offsets = [7, 0, 0], sizes = [1, 45, 6], strides = [1, 1, 1]} : vector<9x45x6xbf16> to vector<1x45x6xbf16>
    %83 = vector.shape_cast %82 : vector<1x45x6xbf16> to vector<45x6xbf16>
    %cst_31 = arith.constant dense<0.000000e+00> : vector<16x6xf32>
    %84 = tpu.matmul %81, %83, %cst_31 {dimension_numbers = #tpu.dot_dimension_numbers<[1], [0], [0], [1], [0, 0, 1, 1], [], []>} : vector<16x45xbf16>, vector<45x6xbf16>, vector<16x6xf32> -> vector<16x6xf32>
    %85 = vector.extract_strided_slice %2 {offsets = [7, 0, 0], sizes = [1, 16, 1], strides = [1, 1, 1]} : vector<9x16x1xf32> to vector<1x16x1xf32>
    %86 = vector.shape_cast %85 : vector<1x16x1xf32> to vector<16x1xf32>
    %87 = vector.broadcast %86 : vector<16x1xf32> to vector<16x6xf32>
    %88 = arith.mulf %87, %84 : vector<16x6xf32>
    %89 = arith.addf %79, %88 : vector<16x6xf32>
    %c10 = arith.constant 10 : index
    %c0_32 = arith.constant 0 : index
    %90 = vector.load %arg9[%c10, %c0_32] : memref<26x45xf32, #tpu.memory_space<vmem>>, vector<16x45xf32>
    %91 = arith.truncf %90 : vector<16x45xf32> to vector<16x45xbf16>
    %92 = vector.extract_strided_slice %8 {offsets = [8, 0, 0], sizes = [1, 45, 6], strides = [1, 1, 1]} : vector<9x45x6xbf16> to vector<1x45x6xbf16>
    %93 = vector.shape_cast %92 : vector<1x45x6xbf16> to vector<45x6xbf16>
    %cst_33 = arith.constant dense<0.000000e+00> : vector<16x6xf32>
    %94 = tpu.matmul %91, %93, %cst_33 {dimension_numbers = #tpu.dot_dimension_numbers<[1], [0], [0], [1], [0, 0, 1, 1], [], []>} : vector<16x45xbf16>, vector<45x6xbf16>, vector<16x6xf32> -> vector<16x6xf32>
    %95 = vector.extract_strided_slice %2 {offsets = [8, 0, 0], sizes = [1, 16, 1], strides = [1, 1, 1]} : vector<9x16x1xf32> to vector<1x16x1xf32>
    %96 = vector.shape_cast %95 : vector<1x16x1xf32> to vector<16x1xf32>
    %97 = vector.broadcast %96 : vector<16x1xf32> to vector<16x6xf32>
    %98 = arith.mulf %97, %94 : vector<16x6xf32>
    %99 = arith.addf %89, %98 : vector<16x6xf32>
    %c0_34 = arith.constant 0 : index
    %c0_35 = arith.constant 0 : index
    %100 = vector.load %arg4[%c0_34, %c0_35] : memref<1x6xf32, #tpu.memory_space<vmem>>, vector<1x6xf32>
    %101 = vector.broadcast %100 : vector<1x6xf32> to vector<16x6xf32>
    %102 = arith.addf %99, %101 : vector<16x6xf32>
    %103 = vector.extract_strided_slice %102 {offsets = [0, 0], sizes = [16, 3], strides = [1, 1]} : vector<16x6xf32> to vector<16x3xf32>
    %104 = arith.addf %4, %103 : vector<16x3xf32>
    %105 = vector.extract_strided_slice %102 {offsets = [0, 3], sizes = [16, 3], strides = [1, 1]} : vector<16x6xf32> to vector<16x3xf32>
    %106 = arith.subf %104, %105 : vector<16x3xf32>
    %c5_36 = arith.constant 5 : index
    %c0_37 = arith.constant 0 : index
    %107 = vector.load %arg9[%c5_36, %c0_37] : memref<26x45xf32, #tpu.memory_space<vmem>>, vector<16x3xf32>
    tpu.vector_store %arg9[%c5_36, %c0_37], %106 {strides = array<i32>} : memref<26x45xf32, #tpu.memory_space<vmem>>, vector<16x3xf32>,
    %c0_38 = arith.constant 0 : index
    %c0_39 = arith.constant 0 : index
    %c0_40 = arith.constant 0 : index
    %108 = vector.load %arg5[%c0_38, %c0_39, %c0_40] : memref<9x3x90xbf16, #tpu.memory_space<vmem>>, vector<9x3x90xbf16>
    %cst_41 = arith.constant 0.000000e+00 : f32
    %109 = vector.broadcast %cst_41 : f32 to vector<16x90xf32>
    %c0_42 = arith.constant 0 : index
    %c0_43 = arith.constant 0 : index
    %110 = vector.load %arg9[%c0_42, %c0_43] : memref<26x45xf32, #tpu.memory_space<vmem>>, vector<16x3xf32>
    %111 = arith.truncf %110 : vector<16x3xf32> to vector<16x3xbf16>
    %112 = vector.extract_strided_slice %108 {offsets = [0, 0, 0], sizes = [1, 3, 90], strides = [1, 1, 1]} : vector<9x3x90xbf16> to vector<1x3x90xbf16>
    %113 = vector.shape_cast %112 : vector<1x3x90xbf16> to vector<3x90xbf16>
    %cst_44 = arith.constant dense<0.000000e+00> : vector<16x90xf32>
    %114 = tpu.matmul %111, %113, %cst_44 {dimension_numbers = #tpu.dot_dimension_numbers<[1], [0], [0], [1], [0, 0, 1, 1], [], []>} : vector<16x3xbf16>, vector<3x90xbf16>, vector<16x90xf32> -> vector<16x90xf32>
    %115 = vector.extract_strided_slice %2 {offsets = [0, 0, 0], sizes = [1, 16, 1], strides = [1, 1, 1]} : vector<9x16x1xf32> to vector<1x16x1xf32>
    %116 = vector.shape_cast %115 : vector<1x16x1xf32> to vector<16x1xf32>
    %117 = vector.broadcast %116 : vector<16x1xf32> to vector<16x90xf32>
    %118 = arith.mulf %117, %114 : vector<16x90xf32>
    %119 = arith.addf %109, %118 : vector<16x90xf32>
    %c1_45 = arith.constant 1 : index
    %c0_46 = arith.constant 0 : index
    %120 = vector.load %arg9[%c1_45, %c0_46] : memref<26x45xf32, #tpu.memory_space<vmem>>, vector<16x3xf32>
    %121 = arith.truncf %120 : vector<16x3xf32> to vector<16x3xbf16>
    %122 = vector.extract_strided_slice %108 {offsets = [1, 0, 0], sizes = [1, 3, 90], strides = [1, 1, 1]} : vector<9x3x90xbf16> to vector<1x3x90xbf16>
    %123 = vector.shape_cast %122 : vector<1x3x90xbf16> to vector<3x90xbf16>
    %cst_47 = arith.constant dense<0.000000e+00> : vector<16x90xf32>
    %124 = tpu.matmul %121, %123, %cst_47 {dimension_numbers = #tpu.dot_dimension_numbers<[1], [0], [0], [1], [0, 0, 1, 1], [], []>} : vector<16x3xbf16>, vector<3x90xbf16>, vector<16x90xf32> -> vector<16x90xf32>
    %125 = vector.extract_strided_slice %2 {offsets = [1, 0, 0], sizes = [1, 16, 1], strides = [1, 1, 1]} : vector<9x16x1xf32> to vector<1x16x1xf32>
    %126 = vector.shape_cast %125 : vector<1x16x1xf32> to vector<16x1xf32>
    %127 = vector.broadcast %126 : vector<16x1xf32> to vector<16x90xf32>
    %128 = arith.mulf %127, %124 : vector<16x90xf32>
    %129 = arith.addf %119, %128 : vector<16x90xf32>
    %c2_48 = arith.constant 2 : index
    %c0_49 = arith.constant 0 : index
    %130 = vector.load %arg9[%c2_48, %c0_49] : memref<26x45xf32, #tpu.memory_space<vmem>>, vector<16x3xf32>
    %131 = arith.truncf %130 : vector<16x3xf32> to vector<16x3xbf16>
    %132 = vector.extract_strided_slice %108 {offsets = [2, 0, 0], sizes = [1, 3, 90], strides = [1, 1, 1]} : vector<9x3x90xbf16> to vector<1x3x90xbf16>
    %133 = vector.shape_cast %132 : vector<1x3x90xbf16> to vector<3x90xbf16>
    %cst_50 = arith.constant dense<0.000000e+00> : vector<16x90xf32>
    %134 = tpu.matmul %131, %133, %cst_50 {dimension_numbers = #tpu.dot_dimension_numbers<[1], [0], [0], [1], [0, 0, 1, 1], [], []>} : vector<16x3xbf16>, vector<3x90xbf16>, vector<16x90xf32> -> vector<16x90xf32>
    %135 = vector.extract_strided_slice %2 {offsets = [2, 0, 0], sizes = [1, 16, 1], strides = [1, 1, 1]} : vector<9x16x1xf32> to vector<1x16x1xf32>
    %136 = vector.shape_cast %135 : vector<1x16x1xf32> to vector<16x1xf32>
    %137 = vector.broadcast %136 : vector<16x1xf32> to vector<16x90xf32>
    %138 = arith.mulf %137, %134 : vector<16x90xf32>
    %139 = arith.addf %129, %138 : vector<16x90xf32>
    %c4_51 = arith.constant 4 : index
    %c0_52 = arith.constant 0 : index
    %140 = vector.load %arg9[%c4_51, %c0_52] : memref<26x45xf32, #tpu.memory_space<vmem>>, vector<16x3xf32>
    %141 = arith.truncf %140 : vector<16x3xf32> to vector<16x3xbf16>
    %142 = vector.extract_strided_slice %108 {offsets = [3, 0, 0], sizes = [1, 3, 90], strides = [1, 1, 1]} : vector<9x3x90xbf16> to vector<1x3x90xbf16>
    %143 = vector.shape_cast %142 : vector<1x3x90xbf16> to vector<3x90xbf16>
    %cst_53 = arith.constant dense<0.000000e+00> : vector<16x90xf32>
    %144 = tpu.matmul %141, %143, %cst_53 {dimension_numbers = #tpu.dot_dimension_numbers<[1], [0], [0], [1], [0, 0, 1, 1], [], []>} : vector<16x3xbf16>, vector<3x90xbf16>, vector<16x90xf32> -> vector<16x90xf32>
    %145 = vector.extract_strided_slice %2 {offsets = [3, 0, 0], sizes = [1, 16, 1], strides = [1, 1, 1]} : vector<9x16x1xf32> to vector<1x16x1xf32>
    %146 = vector.shape_cast %145 : vector<1x16x1xf32> to vector<16x1xf32>
    %147 = vector.broadcast %146 : vector<16x1xf32> to vector<16x90xf32>
    %148 = arith.mulf %147, %144 : vector<16x90xf32>
    %149 = arith.addf %139, %148 : vector<16x90xf32>
    %c5_54 = arith.constant 5 : index
    %c0_55 = arith.constant 0 : index
    %150 = vector.load %arg9[%c5_54, %c0_55] : memref<26x45xf32, #tpu.memory_space<vmem>>, vector<16x3xf32>
    %151 = arith.truncf %150 : vector<16x3xf32> to vector<16x3xbf16>
    %152 = vector.extract_strided_slice %108 {offsets = [4, 0, 0], sizes = [1, 3, 90], strides = [1, 1, 1]} : vector<9x3x90xbf16> to vector<1x3x90xbf16>
    %153 = vector.shape_cast %152 : vector<1x3x90xbf16> to vector<3x90xbf16>
    %cst_56 = arith.constant dense<0.000000e+00> : vector<16x90xf32>
    %154 = tpu.matmul %151, %153, %cst_56 {dimension_numbers = #tpu.dot_dimension_numbers<[1], [0], [0], [1], [0, 0, 1, 1], [], []>} : vector<16x3xbf16>, vector<3x90xbf16>, vector<16x90xf32> -> vector<16x90xf32>
    %155 = vector.extract_strided_slice %2 {offsets = [4, 0, 0], sizes = [1, 16, 1], strides = [1, 1, 1]} : vector<9x16x1xf32> to vector<1x16x1xf32>
    %156 = vector.shape_cast %155 : vector<1x16x1xf32> to vector<16x1xf32>
    %157 = vector.broadcast %156 : vector<16x1xf32> to vector<16x90xf32>
    %158 = arith.mulf %157, %154 : vector<16x90xf32>
    %159 = arith.addf %149, %158 : vector<16x90xf32>
    %c6_57 = arith.constant 6 : index
    %c0_58 = arith.constant 0 : index
    %160 = vector.load %arg9[%c6_57, %c0_58] : memref<26x45xf32, #tpu.memory_space<vmem>>, vector<16x3xf32>
    %161 = arith.truncf %160 : vector<16x3xf32> to vector<16x3xbf16>
    %162 = vector.extract_strided_slice %108 {offsets = [5, 0, 0], sizes = [1, 3, 90], strides = [1, 1, 1]} : vector<9x3x90xbf16> to vector<1x3x90xbf16>
    %163 = vector.shape_cast %162 : vector<1x3x90xbf16> to vector<3x90xbf16>
    %cst_59 = arith.constant dense<0.000000e+00> : vector<16x90xf32>
    %164 = tpu.matmul %161, %163, %cst_59 {dimension_numbers = #tpu.dot_dimension_numbers<[1], [0], [0], [1], [0, 0, 1, 1], [], []>} : vector<16x3xbf16>, vector<3x90xbf16>, vector<16x90xf32> -> vector<16x90xf32>
    %165 = vector.extract_strided_slice %2 {offsets = [5, 0, 0], sizes = [1, 16, 1], strides = [1, 1, 1]} : vector<9x16x1xf32> to vector<1x16x1xf32>
    %166 = vector.shape_cast %165 : vector<1x16x1xf32> to vector<16x1xf32>
    %167 = vector.broadcast %166 : vector<16x1xf32> to vector<16x90xf32>
    %168 = arith.mulf %167, %164 : vector<16x90xf32>
    %169 = arith.addf %159, %168 : vector<16x90xf32>
    %c8_60 = arith.constant 8 : index
    %c0_61 = arith.constant 0 : index
    %170 = vector.load %arg9[%c8_60, %c0_61] : memref<26x45xf32, #tpu.memory_space<vmem>>, vector<16x3xf32>
    %171 = arith.truncf %170 : vector<16x3xf32> to vector<16x3xbf16>
    %172 = vector.extract_strided_slice %108 {offsets = [6, 0, 0], sizes = [1, 3, 90], strides = [1, 1, 1]} : vector<9x3x90xbf16> to vector<1x3x90xbf16>
    %173 = vector.shape_cast %172 : vector<1x3x90xbf16> to vector<3x90xbf16>
    %cst_62 = arith.constant dense<0.000000e+00> : vector<16x90xf32>
    %174 = tpu.matmul %171, %173, %cst_62 {dimension_numbers = #tpu.dot_dimension_numbers<[1], [0], [0], [1], [0, 0, 1, 1], [], []>} : vector<16x3xbf16>, vector<3x90xbf16>, vector<16x90xf32> -> vector<16x90xf32>
    %175 = vector.extract_strided_slice %2 {offsets = [6, 0, 0], sizes = [1, 16, 1], strides = [1, 1, 1]} : vector<9x16x1xf32> to vector<1x16x1xf32>
    %176 = vector.shape_cast %175 : vector<1x16x1xf32> to vector<16x1xf32>
    %177 = vector.broadcast %176 : vector<16x1xf32> to vector<16x90xf32>
    %178 = arith.mulf %177, %174 : vector<16x90xf32>
    %179 = arith.addf %169, %178 : vector<16x90xf32>
    %c9_63 = arith.constant 9 : index
    %c0_64 = arith.constant 0 : index
    %180 = vector.load %arg9[%c9_63, %c0_64] : memref<26x45xf32, #tpu.memory_space<vmem>>, vector<16x3xf32>
    %181 = arith.truncf %180 : vector<16x3xf32> to vector<16x3xbf16>
    %182 = vector.extract_strided_slice %108 {offsets = [7, 0, 0], sizes = [1, 3, 90], strides = [1, 1, 1]} : vector<9x3x90xbf16> to vector<1x3x90xbf16>
    %183 = vector.shape_cast %182 : vector<1x3x90xbf16> to vector<3x90xbf16>
    %cst_65 = arith.constant dense<0.000000e+00> : vector<16x90xf32>
    %184 = tpu.matmul %181, %183, %cst_65 {dimension_numbers = #tpu.dot_dimension_numbers<[1], [0], [0], [1], [0, 0, 1, 1], [], []>} : vector<16x3xbf16>, vector<3x90xbf16>, vector<16x90xf32> -> vector<16x90xf32>
    %185 = vector.extract_strided_slice %2 {offsets = [7, 0, 0], sizes = [1, 16, 1], strides = [1, 1, 1]} : vector<9x16x1xf32> to vector<1x16x1xf32>
    %186 = vector.shape_cast %185 : vector<1x16x1xf32> to vector<16x1xf32>
    %187 = vector.broadcast %186 : vector<16x1xf32> to vector<16x90xf32>
    %188 = arith.mulf %187, %184 : vector<16x90xf32>
    %189 = arith.addf %179, %188 : vector<16x90xf32>
    %c10_66 = arith.constant 10 : index
    %c0_67 = arith.constant 0 : index
    %190 = vector.load %arg9[%c10_66, %c0_67] : memref<26x45xf32, #tpu.memory_space<vmem>>, vector<16x3xf32>
    %191 = arith.truncf %190 : vector<16x3xf32> to vector<16x3xbf16>
    %192 = vector.extract_strided_slice %108 {offsets = [8, 0, 0], sizes = [1, 3, 90], strides = [1, 1, 1]} : vector<9x3x90xbf16> to vector<1x3x90xbf16>
    %193 = vector.shape_cast %192 : vector<1x3x90xbf16> to vector<3x90xbf16>
    %cst_68 = arith.constant dense<0.000000e+00> : vector<16x90xf32>
    %194 = tpu.matmul %191, %193, %cst_68 {dimension_numbers = #tpu.dot_dimension_numbers<[1], [0], [0], [1], [0, 0, 1, 1], [], []>} : vector<16x3xbf16>, vector<3x90xbf16>, vector<16x90xf32> -> vector<16x90xf32>
    %195 = vector.extract_strided_slice %2 {offsets = [8, 0, 0], sizes = [1, 16, 1], strides = [1, 1, 1]} : vector<9x16x1xf32> to vector<1x16x1xf32>
    %196 = vector.shape_cast %195 : vector<1x16x1xf32> to vector<16x1xf32>
    %197 = vector.broadcast %196 : vector<16x1xf32> to vector<16x90xf32>
    %198 = arith.mulf %197, %194 : vector<16x90xf32>
    %199 = arith.addf %189, %198 : vector<16x90xf32>
    %c0_69 = arith.constant 0 : index
    %c0_70 = arith.constant 0 : index
    %200 = vector.load %arg6[%c0_69, %c0_70] : memref<1x90xf32, #tpu.memory_space<vmem>>, vector<1x90xf32>
    %201 = vector.broadcast %200 : vector<1x90xf32> to vector<16x90xf32>
    %202 = arith.addf %199, %201 : vector<16x90xf32>
    %203 = vector.extract_strided_slice %202 {offsets = [0, 0], sizes = [16, 45], strides = [1, 1]} : vector<16x90xf32> to vector<16x45xf32>
    %204 = arith.negf %203 : vector<16x45xf32>
    %205 = math.exp %204 : vector<16x45xf32>
    %cst_71 = arith.constant 1.000000e+00 : f32
    %206 = vector.broadcast %cst_71 : f32 to vector<16x45xf32>
    %207 = arith.addf %206, %205 : vector<16x45xf32>
    %208 = arith.divf %206, %207 : vector<16x45xf32>
    %cst_72 = arith.constant 2.000000e+00 : f32
    %209 = vector.broadcast %cst_72 : f32 to vector<16x45xf32>
    %210 = arith.mulf %208, %209 : vector<16x45xf32>
    %cst_73 = arith.constant 1.000000e+00 : f32
    %211 = vector.broadcast %cst_73 : f32 to vector<16x45xf32>
    %212 = arith.subf %210, %211 : vector<16x45xf32>
    %cst_74 = arith.constant 1.000000e+00 : f32
    %213 = vector.broadcast %cst_74 : f32 to vector<16x45xf32>
    %214 = arith.mulf %213, %212 : vector<16x45xf32>
    %215 = math.exp %214 : vector<16x45xf32>
    %216 = arith.mulf %6, %215 : vector<16x45xf32>
    %217 = vector.extract_strided_slice %202 {offsets = [0, 45], sizes = [16, 45], strides = [1, 1]} : vector<16x90xf32> to vector<16x45xf32>
    %218 = arith.addf %216, %217 : vector<16x45xf32>
    %c0_75 = arith.constant 0 : index
    %c0_76 = arith.constant 0 : index
    %c0_77 = arith.constant 0 : index
    %219 = vector.load %arg7[%c0_75, %c0_76, %c0_77] : memref<1x16x48xf32, #tpu.memory_space<vmem>>, vector<1x16x3xf32>
    %220 = vector.shape_cast %219 : vector<1x16x3xf32> to vector<16x3xf32>
    %221 = vector.shape_cast %106 : vector<16x3xf32> to vector<1x16x3xf32>
    tpu.vector_store %arg7[%c0_75, %c0_76, %c0_77], %221 {strides = array<i32>} : memref<1x16x48xf32, #tpu.memory_space<vmem>>, vector<1x16x3xf32>,
    %c0_78 = arith.constant 0 : index
    %c0_79 = arith.constant 0 : index
    %c3_80 = arith.constant 3 : index
    %222 = vector.load %arg7[%c0_78, %c0_79, %c3_80] : memref<1x16x48xf32, #tpu.memory_space<vmem>>, vector<1x16x45xf32>
    %223 = vector.shape_cast %222 : vector<1x16x45xf32> to vector<16x45xf32>
    %224 = vector.shape_cast %218 : vector<16x45xf32> to vector<1x16x45xf32>
    tpu.vector_store %arg7[%c0_78, %c0_79, %c3_80], %224 {strides = array<i32>} : memref<1x16x48xf32, #tpu.memory_space<vmem>>, vector<1x16x45xf32>,
    %c0_81 = arith.constant 0 : index
    %c0_82 = arith.constant 0 : index
    %c0_83 = arith.constant 0 : index
    %225 = vector.load %arg8[%c0_81, %c0_82, %c0_83] : memref<1x16x3xf32, #tpu.memory_space<vmem>>, vector<1x16x3xf32>
    %226 = vector.shape_cast %225 : vector<1x16x3xf32> to vector<16x3xf32>
    %227 = vector.shape_cast %104 : vector<16x3xf32> to vector<1x16x3xf32>
    tpu.vector_store %arg8[%c0_81, %c0_82, %c0_83], %227 {strides = array<i32>} : memref<1x16x3xf32, #tpu.memory_space<vmem>>, vector<1x16x3xf32>,
    return
  }
  func.func @transform_0(%arg0: i32) -> (i32, i32, i32) {
    %c0_i32 = arith.constant 0 : i32
    %c0_i32_0 = arith.constant 0 : i32
    %c0_i32_1 = arith.constant 0 : i32
    return %arg0, %c0_i32, %c0_i32_0 : i32, i32, i32
  }
  func.func @transform_1(%arg0: i32) -> (i32, i32, i32) {
    %c0_i32 = arith.constant 0 : i32
    %c0_i32_0 = arith.constant 0 : i32
    %c0_i32_1 = arith.constant 0 : i32
    %c0_i32_2 = arith.constant 0 : i32
    return %c0_i32, %c0_i32_0, %c0_i32_1 : i32, i32, i32
  }
  func.func @transform_2(%arg0: i32) -> (i32, i32, i32) {
    %c0_i32 = arith.constant 0 : i32
    %c0_i32_0 = arith.constant 0 : i32
    %c0_i32_1 = arith.constant 0 : i32
    %c0_i32_2 = arith.constant 0 : i32
    return %c0_i32, %c0_i32_0, %c0_i32_1 : i32, i32, i32
  }
  func.func @transform_3(%arg0: i32) -> (i32, i32) {
    %c0_i32 = arith.constant 0 : i32
    %c0_i32_0 = arith.constant 0 : i32
    %c0_i32_1 = arith.constant 0 : i32
    return %c0_i32, %c0_i32_0 : i32, i32
  }
  func.func @transform_4(%arg0: i32) -> (i32, i32, i32) {
    %c0_i32 = arith.constant 0 : i32
    %c0_i32_0 = arith.constant 0 : i32
    %c0_i32_1 = arith.constant 0 : i32
    %c0_i32_2 = arith.constant 0 : i32
    return %c0_i32, %c0_i32_0, %c0_i32_1 : i32, i32, i32
  }
  func.func @transform_5(%arg0: i32) -> (i32, i32) {
    %c0_i32 = arith.constant 0 : i32
    %c0_i32_0 = arith.constant 0 : i32
    %c0_i32_1 = arith.constant 0 : i32
    return %c0_i32, %c0_i32_0 : i32, i32
  }
  func.func @transform_6(%arg0: i32) -> (i32, i32, i32) {
    %c0_i32 = arith.constant 0 : i32
    %c0_i32_0 = arith.constant 0 : i32
    %c0_i32_1 = arith.constant 0 : i32
    return %arg0, %c0_i32, %c0_i32_0 : i32, i32, i32
  }
  func.func @transform_7(%arg0: i32) -> (i32, i32, i32) {
    %c0_i32 = arith.constant 0 : i32
    %c0_i32_0 = arith.constant 0 : i32
    %c0_i32_1 = arith.constant 0 : i32
    return %arg0, %c0_i32, %c0_i32_0 : i32, i32, i32
  }
}

module attributes {stable_mosaic.version = 11 : i64} {
  func.func @_vanilla_block_kernel(%arg0: i32, %arg1: memref<1x16x48xf32, #tpu.memory_space<vmem>>, %arg2: memref<9x16x1xf32, #tpu.memory_space<vmem>>, %arg3: memref<9x45x3xbf16, #tpu.memory_space<vmem>>, %arg4: memref<1x3xf32, #tpu.memory_space<vmem>>, %arg5: memref<9x3x90xbf16, #tpu.memory_space<vmem>>, %arg6: memref<1x90xf32, #tpu.memory_space<vmem>>, %arg7: memref<1x16x48xf32, #tpu.memory_space<vmem>>, %arg8: memref<26x45xf32, #tpu.memory_space<vmem>>) attributes {dimension_semantics = [#tpu.dimension_semantics<parallel>], iteration_bounds = array<i64: 2>, scalar_prefetch = 0 : i64, scratch_operands = 1 : i64, tpu.core_type = #tpu.core_type<tc>, window_params = [{transform_indices = @transform_0, window_bounds = array<i64: 1, 16, 48>}, {pipeline_mode = #tpu.pipeline_mode<synchronous>, transform_indices = @transform_1, window_bounds = array<i64: 9, 16, 1>}, {pipeline_mode = #tpu.pipeline_mode<synchronous>, transform_indices = @transform_2, window_bounds = array<i64: 9, 45, 3>}, {pipeline_mode = #tpu.pipeline_mode<synchronous>, transform_indices = @transform_3, window_bounds = array<i64: 1, 3>}, {pipeline_mode = #tpu.pipeline_mode<synchronous>, transform_indices = @transform_4, window_bounds = array<i64: 9, 3, 90>}, {pipeline_mode = #tpu.pipeline_mode<synchronous>, transform_indices = @transform_5, window_bounds = array<i64: 1, 90>}, {transform_indices = @transform_6, window_bounds = array<i64: 1, 16, 48>}]} {
    %cst = arith.constant 0.000000e+00 : f32
    %0 = vector.broadcast %cst : f32 to vector<26x45xf32>
    %c0 = arith.constant 0 : index
    %c0_0 = arith.constant 0 : index
    %1 = vector.load %arg8[%c0, %c0_0] : memref<26x45xf32, #tpu.memory_space<vmem>>, vector<26x45xf32>
    tpu.vector_store %arg8[%c0, %c0_0], %0 {strides = array<i32>} : memref<26x45xf32, #tpu.memory_space<vmem>>, vector<26x45xf32>,
    %c0_1 = arith.constant 0 : index
    %c0_2 = arith.constant 0 : index
    %c0_3 = arith.constant 0 : index
    %2 = vector.load %arg2[%c0_1, %c0_2, %c0_3] : memref<9x16x1xf32, #tpu.memory_space<vmem>>, vector<9x16x1xf32>
    %c0_4 = arith.constant 0 : index
    %c0_5 = arith.constant 0 : index
    %c0_6 = arith.constant 0 : index
    %3 = vector.load %arg1[%c0_4, %c0_5, %c0_6] : memref<1x16x48xf32, #tpu.memory_space<vmem>>, vector<1x16x3xf32>
    %4 = vector.shape_cast %3 : vector<1x16x3xf32> to vector<16x3xf32>
    %c0_7 = arith.constant 0 : index
    %c0_8 = arith.constant 0 : index
    %c3 = arith.constant 3 : index
    %5 = vector.load %arg1[%c0_7, %c0_8, %c3] : memref<1x16x48xf32, #tpu.memory_space<vmem>>, vector<1x16x45xf32>
    %6 = vector.shape_cast %5 : vector<1x16x45xf32> to vector<16x45xf32>
    %c5 = arith.constant 5 : index
    %c0_9 = arith.constant 0 : index
    %7 = vector.load %arg8[%c5, %c0_9] : memref<26x45xf32, #tpu.memory_space<vmem>>, vector<16x45xf32>
    tpu.vector_store %arg8[%c5, %c0_9], %6 {strides = array<i32>} : memref<26x45xf32, #tpu.memory_space<vmem>>, vector<16x45xf32>,
    %c0_10 = arith.constant 0 : index
    %c0_11 = arith.constant 0 : index
    %c0_12 = arith.constant 0 : index
    %8 = vector.load %arg3[%c0_10, %c0_11, %c0_12] : memref<9x45x3xbf16, #tpu.memory_space<vmem>>, vector<9x45x3xbf16>
    %cst_13 = arith.constant 0.000000e+00 : f32
    %9 = vector.broadcast %cst_13 : f32 to vector<16x3xf32>
    %c0_14 = arith.constant 0 : index
    %c0_15 = arith.constant 0 : index
    %10 = vector.load %arg8[%c0_14, %c0_15] : memref<26x45xf32, #tpu.memory_space<vmem>>, vector<16x45xf32>
    %11 = arith.truncf %10 : vector<16x45xf32> to vector<16x45xbf16>
    %12 = vector.extract_strided_slice %8 {offsets = [0, 0, 0], sizes = [1, 45, 3], strides = [1, 1, 1]} : vector<9x45x3xbf16> to vector<1x45x3xbf16>
    %13 = vector.shape_cast %12 : vector<1x45x3xbf16> to vector<45x3xbf16>
    %cst_16 = arith.constant dense<0.000000e+00> : vector<16x3xf32>
    %14 = tpu.matmul %11, %13, %cst_16 {dimension_numbers = #tpu.dot_dimension_numbers<[1], [0], [0], [1], [0, 0, 1, 1], [], []>} : vector<16x45xbf16>, vector<45x3xbf16>, vector<16x3xf32> -> vector<16x3xf32>
    %15 = vector.extract_strided_slice %2 {offsets = [0, 0, 0], sizes = [1, 16, 1], strides = [1, 1, 1]} : vector<9x16x1xf32> to vector<1x16x1xf32>
    %16 = vector.shape_cast %15 : vector<1x16x1xf32> to vector<16x1xf32>
    %17 = vector.broadcast %16 : vector<16x1xf32> to vector<16x3xf32>
    %18 = arith.mulf %17, %14 : vector<16x3xf32>
    %19 = arith.addf %9, %18 : vector<16x3xf32>
    %c1 = arith.constant 1 : index
    %c0_17 = arith.constant 0 : index
    %20 = vector.load %arg8[%c1, %c0_17] : memref<26x45xf32, #tpu.memory_space<vmem>>, vector<16x45xf32>
    %21 = arith.truncf %20 : vector<16x45xf32> to vector<16x45xbf16>
    %22 = vector.extract_strided_slice %8 {offsets = [1, 0, 0], sizes = [1, 45, 3], strides = [1, 1, 1]} : vector<9x45x3xbf16> to vector<1x45x3xbf16>
    %23 = vector.shape_cast %22 : vector<1x45x3xbf16> to vector<45x3xbf16>
    %cst_18 = arith.constant dense<0.000000e+00> : vector<16x3xf32>
    %24 = tpu.matmul %21, %23, %cst_18 {dimension_numbers = #tpu.dot_dimension_numbers<[1], [0], [0], [1], [0, 0, 1, 1], [], []>} : vector<16x45xbf16>, vector<45x3xbf16>, vector<16x3xf32> -> vector<16x3xf32>
    %25 = vector.extract_strided_slice %2 {offsets = [1, 0, 0], sizes = [1, 16, 1], strides = [1, 1, 1]} : vector<9x16x1xf32> to vector<1x16x1xf32>
    %26 = vector.shape_cast %25 : vector<1x16x1xf32> to vector<16x1xf32>
    %27 = vector.broadcast %26 : vector<16x1xf32> to vector<16x3xf32>
    %28 = arith.mulf %27, %24 : vector<16x3xf32>
    %29 = arith.addf %19, %28 : vector<16x3xf32>
    %c2 = arith.constant 2 : index
    %c0_19 = arith.constant 0 : index
    %30 = vector.load %arg8[%c2, %c0_19] : memref<26x45xf32, #tpu.memory_space<vmem>>, vector<16x45xf32>
    %31 = arith.truncf %30 : vector<16x45xf32> to vector<16x45xbf16>
    %32 = vector.extract_strided_slice %8 {offsets = [2, 0, 0], sizes = [1, 45, 3], strides = [1, 1, 1]} : vector<9x45x3xbf16> to vector<1x45x3xbf16>
    %33 = vector.shape_cast %32 : vector<1x45x3xbf16> to vector<45x3xbf16>
    %cst_20 = arith.constant dense<0.000000e+00> : vector<16x3xf32>
    %34 = tpu.matmul %31, %33, %cst_20 {dimension_numbers = #tpu.dot_dimension_numbers<[1], [0], [0], [1], [0, 0, 1, 1], [], []>} : vector<16x45xbf16>, vector<45x3xbf16>, vector<16x3xf32> -> vector<16x3xf32>
    %35 = vector.extract_strided_slice %2 {offsets = [2, 0, 0], sizes = [1, 16, 1], strides = [1, 1, 1]} : vector<9x16x1xf32> to vector<1x16x1xf32>
    %36 = vector.shape_cast %35 : vector<1x16x1xf32> to vector<16x1xf32>
    %37 = vector.broadcast %36 : vector<16x1xf32> to vector<16x3xf32>
    %38 = arith.mulf %37, %34 : vector<16x3xf32>
    %39 = arith.addf %29, %38 : vector<16x3xf32>
    %c4 = arith.constant 4 : index
    %c0_21 = arith.constant 0 : index
    %40 = vector.load %arg8[%c4, %c0_21] : memref<26x45xf32, #tpu.memory_space<vmem>>, vector<16x45xf32>
    %41 = arith.truncf %40 : vector<16x45xf32> to vector<16x45xbf16>
    %42 = vector.extract_strided_slice %8 {offsets = [3, 0, 0], sizes = [1, 45, 3], strides = [1, 1, 1]} : vector<9x45x3xbf16> to vector<1x45x3xbf16>
    %43 = vector.shape_cast %42 : vector<1x45x3xbf16> to vector<45x3xbf16>
    %cst_22 = arith.constant dense<0.000000e+00> : vector<16x3xf32>
    %44 = tpu.matmul %41, %43, %cst_22 {dimension_numbers = #tpu.dot_dimension_numbers<[1], [0], [0], [1], [0, 0, 1, 1], [], []>} : vector<16x45xbf16>, vector<45x3xbf16>, vector<16x3xf32> -> vector<16x3xf32>
    %45 = vector.extract_strided_slice %2 {offsets = [3, 0, 0], sizes = [1, 16, 1], strides = [1, 1, 1]} : vector<9x16x1xf32> to vector<1x16x1xf32>
    %46 = vector.shape_cast %45 : vector<1x16x1xf32> to vector<16x1xf32>
    %47 = vector.broadcast %46 : vector<16x1xf32> to vector<16x3xf32>
    %48 = arith.mulf %47, %44 : vector<16x3xf32>
    %49 = arith.addf %39, %48 : vector<16x3xf32>
    %c5_23 = arith.constant 5 : index
    %c0_24 = arith.constant 0 : index
    %50 = vector.load %arg8[%c5_23, %c0_24] : memref<26x45xf32, #tpu.memory_space<vmem>>, vector<16x45xf32>
    %51 = arith.truncf %50 : vector<16x45xf32> to vector<16x45xbf16>
    %52 = vector.extract_strided_slice %8 {offsets = [4, 0, 0], sizes = [1, 45, 3], strides = [1, 1, 1]} : vector<9x45x3xbf16> to vector<1x45x3xbf16>
    %53 = vector.shape_cast %52 : vector<1x45x3xbf16> to vector<45x3xbf16>
    %cst_25 = arith.constant dense<0.000000e+00> : vector<16x3xf32>
    %54 = tpu.matmul %51, %53, %cst_25 {dimension_numbers = #tpu.dot_dimension_numbers<[1], [0], [0], [1], [0, 0, 1, 1], [], []>} : vector<16x45xbf16>, vector<45x3xbf16>, vector<16x3xf32> -> vector<16x3xf32>
    %55 = vector.extract_strided_slice %2 {offsets = [4, 0, 0], sizes = [1, 16, 1], strides = [1, 1, 1]} : vector<9x16x1xf32> to vector<1x16x1xf32>
    %56 = vector.shape_cast %55 : vector<1x16x1xf32> to vector<16x1xf32>
    %57 = vector.broadcast %56 : vector<16x1xf32> to vector<16x3xf32>
    %58 = arith.mulf %57, %54 : vector<16x3xf32>
    %59 = arith.addf %49, %58 : vector<16x3xf32>
    %c6 = arith.constant 6 : index
    %c0_26 = arith.constant 0 : index
    %60 = vector.load %arg8[%c6, %c0_26] : memref<26x45xf32, #tpu.memory_space<vmem>>, vector<16x45xf32>
    %61 = arith.truncf %60 : vector<16x45xf32> to vector<16x45xbf16>
    %62 = vector.extract_strided_slice %8 {offsets = [5, 0, 0], sizes = [1, 45, 3], strides = [1, 1, 1]} : vector<9x45x3xbf16> to vector<1x45x3xbf16>
    %63 = vector.shape_cast %62 : vector<1x45x3xbf16> to vector<45x3xbf16>
    %cst_27 = arith.constant dense<0.000000e+00> : vector<16x3xf32>
    %64 = tpu.matmul %61, %63, %cst_27 {dimension_numbers = #tpu.dot_dimension_numbers<[1], [0], [0], [1], [0, 0, 1, 1], [], []>} : vector<16x45xbf16>, vector<45x3xbf16>, vector<16x3xf32> -> vector<16x3xf32>
    %65 = vector.extract_strided_slice %2 {offsets = [5, 0, 0], sizes = [1, 16, 1], strides = [1, 1, 1]} : vector<9x16x1xf32> to vector<1x16x1xf32>
    %66 = vector.shape_cast %65 : vector<1x16x1xf32> to vector<16x1xf32>
    %67 = vector.broadcast %66 : vector<16x1xf32> to vector<16x3xf32>
    %68 = arith.mulf %67, %64 : vector<16x3xf32>
    %69 = arith.addf %59, %68 : vector<16x3xf32>
    %c8 = arith.constant 8 : index
    %c0_28 = arith.constant 0 : index
    %70 = vector.load %arg8[%c8, %c0_28] : memref<26x45xf32, #tpu.memory_space<vmem>>, vector<16x45xf32>
    %71 = arith.truncf %70 : vector<16x45xf32> to vector<16x45xbf16>
    %72 = vector.extract_strided_slice %8 {offsets = [6, 0, 0], sizes = [1, 45, 3], strides = [1, 1, 1]} : vector<9x45x3xbf16> to vector<1x45x3xbf16>
    %73 = vector.shape_cast %72 : vector<1x45x3xbf16> to vector<45x3xbf16>
    %cst_29 = arith.constant dense<0.000000e+00> : vector<16x3xf32>
    %74 = tpu.matmul %71, %73, %cst_29 {dimension_numbers = #tpu.dot_dimension_numbers<[1], [0], [0], [1], [0, 0, 1, 1], [], []>} : vector<16x45xbf16>, vector<45x3xbf16>, vector<16x3xf32> -> vector<16x3xf32>
    %75 = vector.extract_strided_slice %2 {offsets = [6, 0, 0], sizes = [1, 16, 1], strides = [1, 1, 1]} : vector<9x16x1xf32> to vector<1x16x1xf32>
    %76 = vector.shape_cast %75 : vector<1x16x1xf32> to vector<16x1xf32>
    %77 = vector.broadcast %76 : vector<16x1xf32> to vector<16x3xf32>
    %78 = arith.mulf %77, %74 : vector<16x3xf32>
    %79 = arith.addf %69, %78 : vector<16x3xf32>
    %c9 = arith.constant 9 : index
    %c0_30 = arith.constant 0 : index
    %80 = vector.load %arg8[%c9, %c0_30] : memref<26x45xf32, #tpu.memory_space<vmem>>, vector<16x45xf32>
    %81 = arith.truncf %80 : vector<16x45xf32> to vector<16x45xbf16>
    %82 = vector.extract_strided_slice %8 {offsets = [7, 0, 0], sizes = [1, 45, 3], strides = [1, 1, 1]} : vector<9x45x3xbf16> to vector<1x45x3xbf16>
    %83 = vector.shape_cast %82 : vector<1x45x3xbf16> to vector<45x3xbf16>
    %cst_31 = arith.constant dense<0.000000e+00> : vector<16x3xf32>
    %84 = tpu.matmul %81, %83, %cst_31 {dimension_numbers = #tpu.dot_dimension_numbers<[1], [0], [0], [1], [0, 0, 1, 1], [], []>} : vector<16x45xbf16>, vector<45x3xbf16>, vector<16x3xf32> -> vector<16x3xf32>
    %85 = vector.extract_strided_slice %2 {offsets = [7, 0, 0], sizes = [1, 16, 1], strides = [1, 1, 1]} : vector<9x16x1xf32> to vector<1x16x1xf32>
    %86 = vector.shape_cast %85 : vector<1x16x1xf32> to vector<16x1xf32>
    %87 = vector.broadcast %86 : vector<16x1xf32> to vector<16x3xf32>
    %88 = arith.mulf %87, %84 : vector<16x3xf32>
    %89 = arith.addf %79, %88 : vector<16x3xf32>
    %c10 = arith.constant 10 : index
    %c0_32 = arith.constant 0 : index
    %90 = vector.load %arg8[%c10, %c0_32] : memref<26x45xf32, #tpu.memory_space<vmem>>, vector<16x45xf32>
    %91 = arith.truncf %90 : vector<16x45xf32> to vector<16x45xbf16>
    %92 = vector.extract_strided_slice %8 {offsets = [8, 0, 0], sizes = [1, 45, 3], strides = [1, 1, 1]} : vector<9x45x3xbf16> to vector<1x45x3xbf16>
    %93 = vector.shape_cast %92 : vector<1x45x3xbf16> to vector<45x3xbf16>
    %cst_33 = arith.constant dense<0.000000e+00> : vector<16x3xf32>
    %94 = tpu.matmul %91, %93, %cst_33 {dimension_numbers = #tpu.dot_dimension_numbers<[1], [0], [0], [1], [0, 0, 1, 1], [], []>} : vector<16x45xbf16>, vector<45x3xbf16>, vector<16x3xf32> -> vector<16x3xf32>
    %95 = vector.extract_strided_slice %2 {offsets = [8, 0, 0], sizes = [1, 16, 1], strides = [1, 1, 1]} : vector<9x16x1xf32> to vector<1x16x1xf32>
    %96 = vector.shape_cast %95 : vector<1x16x1xf32> to vector<16x1xf32>
    %97 = vector.broadcast %96 : vector<16x1xf32> to vector<16x3xf32>
    %98 = arith.mulf %97, %94 : vector<16x3xf32>
    %99 = arith.addf %89, %98 : vector<16x3xf32>
    %c0_34 = arith.constant 0 : index
    %c0_35 = arith.constant 0 : index
    %100 = vector.load %arg4[%c0_34, %c0_35] : memref<1x3xf32, #tpu.memory_space<vmem>>, vector<1x3xf32>
    %101 = vector.broadcast %100 : vector<1x3xf32> to vector<16x3xf32>
    %102 = arith.addf %99, %101 : vector<16x3xf32>
    %103 = arith.addf %4, %102 : vector<16x3xf32>
    %c5_36 = arith.constant 5 : index
    %c0_37 = arith.constant 0 : index
    %104 = vector.load %arg8[%c5_36, %c0_37] : memref<26x45xf32, #tpu.memory_space<vmem>>, vector<16x3xf32>
    tpu.vector_store %arg8[%c5_36, %c0_37], %103 {strides = array<i32>} : memref<26x45xf32, #tpu.memory_space<vmem>>, vector<16x3xf32>,
    %c0_38 = arith.constant 0 : index
    %c0_39 = arith.constant 0 : index
    %c0_40 = arith.constant 0 : index
    %105 = vector.load %arg5[%c0_38, %c0_39, %c0_40] : memref<9x3x90xbf16, #tpu.memory_space<vmem>>, vector<9x3x90xbf16>
    %cst_41 = arith.constant 0.000000e+00 : f32
    %106 = vector.broadcast %cst_41 : f32 to vector<16x90xf32>
    %c0_42 = arith.constant 0 : index
    %c0_43 = arith.constant 0 : index
    %107 = vector.load %arg8[%c0_42, %c0_43] : memref<26x45xf32, #tpu.memory_space<vmem>>, vector<16x3xf32>
    %108 = arith.truncf %107 : vector<16x3xf32> to vector<16x3xbf16>
    %109 = vector.extract_strided_slice %105 {offsets = [0, 0, 0], sizes = [1, 3, 90], strides = [1, 1, 1]} : vector<9x3x90xbf16> to vector<1x3x90xbf16>
    %110 = vector.shape_cast %109 : vector<1x3x90xbf16> to vector<3x90xbf16>
    %cst_44 = arith.constant dense<0.000000e+00> : vector<16x90xf32>
    %111 = tpu.matmul %108, %110, %cst_44 {dimension_numbers = #tpu.dot_dimension_numbers<[1], [0], [0], [1], [0, 0, 1, 1], [], []>} : vector<16x3xbf16>, vector<3x90xbf16>, vector<16x90xf32> -> vector<16x90xf32>
    %112 = vector.extract_strided_slice %2 {offsets = [0, 0, 0], sizes = [1, 16, 1], strides = [1, 1, 1]} : vector<9x16x1xf32> to vector<1x16x1xf32>
    %113 = vector.shape_cast %112 : vector<1x16x1xf32> to vector<16x1xf32>
    %114 = vector.broadcast %113 : vector<16x1xf32> to vector<16x90xf32>
    %115 = arith.mulf %114, %111 : vector<16x90xf32>
    %116 = arith.addf %106, %115 : vector<16x90xf32>
    %c1_45 = arith.constant 1 : index
    %c0_46 = arith.constant 0 : index
    %117 = vector.load %arg8[%c1_45, %c0_46] : memref<26x45xf32, #tpu.memory_space<vmem>>, vector<16x3xf32>
    %118 = arith.truncf %117 : vector<16x3xf32> to vector<16x3xbf16>
    %119 = vector.extract_strided_slice %105 {offsets = [1, 0, 0], sizes = [1, 3, 90], strides = [1, 1, 1]} : vector<9x3x90xbf16> to vector<1x3x90xbf16>
    %120 = vector.shape_cast %119 : vector<1x3x90xbf16> to vector<3x90xbf16>
    %cst_47 = arith.constant dense<0.000000e+00> : vector<16x90xf32>
    %121 = tpu.matmul %118, %120, %cst_47 {dimension_numbers = #tpu.dot_dimension_numbers<[1], [0], [0], [1], [0, 0, 1, 1], [], []>} : vector<16x3xbf16>, vector<3x90xbf16>, vector<16x90xf32> -> vector<16x90xf32>
    %122 = vector.extract_strided_slice %2 {offsets = [1, 0, 0], sizes = [1, 16, 1], strides = [1, 1, 1]} : vector<9x16x1xf32> to vector<1x16x1xf32>
    %123 = vector.shape_cast %122 : vector<1x16x1xf32> to vector<16x1xf32>
    %124 = vector.broadcast %123 : vector<16x1xf32> to vector<16x90xf32>
    %125 = arith.mulf %124, %121 : vector<16x90xf32>
    %126 = arith.addf %116, %125 : vector<16x90xf32>
    %c2_48 = arith.constant 2 : index
    %c0_49 = arith.constant 0 : index
    %127 = vector.load %arg8[%c2_48, %c0_49] : memref<26x45xf32, #tpu.memory_space<vmem>>, vector<16x3xf32>
    %128 = arith.truncf %127 : vector<16x3xf32> to vector<16x3xbf16>
    %129 = vector.extract_strided_slice %105 {offsets = [2, 0, 0], sizes = [1, 3, 90], strides = [1, 1, 1]} : vector<9x3x90xbf16> to vector<1x3x90xbf16>
    %130 = vector.shape_cast %129 : vector<1x3x90xbf16> to vector<3x90xbf16>
    %cst_50 = arith.constant dense<0.000000e+00> : vector<16x90xf32>
    %131 = tpu.matmul %128, %130, %cst_50 {dimension_numbers = #tpu.dot_dimension_numbers<[1], [0], [0], [1], [0, 0, 1, 1], [], []>} : vector<16x3xbf16>, vector<3x90xbf16>, vector<16x90xf32> -> vector<16x90xf32>
    %132 = vector.extract_strided_slice %2 {offsets = [2, 0, 0], sizes = [1, 16, 1], strides = [1, 1, 1]} : vector<9x16x1xf32> to vector<1x16x1xf32>
    %133 = vector.shape_cast %132 : vector<1x16x1xf32> to vector<16x1xf32>
    %134 = vector.broadcast %133 : vector<16x1xf32> to vector<16x90xf32>
    %135 = arith.mulf %134, %131 : vector<16x90xf32>
    %136 = arith.addf %126, %135 : vector<16x90xf32>
    %c4_51 = arith.constant 4 : index
    %c0_52 = arith.constant 0 : index
    %137 = vector.load %arg8[%c4_51, %c0_52] : memref<26x45xf32, #tpu.memory_space<vmem>>, vector<16x3xf32>
    %138 = arith.truncf %137 : vector<16x3xf32> to vector<16x3xbf16>
    %139 = vector.extract_strided_slice %105 {offsets = [3, 0, 0], sizes = [1, 3, 90], strides = [1, 1, 1]} : vector<9x3x90xbf16> to vector<1x3x90xbf16>
    %140 = vector.shape_cast %139 : vector<1x3x90xbf16> to vector<3x90xbf16>
    %cst_53 = arith.constant dense<0.000000e+00> : vector<16x90xf32>
    %141 = tpu.matmul %138, %140, %cst_53 {dimension_numbers = #tpu.dot_dimension_numbers<[1], [0], [0], [1], [0, 0, 1, 1], [], []>} : vector<16x3xbf16>, vector<3x90xbf16>, vector<16x90xf32> -> vector<16x90xf32>
    %142 = vector.extract_strided_slice %2 {offsets = [3, 0, 0], sizes = [1, 16, 1], strides = [1, 1, 1]} : vector<9x16x1xf32> to vector<1x16x1xf32>
    %143 = vector.shape_cast %142 : vector<1x16x1xf32> to vector<16x1xf32>
    %144 = vector.broadcast %143 : vector<16x1xf32> to vector<16x90xf32>
    %145 = arith.mulf %144, %141 : vector<16x90xf32>
    %146 = arith.addf %136, %145 : vector<16x90xf32>
    %c5_54 = arith.constant 5 : index
    %c0_55 = arith.constant 0 : index
    %147 = vector.load %arg8[%c5_54, %c0_55] : memref<26x45xf32, #tpu.memory_space<vmem>>, vector<16x3xf32>
    %148 = arith.truncf %147 : vector<16x3xf32> to vector<16x3xbf16>
    %149 = vector.extract_strided_slice %105 {offsets = [4, 0, 0], sizes = [1, 3, 90], strides = [1, 1, 1]} : vector<9x3x90xbf16> to vector<1x3x90xbf16>
    %150 = vector.shape_cast %149 : vector<1x3x90xbf16> to vector<3x90xbf16>
    %cst_56 = arith.constant dense<0.000000e+00> : vector<16x90xf32>
    %151 = tpu.matmul %148, %150, %cst_56 {dimension_numbers = #tpu.dot_dimension_numbers<[1], [0], [0], [1], [0, 0, 1, 1], [], []>} : vector<16x3xbf16>, vector<3x90xbf16>, vector<16x90xf32> -> vector<16x90xf32>
    %152 = vector.extract_strided_slice %2 {offsets = [4, 0, 0], sizes = [1, 16, 1], strides = [1, 1, 1]} : vector<9x16x1xf32> to vector<1x16x1xf32>
    %153 = vector.shape_cast %152 : vector<1x16x1xf32> to vector<16x1xf32>
    %154 = vector.broadcast %153 : vector<16x1xf32> to vector<16x90xf32>
    %155 = arith.mulf %154, %151 : vector<16x90xf32>
    %156 = arith.addf %146, %155 : vector<16x90xf32>
    %c6_57 = arith.constant 6 : index
    %c0_58 = arith.constant 0 : index
    %157 = vector.load %arg8[%c6_57, %c0_58] : memref<26x45xf32, #tpu.memory_space<vmem>>, vector<16x3xf32>
    %158 = arith.truncf %157 : vector<16x3xf32> to vector<16x3xbf16>
    %159 = vector.extract_strided_slice %105 {offsets = [5, 0, 0], sizes = [1, 3, 90], strides = [1, 1, 1]} : vector<9x3x90xbf16> to vector<1x3x90xbf16>
    %160 = vector.shape_cast %159 : vector<1x3x90xbf16> to vector<3x90xbf16>
    %cst_59 = arith.constant dense<0.000000e+00> : vector<16x90xf32>
    %161 = tpu.matmul %158, %160, %cst_59 {dimension_numbers = #tpu.dot_dimension_numbers<[1], [0], [0], [1], [0, 0, 1, 1], [], []>} : vector<16x3xbf16>, vector<3x90xbf16>, vector<16x90xf32> -> vector<16x90xf32>
    %162 = vector.extract_strided_slice %2 {offsets = [5, 0, 0], sizes = [1, 16, 1], strides = [1, 1, 1]} : vector<9x16x1xf32> to vector<1x16x1xf32>
    %163 = vector.shape_cast %162 : vector<1x16x1xf32> to vector<16x1xf32>
    %164 = vector.broadcast %163 : vector<16x1xf32> to vector<16x90xf32>
    %165 = arith.mulf %164, %161 : vector<16x90xf32>
    %166 = arith.addf %156, %165 : vector<16x90xf32>
    %c8_60 = arith.constant 8 : index
    %c0_61 = arith.constant 0 : index
    %167 = vector.load %arg8[%c8_60, %c0_61] : memref<26x45xf32, #tpu.memory_space<vmem>>, vector<16x3xf32>
    %168 = arith.truncf %167 : vector<16x3xf32> to vector<16x3xbf16>
    %169 = vector.extract_strided_slice %105 {offsets = [6, 0, 0], sizes = [1, 3, 90], strides = [1, 1, 1]} : vector<9x3x90xbf16> to vector<1x3x90xbf16>
    %170 = vector.shape_cast %169 : vector<1x3x90xbf16> to vector<3x90xbf16>
    %cst_62 = arith.constant dense<0.000000e+00> : vector<16x90xf32>
    %171 = tpu.matmul %168, %170, %cst_62 {dimension_numbers = #tpu.dot_dimension_numbers<[1], [0], [0], [1], [0, 0, 1, 1], [], []>} : vector<16x3xbf16>, vector<3x90xbf16>, vector<16x90xf32> -> vector<16x90xf32>
    %172 = vector.extract_strided_slice %2 {offsets = [6, 0, 0], sizes = [1, 16, 1], strides = [1, 1, 1]} : vector<9x16x1xf32> to vector<1x16x1xf32>
    %173 = vector.shape_cast %172 : vector<1x16x1xf32> to vector<16x1xf32>
    %174 = vector.broadcast %173 : vector<16x1xf32> to vector<16x90xf32>
    %175 = arith.mulf %174, %171 : vector<16x90xf32>
    %176 = arith.addf %166, %175 : vector<16x90xf32>
    %c9_63 = arith.constant 9 : index
    %c0_64 = arith.constant 0 : index
    %177 = vector.load %arg8[%c9_63, %c0_64] : memref<26x45xf32, #tpu.memory_space<vmem>>, vector<16x3xf32>
    %178 = arith.truncf %177 : vector<16x3xf32> to vector<16x3xbf16>
    %179 = vector.extract_strided_slice %105 {offsets = [7, 0, 0], sizes = [1, 3, 90], strides = [1, 1, 1]} : vector<9x3x90xbf16> to vector<1x3x90xbf16>
    %180 = vector.shape_cast %179 : vector<1x3x90xbf16> to vector<3x90xbf16>
    %cst_65 = arith.constant dense<0.000000e+00> : vector<16x90xf32>
    %181 = tpu.matmul %178, %180, %cst_65 {dimension_numbers = #tpu.dot_dimension_numbers<[1], [0], [0], [1], [0, 0, 1, 1], [], []>} : vector<16x3xbf16>, vector<3x90xbf16>, vector<16x90xf32> -> vector<16x90xf32>
    %182 = vector.extract_strided_slice %2 {offsets = [7, 0, 0], sizes = [1, 16, 1], strides = [1, 1, 1]} : vector<9x16x1xf32> to vector<1x16x1xf32>
    %183 = vector.shape_cast %182 : vector<1x16x1xf32> to vector<16x1xf32>
    %184 = vector.broadcast %183 : vector<16x1xf32> to vector<16x90xf32>
    %185 = arith.mulf %184, %181 : vector<16x90xf32>
    %186 = arith.addf %176, %185 : vector<16x90xf32>
    %c10_66 = arith.constant 10 : index
    %c0_67 = arith.constant 0 : index
    %187 = vector.load %arg8[%c10_66, %c0_67] : memref<26x45xf32, #tpu.memory_space<vmem>>, vector<16x3xf32>
    %188 = arith.truncf %187 : vector<16x3xf32> to vector<16x3xbf16>
    %189 = vector.extract_strided_slice %105 {offsets = [8, 0, 0], sizes = [1, 3, 90], strides = [1, 1, 1]} : vector<9x3x90xbf16> to vector<1x3x90xbf16>
    %190 = vector.shape_cast %189 : vector<1x3x90xbf16> to vector<3x90xbf16>
    %cst_68 = arith.constant dense<0.000000e+00> : vector<16x90xf32>
    %191 = tpu.matmul %188, %190, %cst_68 {dimension_numbers = #tpu.dot_dimension_numbers<[1], [0], [0], [1], [0, 0, 1, 1], [], []>} : vector<16x3xbf16>, vector<3x90xbf16>, vector<16x90xf32> -> vector<16x90xf32>
    %192 = vector.extract_strided_slice %2 {offsets = [8, 0, 0], sizes = [1, 16, 1], strides = [1, 1, 1]} : vector<9x16x1xf32> to vector<1x16x1xf32>
    %193 = vector.shape_cast %192 : vector<1x16x1xf32> to vector<16x1xf32>
    %194 = vector.broadcast %193 : vector<16x1xf32> to vector<16x90xf32>
    %195 = arith.mulf %194, %191 : vector<16x90xf32>
    %196 = arith.addf %186, %195 : vector<16x90xf32>
    %c0_69 = arith.constant 0 : index
    %c0_70 = arith.constant 0 : index
    %197 = vector.load %arg6[%c0_69, %c0_70] : memref<1x90xf32, #tpu.memory_space<vmem>>, vector<1x90xf32>
    %198 = vector.broadcast %197 : vector<1x90xf32> to vector<16x90xf32>
    %199 = arith.addf %196, %198 : vector<16x90xf32>
    %200 = vector.extract_strided_slice %199 {offsets = [0, 0], sizes = [16, 45], strides = [1, 1]} : vector<16x90xf32> to vector<16x45xf32>
    %201 = arith.negf %200 : vector<16x45xf32>
    %202 = math.exp %201 : vector<16x45xf32>
    %cst_71 = arith.constant 1.000000e+00 : f32
    %203 = vector.broadcast %cst_71 : f32 to vector<16x45xf32>
    %204 = arith.addf %203, %202 : vector<16x45xf32>
    %205 = arith.divf %203, %204 : vector<16x45xf32>
    %cst_72 = arith.constant 2.000000e+00 : f32
    %206 = vector.broadcast %cst_72 : f32 to vector<16x45xf32>
    %207 = arith.mulf %205, %206 : vector<16x45xf32>
    %cst_73 = arith.constant 1.000000e+00 : f32
    %208 = vector.broadcast %cst_73 : f32 to vector<16x45xf32>
    %209 = arith.subf %207, %208 : vector<16x45xf32>
    %cst_74 = arith.constant 1.000000e+00 : f32
    %210 = vector.broadcast %cst_74 : f32 to vector<16x45xf32>
    %211 = arith.mulf %210, %209 : vector<16x45xf32>
    %212 = math.exp %211 : vector<16x45xf32>
    %213 = arith.mulf %6, %212 : vector<16x45xf32>
    %214 = vector.extract_strided_slice %199 {offsets = [0, 45], sizes = [16, 45], strides = [1, 1]} : vector<16x90xf32> to vector<16x45xf32>
    %215 = arith.addf %213, %214 : vector<16x45xf32>
    %c0_75 = arith.constant 0 : index
    %c0_76 = arith.constant 0 : index
    %c0_77 = arith.constant 0 : index
    %216 = vector.load %arg7[%c0_75, %c0_76, %c0_77] : memref<1x16x48xf32, #tpu.memory_space<vmem>>, vector<1x16x3xf32>
    %217 = vector.shape_cast %216 : vector<1x16x3xf32> to vector<16x3xf32>
    %218 = vector.shape_cast %103 : vector<16x3xf32> to vector<1x16x3xf32>
    tpu.vector_store %arg7[%c0_75, %c0_76, %c0_77], %218 {strides = array<i32>} : memref<1x16x48xf32, #tpu.memory_space<vmem>>, vector<1x16x3xf32>,
    %c0_78 = arith.constant 0 : index
    %c0_79 = arith.constant 0 : index
    %c3_80 = arith.constant 3 : index
    %219 = vector.load %arg7[%c0_78, %c0_79, %c3_80] : memref<1x16x48xf32, #tpu.memory_space<vmem>>, vector<1x16x45xf32>
    %220 = vector.shape_cast %219 : vector<1x16x45xf32> to vector<16x45xf32>
    %221 = vector.shape_cast %215 : vector<16x45xf32> to vector<1x16x45xf32>
    tpu.vector_store %arg7[%c0_78, %c0_79, %c3_80], %221 {strides = array<i32>} : memref<1x16x48xf32, #tpu.memory_space<vmem>>, vector<1x16x45xf32>,
    return
  }
  func.func @transform_0(%arg0: i32) -> (i32, i32, i32) {
    %c0_i32 = arith.constant 0 : i32
    %c0_i32_0 = arith.constant 0 : i32
    %c0_i32_1 = arith.constant 0 : i32
    return %arg0, %c0_i32, %c0_i32_0 : i32, i32, i32
  }
  func.func @transform_1(%arg0: i32) -> (i32, i32, i32) {
    %c0_i32 = arith.constant 0 : i32
    %c0_i32_0 = arith.constant 0 : i32
    %c0_i32_1 = arith.constant 0 : i32
    %c0_i32_2 = arith.constant 0 : i32
    return %c0_i32, %c0_i32_0, %c0_i32_1 : i32, i32, i32
  }
  func.func @transform_2(%arg0: i32) -> (i32, i32, i32) {
    %c0_i32 = arith.constant 0 : i32
    %c0_i32_0 = arith.constant 0 : i32
    %c0_i32_1 = arith.constant 0 : i32
    %c0_i32_2 = arith.constant 0 : i32
    return %c0_i32, %c0_i32_0, %c0_i32_1 : i32, i32, i32
  }
  func.func @transform_3(%arg0: i32) -> (i32, i32) {
    %c0_i32 = arith.constant 0 : i32
    %c0_i32_0 = arith.constant 0 : i32
    %c0_i32_1 = arith.constant 0 : i32
    return %c0_i32, %c0_i32_0 : i32, i32
  }
  func.func @transform_4(%arg0: i32) -> (i32, i32, i32) {
    %c0_i32 = arith.constant 0 : i32
    %c0_i32_0 = arith.constant 0 : i32
    %c0_i32_1 = arith.constant 0 : i32
    %c0_i32_2 = arith.constant 0 : i32
    return %c0_i32, %c0_i32_0, %c0_i32_1 : i32, i32, i32
  }
  func.func @transform_5(%arg0: i32) -> (i32, i32) {
    %c0_i32 = arith.constant 0 : i32
    %c0_i32_0 = arith.constant 0 : i32
    %c0_i32_1 = arith.constant 0 : i32
    return %c0_i32, %c0_i32_0 : i32, i32
  }
  func.func @transform_6(%arg0: i32) -> (i32, i32, i32) {
    %c0_i32 = arith.constant 0 : i32
    %c0_i32_0 = arith.constant 0 : i32
    %c0_i32_1 = arith.constant 0 : i32
    return %arg0, %c0_i32, %c0_i32_0 : i32, i32, i32
  }
}

module attributes {stable_mosaic.version = 11 : i64} {
  func.func @_vanilla_block_kernel(%arg0: i32, %arg1: memref<1x16x48xf32, #tpu.memory_space<vmem>>, %arg2: memref<9x16x1xf32, #tpu.memory_space<vmem>>, %arg3: memref<9x45x3xbf16, #tpu.memory_space<vmem>>, %arg4: memref<1x3xf32, #tpu.memory_space<vmem>>, %arg5: memref<9x3x90xbf16, #tpu.memory_space<vmem>>, %arg6: memref<1x90xf32, #tpu.memory_space<vmem>>, %arg7: memref<1x16x48xf32, #tpu.memory_space<vmem>>, %arg8: memref<26x45xf32, #tpu.memory_space<vmem>>) attributes {dimension_semantics = [#tpu.dimension_semantics<parallel>], iteration_bounds = array<i64: 2>, scalar_prefetch = 0 : i64, scratch_operands = 1 : i64, tpu.core_type = #tpu.core_type<tc>, window_params = [{transform_indices = @transform_0, window_bounds = array<i64: 1, 16, 48>}, {pipeline_mode = #tpu.pipeline_mode<synchronous>, transform_indices = @transform_1, window_bounds = array<i64: 9, 16, 1>}, {pipeline_mode = #tpu.pipeline_mode<synchronous>, transform_indices = @transform_2, window_bounds = array<i64: 9, 45, 3>}, {pipeline_mode = #tpu.pipeline_mode<synchronous>, transform_indices = @transform_3, window_bounds = array<i64: 1, 3>}, {pipeline_mode = #tpu.pipeline_mode<synchronous>, transform_indices = @transform_4, window_bounds = array<i64: 9, 3, 90>}, {pipeline_mode = #tpu.pipeline_mode<synchronous>, transform_indices = @transform_5, window_bounds = array<i64: 1, 90>}, {transform_indices = @transform_6, window_bounds = array<i64: 1, 16, 48>}]} {
    %cst = arith.constant 0.000000e+00 : f32
    %0 = vector.broadcast %cst : f32 to vector<26x45xf32>
    %c0 = arith.constant 0 : index
    %c0_0 = arith.constant 0 : index
    %1 = vector.load %arg8[%c0, %c0_0] : memref<26x45xf32, #tpu.memory_space<vmem>>, vector<26x45xf32>
    tpu.vector_store %arg8[%c0, %c0_0], %0 {strides = array<i32>} : memref<26x45xf32, #tpu.memory_space<vmem>>, vector<26x45xf32>,
    %c0_1 = arith.constant 0 : index
    %c0_2 = arith.constant 0 : index
    %c0_3 = arith.constant 0 : index
    %2 = vector.load %arg2[%c0_1, %c0_2, %c0_3] : memref<9x16x1xf32, #tpu.memory_space<vmem>>, vector<9x16x1xf32>
    %c0_4 = arith.constant 0 : index
    %c0_5 = arith.constant 0 : index
    %c0_6 = arith.constant 0 : index
    %3 = vector.load %arg1[%c0_4, %c0_5, %c0_6] : memref<1x16x48xf32, #tpu.memory_space<vmem>>, vector<1x16x3xf32>
    %4 = vector.shape_cast %3 : vector<1x16x3xf32> to vector<16x3xf32>
    %c0_7 = arith.constant 0 : index
    %c0_8 = arith.constant 0 : index
    %c3 = arith.constant 3 : index
    %5 = vector.load %arg1[%c0_7, %c0_8, %c3] : memref<1x16x48xf32, #tpu.memory_space<vmem>>, vector<1x16x45xf32>
    %6 = vector.shape_cast %5 : vector<1x16x45xf32> to vector<16x45xf32>
    %c5 = arith.constant 5 : index
    %c0_9 = arith.constant 0 : index
    %7 = vector.load %arg8[%c5, %c0_9] : memref<26x45xf32, #tpu.memory_space<vmem>>, vector<16x45xf32>
    tpu.vector_store %arg8[%c5, %c0_9], %6 {strides = array<i32>} : memref<26x45xf32, #tpu.memory_space<vmem>>, vector<16x45xf32>,
    %c0_10 = arith.constant 0 : index
    %c0_11 = arith.constant 0 : index
    %c0_12 = arith.constant 0 : index
    %8 = vector.load %arg3[%c0_10, %c0_11, %c0_12] : memref<9x45x3xbf16, #tpu.memory_space<vmem>>, vector<9x45x3xbf16>
    %cst_13 = arith.constant 0.000000e+00 : f32
    %9 = vector.broadcast %cst_13 : f32 to vector<16x3xf32>
    %c0_14 = arith.constant 0 : index
    %c0_15 = arith.constant 0 : index
    %10 = vector.load %arg8[%c0_14, %c0_15] : memref<26x45xf32, #tpu.memory_space<vmem>>, vector<16x45xf32>
    %11 = arith.truncf %10 : vector<16x45xf32> to vector<16x45xbf16>
    %12 = vector.extract_strided_slice %8 {offsets = [0, 0, 0], sizes = [1, 45, 3], strides = [1, 1, 1]} : vector<9x45x3xbf16> to vector<1x45x3xbf16>
    %13 = vector.shape_cast %12 : vector<1x45x3xbf16> to vector<45x3xbf16>
    %cst_16 = arith.constant dense<0.000000e+00> : vector<16x3xf32>
    %14 = tpu.matmul %11, %13, %cst_16 {dimension_numbers = #tpu.dot_dimension_numbers<[1], [0], [0], [1], [0, 0, 1, 1], [], []>} : vector<16x45xbf16>, vector<45x3xbf16>, vector<16x3xf32> -> vector<16x3xf32>
    %15 = vector.extract_strided_slice %2 {offsets = [0, 0, 0], sizes = [1, 16, 1], strides = [1, 1, 1]} : vector<9x16x1xf32> to vector<1x16x1xf32>
    %16 = vector.shape_cast %15 : vector<1x16x1xf32> to vector<16x1xf32>
    %17 = vector.broadcast %16 : vector<16x1xf32> to vector<16x3xf32>
    %18 = arith.mulf %17, %14 : vector<16x3xf32>
    %19 = arith.addf %9, %18 : vector<16x3xf32>
    %c1 = arith.constant 1 : index
    %c0_17 = arith.constant 0 : index
    %20 = vector.load %arg8[%c1, %c0_17] : memref<26x45xf32, #tpu.memory_space<vmem>>, vector<16x45xf32>
    %21 = arith.truncf %20 : vector<16x45xf32> to vector<16x45xbf16>
    %22 = vector.extract_strided_slice %8 {offsets = [1, 0, 0], sizes = [1, 45, 3], strides = [1, 1, 1]} : vector<9x45x3xbf16> to vector<1x45x3xbf16>
    %23 = vector.shape_cast %22 : vector<1x45x3xbf16> to vector<45x3xbf16>
    %cst_18 = arith.constant dense<0.000000e+00> : vector<16x3xf32>
    %24 = tpu.matmul %21, %23, %cst_18 {dimension_numbers = #tpu.dot_dimension_numbers<[1], [0], [0], [1], [0, 0, 1, 1], [], []>} : vector<16x45xbf16>, vector<45x3xbf16>, vector<16x3xf32> -> vector<16x3xf32>
    %25 = vector.extract_strided_slice %2 {offsets = [1, 0, 0], sizes = [1, 16, 1], strides = [1, 1, 1]} : vector<9x16x1xf32> to vector<1x16x1xf32>
    %26 = vector.shape_cast %25 : vector<1x16x1xf32> to vector<16x1xf32>
    %27 = vector.broadcast %26 : vector<16x1xf32> to vector<16x3xf32>
    %28 = arith.mulf %27, %24 : vector<16x3xf32>
    %29 = arith.addf %19, %28 : vector<16x3xf32>
    %c2 = arith.constant 2 : index
    %c0_19 = arith.constant 0 : index
    %30 = vector.load %arg8[%c2, %c0_19] : memref<26x45xf32, #tpu.memory_space<vmem>>, vector<16x45xf32>
    %31 = arith.truncf %30 : vector<16x45xf32> to vector<16x45xbf16>
    %32 = vector.extract_strided_slice %8 {offsets = [2, 0, 0], sizes = [1, 45, 3], strides = [1, 1, 1]} : vector<9x45x3xbf16> to vector<1x45x3xbf16>
    %33 = vector.shape_cast %32 : vector<1x45x3xbf16> to vector<45x3xbf16>
    %cst_20 = arith.constant dense<0.000000e+00> : vector<16x3xf32>
    %34 = tpu.matmul %31, %33, %cst_20 {dimension_numbers = #tpu.dot_dimension_numbers<[1], [0], [0], [1], [0, 0, 1, 1], [], []>} : vector<16x45xbf16>, vector<45x3xbf16>, vector<16x3xf32> -> vector<16x3xf32>
    %35 = vector.extract_strided_slice %2 {offsets = [2, 0, 0], sizes = [1, 16, 1], strides = [1, 1, 1]} : vector<9x16x1xf32> to vector<1x16x1xf32>
    %36 = vector.shape_cast %35 : vector<1x16x1xf32> to vector<16x1xf32>
    %37 = vector.broadcast %36 : vector<16x1xf32> to vector<16x3xf32>
    %38 = arith.mulf %37, %34 : vector<16x3xf32>
    %39 = arith.addf %29, %38 : vector<16x3xf32>
    %c4 = arith.constant 4 : index
    %c0_21 = arith.constant 0 : index
    %40 = vector.load %arg8[%c4, %c0_21] : memref<26x45xf32, #tpu.memory_space<vmem>>, vector<16x45xf32>
    %41 = arith.truncf %40 : vector<16x45xf32> to vector<16x45xbf16>
    %42 = vector.extract_strided_slice %8 {offsets = [3, 0, 0], sizes = [1, 45, 3], strides = [1, 1, 1]} : vector<9x45x3xbf16> to vector<1x45x3xbf16>
    %43 = vector.shape_cast %42 : vector<1x45x3xbf16> to vector<45x3xbf16>
    %cst_22 = arith.constant dense<0.000000e+00> : vector<16x3xf32>
    %44 = tpu.matmul %41, %43, %cst_22 {dimension_numbers = #tpu.dot_dimension_numbers<[1], [0], [0], [1], [0, 0, 1, 1], [], []>} : vector<16x45xbf16>, vector<45x3xbf16>, vector<16x3xf32> -> vector<16x3xf32>
    %45 = vector.extract_strided_slice %2 {offsets = [3, 0, 0], sizes = [1, 16, 1], strides = [1, 1, 1]} : vector<9x16x1xf32> to vector<1x16x1xf32>
    %46 = vector.shape_cast %45 : vector<1x16x1xf32> to vector<16x1xf32>
    %47 = vector.broadcast %46 : vector<16x1xf32> to vector<16x3xf32>
    %48 = arith.mulf %47, %44 : vector<16x3xf32>
    %49 = arith.addf %39, %48 : vector<16x3xf32>
    %c5_23 = arith.constant 5 : index
    %c0_24 = arith.constant 0 : index
    %50 = vector.load %arg8[%c5_23, %c0_24] : memref<26x45xf32, #tpu.memory_space<vmem>>, vector<16x45xf32>
    %51 = arith.truncf %50 : vector<16x45xf32> to vector<16x45xbf16>
    %52 = vector.extract_strided_slice %8 {offsets = [4, 0, 0], sizes = [1, 45, 3], strides = [1, 1, 1]} : vector<9x45x3xbf16> to vector<1x45x3xbf16>
    %53 = vector.shape_cast %52 : vector<1x45x3xbf16> to vector<45x3xbf16>
    %cst_25 = arith.constant dense<0.000000e+00> : vector<16x3xf32>
    %54 = tpu.matmul %51, %53, %cst_25 {dimension_numbers = #tpu.dot_dimension_numbers<[1], [0], [0], [1], [0, 0, 1, 1], [], []>} : vector<16x45xbf16>, vector<45x3xbf16>, vector<16x3xf32> -> vector<16x3xf32>
    %55 = vector.extract_strided_slice %2 {offsets = [4, 0, 0], sizes = [1, 16, 1], strides = [1, 1, 1]} : vector<9x16x1xf32> to vector<1x16x1xf32>
    %56 = vector.shape_cast %55 : vector<1x16x1xf32> to vector<16x1xf32>
    %57 = vector.broadcast %56 : vector<16x1xf32> to vector<16x3xf32>
    %58 = arith.mulf %57, %54 : vector<16x3xf32>
    %59 = arith.addf %49, %58 : vector<16x3xf32>
    %c6 = arith.constant 6 : index
    %c0_26 = arith.constant 0 : index
    %60 = vector.load %arg8[%c6, %c0_26] : memref<26x45xf32, #tpu.memory_space<vmem>>, vector<16x45xf32>
    %61 = arith.truncf %60 : vector<16x45xf32> to vector<16x45xbf16>
    %62 = vector.extract_strided_slice %8 {offsets = [5, 0, 0], sizes = [1, 45, 3], strides = [1, 1, 1]} : vector<9x45x3xbf16> to vector<1x45x3xbf16>
    %63 = vector.shape_cast %62 : vector<1x45x3xbf16> to vector<45x3xbf16>
    %cst_27 = arith.constant dense<0.000000e+00> : vector<16x3xf32>
    %64 = tpu.matmul %61, %63, %cst_27 {dimension_numbers = #tpu.dot_dimension_numbers<[1], [0], [0], [1], [0, 0, 1, 1], [], []>} : vector<16x45xbf16>, vector<45x3xbf16>, vector<16x3xf32> -> vector<16x3xf32>
    %65 = vector.extract_strided_slice %2 {offsets = [5, 0, 0], sizes = [1, 16, 1], strides = [1, 1, 1]} : vector<9x16x1xf32> to vector<1x16x1xf32>
    %66 = vector.shape_cast %65 : vector<1x16x1xf32> to vector<16x1xf32>
    %67 = vector.broadcast %66 : vector<16x1xf32> to vector<16x3xf32>
    %68 = arith.mulf %67, %64 : vector<16x3xf32>
    %69 = arith.addf %59, %68 : vector<16x3xf32>
    %c8 = arith.constant 8 : index
    %c0_28 = arith.constant 0 : index
    %70 = vector.load %arg8[%c8, %c0_28] : memref<26x45xf32, #tpu.memory_space<vmem>>, vector<16x45xf32>
    %71 = arith.truncf %70 : vector<16x45xf32> to vector<16x45xbf16>
    %72 = vector.extract_strided_slice %8 {offsets = [6, 0, 0], sizes = [1, 45, 3], strides = [1, 1, 1]} : vector<9x45x3xbf16> to vector<1x45x3xbf16>
    %73 = vector.shape_cast %72 : vector<1x45x3xbf16> to vector<45x3xbf16>
    %cst_29 = arith.constant dense<0.000000e+00> : vector<16x3xf32>
    %74 = tpu.matmul %71, %73, %cst_29 {dimension_numbers = #tpu.dot_dimension_numbers<[1], [0], [0], [1], [0, 0, 1, 1], [], []>} : vector<16x45xbf16>, vector<45x3xbf16>, vector<16x3xf32> -> vector<16x3xf32>
    %75 = vector.extract_strided_slice %2 {offsets = [6, 0, 0], sizes = [1, 16, 1], strides = [1, 1, 1]} : vector<9x16x1xf32> to vector<1x16x1xf32>
    %76 = vector.shape_cast %75 : vector<1x16x1xf32> to vector<16x1xf32>
    %77 = vector.broadcast %76 : vector<16x1xf32> to vector<16x3xf32>
    %78 = arith.mulf %77, %74 : vector<16x3xf32>
    %79 = arith.addf %69, %78 : vector<16x3xf32>
    %c9 = arith.constant 9 : index
    %c0_30 = arith.constant 0 : index
    %80 = vector.load %arg8[%c9, %c0_30] : memref<26x45xf32, #tpu.memory_space<vmem>>, vector<16x45xf32>
    %81 = arith.truncf %80 : vector<16x45xf32> to vector<16x45xbf16>
    %82 = vector.extract_strided_slice %8 {offsets = [7, 0, 0], sizes = [1, 45, 3], strides = [1, 1, 1]} : vector<9x45x3xbf16> to vector<1x45x3xbf16>
    %83 = vector.shape_cast %82 : vector<1x45x3xbf16> to vector<45x3xbf16>
    %cst_31 = arith.constant dense<0.000000e+00> : vector<16x3xf32>
    %84 = tpu.matmul %81, %83, %cst_31 {dimension_numbers = #tpu.dot_dimension_numbers<[1], [0], [0], [1], [0, 0, 1, 1], [], []>} : vector<16x45xbf16>, vector<45x3xbf16>, vector<16x3xf32> -> vector<16x3xf32>
    %85 = vector.extract_strided_slice %2 {offsets = [7, 0, 0], sizes = [1, 16, 1], strides = [1, 1, 1]} : vector<9x16x1xf32> to vector<1x16x1xf32>
    %86 = vector.shape_cast %85 : vector<1x16x1xf32> to vector<16x1xf32>
    %87 = vector.broadcast %86 : vector<16x1xf32> to vector<16x3xf32>
    %88 = arith.mulf %87, %84 : vector<16x3xf32>
    %89 = arith.addf %79, %88 : vector<16x3xf32>
    %c10 = arith.constant 10 : index
    %c0_32 = arith.constant 0 : index
    %90 = vector.load %arg8[%c10, %c0_32] : memref<26x45xf32, #tpu.memory_space<vmem>>, vector<16x45xf32>
    %91 = arith.truncf %90 : vector<16x45xf32> to vector<16x45xbf16>
    %92 = vector.extract_strided_slice %8 {offsets = [8, 0, 0], sizes = [1, 45, 3], strides = [1, 1, 1]} : vector<9x45x3xbf16> to vector<1x45x3xbf16>
    %93 = vector.shape_cast %92 : vector<1x45x3xbf16> to vector<45x3xbf16>
    %cst_33 = arith.constant dense<0.000000e+00> : vector<16x3xf32>
    %94 = tpu.matmul %91, %93, %cst_33 {dimension_numbers = #tpu.dot_dimension_numbers<[1], [0], [0], [1], [0, 0, 1, 1], [], []>} : vector<16x45xbf16>, vector<45x3xbf16>, vector<16x3xf32> -> vector<16x3xf32>
    %95 = vector.extract_strided_slice %2 {offsets = [8, 0, 0], sizes = [1, 16, 1], strides = [1, 1, 1]} : vector<9x16x1xf32> to vector<1x16x1xf32>
    %96 = vector.shape_cast %95 : vector<1x16x1xf32> to vector<16x1xf32>
    %97 = vector.broadcast %96 : vector<16x1xf32> to vector<16x3xf32>
    %98 = arith.mulf %97, %94 : vector<16x3xf32>
    %99 = arith.addf %89, %98 : vector<16x3xf32>
    %c0_34 = arith.constant 0 : index
    %c0_35 = arith.constant 0 : index
    %100 = vector.load %arg4[%c0_34, %c0_35] : memref<1x3xf32, #tpu.memory_space<vmem>>, vector<1x3xf32>
    %101 = vector.broadcast %100 : vector<1x3xf32> to vector<16x3xf32>
    %102 = arith.addf %99, %101 : vector<16x3xf32>
    %103 = arith.addf %4, %102 : vector<16x3xf32>
    %c5_36 = arith.constant 5 : index
    %c0_37 = arith.constant 0 : index
    %104 = vector.load %arg8[%c5_36, %c0_37] : memref<26x45xf32, #tpu.memory_space<vmem>>, vector<16x3xf32>
    tpu.vector_store %arg8[%c5_36, %c0_37], %103 {strides = array<i32>} : memref<26x45xf32, #tpu.memory_space<vmem>>, vector<16x3xf32>,
    %c0_38 = arith.constant 0 : index
    %c0_39 = arith.constant 0 : index
    %c0_40 = arith.constant 0 : index
    %105 = vector.load %arg5[%c0_38, %c0_39, %c0_40] : memref<9x3x90xbf16, #tpu.memory_space<vmem>>, vector<9x3x90xbf16>
    %cst_41 = arith.constant 0.000000e+00 : f32
    %106 = vector.broadcast %cst_41 : f32 to vector<16x90xf32>
    %c0_42 = arith.constant 0 : index
    %c0_43 = arith.constant 0 : index
    %107 = vector.load %arg8[%c0_42, %c0_43] : memref<26x45xf32, #tpu.memory_space<vmem>>, vector<16x3xf32>
    %108 = arith.truncf %107 : vector<16x3xf32> to vector<16x3xbf16>
    %109 = vector.extract_strided_slice %105 {offsets = [0, 0, 0], sizes = [1, 3, 90], strides = [1, 1, 1]} : vector<9x3x90xbf16> to vector<1x3x90xbf16>
    %110 = vector.shape_cast %109 : vector<1x3x90xbf16> to vector<3x90xbf16>
    %cst_44 = arith.constant dense<0.000000e+00> : vector<16x90xf32>
    %111 = tpu.matmul %108, %110, %cst_44 {dimension_numbers = #tpu.dot_dimension_numbers<[1], [0], [0], [1], [0, 0, 1, 1], [], []>} : vector<16x3xbf16>, vector<3x90xbf16>, vector<16x90xf32> -> vector<16x90xf32>
    %112 = vector.extract_strided_slice %2 {offsets = [0, 0, 0], sizes = [1, 16, 1], strides = [1, 1, 1]} : vector<9x16x1xf32> to vector<1x16x1xf32>
    %113 = vector.shape_cast %112 : vector<1x16x1xf32> to vector<16x1xf32>
    %114 = vector.broadcast %113 : vector<16x1xf32> to vector<16x90xf32>
    %115 = arith.mulf %114, %111 : vector<16x90xf32>
    %116 = arith.addf %106, %115 : vector<16x90xf32>
    %c1_45 = arith.constant 1 : index
    %c0_46 = arith.constant 0 : index
    %117 = vector.load %arg8[%c1_45, %c0_46] : memref<26x45xf32, #tpu.memory_space<vmem>>, vector<16x3xf32>
    %118 = arith.truncf %117 : vector<16x3xf32> to vector<16x3xbf16>
    %119 = vector.extract_strided_slice %105 {offsets = [1, 0, 0], sizes = [1, 3, 90], strides = [1, 1, 1]} : vector<9x3x90xbf16> to vector<1x3x90xbf16>
    %120 = vector.shape_cast %119 : vector<1x3x90xbf16> to vector<3x90xbf16>
    %cst_47 = arith.constant dense<0.000000e+00> : vector<16x90xf32>
    %121 = tpu.matmul %118, %120, %cst_47 {dimension_numbers = #tpu.dot_dimension_numbers<[1], [0], [0], [1], [0, 0, 1, 1], [], []>} : vector<16x3xbf16>, vector<3x90xbf16>, vector<16x90xf32> -> vector<16x90xf32>
    %122 = vector.extract_strided_slice %2 {offsets = [1, 0, 0], sizes = [1, 16, 1], strides = [1, 1, 1]} : vector<9x16x1xf32> to vector<1x16x1xf32>
    %123 = vector.shape_cast %122 : vector<1x16x1xf32> to vector<16x1xf32>
    %124 = vector.broadcast %123 : vector<16x1xf32> to vector<16x90xf32>
    %125 = arith.mulf %124, %121 : vector<16x90xf32>
    %126 = arith.addf %116, %125 : vector<16x90xf32>
    %c2_48 = arith.constant 2 : index
    %c0_49 = arith.constant 0 : index
    %127 = vector.load %arg8[%c2_48, %c0_49] : memref<26x45xf32, #tpu.memory_space<vmem>>, vector<16x3xf32>
    %128 = arith.truncf %127 : vector<16x3xf32> to vector<16x3xbf16>
    %129 = vector.extract_strided_slice %105 {offsets = [2, 0, 0], sizes = [1, 3, 90], strides = [1, 1, 1]} : vector<9x3x90xbf16> to vector<1x3x90xbf16>
    %130 = vector.shape_cast %129 : vector<1x3x90xbf16> to vector<3x90xbf16>
    %cst_50 = arith.constant dense<0.000000e+00> : vector<16x90xf32>
    %131 = tpu.matmul %128, %130, %cst_50 {dimension_numbers = #tpu.dot_dimension_numbers<[1], [0], [0], [1], [0, 0, 1, 1], [], []>} : vector<16x3xbf16>, vector<3x90xbf16>, vector<16x90xf32> -> vector<16x90xf32>
    %132 = vector.extract_strided_slice %2 {offsets = [2, 0, 0], sizes = [1, 16, 1], strides = [1, 1, 1]} : vector<9x16x1xf32> to vector<1x16x1xf32>
    %133 = vector.shape_cast %132 : vector<1x16x1xf32> to vector<16x1xf32>
    %134 = vector.broadcast %133 : vector<16x1xf32> to vector<16x90xf32>
    %135 = arith.mulf %134, %131 : vector<16x90xf32>
    %136 = arith.addf %126, %135 : vector<16x90xf32>
    %c4_51 = arith.constant 4 : index
    %c0_52 = arith.constant 0 : index
    %137 = vector.load %arg8[%c4_51, %c0_52] : memref<26x45xf32, #tpu.memory_space<vmem>>, vector<16x3xf32>
    %138 = arith.truncf %137 : vector<16x3xf32> to vector<16x3xbf16>
    %139 = vector.extract_strided_slice %105 {offsets = [3, 0, 0], sizes = [1, 3, 90], strides = [1, 1, 1]} : vector<9x3x90xbf16> to vector<1x3x90xbf16>
    %140 = vector.shape_cast %139 : vector<1x3x90xbf16> to vector<3x90xbf16>
    %cst_53 = arith.constant dense<0.000000e+00> : vector<16x90xf32>
    %141 = tpu.matmul %138, %140, %cst_53 {dimension_numbers = #tpu.dot_dimension_numbers<[1], [0], [0], [1], [0, 0, 1, 1], [], []>} : vector<16x3xbf16>, vector<3x90xbf16>, vector<16x90xf32> -> vector<16x90xf32>
    %142 = vector.extract_strided_slice %2 {offsets = [3, 0, 0], sizes = [1, 16, 1], strides = [1, 1, 1]} : vector<9x16x1xf32> to vector<1x16x1xf32>
    %143 = vector.shape_cast %142 : vector<1x16x1xf32> to vector<16x1xf32>
    %144 = vector.broadcast %143 : vector<16x1xf32> to vector<16x90xf32>
    %145 = arith.mulf %144, %141 : vector<16x90xf32>
    %146 = arith.addf %136, %145 : vector<16x90xf32>
    %c5_54 = arith.constant 5 : index
    %c0_55 = arith.constant 0 : index
    %147 = vector.load %arg8[%c5_54, %c0_55] : memref<26x45xf32, #tpu.memory_space<vmem>>, vector<16x3xf32>
    %148 = arith.truncf %147 : vector<16x3xf32> to vector<16x3xbf16>
    %149 = vector.extract_strided_slice %105 {offsets = [4, 0, 0], sizes = [1, 3, 90], strides = [1, 1, 1]} : vector<9x3x90xbf16> to vector<1x3x90xbf16>
    %150 = vector.shape_cast %149 : vector<1x3x90xbf16> to vector<3x90xbf16>
    %cst_56 = arith.constant dense<0.000000e+00> : vector<16x90xf32>
    %151 = tpu.matmul %148, %150, %cst_56 {dimension_numbers = #tpu.dot_dimension_numbers<[1], [0], [0], [1], [0, 0, 1, 1], [], []>} : vector<16x3xbf16>, vector<3x90xbf16>, vector<16x90xf32> -> vector<16x90xf32>
    %152 = vector.extract_strided_slice %2 {offsets = [4, 0, 0], sizes = [1, 16, 1], strides = [1, 1, 1]} : vector<9x16x1xf32> to vector<1x16x1xf32>
    %153 = vector.shape_cast %152 : vector<1x16x1xf32> to vector<16x1xf32>
    %154 = vector.broadcast %153 : vector<16x1xf32> to vector<16x90xf32>
    %155 = arith.mulf %154, %151 : vector<16x90xf32>
    %156 = arith.addf %146, %155 : vector<16x90xf32>
    %c6_57 = arith.constant 6 : index
    %c0_58 = arith.constant 0 : index
    %157 = vector.load %arg8[%c6_57, %c0_58] : memref<26x45xf32, #tpu.memory_space<vmem>>, vector<16x3xf32>
    %158 = arith.truncf %157 : vector<16x3xf32> to vector<16x3xbf16>
    %159 = vector.extract_strided_slice %105 {offsets = [5, 0, 0], sizes = [1, 3, 90], strides = [1, 1, 1]} : vector<9x3x90xbf16> to vector<1x3x90xbf16>
    %160 = vector.shape_cast %159 : vector<1x3x90xbf16> to vector<3x90xbf16>
    %cst_59 = arith.constant dense<0.000000e+00> : vector<16x90xf32>
    %161 = tpu.matmul %158, %160, %cst_59 {dimension_numbers = #tpu.dot_dimension_numbers<[1], [0], [0], [1], [0, 0, 1, 1], [], []>} : vector<16x3xbf16>, vector<3x90xbf16>, vector<16x90xf32> -> vector<16x90xf32>
    %162 = vector.extract_strided_slice %2 {offsets = [5, 0, 0], sizes = [1, 16, 1], strides = [1, 1, 1]} : vector<9x16x1xf32> to vector<1x16x1xf32>
    %163 = vector.shape_cast %162 : vector<1x16x1xf32> to vector<16x1xf32>
    %164 = vector.broadcast %163 : vector<16x1xf32> to vector<16x90xf32>
    %165 = arith.mulf %164, %161 : vector<16x90xf32>
    %166 = arith.addf %156, %165 : vector<16x90xf32>
    %c8_60 = arith.constant 8 : index
    %c0_61 = arith.constant 0 : index
    %167 = vector.load %arg8[%c8_60, %c0_61] : memref<26x45xf32, #tpu.memory_space<vmem>>, vector<16x3xf32>
    %168 = arith.truncf %167 : vector<16x3xf32> to vector<16x3xbf16>
    %169 = vector.extract_strided_slice %105 {offsets = [6, 0, 0], sizes = [1, 3, 90], strides = [1, 1, 1]} : vector<9x3x90xbf16> to vector<1x3x90xbf16>
    %170 = vector.shape_cast %169 : vector<1x3x90xbf16> to vector<3x90xbf16>
    %cst_62 = arith.constant dense<0.000000e+00> : vector<16x90xf32>
    %171 = tpu.matmul %168, %170, %cst_62 {dimension_numbers = #tpu.dot_dimension_numbers<[1], [0], [0], [1], [0, 0, 1, 1], [], []>} : vector<16x3xbf16>, vector<3x90xbf16>, vector<16x90xf32> -> vector<16x90xf32>
    %172 = vector.extract_strided_slice %2 {offsets = [6, 0, 0], sizes = [1, 16, 1], strides = [1, 1, 1]} : vector<9x16x1xf32> to vector<1x16x1xf32>
    %173 = vector.shape_cast %172 : vector<1x16x1xf32> to vector<16x1xf32>
    %174 = vector.broadcast %173 : vector<16x1xf32> to vector<16x90xf32>
    %175 = arith.mulf %174, %171 : vector<16x90xf32>
    %176 = arith.addf %166, %175 : vector<16x90xf32>
    %c9_63 = arith.constant 9 : index
    %c0_64 = arith.constant 0 : index
    %177 = vector.load %arg8[%c9_63, %c0_64] : memref<26x45xf32, #tpu.memory_space<vmem>>, vector<16x3xf32>
    %178 = arith.truncf %177 : vector<16x3xf32> to vector<16x3xbf16>
    %179 = vector.extract_strided_slice %105 {offsets = [7, 0, 0], sizes = [1, 3, 90], strides = [1, 1, 1]} : vector<9x3x90xbf16> to vector<1x3x90xbf16>
    %180 = vector.shape_cast %179 : vector<1x3x90xbf16> to vector<3x90xbf16>
    %cst_65 = arith.constant dense<0.000000e+00> : vector<16x90xf32>
    %181 = tpu.matmul %178, %180, %cst_65 {dimension_numbers = #tpu.dot_dimension_numbers<[1], [0], [0], [1], [0, 0, 1, 1], [], []>} : vector<16x3xbf16>, vector<3x90xbf16>, vector<16x90xf32> -> vector<16x90xf32>
    %182 = vector.extract_strided_slice %2 {offsets = [7, 0, 0], sizes = [1, 16, 1], strides = [1, 1, 1]} : vector<9x16x1xf32> to vector<1x16x1xf32>
    %183 = vector.shape_cast %182 : vector<1x16x1xf32> to vector<16x1xf32>
    %184 = vector.broadcast %183 : vector<16x1xf32> to vector<16x90xf32>
    %185 = arith.mulf %184, %181 : vector<16x90xf32>
    %186 = arith.addf %176, %185 : vector<16x90xf32>
    %c10_66 = arith.constant 10 : index
    %c0_67 = arith.constant 0 : index
    %187 = vector.load %arg8[%c10_66, %c0_67] : memref<26x45xf32, #tpu.memory_space<vmem>>, vector<16x3xf32>
    %188 = arith.truncf %187 : vector<16x3xf32> to vector<16x3xbf16>
    %189 = vector.extract_strided_slice %105 {offsets = [8, 0, 0], sizes = [1, 3, 90], strides = [1, 1, 1]} : vector<9x3x90xbf16> to vector<1x3x90xbf16>
    %190 = vector.shape_cast %189 : vector<1x3x90xbf16> to vector<3x90xbf16>
    %cst_68 = arith.constant dense<0.000000e+00> : vector<16x90xf32>
    %191 = tpu.matmul %188, %190, %cst_68 {dimension_numbers = #tpu.dot_dimension_numbers<[1], [0], [0], [1], [0, 0, 1, 1], [], []>} : vector<16x3xbf16>, vector<3x90xbf16>, vector<16x90xf32> -> vector<16x90xf32>
    %192 = vector.extract_strided_slice %2 {offsets = [8, 0, 0], sizes = [1, 16, 1], strides = [1, 1, 1]} : vector<9x16x1xf32> to vector<1x16x1xf32>
    %193 = vector.shape_cast %192 : vector<1x16x1xf32> to vector<16x1xf32>
    %194 = vector.broadcast %193 : vector<16x1xf32> to vector<16x90xf32>
    %195 = arith.mulf %194, %191 : vector<16x90xf32>
    %196 = arith.addf %186, %195 : vector<16x90xf32>
    %c0_69 = arith.constant 0 : index
    %c0_70 = arith.constant 0 : index
    %197 = vector.load %arg6[%c0_69, %c0_70] : memref<1x90xf32, #tpu.memory_space<vmem>>, vector<1x90xf32>
    %198 = vector.broadcast %197 : vector<1x90xf32> to vector<16x90xf32>
    %199 = arith.addf %196, %198 : vector<16x90xf32>
    %200 = vector.extract_strided_slice %199 {offsets = [0, 0], sizes = [16, 45], strides = [1, 1]} : vector<16x90xf32> to vector<16x45xf32>
    %201 = arith.negf %200 : vector<16x45xf32>
    %202 = math.exp %201 : vector<16x45xf32>
    %cst_71 = arith.constant 1.000000e+00 : f32
    %203 = vector.broadcast %cst_71 : f32 to vector<16x45xf32>
    %204 = arith.addf %203, %202 : vector<16x45xf32>
    %205 = arith.divf %203, %204 : vector<16x45xf32>
    %cst_72 = arith.constant 2.000000e+00 : f32
    %206 = vector.broadcast %cst_72 : f32 to vector<16x45xf32>
    %207 = arith.mulf %205, %206 : vector<16x45xf32>
    %cst_73 = arith.constant 1.000000e+00 : f32
    %208 = vector.broadcast %cst_73 : f32 to vector<16x45xf32>
    %209 = arith.subf %207, %208 : vector<16x45xf32>
    %cst_74 = arith.constant 1.000000e+00 : f32
    %210 = vector.broadcast %cst_74 : f32 to vector<16x45xf32>
    %211 = arith.mulf %210, %209 : vector<16x45xf32>
    %212 = math.exp %211 : vector<16x45xf32>
    %213 = arith.mulf %6, %212 : vector<16x45xf32>
    %214 = vector.extract_strided_slice %199 {offsets = [0, 45], sizes = [16, 45], strides = [1, 1]} : vector<16x90xf32> to vector<16x45xf32>
    %215 = arith.addf %213, %214 : vector<16x45xf32>
    %c0_75 = arith.constant 0 : index
    %c0_76 = arith.constant 0 : index
    %c0_77 = arith.constant 0 : index
    %216 = vector.load %arg7[%c0_75, %c0_76, %c0_77] : memref<1x16x48xf32, #tpu.memory_space<vmem>>, vector<1x16x3xf32>
    %217 = vector.shape_cast %216 : vector<1x16x3xf32> to vector<16x3xf32>
    %218 = vector.shape_cast %103 : vector<16x3xf32> to vector<1x16x3xf32>
    tpu.vector_store %arg7[%c0_75, %c0_76, %c0_77], %218 {strides = array<i32>} : memref<1x16x48xf32, #tpu.memory_space<vmem>>, vector<1x16x3xf32>,
    %c0_78 = arith.constant 0 : index
    %c0_79 = arith.constant 0 : index
    %c3_80 = arith.constant 3 : index
    %219 = vector.load %arg7[%c0_78, %c0_79, %c3_80] : memref<1x16x48xf32, #tpu.memory_space<vmem>>, vector<1x16x45xf32>
    %220 = vector.shape_cast %219 : vector<1x16x45xf32> to vector<16x45xf32>
    %221 = vector.shape_cast %215 : vector<16x45xf32> to vector<1x16x45xf32>
    tpu.vector_store %arg7[%c0_78, %c0_79, %c3_80], %221 {strides = array<i32>} : memref<1x16x48xf32, #tpu.memory_space<vmem>>, vector<1x16x45xf32>,
    return
  }
  func.func @transform_0(%arg0: i32) -> (i32, i32, i32) {
    %c0_i32 = arith.constant 0 : i32
    %c0_i32_0 = arith.constant 0 : i32
    %c0_i32_1 = arith.constant 0 : i32
    return %arg0, %c0_i32, %c0_i32_0 : i32, i32, i32
  }
  func.func @transform_1(%arg0: i32) -> (i32, i32, i32) {
    %c0_i32 = arith.constant 0 : i32
    %c0_i32_0 = arith.constant 0 : i32
    %c0_i32_1 = arith.constant 0 : i32
    %c0_i32_2 = arith.constant 0 : i32
    return %c0_i32, %c0_i32_0, %c0_i32_1 : i32, i32, i32
  }
  func.func @transform_2(%arg0: i32) -> (i32, i32, i32) {
    %c0_i32 = arith.constant 0 : i32
    %c0_i32_0 = arith.constant 0 : i32
    %c0_i32_1 = arith.constant 0 : i32
    %c0_i32_2 = arith.constant 0 : i32
    return %c0_i32, %c0_i32_0, %c0_i32_1 : i32, i32, i32
  }
  func.func @transform_3(%arg0: i32) -> (i32, i32) {
    %c0_i32 = arith.constant 0 : i32
    %c0_i32_0 = arith.constant 0 : i32
    %c0_i32_1 = arith.constant 0 : i32
    return %c0_i32, %c0_i32_0 : i32, i32
  }
  func.func @transform_4(%arg0: i32) -> (i32, i32, i32) {
    %c0_i32 = arith.constant 0 : i32
    %c0_i32_0 = arith.constant 0 : i32
    %c0_i32_1 = arith.constant 0 : i32
    %c0_i32_2 = arith.constant 0 : i32
    return %c0_i32, %c0_i32_0, %c0_i32_1 : i32, i32, i32
  }
  func.func @transform_5(%arg0: i32) -> (i32, i32) {
    %c0_i32 = arith.constant 0 : i32
    %c0_i32_0 = arith.constant 0 : i32
    %c0_i32_1 = arith.constant 0 : i32
    return %c0_i32, %c0_i32_0 : i32, i32
  }
  func.func @transform_6(%arg0: i32) -> (i32, i32, i32) {
    %c0_i32 = arith.constant 0 : i32
    %c0_i32_0 = arith.constant 0 : i32
    %c0_i32_1 = arith.constant 0 : i32
    return %arg0, %c0_i32, %c0_i32_0 : i32, i32, i32
  }
}

</mosaic_0001>

<llo_original>
// kernel: sainet_forward.10
$region0: #{sainet_forward.10}
  #allocation0 [shape = 'u32[]', space=smem, size = 0x4, offset = 0x4, fixed_abs, tag = 'smem constant byte address 0x4 - core index']
  #allocation1 [shape = 'u32[144,128]{1,0:T(1,128)}', space=vmem, size = 0x12000, scoped, tag = 'internal scratch']
  %s0 = inlined_call_operand.vmem [shape: f32[128,3], index: 0, kind: input, shape index: {}]
  %s1 = inlined_call_operand.vmem [shape: f32[128,3], index: 1, kind: input, shape index: {}]
  %s2 = inlined_call_operand.vmem [shape: f32[128,3], index: 2, kind: input, shape index: {}]
  %s3 = inlined_call_operand.vmem [shape: f32[128,3], index: 3, kind: input, shape index: {}]
  %s4 = inlined_call_operand.vmem [shape: f32[128,12], index: 4, kind: output, shape index: {}]
  %s5 = sld [smem:[#allocation0]]
  $region26: #{sainet_forward.10} parent=0
    _
  %s7 = ssub.s32 1, %s5
  %s8 = scalar_select 0, %s7, %s5
  // Predicated region
  $region2: #{sainet_forward.10} parent=0 // pred_check
    _
  $region3: #{sainet_forward.10} parent=0 // pred_check_branch
    %10 = sbr.rel (0) target = $region5
  $region4: #{sainet_forward.10} parent=0 // pred_region
    _
  $region5: #{sainet_forward.10} parent=0 // pred_fallthru
    _
  // Predicated region
  $region6: #{sainet_forward.10} parent=0 // pred_check
    _
  $region7: #{sainet_forward.10} parent=0 // pred_check_branch
    %12 = sbr.rel (0) target = $region9
  $region8: #{sainet_forward.10} parent=0 // pred_region
    _
  $region9: #{sainet_forward.10} parent=0 // pred_fallthru
    _
  // Predicated region
  $region10: #{sainet_forward.10} parent=0 // pred_check
    _
  $region11: #{sainet_forward.10} parent=0 // pred_check_branch
    %14 = sbr.rel (0) target = $region13
  $region12: #{sainet_forward.10} parent=0 // pred_region
    _
  $region13: #{sainet_forward.10} parent=0 // pred_fallthru
    _
  // Predicated region
  $region14: #{sainet_forward.10} parent=0 // pred_check
    _
  $region15: #{sainet_forward.10} parent=0 // pred_check_branch
    %16 = sbr.rel (0) target = $region17
  $region16: #{sainet_forward.10} parent=0 // pred_region
    _
  $region17: #{sainet_forward.10} parent=0 // pred_fallthru
    _
  %v17 = vld [vmem:[%s0] sm:$0xff]
  %v18 = vld [vmem:[%s0 + $0x8] sm:$0xff]
  %v19 = vld [vmem:[%s0 + $0x10] sm:$0xff]
  %v20 = vld [vmem:[%s0 + $0x18] sm:$0xff]
  %v21 = vld [vmem:[%s0 + $0x20] sm:$0xff]
  %v22 = vld [vmem:[%s0 + $0x28] sm:$0xff]
  %v23 = vld [vmem:[%s0 + $0x30] sm:$0xff]
  %v24 = vld [vmem:[%s0 + $0x38] sm:$0xff]
  %v25 = vld [vmem:[%s0 + $0x40] sm:$0xff]
  %v26 = vld [vmem:[%s0 + $0x48] sm:$0xff]
  %v27 = vld [vmem:[%s0 + $0x50] sm:$0xff]
  %v28 = vld [vmem:[%s0 + $0x58] sm:$0xff]
  %v29 = vld [vmem:[%s0 + $0x60] sm:$0xff]
  %v30 = vld [vmem:[%s0 + $0x68] sm:$0xff]
  %v31 = vld [vmem:[%s0 + $0x70] sm:$0xff]
  %v32 = vld [vmem:[%s0 + $0x78] sm:$0xff]
  %v33 = vld [vmem:[%s1] sm:$0xff]
  %v34 = vld [vmem:[%s1 + $0x8] sm:$0xff]
  %v35 = vld [vmem:[%s1 + $0x10] sm:$0xff]
  %v36 = vld [vmem:[%s1 + $0x18] sm:$0xff]
  %v37 = vld [vmem:[%s1 + $0x20] sm:$0xff]
  %v38 = vld [vmem:[%s1 + $0x28] sm:$0xff]
  %v39 = vld [vmem:[%s1 + $0x30] sm:$0xff]
  %v40 = vld [vmem:[%s1 + $0x38] sm:$0xff]
  %v41 = vld [vmem:[%s1 + $0x40] sm:$0xff]
  %v42 = vld [vmem:[%s1 + $0x48] sm:$0xff]
  %v43 = vld [vmem:[%s1 + $0x50] sm:$0xff]
  %v44 = vld [vmem:[%s1 + $0x58] sm:$0xff]
  %v45 = vld [vmem:[%s1 + $0x60] sm:$0xff]
  %v46 = vld [vmem:[%s1 + $0x68] sm:$0xff]
  %v47 = vld [vmem:[%s1 + $0x70] sm:$0xff]
  %v48 = vld [vmem:[%s1 + $0x78] sm:$0xff]
  %v49 = vld [vmem:[%s2] sm:$0xff]
  %v50 = vld [vmem:[%s2 + $0x8] sm:$0xff]
  %v51 = vld [vmem:[%s2 + $0x10] sm:$0xff]
  %v52 = vld [vmem:[%s2 + $0x18] sm:$0xff]
  %v53 = vld [vmem:[%s2 + $0x20] sm:$0xff]
  %v54 = vld [vmem:[%s2 + $0x28] sm:$0xff]
  %v55 = vld [vmem:[%s2 + $0x30] sm:$0xff]
  %v56 = vld [vmem:[%s2 + $0x38] sm:$0xff]
  %v57 = vld [vmem:[%s2 + $0x40] sm:$0xff]
  %v58 = vld [vmem:[%s2 + $0x48] sm:$0xff]
  %v59 = vld [vmem:[%s2 + $0x50] sm:$0xff]
  %v60 = vld [vmem:[%s2 + $0x58] sm:$0xff]
  %v61 = vld [vmem:[%s2 + $0x60] sm:$0xff]
  %v62 = vld [vmem:[%s2 + $0x68] sm:$0xff]
  %v63 = vld [vmem:[%s2 + $0x70] sm:$0xff]
  %v64 = vld [vmem:[%s2 + $0x78] sm:$0xff]
  %v65 = vld [vmem:[%s3] sm:$0xff]
  %v66 = vld [vmem:[%s3 + $0x8] sm:$0xff]
  %v67 = vld [vmem:[%s3 + $0x10] sm:$0xff]
  %v68 = vld [vmem:[%s3 + $0x18] sm:$0xff]
  %v69 = vld [vmem:[%s3 + $0x20] sm:$0xff]
  %v70 = vld [vmem:[%s3 + $0x28] sm:$0xff]
  %v71 = vld [vmem:[%s3 + $0x30] sm:$0xff]
  %v72 = vld [vmem:[%s3 + $0x38] sm:$0xff]
  %v73 = vld [vmem:[%s3 + $0x40] sm:$0xff]
  %v74 = vld [vmem:[%s3 + $0x48] sm:$0xff]
  %v75 = vld [vmem:[%s3 + $0x50] sm:$0xff]
  %v76 = vld [vmem:[%s3 + $0x58] sm:$0xff]
  %v77 = vld [vmem:[%s3 + $0x60] sm:$0xff]
  %v78 = vld [vmem:[%s3 + $0x68] sm:$0xff]
  %v79 = vld [vmem:[%s3 + $0x70] sm:$0xff]
  %v80 = vld [vmem:[%s3 + $0x78] sm:$0xff]
  %v81 = vadd.f32 %v17, %v33
  %v82 = vadd.f32 %v18, %v34
  %v83 = vadd.f32 %v19, %v35
  %v84 = vadd.f32 %v20, %v36
  %v85 = vadd.f32 %v21, %v37
  %v86 = vadd.f32 %v22, %v38
  %v87 = vadd.f32 %v23, %v39
  %v88 = vadd.f32 %v24, %v40
  %v89 = vadd.f32 %v25, %v41
  %v90 = vadd.f32 %v26, %v42
  %v91 = vadd.f32 %v27, %v43
  %v92 = vadd.f32 %v28, %v44
  %v93 = vadd.f32 %v29, %v45
  %v94 = vadd.f32 %v30, %v46
  %v95 = vadd.f32 %v31, %v47
  %v96 = vadd.f32 %v32, %v48
  %v97 = vadd.f32 %v81, %v49
  %v98 = vadd.f32 %v82, %v50
  %v99 = vadd.f32 %v83, %v51
  %v100 = vadd.f32 %v84, %v52
  %v101 = vadd.f32 %v85, %v53
  %v102 = vadd.f32 %v86, %v54
  %v103 = vadd.f32 %v87, %v55
  %v104 = vadd.f32 %v88, %v56
  %v105 = vadd.f32 %v89, %v57
  %v106 = vadd.f32 %v90, %v58
  %v107 = vadd.f32 %v91, %v59
  %v108 = vadd.f32 %v92, %v60
  %v109 = vadd.f32 %v93, %v61
  %v110 = vadd.f32 %v94, %v62
  %v111 = vadd.f32 %v95, %v63
  %v112 = vadd.f32 %v96, %v64
  %v113 = vadd.f32 %v97, %v65
  %v114 = vadd.f32 %v98, %v66
  %v115 = vadd.f32 %v99, %v67
  %v116 = vadd.f32 %v100, %v68
  %v117 = vadd.f32 %v101, %v69
  %v118 = vadd.f32 %v102, %v70
  %v119 = vadd.f32 %v103, %v71
  %v120 = vadd.f32 %v104, %v72
  %v121 = vadd.f32 %v105, %v73
  %v122 = vadd.f32 %v106, %v74
  %v123 = vadd.f32 %v107, %v75
  %v124 = vadd.f32 %v108, %v76
  %v125 = vadd.f32 %v109, %v77
  %v126 = vadd.f32 %v110, %v78
  %v127 = vadd.f32 %v111, %v79
  %v128 = vadd.f32 %v112, %v80
  %v129 = vmul.f32 %v113, 0.25
  %v130 = vmul.f32 %v114, 0.25
  %v131 = vmul.f32 %v115, 0.25
  %v132 = vmul.f32 %v116, 0.25
  %v133 = vmul.f32 %v117, 0.25
  %v134 = vmul.f32 %v118, 0.25
  %v135 = vmul.f32 %v119, 0.25
  %v136 = vmul.f32 %v120, 0.25
  %v137 = vmul.f32 %v121, 0.25
  %v138 = vmul.f32 %v122, 0.25
  %v139 = vmul.f32 %v123, 0.25
  %v140 = vmul.f32 %v124, 0.25
  %v141 = vmul.f32 %v125, 0.25
  %v142 = vmul.f32 %v126, 0.25
  %v143 = vmul.f32 %v127, 0.25
  %v144 = vmul.f32 %v128, 0.25
  %vm145 = vcmask 23552
  %146 = vst.msk [vmem:[%s4] sm:$0xff] %vm145, %v129
  %147 = vst.msk [vmem:[%s4 + $0x8] sm:$0xff] %vm145, %v130
  %148 = vst.msk [vmem:[%s4 + $0x10] sm:$0xff] %vm145, %v131
  %149 = vst.msk [vmem:[%s4 + $0x18] sm:$0xff] %vm145, %v132
  %150 = vst.msk [vmem:[%s4 + $0x20] sm:$0xff] %vm145, %v133
  %151 = vst.msk [vmem:[%s4 + $0x28] sm:$0xff] %vm145, %v134
  %152 = vst.msk [vmem:[%s4 + $0x30] sm:$0xff] %vm145, %v135
  %153 = vst.msk [vmem:[%s4 + $0x38] sm:$0xff] %vm145, %v136
  %154 = vst.msk [vmem:[%s4 + $0x40] sm:$0xff] %vm145, %v137
  %155 = vst.msk [vmem:[%s4 + $0x48] sm:$0xff] %vm145, %v138
  %156 = vst.msk [vmem:[%s4 + $0x50] sm:$0xff] %vm145, %v139
  %157 = vst.msk [vmem:[%s4 + $0x58] sm:$0xff] %vm145, %v140
  %158 = vst.msk [vmem:[%s4 + $0x60] sm:$0xff] %vm145, %v141
  %159 = vst.msk [vmem:[%s4 + $0x68] sm:$0xff] %vm145, %v142
  %160 = vst.msk [vmem:[%s4 + $0x70] sm:$0xff] %vm145, %v143
  %161 = vst.msk [vmem:[%s4 + $0x78] sm:$0xff] %vm145, %v144
  %v162 = vsub.f32 %v17, %v33
  %v163 = vsub.f32 %v18, %v34
  %v164 = vsub.f32 %v19, %v35
  %v165 = vsub.f32 %v20, %v36
  %v166 = vsub.f32 %v21, %v37
  %v167 = vsub.f32 %v22, %v38
  %v168 = vsub.f32 %v23, %v39
  %v169 = vsub.f32 %v24, %v40
  %v170 = vsub.f32 %v25, %v41
  %v171 = vsub.f32 %v26, %v42
  %v172 = vsub.f32 %v27, %v43
  %v173 = vsub.f32 %v28, %v44
  %v174 = vsub.f32 %v29, %v45
  %v175 = vsub.f32 %v30, %v46
  %v176 = vsub.f32 %v31, %v47
  %v177 = vsub.f32 %v32, %v48
  %v178 = vadd.f32 %v162, %v49
  %v179 = vadd.f32 %v163, %v50
  %v180 = vadd.f32 %v164, %v51
  %v181 = vadd.f32 %v165, %v52
  %v182 = vadd.f32 %v166, %v53
  %v183 = vadd.f32 %v167, %v54
  %v184 = vadd.f32 %v168, %v55
  %v185 = vadd.f32 %v169, %v56
  %v186 = vadd.f32 %v170, %v57
  %v187 = vadd.f32 %v171, %v58
  %v188 = vadd.f32 %v172, %v59
  %v189 = vadd.f32 %v173, %v60
  %v190 = vadd.f32 %v174, %v61
  %v191 = vadd.f32 %v175, %v62
  %v192 = vadd.f32 %v176, %v63
  %v193 = vadd.f32 %v177, %v64
  %v194 = vsub.f32 %v178, %v65
  %v195 = vsub.f32 %v179, %v66
  %v196 = vsub.f32 %v180, %v67
  %v197 = vsub.f32 %v181, %v68
  %v198 = vsub.f32 %v182, %v69
  %v199 = vsub.f32 %v183, %v70
  %v200 = vsub.f32 %v184, %v71
  %v201 = vsub.f32 %v185, %v72
  %v202 = vsub.f32 %v186, %v73
  %v203 = vsub.f32 %v187, %v74
  %v204 = vsub.f32 %v188, %v75
  %v205 = vsub.f32 %v189, %v76
  %v206 = vsub.f32 %v190, %v77
  %v207 = vsub.f32 %v191, %v78
  %v208 = vsub.f32 %v192, %v79
  %v209 = vsub.f32 %v193, %v80
  %v210 = vmul.f32 %v194, 0.25
  %v211 = vmul.f32 %v195, 0.25
  %v212 = vmul.f32 %v196, 0.25
  %v213 = vmul.f32 %v197, 0.25
  %v214 = vmul.f32 %v198, 0.25
  %v215 = vmul.f32 %v199, 0.25
  %v216 = vmul.f32 %v200, 0.25
  %v217 = vmul.f32 %v201, 0.25
  %v218 = vmul.f32 %v202, 0.25
  %v219 = vmul.f32 %v203, 0.25
  %v220 = vmul.f32 %v204, 0.25
  %v221 = vmul.f32 %v205, 0.25
  %v222 = vmul.f32 %v206, 0.25
  %v223 = vmul.f32 %v207, 0.25
  %v224 = vmul.f32 %v208, 0.25
  %v225 = vmul.f32 %v209, 0.25
  %242 = vrot.lane.b32.xlu0 %v210, 3
  %v243 = vpop.permute.xlu0 %242
  %244 = vrot.lane.b32.xlu0 %v211, 3
  %v245 = vpop.permute.xlu0 %244
  %246 = vrot.lane.b32.xlu0 %v212, 3
  %v247 = vpop.permute.xlu0 %246
  %248 = vrot.lane.b32.xlu0 %v213, 3
  %v249 = vpop.permute.xlu0 %248
  %250 = vrot.lane.b32.xlu0 %v214, 3
  %v251 = vpop.permute.xlu0 %250
  %252 = vrot.lane.b32.xlu0 %v215, 3
  %v253 = vpop.permute.xlu0 %252
  %254 = vrot.lane.b32.xlu0 %v216, 3
  %v255 = vpop.permute.xlu0 %254
  %256 = vrot.lane.b32.xlu0 %v217, 3
  %v257 = vpop.permute.xlu0 %256
  %258 = vrot.lane.b32.xlu0 %v218, 3
  %v259 = vpop.permute.xlu0 %258
  %260 = vrot.lane.b32.xlu0 %v219, 3
  %v261 = vpop.permute.xlu0 %260
  %262 = vrot.lane.b32.xlu0 %v220, 3
  %v263 = vpop.permute.xlu0 %262
  %264 = vrot.lane.b32.xlu0 %v221, 3
  %v265 = vpop.permute.xlu0 %264
  %266 = vrot.lane.b32.xlu0 %v222, 3
  %v267 = vpop.permute.xlu0 %266
  %268 = vrot.lane.b32.xlu0 %v223, 3
  %v269 = vpop.permute.xlu0 %268
  %270 = vrot.lane.b32.xlu0 %v224, 3
  %v271 = vpop.permute.xlu0 %270
  %272 = vrot.lane.b32.xlu0 %v225, 3
  %v273 = vpop.permute.xlu0 %272
  %vm290 = vcmask 48152
  %291 = vst.msk [vmem:[%s4] sm:$0xff] %vm290, %v243
  %292 = vst.msk [vmem:[%s4 + $0x8] sm:$0xff] %vm290, %v245
  %293 = vst.msk [vmem:[%s4 + $0x10] sm:$0xff] %vm290, %v247
  %294 = vst.msk [vmem:[%s4 + $0x18] sm:$0xff] %vm290, %v249
  %295 = vst.msk [vmem:[%s4 + $0x20] sm:$0xff] %vm290, %v251
  %296 = vst.msk [vmem:[%s4 + $0x28] sm:$0xff] %vm290, %v253
  %297 = vst.msk [vmem:[%s4 + $0x30] sm:$0xff] %vm290, %v255
  %298 = vst.msk [vmem:[%s4 + $0x38] sm:$0xff] %vm290, %v257
  %299 = vst.msk [vmem:[%s4 + $0x40] sm:$0xff] %vm290, %v259
  %300 = vst.msk [vmem:[%s4 + $0x48] sm:$0xff] %vm290, %v261
  %301 = vst.msk [vmem:[%s4 + $0x50] sm:$0xff] %vm290, %v263
  %302 = vst.msk [vmem:[%s4 + $0x58] sm:$0xff] %vm290, %v265
  %303 = vst.msk [vmem:[%s4 + $0x60] sm:$0xff] %vm290, %v267
  %304 = vst.msk [vmem:[%s4 + $0x68] sm:$0xff] %vm290, %v269
  %305 = vst.msk [vmem:[%s4 + $0x70] sm:$0xff] %vm290, %v271
  %306 = vst.msk [vmem:[%s4 + $0x78] sm:$0xff] %vm290, %v273
  %v307 = vsub.f32 %v81, %v49
  %v308 = vsub.f32 %v82, %v50
  %v309 = vsub.f32 %v83, %v51
  %v310 = vsub.f32 %v84, %v52
  %v311 = vsub.f32 %v85, %v53
  %v312 = vsub.f32 %v86, %v54
  %v313 = vsub.f32 %v87, %v55
  %v314 = vsub.f32 %v88, %v56
  %v315 = vsub.f32 %v89, %v57
  %v316 = vsub.f32 %v90, %v58
  %v317 = vsub.f32 %v91, %v59
  %v318 = vsub.f32 %v92, %v60
  %v319 = vsub.f32 %v93, %v61
  %v320 = vsub.f32 %v94, %v62
  %v321 = vsub.f32 %v95, %v63
  %v322 = vsub.f32 %v96, %v64
  %v323 = vsub.f32 %v307, %v65
  %v324 = vsub.f32 %v308, %v66
  %v325 = vsub.f32 %v309, %v67
  %v326 = vsub.f32 %v310, %v68
  %v327 = vsub.f32 %v311, %v69
  %v328 = vsub.f32 %v312, %v70
  %v329 = vsub.f32 %v313, %v71
  %v330 = vsub.f32 %v314, %v72
  %v331 = vsub.f32 %v315, %v73
  %v332 = vsub.f32 %v316, %v74
  %v333 = vsub.f32 %v317, %v75
  %v334 = vsub.f32 %v318, %v76
  %v335 = vsub.f32 %v319, %v77
  %v336 = vsub.f32 %v320, %v78
  %v337 = vsub.f32 %v321, %v79
  %v338 = vsub.f32 %v322, %v80
  %v339 = vmul.f32 %v323, 0.25
  %v340 = vmul.f32 %v324, 0.25
  %v341 = vmul.f32 %v325, 0.25
  %v342 = vmul.f32 %v326, 0.25
  %v343 = vmul.f32 %v327, 0.25
  %v344 = vmul.f32 %v328, 0.25
  %v345 = vmul.f32 %v329, 0.25
  %v346 = vmul.f32 %v330, 0.25
  %v347 = vmul.f32 %v331, 0.25
  %v348 = vmul.f32 %v332, 0.25
  %v349 = vmul.f32 %v333, 0.25
  %v350 = vmul.f32 %v334, 0.25
  %v351 = vmul.f32 %v335, 0.25
  %v352 = vmul.f32 %v336, 0.25
  %v353 = vmul.f32 %v337, 0.25
  %v354 = vmul.f32 %v338, 0.25
  %371 = vrot.lane.b32.xlu0 %v339, 6
  %v372 = vpop.permute.xlu0 %371
  %373 = vrot.lane.b32.xlu0 %v340, 6
  %v374 = vpop.permute.xlu0 %373
  %375 = vrot.lane.b32.xlu0 %v341, 6
  %v376 = vpop.permute.xlu0 %375
  %377 = vrot.lane.b32.xlu0 %v342, 6
  %v378 = vpop.permute.xlu0 %377
  %379 = vrot.lane.b32.xlu0 %v343, 6
  %v380 = vpop.permute.xlu0 %379
  %381 = vrot.lane.b32.xlu0 %v344, 6
  %v382 = vpop.permute.xlu0 %381
  %383 = vrot.lane.b32.xlu0 %v345, 6
  %v384 = vpop.permute.xlu0 %383
  %385 = vrot.lane.b32.xlu0 %v346, 6
  %v386 = vpop.permute.xlu0 %385
  %387 = vrot.lane.b32.xlu0 %v347, 6
  %v388 = vpop.permute.xlu0 %387
  %389 = vrot.lane.b32.xlu0 %v348, 6
  %v390 = vpop.permute.xlu0 %389
  %391 = vrot.lane.b32.xlu0 %v349, 6
  %v392 = vpop.permute.xlu0 %391
  %393 = vrot.lane.b32.xlu0 %v350, 6
  %v394 = vpop.permute.xlu0 %393
  %395 = vrot.lane.b32.xlu0 %v351, 6
  %v396 = vpop.permute.xlu0 %395
  %397 = vrot.lane.b32.xlu0 %v352, 6
  %v398 = vpop.permute.xlu0 %397
  %399 = vrot.lane.b32.xlu0 %v353, 6
  %v400 = vpop.permute.xlu0 %399
  %401 = vrot.lane.b32.xlu0 %v354, 6
  %v402 = vpop.permute.xlu0 %401
  %vm419 = vcmask 72752
  %420 = vst.msk [vmem:[%s4] sm:$0xff] %vm419, %v372
  %421 = vst.msk [vmem:[%s4 + $0x8] sm:$0xff] %vm419, %v374
  %422 = vst.msk [vmem:[%s4 + $0x10] sm:$0xff] %vm419, %v376
  %423 = vst.msk [vmem:[%s4 + $0x18] sm:$0xff] %vm419, %v378
  %424 = vst.msk [vmem:[%s4 + $0x20] sm:$0xff] %vm419, %v380
  %425 = vst.msk [vmem:[%s4 + $0x28] sm:$0xff] %vm419, %v382
  %426 = vst.msk [vmem:[%s4 + $0x30] sm:$0xff] %vm419, %v384
  %427 = vst.msk [vmem:[%s4 + $0x38] sm:$0xff] %vm419, %v386
  %428 = vst.msk [vmem:[%s4 + $0x40] sm:$0xff] %vm419, %v388
  %429 = vst.msk [vmem:[%s4 + $0x48] sm:$0xff] %vm419, %v390
  %430 = vst.msk [vmem:[%s4 + $0x50] sm:$0xff] %vm419, %v392
  %431 = vst.msk [vmem:[%s4 + $0x58] sm:$0xff] %vm419, %v394
  %432 = vst.msk [vmem:[%s4 + $0x60] sm:$0xff] %vm419, %v396
  %433 = vst.msk [vmem:[%s4 + $0x68] sm:$0xff] %vm419, %v398
  %434 = vst.msk [vmem:[%s4 + $0x70] sm:$0xff] %vm419, %v400
  %435 = vst.msk [vmem:[%s4 + $0x78] sm:$0xff] %vm419, %v402
  %v436 = vsub.f32 %v162, %v49
  %v437 = vsub.f32 %v163, %v50
  %v438 = vsub.f32 %v164, %v51
  %v439 = vsub.f32 %v165, %v52
  %v440 = vsub.f32 %v166, %v53
  %v441 = vsub.f32 %v167, %v54
  %v442 = vsub.f32 %v168, %v55
  %v443 = vsub.f32 %v169, %v56
  %v444 = vsub.f32 %v170, %v57
  %v445 = vsub.f32 %v171, %v58
  %v446 = vsub.f32 %v172, %v59
  %v447 = vsub.f32 %v173, %v60
  %v448 = vsub.f32 %v174, %v61
  %v449 = vsub.f32 %v175, %v62
  %v450 = vsub.f32 %v176, %v63
  %v451 = vsub.f32 %v177, %v64
  %v452 = vadd.f32 %v436, %v65
  %v453 = vadd.f32 %v437, %v66
  %v454 = vadd.f32 %v438, %v67
  %v455 = vadd.f32 %v439, %v68
  %v456 = vadd.f32 %v440, %v69
  %v457 = vadd.f32 %v441, %v70
  %v458 = vadd.f32 %v442, %v71
  %v459 = vadd.f32 %v443, %v72
  %v460 = vadd.f32 %v444, %v73
  %v461 = vadd.f32 %v445, %v74
  %v462 = vadd.f32 %v446, %v75
  %v463 = vadd.f32 %v447, %v76
  %v464 = vadd.f32 %v448, %v77
  %v465 = vadd.f32 %v449, %v78
  %v466 = vadd.f32 %v450, %v79
  %v467 = vadd.f32 %v451, %v80
  %v468 = vmul.f32 %v452, 0.25
  %v469 = vmul.f32 %v453, 0.25
  %v470 = vmul.f32 %v454, 0.25
  %v471 = vmul.f32 %v455, 0.25
  %v472 = vmul.f32 %v456, 0.25
  %v473 = vmul.f32 %v457, 0.25
  %v474 = vmul.f32 %v458, 0.25
  %v475 = vmul.f32 %v459, 0.25
  %v476 = vmul.f32 %v460, 0.25
  %v477 = vmul.f32 %v461, 0.25
  %v478 = vmul.f32 %v462, 0.25
  %v479 = vmul.f32 %v463, 0.25
  %v480 = vmul.f32 %v464, 0.25
  %v481 = vmul.f32 %v465, 0.25
  %v482 = vmul.f32 %v466, 0.25
  %v483 = vmul.f32 %v467, 0.25
  %500 = vrot.lane.b32.xlu0 %v468, 9
  %v501 = vpop.permute.xlu0 %500
  %502 = vrot.lane.b32.xlu0 %v469, 9
  %v503 = vpop.permute.xlu0 %502
  %504 = vrot.lane.b32.xlu0 %v470, 9
  %v505 = vpop.permute.xlu0 %504
  %506 = vrot.lane.b32.xlu0 %v471, 9
  %v507 = vpop.permute.xlu0 %506
  %508 = vrot.lane.b32.xlu0 %v472, 9
  %v509 = vpop.permute.xlu0 %508
  %510 = vrot.lane.b32.xlu0 %v473, 9
  %v511 = vpop.permute.xlu0 %510
  %512 = vrot.lane.b32.xlu0 %v474, 9
  %v513 = vpop.permute.xlu0 %512
  %514 = vrot.lane.b32.xlu0 %v475, 9
  %v515 = vpop.permute.xlu0 %514
  %516 = vrot.lane.b32.xlu0 %v476, 9
  %v517 = vpop.permute.xlu0 %516
  %518 = vrot.lane.b32.xlu0 %v477, 9
  %v519 = vpop.permute.xlu0 %518
  %520 = vrot.lane.b32.xlu0 %v478, 9
  %v521 = vpop.permute.xlu0 %520
  %522 = vrot.lane.b32.xlu0 %v479, 9
  %v523 = vpop.permute.xlu0 %522
  %524 = vrot.lane.b32.xlu0 %v480, 9
  %v525 = vpop.permute.xlu0 %524
  %526 = vrot.lane.b32.xlu0 %v481, 9
  %v527 = vpop.permute.xlu0 %526
  %528 = vrot.lane.b32.xlu0 %v482, 9
  %v529 = vpop.permute.xlu0 %528
  %530 = vrot.lane.b32.xlu0 %v483, 9
  %v531 = vpop.permute.xlu0 %530
  %vm548 = vcmask 97352
  %549 = vst.msk [vmem:[%s4] sm:$0xff] %vm548, %v501
  %550 = vst.msk [vmem:[%s4 + $0x8] sm:$0xff] %vm548, %v503
  %551 = vst.msk [vmem:[%s4 + $0x10] sm:$0xff] %vm548, %v505
  %552 = vst.msk [vmem:[%s4 + $0x18] sm:$0xff] %vm548, %v507
  %553 = vst.msk [vmem:[%s4 + $0x20] sm:$0xff] %vm548, %v509
  %554 = vst.msk [vmem:[%s4 + $0x28] sm:$0xff] %vm548, %v511
  %555 = vst.msk [vmem:[%s4 + $0x30] sm:$0xff] %vm548, %v513
  %556 = vst.msk [vmem:[%s4 + $0x38] sm:$0xff] %vm548, %v515
  %557 = vst.msk [vmem:[%s4 + $0x40] sm:$0xff] %vm548, %v517
  %558 = vst.msk [vmem:[%s4 + $0x48] sm:$0xff] %vm548, %v519
  %559 = vst.msk [vmem:[%s4 + $0x50] sm:$0xff] %vm548, %v521
  %560 = vst.msk [vmem:[%s4 + $0x58] sm:$0xff] %vm548, %v523
  %561 = vst.msk [vmem:[%s4 + $0x60] sm:$0xff] %vm548, %v525
  %562 = vst.msk [vmem:[%s4 + $0x68] sm:$0xff] %vm548, %v527
  %563 = vst.msk [vmem:[%s4 + $0x70] sm:$0xff] %vm548, %v529
  %564 = vst.msk [vmem:[%s4 + $0x78] sm:$0xff] %vm548, %v531
  // Predicated region
  $region18: #{sainet_forward.10} parent=0 // pred_check
    _
  $region19: #{sainet_forward.10} parent=0 // pred_check_branch
    %566 = sbr.rel (0) target = $region21
  $region20: #{sainet_forward.10} parent=0 // pred_region
    _
  $region21: #{sainet_forward.10} parent=0 // pred_fallthru
    _
  // Predicated region
  $region22: #{sainet_forward.10} parent=0 // pred_check
    _
  $region23: #{sainet_forward.10} parent=0 // pred_check_branch
    %568 = sbr.rel (0) target = $region25
  $region24: #{sainet_forward.10} parent=0 // pred_region
    _
  $region25: #{sainet_forward.10} parent=0 // pred_fallthru
    _

// kernel: sainet_forward.11
$region0: #{sainet_forward.11}
  #allocation0 [shape = 'u32[]', space=smem, size = 0x4, offset = 0x4, fixed_abs, tag = 'smem constant byte address 0x4 - core index']
  #allocation1 [shape = 'u32[144,128]{1,0:T(1,128)}', space=vmem, size = 0x12000, scoped, tag = 'internal scratch']
  %s0 = inlined_call_operand.vmem [shape: f32[32,12], index: 0, kind: input, shape index: {}]
  %s1 = inlined_call_operand.vmem [shape: f32[32,12], index: 1, kind: input, shape index: {}]
  %s2 = inlined_call_operand.vmem [shape: f32[32,12], index: 2, kind: input, shape index: {}]
  %s3 = inlined_call_operand.vmem [shape: f32[32,12], index: 3, kind: input, shape index: {}]
  %s4 = inlined_call_operand.vmem [shape: f32[32,48], index: 4, kind: output, shape index: {}]
  %s5 = sld [smem:[#allocation0]]
  $region26: #{sainet_forward.11} parent=0
    _
  %s7 = ssub.s32 1, %s5
  %s8 = scalar_select 0, %s7, %s5
  // Predicated region
  $region2: #{sainet_forward.11} parent=0 // pred_check
    _
  $region3: #{sainet_forward.11} parent=0 // pred_check_branch
    %10 = sbr.rel (0) target = $region5
  $region4: #{sainet_forward.11} parent=0 // pred_region
    _
  $region5: #{sainet_forward.11} parent=0 // pred_fallthru
    _
  // Predicated region
  $region6: #{sainet_forward.11} parent=0 // pred_check
    _
  $region7: #{sainet_forward.11} parent=0 // pred_check_branch
    %12 = sbr.rel (0) target = $region9
  $region8: #{sainet_forward.11} parent=0 // pred_region
    _
  $region9: #{sainet_forward.11} parent=0 // pred_fallthru
    _
  // Predicated region
  $region10: #{sainet_forward.11} parent=0 // pred_check
    _
  $region11: #{sainet_forward.11} parent=0 // pred_check_branch
    %14 = sbr.rel (0) target = $region13
  $region12: #{sainet_forward.11} parent=0 // pred_region
    _
  $region13: #{sainet_forward.11} parent=0 // pred_fallthru
    _
  // Predicated region
  $region14: #{sainet_forward.11} parent=0 // pred_check
    _
  $region15: #{sainet_forward.11} parent=0 // pred_check_branch
    %16 = sbr.rel (0) target = $region17
  $region16: #{sainet_forward.11} parent=0 // pred_region
    _
  $region17: #{sainet_forward.11} parent=0 // pred_fallthru
    _
  %v17 = vld [vmem:[%s0] sm:$0xff]
  %v18 = vld [vmem:[%s0 + $0x8] sm:$0xff]
  %v19 = vld [vmem:[%s0 + $0x10] sm:$0xff]
  %v20 = vld [vmem:[%s0 + $0x18] sm:$0xff]
  %v21 = vld [vmem:[%s1] sm:$0xff]
  %v22 = vld [vmem:[%s1 + $0x8] sm:$0xff]
  %v23 = vld [vmem:[%s1 + $0x10] sm:$0xff]
  %v24 = vld [vmem:[%s1 + $0x18] sm:$0xff]
  %v25 = vld [vmem:[%s2] sm:$0xff]
  %v26 = vld [vmem:[%s2 + $0x8] sm:$0xff]
  %v27 = vld [vmem:[%s2 + $0x10] sm:$0xff]
  %v28 = vld [vmem:[%s2 + $0x18] sm:$0xff]
  %v29 = vld [vmem:[%s3] sm:$0xff]
  %v30 = vld [vmem:[%s3 + $0x8] sm:$0xff]
  %v31 = vld [vmem:[%s3 + $0x10] sm:$0xff]
  %v32 = vld [vmem:[%s3 + $0x18] sm:$0xff]
  %v33 = vadd.f32 %v17, %v21
  %v34 = vadd.f32 %v18, %v22
  %v35 = vadd.f32 %v19, %v23
  %v36 = vadd.f32 %v20, %v24
  %v37 = vadd.f32 %v33, %v25
  %v38 = vadd.f32 %v34, %v26
  %v39 = vadd.f32 %v35, %v27
  %v40 = vadd.f32 %v36, %v28
  %v41 = vadd.f32 %v37, %v29
  %v42 = vadd.f32 %v38, %v30
  %v43 = vadd.f32 %v39, %v31
  %v44 = vadd.f32 %v40, %v32
  %v45 = vmul.f32 %v41, 0.25
  %v46 = vmul.f32 %v42, 0.25
  %v47 = vmul.f32 %v43, 0.25
  %v48 = vmul.f32 %v44, 0.25
  %vm49 = vcmask 97280
  %50 = vst.msk [vmem:[%s4] sm:$0xff] %vm49, %v45
  %51 = vst.msk [vmem:[%s4 + $0x8] sm:$0xff] %vm49, %v46
  %52 = vst.msk [vmem:[%s4 + $0x10] sm:$0xff] %vm49, %v47
  %53 = vst.msk [vmem:[%s4 + $0x18] sm:$0xff] %vm49, %v48
  %v54 = vsub.f32 %v17, %v21
  %v55 = vsub.f32 %v18, %v22
  %v56 = vsub.f32 %v19, %v23
  %v57 = vsub.f32 %v20, %v24
  %v58 = vadd.f32 %v54, %v25
  %v59 = vadd.f32 %v55, %v26
  %v60 = vadd.f32 %v56, %v27
  %v61 = vadd.f32 %v57, %v28
  %v62 = vsub.f32 %v58, %v29
  %v63 = vsub.f32 %v59, %v30
  %v64 = vsub.f32 %v60, %v31
  %v65 = vsub.f32 %v61, %v32
  %v66 = vmul.f32 %v62, 0.25
  %v67 = vmul.f32 %v63, 0.25
  %v68 = vmul.f32 %v64, 0.25
  %v69 = vmul.f32 %v65, 0.25
  %74 = vrot.lane.b32.xlu0 %v66, 12
  %v75 = vpop.permute.xlu0 %74
  %76 = vrot.lane.b32.xlu0 %v67, 12
  %v77 = vpop.permute.xlu0 %76
  %78 = vrot.lane.b32.xlu0 %v68, 12
  %v79 = vpop.permute.xlu0 %78
  %80 = vrot.lane.b32.xlu0 %v69, 12
  %v81 = vpop.permute.xlu0 %80
  %vm86 = vcmask 195680
  %87 = vst.msk [vmem:[%s4] sm:$0xff] %vm86, %v75
  %88 = vst.msk [vmem:[%s4 + $0x8] sm:$0xff] %vm86, %v77
  %89 = vst.msk [vmem:[%s4 + $0x10] sm:$0xff] %vm86, %v79
  %90 = vst.msk [vmem:[%s4 + $0x18] sm:$0xff] %vm86, %v81
  %v91 = vsub.f32 %v33, %v25
  %v92 = vsub.f32 %v34, %v26
  %v93 = vsub.f32 %v35, %v27
  %v94 = vsub.f32 %v36, %v28
  %v95 = vsub.f32 %v91, %v29
  %v96 = vsub.f32 %v92, %v30
  %v97 = vsub.f32 %v93, %v31
  %v98 = vsub.f32 %v94, %v32
  %v99 = vmul.f32 %v95, 0.25
  %v100 = vmul.f32 %v96, 0.25
  %v101 = vmul.f32 %v97, 0.25
  %v102 = vmul.f32 %v98, 0.25
  %107 = vrot.lane.b32.xlu0 %v99, 24
  %v108 = vpop.permute.xlu0 %107
  %109 = vrot.lane.b32.xlu0 %v100, 24
  %v110 = vpop.permute.xlu0 %109
  %111 = vrot.lane.b32.xlu0 %v101, 24
  %v112 = vpop.permute.xlu0 %111
  %113 = vrot.lane.b32.xlu0 %v102, 24
  %v114 = vpop.permute.xlu0 %113
  %vm119 = vcmask 294080
  %120 = vst.msk [vmem:[%s4] sm:$0xff] %vm119, %v108
  %121 = vst.msk [vmem:[%s4 + $0x8] sm:$0xff] %vm119, %v110
  %122 = vst.msk [vmem:[%s4 + $0x10] sm:$0xff] %vm119, %v112
  %123 = vst.msk [vmem:[%s4 + $0x18] sm:$0xff] %vm119, %v114
  %v124 = vsub.f32 %v54, %v25
  %v125 = vsub.f32 %v55, %v26
  %v126 = vsub.f32 %v56, %v27
  %v127 = vsub.f32 %v57, %v28
  %v128 = vadd.f32 %v124, %v29
  %v129 = vadd.f32 %v125, %v30
  %v130 = vadd.f32 %v126, %v31
  %v131 = vadd.f32 %v127, %v32
  %v132 = vmul.f32 %v128, 0.25
  %v133 = vmul.f32 %v129, 0.25
  %v134 = vmul.f32 %v130, 0.25
  %v135 = vmul.f32 %v131, 0.25
  %140 = vrot.lane.b32.xlu0 %v132, 36
  %v141 = vpop.permute.xlu0 %140
  %142 = vrot.lane.b32.xlu0 %v133, 36
  %v143 = vpop.permute.xlu0 %142
  %144 = vrot.lane.b32.xlu0 %v134, 36
  %v145 = vpop.permute.xlu0 %144
  %146 = vrot.lane.b32.xlu0 %v135, 36
  %v147 = vpop.permute.xlu0 %146
  %vm152 = vcmask 392480
  %153 = vst.msk [vmem:[%s4] sm:$0xff] %vm152, %v141
  %154 = vst.msk [vmem:[%s4 + $0x8] sm:$0xff] %vm152, %v143
  %155 = vst.msk [vmem:[%s4 + $0x10] sm:$0xff] %vm152, %v145
  %156 = vst.msk [vmem:[%s4 + $0x18] sm:$0xff] %vm152, %v147
  // Predicated region
  $region18: #{sainet_forward.11} parent=0 // pred_check
    _
  $region19: #{sainet_forward.11} parent=0 // pred_check_branch
    %158 = sbr.rel (0) target = $region21
  $region20: #{sainet_forward.11} parent=0 // pred_region
    _
  $region21: #{sainet_forward.11} parent=0 // pred_fallthru
    _
  // Predicated region
  $region22: #{sainet_forward.11} parent=0 // pred_check
    _
  $region23: #{sainet_forward.11} parent=0 // pred_check_branch
    %160 = sbr.rel (0) target = $region25
  $region24: #{sainet_forward.11} parent=0 // pred_region
    _
  $region25: #{sainet_forward.11} parent=0 // pred_fallthru
    _

// kernel: sainet_forward.16
$region0: #{sainet_forward.16}
  #allocation0 [shape = 'u32[]', space=smem, size = 0x4, offset = 0x4, fixed_abs, tag = 'smem constant byte address 0x4 - core index']
  #allocation1 [shape = 'u32[144,128]{1,0:T(1,128)}', space=vmem, size = 0x12000, scoped, tag = 'internal scratch']
  #allocation2 [shape = 'f32[26,45]{1,0:T(8,128)}', space=vmem, size = 0x4000, scoped, tag = 'scratch operand']
  %s0 = inlined_call_operand.vmem [shape: f32[2,16,48], index: 0, kind: input, shape index: {}]
  %s1 = inlined_call_operand.vmem [shape: f32[9,16,1], index: 1, kind: input, shape index: {}]
  %s2 = inlined_call_operand.vmem [shape: bf16[9,45,6], index: 2, kind: input, shape index: {}]
  %s3 = inlined_call_operand.vmem [shape: f32[1,6], index: 3, kind: input, shape index: {}]
  %s4 = inlined_call_operand.vmem [shape: bf16[9,3,90], index: 4, kind: input, shape index: {}]
  %s5 = inlined_call_operand.vmem [shape: f32[1,90], index: 5, kind: input, shape index: {}]
  %s6 = inlined_call_operand.vmem [shape: f32[2,16,48], index: 6, kind: output, shape index: {0}]
  %s7 = inlined_call_operand.vmem [shape: f32[2,16,3], index: 7, kind: output, shape index: {1}]
  %8 = xla_tuple %s6, %s7
  %s9 = sld [smem:[#allocation0]]
  $region65: #{sainet_forward.16} parent=0
    _
  %s11 = ssub.s32 1, %s9
  %s12 = scalar_select 0, %s11, %s9
  loop: start=0, step=1, limit=4
  $region2: #{sainet_forward.16} parent=0 // loop_pre_header
    _
  $region3: #{sainet_forward.16} parent=0 // loop_header
    %s14 = sphi 0, %s18
    %p15 = scmp.ge.s32.totalorder %s14, 4
    %s24 = sphi 0, %s26
    %s27 = sphi 0, %s24
    %s28 = sphi 0, %s27
    %s44 = sphi 0, %s28
    %s48 = sphi 0, %s48
    %s50 = sphi 0, %s48
    %s51 = sphi 0, %s50
    %s65 = sphi 0, %s51
    %s69 = sphi 0, %s69
    %s71 = sphi 0, %s69
    %s72 = sphi 0, %s71
    %s86 = sphi 0, %s72
    %s90 = sphi 0, %s90
    %s92 = sphi 0, %s90
    %s93 = sphi 0, %s92
    %s107 = sphi 0, %s93
    %s111 = sphi 0, %s111
    %s113 = sphi 0, %s111
    %s114 = sphi 0, %s113
    %s128 = sphi 0, %s114
    %s132 = sphi 0, %s132
    %s134 = sphi 0, %s132
    %s135 = sphi 0, %s134
    %s149 = sphi 0, %s135
    %s155 = sphi 0, %s157
    %s158 = sphi 0, %s155
    %s159 = sphi 0, %s158
    %s175 = sphi 0, %s159
    %s181 = sphi 0, %s183
    %s184 = sphi 0, %s181
    %s185 = sphi 0, %s184
    %s201 = sphi 0, %s185
  $region4: #{sainet_forward.16} parent=0 // loop_header_branch
    %17 = sbr.rel (%p15) target = $region8
  $region5: #{sainet_forward.16} parent=0 // loop_body
    %s19 = ssub.s32 %s14, 1
    %s20 = ssub.s32 %s14, 2
    %s21 = sadd.s32 %s14, 1
    %s22 = ssub.s32 %s14, %s21
    %p23 = scmp.eq.s32.totalorder %s22, 0
    %s25 = sadd.s32 %s24, 1
    %s26 = scalar_select %p23, %s24, %s25
    %p29 = pneg %p23
    %p30 = scmp.eq.s32.totalorder %s14, 1
    %p31 = por %p29, %p30
    %p32 = scmp.ne.s32.totalorder %s24, %s27
    %p33 = scmp.eq.s32.totalorder %s14, 0
    %p34 = por %p32, %p33
    %p35 = scmp.ne.s32.totalorder %s24, %s27
    %p36 = scmp.eq.s32.totalorder %s19, 1
    %p37 = por %p35, %p36
    %p38 = scmp.ne.s32.totalorder %s27, %s28
    %p39 = scmp.eq.s32.totalorder %s19, 0
    %p40 = por %p38, %p39
    %p41 = scmp.ne.s32.totalorder %s27, %s28
    %p42 = scmp.eq.s32.totalorder %s20, 1
    %p43 = por %p41, %p42
    %p45 = scmp.ne.s32.totalorder %s28, %s44
    %p46 = scmp.eq.s32.totalorder %s20, 0
    %p47 = por %p45, %p46
    %s49 = sadd.s32 %s48, 1
    %p52 = scmp.eq.s32.totalorder %s14, 1
    %p53 = scmp.ne.s32.totalorder %s48, %s50
    %p54 = scmp.eq.s32.totalorder %s14, 0
    %p55 = por %p53, %p54
    %p56 = scmp.ne.s32.totalorder %s48, %s50
    %p57 = scmp.eq.s32.totalorder %s19, 1
    %p58 = por %p56, %p57
    %p59 = scmp.ne.s32.totalorder %s50, %s51
    %p60 = scmp.eq.s32.totalorder %s19, 0
    %p61 = por %p59, %p60
    %p62 = scmp.ne.s32.totalorder %s50, %s51
    %p63 = scmp.eq.s32.totalorder %s20, 1
    %p64 = por %p62, %p63
    %p66 = scmp.ne.s32.totalorder %s51, %s65
    %p67 = scmp.eq.s32.totalorder %s20, 0
    %p68 = por %p66, %p67
    %s70 = sadd.s32 %s69, 1
    %p73 = scmp.eq.s32.totalorder %s14, 1
    %p74 = scmp.ne.s32.totalorder %s69, %s71
    %p75 = scmp.eq.s32.totalorder %s14, 0
    %p76 = por %p74, %p75
    %p77 = scmp.ne.s32.totalorder %s69, %s71
    %p78 = scmp.eq.s32.totalorder %s19, 1
    %p79 = por %p77, %p78
    %p80 = scmp.ne.s32.totalorder %s71, %s72
    %p81 = scmp.eq.s32.totalorder %s19, 0
    %p82 = por %p80, %p81
    %p83 = scmp.ne.s32.totalorder %s71, %s72
    %p84 = scmp.eq.s32.totalorder %s20, 1
    %p85 = por %p83, %p84
    %p87 = scmp.ne.s32.totalorder %s72, %s86
    %p88 = scmp.eq.s32.totalorder %s20, 0
    %p89 = por %p87, %p88
    %s91 = sadd.s32 %s90, 1
    %p94 = scmp.eq.s32.totalorder %s14, 1
    %p95 = scmp.ne.s32.totalorder %s90, %s92
    %p96 = scmp.eq.s32.totalorder %s14, 0
    %p97 = por %p95, %p96
    %p98 = scmp.ne.s32.totalorder %s90, %s92
    %p99 = scmp.eq.s32.totalorder %s19, 1
    %p100 = por %p98, %p99
    %p101 = scmp.ne.s32.totalorder %s92, %s93
    %p102 = scmp.eq.s32.totalorder %s19, 0
    %p103 = por %p101, %p102
    %p104 = scmp.ne.s32.totalorder %s92, %s93
    %p105 = scmp.eq.s32.totalorder %s20, 1
    %p106 = por %p104, %p105
    %p108 = scmp.ne.s32.totalorder %s93, %s107
    %p109 = scmp.eq.s32.totalorder %s20, 0
    %p110 = por %p108, %p109
    %s112 = sadd.s32 %s111, 1
    %p115 = scmp.eq.s32.totalorder %s14, 1
    %p116 = scmp.ne.s32.totalorder %s111, %s113
    %p117 = scmp.eq.s32.totalorder %s14, 0
    %p118 = por %p116, %p117
    %p119 = scmp.ne.s32.totalorder %s111, %s113
    %p120 = scmp.eq.s32.totalorder %s19, 1
    %p121 = por %p119, %p120
    %p122 = scmp.ne.s32.totalorder %s113, %s114
    %p123 = scmp.eq.s32.totalorder %s19, 0
    %p124 = por %p122, %p123
    %p125 = scmp.ne.s32.totalorder %s113, %s114
    %p126 = scmp.eq.s32.totalorder %s20, 1
    %p127 = por %p125, %p126
    %p129 = scmp.ne.s32.totalorder %s114, %s128
    %p130 = scmp.eq.s32.totalorder %s20, 0
    %p131 = por %p129, %p130
    %s133 = sadd.s32 %s132, 1
    %p136 = scmp.eq.s32.totalorder %s14, 1
    %p137 = scmp.ne.s32.totalorder %s132, %s134
    %p138 = scmp.eq.s32.totalorder %s14, 0
    %p139 = por %p137, %p138
    %p140 = scmp.ne.s32.totalorder %s132, %s134
    %p141 = scmp.eq.s32.totalorder %s19, 1
    %p142 = por %p140, %p141
    %p143 = scmp.ne.s32.totalorder %s134, %s135
    %p144 = scmp.eq.s32.totalorder %s19, 0
    %p145 = por %p143, %p144
    %p146 = scmp.ne.s32.totalorder %s134, %s135
    %p147 = scmp.eq.s32.totalorder %s20, 1
    %p148 = por %p146, %p147
    %p150 = scmp.ne.s32.totalorder %s135, %s149
    %p151 = scmp.eq.s32.totalorder %s20, 0
    %p152 = por %p150, %p151
    %s153 = ssub.s32 %s14, %s21
    %p154 = scmp.eq.s32.totalorder %s153, 0
    %s156 = sadd.s32 %s155, 1
    %s157 = scalar_select %p154, %s155, %s156
    %p160 = pneg %p154
    %p161 = scmp.eq.s32.totalorder %s14, 1
    %p162 = por %p160, %p161
    %p163 = scmp.ne.s32.totalorder %s155, %s158
    %p164 = scmp.eq.s32.totalorder %s14, 0
    %p165 = por %p163, %p164
    %p166 = scmp.ne.s32.totalorder %s155, %s158
    %p167 = scmp.eq.s32.totalorder %s19, 1
    %p168 = por %p166, %p167
    %p169 = scmp.ne.s32.totalorder %s158, %s159
    %p170 = scmp.eq.s32.totalorder %s19, 0
    %p171 = por %p169, %p170
    %p172 = scmp.ne.s32.totalorder %s158, %s159
    %p173 = scmp.eq.s32.totalorder %s20, 1
    %p174 = por %p172, %p173
    %p176 = scmp.ne.s32.totalorder %s159, %s175
    %p177 = scmp.eq.s32.totalorder %s20, 0
    %p178 = por %p176, %p177
    %s179 = ssub.s32 %s14, %s21
    %p180 = scmp.eq.s32.totalorder %s179, 0
    %s182 = sadd.s32 %s181, 1
    %s183 = scalar_select %p180, %s181, %s182
    %p186 = pneg %p180
    %p187 = scmp.eq.s32.totalorder %s14, 1
    %p188 = por %p186, %p187
    %p189 = scmp.ne.s32.totalorder %s181, %s184
    %p190 = scmp.eq.s32.totalorder %s14, 0
    %p191 = por %p189, %p190
    %p192 = scmp.ne.s32.totalorder %s181, %s184
    %p193 = scmp.eq.s32.totalorder %s19, 1
    %p194 = por %p192, %p193
    %p195 = scmp.ne.s32.totalorder %s184, %s185
    %p196 = scmp.eq.s32.totalorder %s19, 0
    %p197 = por %p195, %p196
    %p198 = scmp.ne.s32.totalorder %s184, %s185
    %p199 = scmp.eq.s32.totalorder %s20, 1
    %p200 = por %p198, %p199
    %p202 = scmp.ne.s32.totalorder %s185, %s201
    %p203 = scmp.eq.s32.totalorder %s20, 0
    %p204 = por %p202, %p203
    %p205 = scmp.le.s32.totalorder 1, %s14
    %p206 = scmp.lt.s32.totalorder %s14, 3
    %p207 = pnand %p205, %p206
    %p208 = pneg %p207
    // Predicated region
    $region9: #{sainet_forward.16} parent=5 // pred_check
      _
    $region10: #{sainet_forward.16} parent=5 // pred_check_branch
      %210 = sbr.rel (%p207) target = $region12
    $region11: #{sainet_forward.16} parent=5 // pred_region
      %s211 = ssub.s32 %s14, 1
      // Predicated region
      $region13: #{sainet_forward.16} parent=11 // pred_check
        %p212 = pneg %p61
      $region14: #{sainet_forward.16} parent=11 // pred_check_branch
        %214 = sbr.rel (%p212) target = $region16
      $region15: #{sainet_forward.16} parent=11 // pred_region
        _
      $region16: #{sainet_forward.16} parent=11 // pred_fallthru
        _
      // Predicated region
      $region17: #{sainet_forward.16} parent=11 // pred_check
        %p215 = pneg %p82
      $region18: #{sainet_forward.16} parent=11 // pred_check_branch
        %217 = sbr.rel (%p215) target = $region20
      $region19: #{sainet_forward.16} parent=11 // pred_region
        _
      $region20: #{sainet_forward.16} parent=11 // pred_fallthru
        _
      // Predicated region
      $region21: #{sainet_forward.16} parent=11 // pred_check
        %p218 = pneg %p103
      $region22: #{sainet_forward.16} parent=11 // pred_check_branch
        %220 = sbr.rel (%p218) target = $region24
      $region23: #{sainet_forward.16} parent=11 // pred_region
        _
      $region24: #{sainet_forward.16} parent=11 // pred_fallthru
        _
      // Predicated region
      $region25: #{sainet_forward.16} parent=11 // pred_check
        %p221 = pneg %p124
      $region26: #{sainet_forward.16} parent=11 // pred_check_branch
        %223 = sbr.rel (%p221) target = $region28
      $region27: #{sainet_forward.16} parent=11 // pred_region
        _
      $region28: #{sainet_forward.16} parent=11 // pred_fallthru
        _
      // Predicated region
      $region29: #{sainet_forward.16} parent=11 // pred_check
        %p224 = pneg %p145
      $region30: #{sainet_forward.16} parent=11 // pred_check_branch
        %226 = sbr.rel (%p224) target = $region32
      $region31: #{sainet_forward.16} parent=11 // pred_region
        _
      $region32: #{sainet_forward.16} parent=11 // pred_fallthru
        _
    $region12: #{sainet_forward.16} parent=5 // pred_fallthru
      _
    %p227 = scmp.lt.s32.totalorder %s14, 2
    // Predicated region
    $region33: #{sainet_forward.16} parent=5 // pred_check
      %p228 = pneg %p227
    $region34: #{sainet_forward.16} parent=5 // pred_check_branch
      %230 = sbr.rel (%p228) target = $region36
    $region35: #{sainet_forward.16} parent=5 // pred_region
      // Predicated region
      $region37: #{sainet_forward.16} parent=35 // pred_check
        %p231 = pneg %p34
      $region38: #{sainet_forward.16} parent=35 // pred_check_branch
        %233 = sbr.rel (%p231) target = $region40
      $region39: #{sainet_forward.16} parent=35 // pred_region
        %p234 = scmp.lt.s32.totalorder %s14, 1
        %s235 = scalar_select %p234, %s14, 1
        %s236 = smul.addr %s235, 2
        %s237 = smul.addr %s236, 8
        %s238 = scalar_lea.vmem %s0, %s237
      $region40: #{sainet_forward.16} parent=35 // pred_fallthru
        _
    $region36: #{sainet_forward.16} parent=5 // pred_fallthru
      _
    %p239 = scmp.le.s32.totalorder 1, %s14
    %p240 = scmp.lt.s32.totalorder %s14, 3
    %p241 = pnand %p239, %p240
    %p242 = pneg %p241
    // Predicated region
    $region41: #{sainet_forward.16} parent=5 // pred_check
      _
    $region42: #{sainet_forward.16} parent=5 // pred_check_branch
      %244 = sbr.rel (%p241) target = $region44
    $region43: #{sainet_forward.16} parent=5 // pred_region
      %s245 = ssub.s32 %s14, 1
      %p246 = scmp.lt.s32.totalorder %s19, 1
      %s247 = scalar_select %p246, %s19, 1
      %s248 = smul.addr %s247, 2
      %s249 = smul.addr %s248, 8
      %s250 = scalar_lea.vmem %s0, %s249
      %p251 = pneg %p40
      %p252 = pneg %p37
      %p253 = pneg %p61
      %p254 = pneg %p58
      %p255 = pneg %p82
      %p256 = pneg %p79
      %p257 = pneg %p103
      %p258 = pneg %p100
      %p259 = pneg %p124
      %p260 = pneg %p121
      %p261 = pneg %p145
      %p262 = pneg %p142
      %p263 = pneg %p171
      %p264 = pneg %p168
      %p265 = scmp.lt.s32.totalorder %s19, 1
      %s266 = scalar_select %p265, %s19, 1
      %s267 = smul.addr %s266, 2
      %s268 = smul.addr %s267, 8
      %s269 = scalar_lea.vmem %s6, %s268
      %p270 = pneg %p197
      %p271 = pneg %p194
      %p272 = scmp.lt.s32.totalorder %s19, 1
      %s273 = scalar_select %p272, %s19, 1
      %s274 = smul.addr %s273, 2
      %s275 = smul.addr %s274, 8
      %s276 = scalar_lea.vmem %s7, %s275
      %p277 = scmp.lt.s32.totalorder %s19, 1
      %s278 = scalar_select %p277, %s19, 1
      %s279 = smul.addr %s278, 2
      %s280 = smul.addr %s279, 8
      %s281 = scalar_lea.vmem %s0, %s280
      %p282 = scmp.lt.s32.totalorder %s19, 1
      %s283 = scalar_select %p282, %s19, 1
      %s284 = smul.addr %s283, 2
      %s285 = smul.addr %s284, 8
      %s286 = scalar_lea.vmem %s6, %s285
      %p287 = scmp.lt.s32.totalorder %s19, 1
      %s288 = scalar_select %p287, %s19, 1
      %s289 = smul.addr %s288, 2
      %s290 = smul.addr %s289, 8
      %s291 = scalar_lea.vmem %s7, %s290
      %vm293 = vcmask 367616
      %294 = vst.msk [vmem:[#allocation2] sm:$0xff] %vm293, 0.0
      %295 = vst.msk [vmem:[#allocation2 + $0x8] sm:$0xff] %vm293, 0.0
      %296 = vst.msk [vmem:[#allocation2 + $0x10] sm:$0xff] %vm293, 0.0
      %vm297 = vcmask 361472
      %298 = vst.msk [vmem:[#allocation2 + $0x18] sm:$0x3] %vm297, 0.0
      %v299 = vld [vmem:[%s1] sm:$0xff]
      %v300 = vld [vmem:[%s1 + $0x8] sm:$0xff]
      %v301 = vld [vmem:[%s1 + $0x10] sm:$0xff]
      %v302 = vld [vmem:[%s1 + $0x18] sm:$0xff]
      %v303 = vld [vmem:[%s1 + $0x20] sm:$0xff]
      %v304 = vld [vmem:[%s1 + $0x28] sm:$0xff]
      %v305 = vld [vmem:[%s1 + $0x30] sm:$0xff]
      %v306 = vld [vmem:[%s1 + $0x38] sm:$0xff]
      %v307 = vld [vmem:[%s1 + $0x40] sm:$0xff]
      %v308 = vld [vmem:[%s1 + $0x48] sm:$0xff]
      %v309 = vld [vmem:[%s1 + $0x50] sm:$0xff]
      %v310 = vld [vmem:[%s1 + $0x58] sm:$0xff]
      %v311 = vld [vmem:[%s1 + $0x60] sm:$0xff]
      %v312 = vld [vmem:[%s1 + $0x68] sm:$0xff]
      %v313 = vld [vmem:[%s1 + $0x70] sm:$0xff]
      %v314 = vld [vmem:[%s1 + $0x78] sm:$0xff]
      %v315 = vld [vmem:[%s1 + $0x80] sm:$0xff]
      %v316 = vld [vmem:[%s1 + $0x88] sm:$0xff]
      %v317 = vld [vmem:[%s281] sm:$0xff]
      %v318 = vld [vmem:[%s281 + $0x8] sm:$0xff]
      %321 = vrot.lane.b32.xlu0 %v317, 125
      %v322 = vpop.permute.xlu0 %321
      %323 = vrot.lane.b32.xlu0 %v318, 125
      %v324 = vpop.permute.xlu0 %323
      %327 = vst.msk [vmem:[#allocation2 + $0x5] sm:$0xff] %vm293, %v322
      %328 = vst.msk [vmem:[#allocation2 + $0xd] sm:$0xff] %vm293, %v324
      %v329 = vld [vmem:[%s2] sm:$0xf]
      %v330 = vld [vmem:[%s2 + $0x4] sm:$0xf]
      %v331 = vld [vmem:[%s2 + $0x8] sm:$0xf]
      %v332 = vld [vmem:[%s2 + $0xc] sm:$0xf]
      %v333 = vld [vmem:[%s2 + $0x10] sm:$0xf]
      %v334 = vld [vmem:[%s2 + $0x14] sm:$0x7]
      %v335 = vld [vmem:[%s2 + $0x18] sm:$0xf]
      %v336 = vld [vmem:[%s2 + $0x1c] sm:$0xf]
      %v337 = vld [vmem:[%s2 + $0x20] sm:$0xf]
      %v338 = vld [vmem:[%s2 + $0x24] sm:$0xf]
      %v339 = vld [vmem:[%s2 + $0x28] sm:$0xf]
      %v340 = vld [vmem:[%s2 + $0x2c] sm:$0x7]
      %v341 = vld [vmem:[%s2 + $0x30] sm:$0xf]
      %v342 = vld [vmem:[%s2 + $0x34] sm:$0xf]
      %v343 = vld [vmem:[%s2 + $0x38] sm:$0xf]
      %v344 = vld [vmem:[%s2 + $0x3c] sm:$0xf]
      %v345 = vld [vmem:[%s2 + $0x40] sm:$0xf]
      %v346 = vld [vmem:[%s2 + $0x44] sm:$0x7]
      %v347 = vld [vmem:[%s2 + $0x48] sm:$0xf]
      %v348 = vld [vmem:[%s2 + $0x4c] sm:$0xf]
      %v349 = vld [vmem:[%s2 + $0x50] sm:$0xf]
      %v350 = vld [vmem:[%s2 + $0x54] sm:$0xf]
      %v351 = vld [vmem:[%s2 + $0x58] sm:$0xf]
      %v352 = vld [vmem:[%s2 + $0x5c] sm:$0x7]
      %v353 = vld [vmem:[%s2 + $0x60] sm:$0xf]
      %v354 = vld [vmem:[%s2 + $0x64] sm:$0xf]
      %v355 = vld [vmem:[%s2 + $0x68] sm:$0xf]
      %v356 = vld [vmem:[%s2 + $0x6c] sm:$0xf]
      %v357 = vld [vmem:[%s2 + $0x70] sm:$0xf]
      %v358 = vld [vmem:[%s2 + $0x74] sm:$0x7]
      %v359 = vld [vmem:[%s2 + $0x78] sm:$0xf]
      %v360 = vld [vmem:[%s2 + $0x7c] sm:$0xf]
      %v361 = vld [vmem:[%s2 + $0x80] sm:$0xf]
      %v362 = vld [vmem:[%s2 + $0x84] sm:$0xf]
      %v363 = vld [vmem:[%s2 + $0x88] sm:$0xf]
      %v364 = vld [vmem:[%s2 + $0x8c] sm:$0x7]
      %v365 = vld [vmem:[%s2 + $0x90] sm:$0xf]
      %v366 = vld [vmem:[%s2 + $0x94] sm:$0xf]
      %v367 = vld [vmem:[%s2 + $0x98] sm:$0xf]
      %v368 = vld [vmem:[%s2 + $0x9c] sm:$0xf]
      %v369 = vld [vmem:[%s2 + $0xa0] sm:$0xf]
      %v370 = vld [vmem:[%s2 + $0xa4] sm:$0x7]
      %v371 = vld [vmem:[%s2 + $0xa8] sm:$0xf]
      %v372 = vld [vmem:[%s2 + $0xac] sm:$0xf]
      %v373 = vld [vmem:[%s2 + $0xb0] sm:$0xf]
      %v374 = vld [vmem:[%s2 + $0xb4] sm:$0xf]
      %v375 = vld [vmem:[%s2 + $0xb8] sm:$0xf]
      %v376 = vld [vmem:[%s2 + $0xbc] sm:$0x7]
      %v377 = vld [vmem:[%s2 + $0xc0] sm:$0xf]
      %v378 = vld [vmem:[%s2 + $0xc4] sm:$0xf]
      %v379 = vld [vmem:[%s2 + $0xc8] sm:$0xf]
      %v380 = vld [vmem:[%s2 + $0xcc] sm:$0xf]
      %v381 = vld [vmem:[%s2 + $0xd0] sm:$0xf]
      %v382 = vld [vmem:[%s2 + $0xd4] sm:$0x7]
      %v383 = vld [vmem:[#allocation2] sm:$0xff]
      %v384 = vld [vmem:[#allocation2 + $0x8] sm:$0xff]
      %v385 = vpack.c.bf16 %v384, %v383
      %v392 = vunpack.c.l.b16 %v329
      %v393 = vunpack.c.l.b16 %v330
      %v394 = vunpack.c.l.b16 %v331
      %v395 = vunpack.c.l.b16 %v332
      %v396 = vunpack.c.l.b16 %v333
      %v397 = vunpack.c.l.b16 %v334
      %v398 = vpack.c.b16 %v393, %v392
      %v399 = vpack.c.b16 %v395, %v394
      %v400 = vpack.c.b16 %v397, %v396
      %v404 = vsel %vm293, %v385, 0
      %vm406 = vcmask 1045504
      %vm407 = vcmask 1046528
      %v408 = vsel %vm406, 4294967295, 65535
      %v409 = vsel %vm407, %v408, 0
      %v411 = vand.u32 %v400, %v409
      %413 = vmatprep.subr.bf16.mxu0 0
      %414 = vmatpush1.bf16.msra.mxu0 %v398
      %415 = vmatprep.subr.bf16.mxu0 0
      %416 = vmatpush1.bf16.msra.mxu0 %v399
      %417 = vmatprep.subr.bf16.mxu0 0
      %418 = vmatpush1.bf16.msra.mxu0 %v411
      %419 = vmatprep.subr.bf16.mxu0 0
      %420 = vmatpush1.bf16.msra.mxu0 0
      %421 = vmatprep.subr.bf16.mxu0 0
      %422 = vmatpush1.bf16.msra.mxu0 0
      %423 = vmatprep.subr.bf16.mxu0 0
      %424 = vmatpush1.bf16.msra.mxu0 0
      %425 = vmatprep.subr.bf16.mxu0 0
      %426 = vmatpush1.bf16.msra.mxu0 0
      %427 = vmatprep.subr.bf16.mxu0 0
      %428 = vmatpush1.bf16.msra.mxu0 0
      %429 = vmatprep.subr.bf16.mxu0 0
      %430 = vmatpush1.bf16.msra.mxu0 0
      %431 = vmatprep.subr.bf16.mxu0 0
      %432 = vmatpush1.bf16.msra.mxu0 0
      %433 = vmatprep.subr.bf16.mxu0 0
      %434 = vmatpush1.bf16.msra.mxu0 0
      %435 = vmatprep.subr.bf16.mxu0 0
      %436 = vmatpush1.bf16.msra.mxu0 0
      %437 = vmatprep.subr.bf16.mxu0 0
      %438 = vmatpush1.bf16.msra.mxu0 0
      %439 = vmatprep.subr.bf16.mxu0 0
      %440 = vmatpush1.bf16.msra.mxu0 0
      %441 = vmatprep.subr.bf16.mxu0 0
      %442 = vmatpush1.bf16.msra.mxu0 0
      %443 = vmatprep.subr.bf16.mxu0 0
      %444 = vmatpush1.bf16.msra.mxu0 0
      %445 = vmatprep.mubr.bf16.mxu0 0
      %446 = vmatmul.mubr.bf16.gmra.mrb[0].mxu0 %v404
      %v447 = vpop.f32.mrb[0].mxu0
      %v448 = vadd.f32 0.0, %v447
      %v449 = vpop.f32.mrb[0].mxu0
      %v450 = vpop.f32.mrb[0].mxu0
      %v451 = vadd.f32 0.0, %v450
      %v452 = vpop.f32.mrb[0].mxu0
      %453 = vdwg.mxu0
      %455 = vset.pattern.permute.xlu0 0
      %456 = vperm.xlu0 %455, %v299
      %v457 = vpop.permute.xlu0 %456
      %460 = vset.pattern.permute.xlu0 0
      %461 = vperm.xlu0 %460, %v300
      %v462 = vpop.permute.xlu0 %461
      %v464 = vmul.f32 %v457, %v448
      %v465 = vmul.f32 %v462, %v451
      %v466 = vadd.f32 %v464, 0.0
      %v467 = vadd.f32 %v465, 0.0
      %v468 = vld [vmem:[#allocation2 + $0x1] sm:$0xff]
      %v469 = vld [vmem:[#allocation2 + $0x9] sm:$0xff]
      %v470 = vpack.c.bf16 %v469, %v468
      %v477 = vunpack.c.l.b16 %v335
      %v478 = vunpack.c.l.b16 %v336
      %v479 = vunpack.c.l.b16 %v337
      %v480 = vunpack.c.l.b16 %v338
      %v481 = vunpack.c.l.b16 %v339
      %v482 = vunpack.c.l.b16 %v340
      %v483 = vpack.c.b16 %v478, %v477
      %v484 = vpack.c.b16 %v480, %v479
      %v485 = vpack.c.b16 %v482, %v481
      %v489 = vsel %vm293, %v470, 0
      %v492 = vand.u32 %v485, %v409
      %494 = vmatprep.subr.bf16.mxu0 0
      %495 = vmatpush1.bf16.msra.mxu0 %v483
      %496 = vmatprep.subr.bf16.mxu0 0
      %497 = vmatpush1.bf16.msra.mxu0 %v484
      %498 = vmatprep.subr.bf16.mxu0 0
      %499 = vmatpush1.bf16.msra.mxu0 %v492
      %500 = vmatprep.subr.bf16.mxu0 0
      %501 = vmatpush1.bf16.msra.mxu0 0
      %502 = vmatprep.subr.bf16.mxu0 0
      %503 = vmatpush1.bf16.msra.mxu0 0
      %504 = vmatprep.subr.bf16.mxu0 0
      %505 = vmatpush1.bf16.msra.mxu0 0
      %506 = vmatprep.subr.bf16.mxu0 0
      %507 = vmatpush1.bf16.msra.mxu0 0
      %508 = vmatprep.subr.bf16.mxu0 0
      %509 = vmatpush1.bf16.msra.mxu0 0
      %510 = vmatprep.subr.bf16.mxu0 0
      %511 = vmatpush1.bf16.msra.mxu0 0
      %512 = vmatprep.subr.bf16.mxu0 0
      %513 = vmatpush1.bf16.msra.mxu0 0
      %514 = vmatprep.subr.bf16.mxu0 0
      %515 = vmatpush1.bf16.msra.mxu0 0
      %516 = vmatprep.subr.bf16.mxu0 0
      %517 = vmatpush1.bf16.msra.mxu0 0
      %518 = vmatprep.subr.bf16.mxu0 0
      %519 = vmatpush1.bf16.msra.mxu0 0
      %520 = vmatprep.subr.bf16.mxu0 0
      %521 = vmatpush1.bf16.msra.mxu0 0
      %522 = vmatprep.subr.bf16.mxu0 0
      %523 = vmatpush1.bf16.msra.mxu0 0
      %524 = vmatprep.subr.bf16.mxu0 0
      %525 = vmatpush1.bf16.msra.mxu0 0
      %526 = vmatprep.mubr.bf16.mxu0 0
      %527 = vmatmul.mubr.bf16.gmra.mrb[0].mxu0 %v489
      %v528 = vpop.f32.mrb[0].mxu0
      %v529 = vadd.f32 0.0, %v528
      %v530 = vpop.f32.mrb[0].mxu0
      %v531 = vpop.f32.mrb[0].mxu0
      %v532 = vadd.f32 0.0, %v531
      %v533 = vpop.f32.mrb[0].mxu0
      %534 = vdwg.mxu0
      %536 = vset.pattern.permute.xlu0 0
      %537 = vperm.xlu0 %536, %v301
      %v538 = vpop.permute.xlu0 %537
      %541 = vset.pattern.permute.xlu0 0
      %542 = vperm.xlu0 %541, %v302
      %v543 = vpop.permute.xlu0 %542
      %v545 = vmul.f32 %v538, %v529
      %v546 = vmul.f32 %v543, %v532
      %v547 = vadd.f32 %v466, %v545
      %v548 = vadd.f32 %v467, %v546
      %v549 = vld [vmem:[#allocation2 + $0x2] sm:$0xff]
      %v550 = vld [vmem:[#allocation2 + $0xa] sm:$0xff]
      %v551 = vpack.c.bf16 %v550, %v549
      %v558 = vunpack.c.l.b16 %v341
      %v559 = vunpack.c.l.b16 %v342
      %v560 = vunpack.c.l.b16 %v343
      %v561 = vunpack.c.l.b16 %v344
      %v562 = vunpack.c.l.b16 %v345
      %v563 = vunpack.c.l.b16 %v346
      %v564 = vpack.c.b16 %v559, %v558
      %v565 = vpack.c.b16 %v561, %v560
      %v566 = vpack.c.b16 %v563, %v562
      %v570 = vsel %vm293, %v551, 0
      %v573 = vand.u32 %v566, %v409
      %575 = vmatprep.subr.bf16.mxu0 0
      %576 = vmatpush1.bf16.msra.mxu0 %v564
      %577 = vmatprep.subr.bf16.mxu0 0
      %578 = vmatpush1.bf16.msra.mxu0 %v565
      %579 = vmatprep.subr.bf16.mxu0 0
      %580 = vmatpush1.bf16.msra.mxu0 %v573
      %581 = vmatprep.subr.bf16.mxu0 0
      %582 = vmatpush1.bf16.msra.mxu0 0
      %583 = vmatprep.subr.bf16.mxu0 0
      %584 = vmatpush1.bf16.msra.mxu0 0
      %585 = vmatprep.subr.bf16.mxu0 0
      %586 = vmatpush1.bf16.msra.mxu0 0
      %587 = vmatprep.subr.bf16.mxu0 0
      %588 = vmatpush1.bf16.msra.mxu0 0
      %589 = vmatprep.subr.bf16.mxu0 0
      %590 = vmatpush1.bf16.msra.mxu0 0
      %591 = vmatprep.subr.bf16.mxu0 0
      %592 = vmatpush1.bf16.msra.mxu0 0
      %593 = vmatprep.subr.bf16.mxu0 0
      %594 = vmatpush1.bf16.msra.mxu0 0
      %595 = vmatprep.subr.bf16.mxu0 0
      %596 = vmatpush1.bf16.msra.mxu0 0
      %597 = vmatprep.subr.bf16.mxu0 0
      %598 = vmatpush1.bf16.msra.mxu0 0
      %599 = vmatprep.subr.bf16.mxu0 0
      %600 = vmatpush1.bf16.msra.mxu0 0
      %601 = vmatprep.subr.bf16.mxu0 0
      %602 = vmatpush1.bf16.msra.mxu0 0
      %603 = vmatprep.subr.bf16.mxu0 0
      %604 = vmatpush1.bf16.msra.mxu0 0
      %605 = vmatprep.subr.bf16.mxu0 0
      %606 = vmatpush1.bf16.msra.mxu0 0
      %607 = vmatprep.mubr.bf16.mxu0 0
      %608 = vmatmul.mubr.bf16.gmra.mrb[0].mxu0 %v570
      %v609 = vpop.f32.mrb[0].mxu0
      %v610 = vadd.f32 0.0, %v609
      %v611 = vpop.f32.mrb[0].mxu0
      %v612 = vpop.f32.mrb[0].mxu0
      %v613 = vadd.f32 0.0, %v612
      %v614 = vpop.f32.mrb[0].mxu0
      %615 = vdwg.mxu0
      %617 = vset.pattern.permute.xlu0 0
      %618 = vperm.xlu0 %617, %v303
      %v619 = vpop.permute.xlu0 %618
      %622 = vset.pattern.permute.xlu0 0
      %623 = vperm.xlu0 %622, %v304
      %v624 = vpop.permute.xlu0 %623
      %v626 = vmul.f32 %v619, %v610
      %v627 = vmul.f32 %v624, %v613
      %v628 = vadd.f32 %v547, %v626
      %v629 = vadd.f32 %v548, %v627
      %v630 = vld [vmem:[#allocation2 + $0x4] sm:$0xff]
      %v631 = vld [vmem:[#allocation2 + $0xc] sm:$0xff]
      %v632 = vpack.c.bf16 %v631, %v630
      %v639 = vunpack.c.l.b16 %v347
      %v640 = vunpack.c.l.b16 %v348
      %v641 = vunpack.c.l.b16 %v349
      %v642 = vunpack.c.l.b16 %v350
      %v643 = vunpack.c.l.b16 %v351
      %v644 = vunpack.c.l.b16 %v352
      %v645 = vpack.c.b16 %v640, %v639
      %v646 = vpack.c.b16 %v642, %v641
      %v647 = vpack.c.b16 %v644, %v643
      %v651 = vsel %vm293, %v632, 0
      %v654 = vand.u32 %v647, %v409
      %656 = vmatprep.subr.bf16.mxu0 0
      %657 = vmatpush1.bf16.msra.mxu0 %v645
      %658 = vmatprep.subr.bf16.mxu0 0
      %659 = vmatpush1.bf16.msra.mxu0 %v646
      %660 = vmatprep.subr.bf16.mxu0 0
      %661 = vmatpush1.bf16.msra.mxu0 %v654
      %662 = vmatprep.subr.bf16.mxu0 0
      %663 = vmatpush1.bf16.msra.mxu0 0
      %664 = vmatprep.subr.bf16.mxu0 0
      %665 = vmatpush1.bf16.msra.mxu0 0
      %666 = vmatprep.subr.bf16.mxu0 0
      %667 = vmatpush1.bf16.msra.mxu0 0
      %668 = vmatprep.subr.bf16.mxu0 0
      %669 = vmatpush1.bf16.msra.mxu0 0
      %670 = vmatprep.subr.bf16.mxu0 0
      %671 = vmatpush1.bf16.msra.mxu0 0
      %672 = vmatprep.subr.bf16.mxu0 0
      %673 = vmatpush1.bf16.msra.mxu0 0
      %674 = vmatprep.subr.bf16.mxu0 0
      %675 = vmatpush1.bf16.msra.mxu0 0
      %676 = vmatprep.subr.bf16.mxu0 0
      %677 = vmatpush1.bf16.msra.mxu0 0
      %678 = vmatprep.subr.bf16.mxu0 0
      %679 = vmatpush1.bf16.msra.mxu0 0
      %680 = vmatprep.subr.bf16.mxu0 0
      %681 = vmatpush1.bf16.msra.mxu0 0
      %682 = vmatprep.subr.bf16.mxu0 0
      %683 = vmatpush1.bf16.msra.mxu0 0
      %684 = vmatprep.subr.bf16.mxu0 0
      %685 = vmatpush1.bf16.msra.mxu0 0
      %686 = vmatprep.subr.bf16.mxu0 0
      %687 = vmatpush1.bf16.msra.mxu0 0
      %688 = vmatprep.mubr.bf16.mxu0 0
      %689 = vmatmul.mubr.bf16.gmra.mrb[0].mxu0 %v651
      %v690 = vpop.f32.mrb[0].mxu0
      %v691 = vadd.f32 0.0, %v690
      %v692 = vpop.f32.mrb[0].mxu0
      %v693 = vpop.f32.mrb[0].mxu0
      %v694 = vadd.f32 0.0, %v693
      %v695 = vpop.f32.mrb[0].mxu0
      %696 = vdwg.mxu0
      %698 = vset.pattern.permute.xlu0 0
      %699 = vperm.xlu0 %698, %v305
      %v700 = vpop.permute.xlu0 %699
      %703 = vset.pattern.permute.xlu0 0
      %704 = vperm.xlu0 %703, %v306
      %v705 = vpop.permute.xlu0 %704
      %v707 = vmul.f32 %v700, %v691
      %v708 = vmul.f32 %v705, %v694
      %v709 = vadd.f32 %v628, %v707
      %v710 = vadd.f32 %v629, %v708
      %v711 = vld [vmem:[#allocation2 + $0x5] sm:$0xff]
      %v712 = vld [vmem:[#allocation2 + $0xd] sm:$0xff]
      %v713 = vpack.c.bf16 %v712, %v711
      %v720 = vunpack.c.l.b16 %v353
      %v721 = vunpack.c.l.b16 %v354
      %v722 = vunpack.c.l.b16 %v355
      %v723 = vunpack.c.l.b16 %v356
      %v724 = vunpack.c.l.b16 %v357
      %v725 = vunpack.c.l.b16 %v358
      %v726 = vpack.c.b16 %v721, %v720
      %v727 = vpack.c.b16 %v723, %v722
      %v728 = vpack.c.b16 %v725, %v724
      %v732 = vsel %vm293, %v713, 0
      %v735 = vand.u32 %v728, %v409
      %737 = vmatprep.subr.bf16.mxu0 0
      %738 = vmatpush1.bf16.msra.mxu0 %v726
      %739 = vmatprep.subr.bf16.mxu0 0
      %740 = vmatpush1.bf16.msra.mxu0 %v727
      %741 = vmatprep.subr.bf16.mxu0 0
      %742 = vmatpush1.bf16.msra.mxu0 %v735
      %743 = vmatprep.subr.bf16.mxu0 0
      %744 = vmatpush1.bf16.msra.mxu0 0
      %745 = vmatprep.subr.bf16.mxu0 0
      %746 = vmatpush1.bf16.msra.mxu0 0
      %747 = vmatprep.subr.bf16.mxu0 0
      %748 = vmatpush1.bf16.msra.mxu0 0
      %749 = vmatprep.subr.bf16.mxu0 0
      %750 = vmatpush1.bf16.msra.mxu0 0
      %751 = vmatprep.subr.bf16.mxu0 0
      %752 = vmatpush1.bf16.msra.mxu0 0
      %753 = vmatprep.subr.bf16.mxu0 0
      %754 = vmatpush1.bf16.msra.mxu0 0
      %755 = vmatprep.subr.bf16.mxu0 0
      %756 = vmatpush1.bf16.msra.mxu0 0
      %757 = vmatprep.subr.bf16.mxu0 0
      %758 = vmatpush1.bf16.msra.mxu0 0
      %759 = vmatprep.subr.bf16.mxu0 0
      %760 = vmatpush1.bf16.msra.mxu0 0
      %761 = vmatprep.subr.bf16.mxu0 0
      %762 = vmatpush1.bf16.msra.mxu0 0
      %763 = vmatprep.subr.bf16.mxu0 0
      %764 = vmatpush1.bf16.msra.mxu0 0
      %765 = vmatprep.subr.bf16.mxu0 0
      %766 = vmatpush1.bf16.msra.mxu0 0
      %767 = vmatprep.subr.bf16.mxu0 0
      %768 = vmatpush1.bf16.msra.mxu0 0
      %769 = vmatprep.mubr.bf16.mxu0 0
      %770 = vmatmul.mubr.bf16.gmra.mrb[0].mxu0 %v732
      %v771 = vpop.f32.mrb[0].mxu0
      %v772 = vadd.f32 0.0, %v771
      %v773 = vpop.f32.mrb[0].mxu0
      %v774 = vpop.f32.mrb[0].mxu0
      %v775 = vadd.f32 0.0, %v774
      %v776 = vpop.f32.mrb[0].mxu0
      %777 = vdwg.mxu0
      %779 = vset.pattern.permute.xlu0 0
      %780 = vperm.xlu0 %779, %v307
      %v781 = vpop.permute.xlu0 %780
      %784 = vset.pattern.permute.xlu0 0
      %785 = vperm.xlu0 %784, %v308
      %v786 = vpop.permute.xlu0 %785
      %v788 = vmul.f32 %v781, %v772
      %v789 = vmul.f32 %v786, %v775
      %v790 = vadd.f32 %v709, %v788
      %v791 = vadd.f32 %v710, %v789
      %v792 = vld [vmem:[#allocation2 + $0x6] sm:$0xff]
      %v793 = vld [vmem:[#allocation2 + $0xe] sm:$0xff]
      %v794 = vpack.c.bf16 %v793, %v792
      %v801 = vunpack.c.l.b16 %v359
      %v802 = vunpack.c.l.b16 %v360
      %v803 = vunpack.c.l.b16 %v361
      %v804 = vunpack.c.l.b16 %v362
      %v805 = vunpack.c.l.b16 %v363
      %v806 = vunpack.c.l.b16 %v364
      %v807 = vpack.c.b16 %v802, %v801
      %v808 = vpack.c.b16 %v804, %v803
      %v809 = vpack.c.b16 %v806, %v805
      %v813 = vsel %vm293, %v794, 0
      %v816 = vand.u32 %v809, %v409
      %818 = vmatprep.subr.bf16.mxu0 0
      %819 = vmatpush1.bf16.msra.mxu0 %v807
      %820 = vmatprep.subr.bf16.mxu0 0
      %821 = vmatpush1.bf16.msra.mxu0 %v808
      %822 = vmatprep.subr.bf16.mxu0 0
      %823 = vmatpush1.bf16.msra.mxu0 %v816
      %824 = vmatprep.subr.bf16.mxu0 0
      %825 = vmatpush1.bf16.msra.mxu0 0
      %826 = vmatprep.subr.bf16.mxu0 0
      %827 = vmatpush1.bf16.msra.mxu0 0
      %828 = vmatprep.subr.bf16.mxu0 0
      %829 = vmatpush1.bf16.msra.mxu0 0
      %830 = vmatprep.subr.bf16.mxu0 0
      %831 = vmatpush1.bf16.msra.mxu0 0
      %832 = vmatprep.subr.bf16.mxu0 0
      %833 = vmatpush1.bf16.msra.mxu0 0
      %834 = vmatprep.subr.bf16.mxu0 0
      %835 = vmatpush1.bf16.msra.mxu0 0
      %836 = vmatprep.subr.bf16.mxu0 0
      %837 = vmatpush1.bf16.msra.mxu0 0
      %838 = vmatprep.subr.bf16.mxu0 0
      %839 = vmatpush1.bf16.msra.mxu0 0
      %840 = vmatprep.subr.bf16.mxu0 0
      %841 = vmatpush1.bf16.msra.mxu0 0
      %842 = vmatprep.subr.bf16.mxu0 0
      %843 = vmatpush1.bf16.msra.mxu0 0
      %844 = vmatprep.subr.bf16.mxu0 0
      %845 = vmatpush1.bf16.msra.mxu0 0
      %846 = vmatprep.subr.bf16.mxu0 0
      %847 = vmatpush1.bf16.msra.mxu0 0
      %848 = vmatprep.subr.bf16.mxu0 0
      %849 = vmatpush1.bf16.msra.mxu0 0
      %850 = vmatprep.mubr.bf16.mxu0 0
      %851 = vmatmul.mubr.bf16.gmra.mrb[0].mxu0 %v813
      %v852 = vpop.f32.mrb[0].mxu0
      %v853 = vadd.f32 0.0, %v852
      %v854 = vpop.f32.mrb[0].mxu0
      %v855 = vpop.f32.mrb[0].mxu0
      %v856 = vadd.f32 0.0, %v855
      %v857 = vpop.f32.mrb[0].mxu0
      %858 = vdwg.mxu0
      %860 = vset.pattern.permute.xlu0 0
      %861 = vperm.xlu0 %860, %v309
      %v862 = vpop.permute.xlu0 %861
      %865 = vset.pattern.permute.xlu0 0
      %866 = vperm.xlu0 %865, %v310
      %v867 = vpop.permute.xlu0 %866
      %v869 = vmul.f32 %v862, %v853
      %v870 = vmul.f32 %v867, %v856
      %v871 = vadd.f32 %v790, %v869
      %v872 = vadd.f32 %v791, %v870
      %v873 = vld [vmem:[#allocation2 + $0x8] sm:$0xff]
      %v874 = vld [vmem:[#allocation2 + $0x10] sm:$0xff]
      %v875 = vpack.c.bf16 %v874, %v873
      %v882 = vunpack.c.l.b16 %v365
      %v883 = vunpack.c.l.b16 %v366
      %v884 = vunpack.c.l.b16 %v367
      %v885 = vunpack.c.l.b16 %v368
      %v886 = vunpack.c.l.b16 %v369
      %v887 = vunpack.c.l.b16 %v370
      %v888 = vpack.c.b16 %v883, %v882
      %v889 = vpack.c.b16 %v885, %v884
      %v890 = vpack.c.b16 %v887, %v886
      %v894 = vsel %vm293, %v875, 0
      %v897 = vand.u32 %v890, %v409
      %899 = vmatprep.subr.bf16.mxu0 0
      %900 = vmatpush1.bf16.msra.mxu0 %v888
      %901 = vmatprep.subr.bf16.mxu0 0
      %902 = vmatpush1.bf16.msra.mxu0 %v889
      %903 = vmatprep.subr.bf16.mxu0 0
      %904 = vmatpush1.bf16.msra.mxu0 %v897
      %905 = vmatprep.subr.bf16.mxu0 0
      %906 = vmatpush1.bf16.msra.mxu0 0
      %907 = vmatprep.subr.bf16.mxu0 0
      %908 = vmatpush1.bf16.msra.mxu0 0
      %909 = vmatprep.subr.bf16.mxu0 0
      %910 = vmatpush1.bf16.msra.mxu0 0
      %911 = vmatprep.subr.bf16.mxu0 0
      %912 = vmatpush1.bf16.msra.mxu0 0
      %913 = vmatprep.subr.bf16.mxu0 0
      %914 = vmatpush1.bf16.msra.mxu0 0
      %915 = vmatprep.subr.bf16.mxu0 0
      %916 = vmatpush1.bf16.msra.mxu0 0
      %917 = vmatprep.subr.bf16.mxu0 0
      %918 = vmatpush1.bf16.msra.mxu0 0
      %919 = vmatprep.subr.bf16.mxu0 0
      %920 = vmatpush1.bf16.msra.mxu0 0
      %921 = vmatprep.subr.bf16.mxu0 0
      %922 = vmatpush1.bf16.msra.mxu0 0
      %923 = vmatprep.subr.bf16.mxu0 0
      %924 = vmatpush1.bf16.msra.mxu0 0
      %925 = vmatprep.subr.bf16.mxu0 0
      %926 = vmatpush1.bf16.msra.mxu0 0
      %927 = vmatprep.subr.bf16.mxu0 0
      %928 = vmatpush1.bf16.msra.mxu0 0
      %929 = vmatprep.subr.bf16.mxu0 0
      %930 = vmatpush1.bf16.msra.mxu0 0
      %931 = vmatprep.mubr.bf16.mxu0 0
      %932 = vmatmul.mubr.bf16.gmra.mrb[0].mxu0 %v894
      %v933 = vpop.f32.mrb[0].mxu0
      %v934 = vadd.f32 0.0, %v933
      %v935 = vpop.f32.mrb[0].mxu0
      %v936 = vpop.f32.mrb[0].mxu0
      %v937 = vadd.f32 0.0, %v936
      %v938 = vpop.f32.mrb[0].mxu0
      %939 = vdwg.mxu0
      %941 = vset.pattern.permute.xlu0 0
      %942 = vperm.xlu0 %941, %v311
      %v943 = vpop.permute.xlu0 %942
      %946 = vset.pattern.permute.xlu0 0
      %947 = vperm.xlu0 %946, %v312
      %v948 = vpop.permute.xlu0 %947
      %v950 = vmul.f32 %v943, %v934
      %v951 = vmul.f32 %v948, %v937
      %v952 = vadd.f32 %v871, %v950
      %v953 = vadd.f32 %v872, %v951
      %v954 = vld [vmem:[#allocation2 + $0x9] sm:$0xff]
      %v955 = vld [vmem:[#allocation2 + $0x11] sm:$0xff]
      %v956 = vpack.c.bf16 %v955, %v954
      %v963 = vunpack.c.l.b16 %v371
      %v964 = vunpack.c.l.b16 %v372
      %v965 = vunpack.c.l.b16 %v373
      %v966 = vunpack.c.l.b16 %v374
      %v967 = vunpack.c.l.b16 %v375
      %v968 = vunpack.c.l.b16 %v376
      %v969 = vpack.c.b16 %v964, %v963
      %v970 = vpack.c.b16 %v966, %v965
      %v971 = vpack.c.b16 %v968, %v967
      %v975 = vsel %vm293, %v956, 0
      %v978 = vand.u32 %v971, %v409
      %980 = vmatprep.subr.bf16.mxu0 0
      %981 = vmatpush1.bf16.msra.mxu0 %v969
      %982 = vmatprep.subr.bf16.mxu0 0
      %983 = vmatpush1.bf16.msra.mxu0 %v970
      %984 = vmatprep.subr.bf16.mxu0 0
      %985 = vmatpush1.bf16.msra.mxu0 %v978
      %986 = vmatprep.subr.bf16.mxu0 0
      %987 = vmatpush1.bf16.msra.mxu0 0
      %988 = vmatprep.subr.bf16.mxu0 0
      %989 = vmatpush1.bf16.msra.mxu0 0
      %990 = vmatprep.subr.bf16.mxu0 0
      %991 = vmatpush1.bf16.msra.mxu0 0
      %992 = vmatprep.subr.bf16.mxu0 0
      %993 = vmatpush1.bf16.msra.mxu0 0
      %994 = vmatprep.subr.bf16.mxu0 0
      %995 = vmatpush1.bf16.msra.mxu0 0
      %996 = vmatprep.subr.bf16.mxu0 0
      %997 = vmatpush1.bf16.msra.mxu0 0
      %998 = vmatprep.subr.bf16.mxu0 0
      %999 = vmatpush1.bf16.msra.mxu0 0
      %1000 = vmatprep.subr.bf16.mxu0 0
      %1001 = vmatpush1.bf16.msra.mxu0 0
      %1002 = vmatprep.subr.bf16.mxu0 0
      %1003 = vmatpush1.bf16.msra.mxu0 0
      %1004 = vmatprep.subr.bf16.mxu0 0
      %1005 = vmatpush1.bf16.msra.mxu0 0
      %1006 = vmatprep.subr.bf16.mxu0 0
      %1007 = vmatpush1.bf16.msra.mxu0 0
      %1008 = vmatprep.subr.bf16.mxu0 0
      %1009 = vmatpush1.bf16.msra.mxu0 0
      %1010 = vmatprep.subr.bf16.mxu0 0
      %1011 = vmatpush1.bf16.msra.mxu0 0
      %1012 = vmatprep.mubr.bf16.mxu0 0
      %1013 = vmatmul.mubr.bf16.gmra.mrb[0].mxu0 %v975
      %v1014 = vpop.f32.mrb[0].mxu0
      %v1015 = vadd.f32 0.0, %v1014
      %v1016 = vpop.f32.mrb[0].mxu0
      %v1017 = vpop.f32.mrb[0].mxu0
      %v1018 = vadd.f32 0.0, %v1017
      %v1019 = vpop.f32.mrb[0].mxu0
      %1020 = vdwg.mxu0
      %1022 = vset.pattern.permute.xlu0 0
      %1023 = vperm.xlu0 %1022, %v313
      %v1024 = vpop.permute.xlu0 %1023
      %1027 = vset.pattern.permute.xlu0 0
      %1028 = vperm.xlu0 %1027, %v314
      %v1029 = vpop.permute.xlu0 %1028
      %v1031 = vmul.f32 %v1024, %v1015
      %v1032 = vmul.f32 %v1029, %v1018
      %v1033 = vadd.f32 %v952, %v1031
      %v1034 = vadd.f32 %v953, %v1032
      %v1035 = vld [vmem:[#allocation2 + $0xa] sm:$0xff]
      %v1036 = vld [vmem:[#allocation2 + $0x12] sm:$0xff]
      %v1037 = vpack.c.bf16 %v1036, %v1035
      %v1044 = vunpack.c.l.b16 %v377
      %v1045 = vunpack.c.l.b16 %v378
      %v1046 = vunpack.c.l.b16 %v379
      %v1047 = vunpack.c.l.b16 %v380
      %v1048 = vunpack.c.l.b16 %v381
      %v1049 = vunpack.c.l.b16 %v382
      %v1050 = vpack.c.b16 %v1045, %v1044
      %v1051 = vpack.c.b16 %v1047, %v1046
      %v1052 = vpack.c.b16 %v1049, %v1048
      %v1056 = vsel %vm293, %v1037, 0
      %v1059 = vand.u32 %v1052, %v409
      %1061 = vmatprep.subr.bf16.mxu0 0
      %1062 = vmatpush1.bf16.msra.mxu0 %v1050
      %1063 = vmatprep.subr.bf16.mxu0 0
      %1064 = vmatpush1.bf16.msra.mxu0 %v1051
      %1065 = vmatprep.subr.bf16.mxu0 0
      %1066 = vmatpush1.bf16.msra.mxu0 %v1059
      %1067 = vmatprep.subr.bf16.mxu0 0
      %1068 = vmatpush1.bf16.msra.mxu0 0
      %1069 = vmatprep.subr.bf16.mxu0 0
      %1070 = vmatpush1.bf16.msra.mxu0 0
      %1071 = vmatprep.subr.bf16.mxu0 0
      %1072 = vmatpush1.bf16.msra.mxu0 0
      %1073 = vmatprep.subr.bf16.mxu0 0
      %1074 = vmatpush1.bf16.msra.mxu0 0
      %1075 = vmatprep.subr.bf16.mxu0 0
      %1076 = vmatpush1.bf16.msra.mxu0 0
      %1077 = vmatprep.subr.bf16.mxu0 0
      %1078 = vmatpush1.bf16.msra.mxu0 0
      %1079 = vmatprep.subr.bf16.mxu0 0
      %1080 = vmatpush1.bf16.msra.mxu0 0
      %1081 = vmatprep.subr.bf16.mxu0 0
      %1082 = vmatpush1.bf16.msra.mxu0 0
      %1083 = vmatprep.subr.bf16.mxu0 0
      %1084 = vmatpush1.bf16.msra.mxu0 0
      %1085 = vmatprep.subr.bf16.mxu0 0
      %1086 = vmatpush1.bf16.msra.mxu0 0
      %1087 = vmatprep.subr.bf16.mxu0 0
      %1088 = vmatpush1.bf16.msra.mxu0 0
      %1089 = vmatprep.subr.bf16.mxu0 0
      %1090 = vmatpush1.bf16.msra.mxu0 0
      %1091 = vmatprep.subr.bf16.mxu0 0
      %1092 = vmatpush1.bf16.msra.mxu0 0
      %1093 = vmatprep.mubr.bf16.mxu0 0
      %1094 = vmatmul.mubr.bf16.gmra.mrb[0].mxu0 %v1056
      %v1095 = vpop.f32.mrb[0].mxu0
      %v1096 = vadd.f32 0.0, %v1095
      %v1097 = vpop.f32.mrb[0].mxu0
      %v1098 = vpop.f32.mrb[0].mxu0
      %v1099 = vadd.f32 0.0, %v1098
      %v1100 = vpop.f32.mrb[0].mxu0
      %1101 = vdwg.mxu0
      %1103 = vset.pattern.permute.xlu0 0
      %1104 = vperm.xlu0 %1103, %v315
      %v1105 = vpop.permute.xlu0 %1104
      %1108 = vset.pattern.permute.xlu0 0
      %1109 = vperm.xlu0 %1108, %v316
      %v1110 = vpop.permute.xlu0 %1109
      %v1112 = vmul.f32 %v1105, %v1096
      %v1113 = vmul.f32 %v1110, %v1099
      %v1114 = vadd.f32 %v1033, %v1112
      %v1115 = vadd.f32 %v1034, %v1113
      %v1116 = vld [vmem:[%s3] sm:$0x1]
      %v1118 = vlaneseq
      %v1119 = vshrl.u32 %v1118, 7
      %v1120 = vsub.s32 0, %v1119
      %v1121 = vrot.slane %v1116, %v1120
      %v1123 = vadd.f32 %v1114, %v1121
      %v1124 = vadd.f32 %v1115, %v1121
      %v1125 = vadd.f32 %v317, %v1123
      %v1126 = vadd.f32 %v318, %v1124
      %1129 = vrot.lane.b32.xlu0 %v1123, 125
      %v1130 = vpop.permute.xlu0 %1129
      %1131 = vrot.lane.b32.xlu0 %v1124, 125
      %v1132 = vpop.permute.xlu0 %1131
      %v1135 = vsub.f32 %v1125, %v1130
      %v1136 = vsub.f32 %v1126, %v1132
      %vm1137 = vcmask 23552
      %1138 = vst.msk [vmem:[#allocation2 + $0x5] sm:$0xff] %vm1137, %v1135
      %1139 = vst.msk [vmem:[#allocation2 + $0xd] sm:$0xff] %vm1137, %v1136
      %v1140 = vld [vmem:[%s4] sm:$0x3]
      %v1141 = vld [vmem:[%s4 + $0x2] sm:$0x3]
      %v1142 = vld [vmem:[%s4 + $0x4] sm:$0x3]
      %v1143 = vld [vmem:[%s4 + $0x6] sm:$0x3]
      %v1144 = vld [vmem:[%s4 + $0x8] sm:$0x3]
      %v1145 = vld [vmem:[%s4 + $0xa] sm:$0x3]
      %v1146 = vld [vmem:[%s4 + $0xc] sm:$0x3]
      %v1147 = vld [vmem:[%s4 + $0xe] sm:$0x3]
      %v1148 = vld [vmem:[%s4 + $0x10] sm:$0x3]
      %v1149 = vld [vmem:[#allocation2] sm:$0xff]
      %v1150 = vld [vmem:[#allocation2 + $0x8] sm:$0xff]
      %v1151 = vpack.c.bf16 %v1150, %v1149
      %v1153 = vsel %vm1137, %v1151, 0
      %vm1155 = vcmask 1040384
      %vm1156 = vcmask 1041408
      %v1157 = vsel %vm1155, 4294967295, 65535
      %v1158 = vsel %vm1156, %v1157, 0
      %v1160 = vand.u32 %v1140, %v1158
      %1162 = vmatprep.subr.bf16.mxu0 0
      %1163 = vmatpush1.bf16.msra.mxu0 %v1160
      %1164 = vmatprep.subr.bf16.mxu0 0
      %1165 = vmatpush1.bf16.msra.mxu0 0
      %1166 = vmatprep.subr.bf16.mxu0 0
      %1167 = vmatpush1.bf16.msra.mxu0 0
      %1168 = vmatprep.subr.bf16.mxu0 0
      %1169 = vmatpush1.bf16.msra.mxu0 0
      %1170 = vmatprep.subr.bf16.mxu0 0
      %1171 = vmatpush1.bf16.msra.mxu0 0
      %1172 = vmatprep.subr.bf16.mxu0 0
      %1173 = vmatpush1.bf16.msra.mxu0 0
      %1174 = vmatprep.subr.bf16.mxu0 0
      %1175 = vmatpush1.bf16.msra.mxu0 0
      %1176 = vmatprep.subr.bf16.mxu0 0
      %1177 = vmatpush1.bf16.msra.mxu0 0
      %1178 = vmatprep.subr.bf16.mxu0 0
      %1179 = vmatpush1.bf16.msra.mxu0 0
      %1180 = vmatprep.subr.bf16.mxu0 0
      %1181 = vmatpush1.bf16.msra.mxu0 0
      %1182 = vmatprep.subr.bf16.mxu0 0
      %1183 = vmatpush1.bf16.msra.mxu0 0
      %1184 = vmatprep.subr.bf16.mxu0 0
      %1185 = vmatpush1.bf16.msra.mxu0 0
      %1186 = vmatprep.subr.bf16.mxu0 0
      %1187 = vmatpush1.bf16.msra.mxu0 0
      %1188 = vmatprep.subr.bf16.mxu0 0
      %1189 = vmatpush1.bf16.msra.mxu0 0
      %1190 = vmatprep.subr.bf16.mxu0 0
      %1191 = vmatpush1.bf16.msra.mxu0 0
      %1192 = vmatprep.subr.bf16.mxu0 0
      %1193 = vmatpush1.bf16.msra.mxu0 0
      %1194 = vmatprep.mubr.bf16.mxu0 0
      %1195 = vmatmul.mubr.bf16.gmra.mrb[0].mxu0 %v1153
      %v1196 = vpop.f32.mrb[0].mxu0
      %v1197 = vadd.f32 0.0, %v1196
      %v1198 = vpop.f32.mrb[0].mxu0
      %v1199 = vpop.f32.mrb[0].mxu0
      %v1200 = vadd.f32 0.0, %v1199
      %v1201 = vpop.f32.mrb[0].mxu0
      %1202 = vdwg.mxu0
      %v1203 = vmul.f32 %v457, %v1197
      %v1204 = vmul.f32 %v462, %v1200
      %v1205 = vadd.f32 %v1203, 0.0
      %v1206 = vadd.f32 %v1204, 0.0
      %v1207 = vld [vmem:[#allocation2 + $0x1] sm:$0xff]
      %v1208 = vld [vmem:[#allocation2 + $0x9] sm:$0xff]
      %v1209 = vpack.c.bf16 %v1208, %v1207
      %v1211 = vsel %vm1137, %v1209, 0
      %v1214 = vand.u32 %v1141, %v1158
      %1216 = vmatprep.subr.bf16.mxu0 0
      %1217 = vmatpush1.bf16.msra.mxu0 %v1214
      %1218 = vmatprep.subr.bf16.mxu0 0
      %1219 = vmatpush1.bf16.msra.mxu0 0
      %1220 = vmatprep.subr.bf16.mxu0 0
      %1221 = vmatpush1.bf16.msra.mxu0 0
      %1222 = vmatprep.subr.bf16.mxu0 0
      %1223 = vmatpush1.bf16.msra.mxu0 0
      %1224 = vmatprep.subr.bf16.mxu0 0
      %1225 = vmatpush1.bf16.msra.mxu0 0
      %1226 = vmatprep.subr.bf16.mxu0 0
      %1227 = vmatpush1.bf16.msra.mxu0 0
      %1228 = vmatprep.subr.bf16.mxu0 0
      %1229 = vmatpush1.bf16.msra.mxu0 0
      %1230 = vmatprep.subr.bf16.mxu0 0
      %1231 = vmatpush1.bf16.msra.mxu0 0
      %1232 = vmatprep.subr.bf16.mxu0 0
      %1233 = vmatpush1.bf16.msra.mxu0 0
      %1234 = vmatprep.subr.bf16.mxu0 0
      %1235 = vmatpush1.bf16.msra.mxu0 0
      %1236 = vmatprep.subr.bf16.mxu0 0
      %1237 = vmatpush1.bf16.msra.mxu0 0
      %1238 = vmatprep.subr.bf16.mxu0 0
      %1239 = vmatpush1.bf16.msra.mxu0 0
      %1240 = vmatprep.subr.bf16.mxu0 0
      %1241 = vmatpush1.bf16.msra.mxu0 0
      %1242 = vmatprep.subr.bf16.mxu0 0
      %1243 = vmatpush1.bf16.msra.mxu0 0
      %1244 = vmatprep.subr.bf16.mxu0 0
      %1245 = vmatpush1.bf16.msra.mxu0 0
      %1246 = vmatprep.subr.bf16.mxu0 0
      %1247 = vmatpush1.bf16.msra.mxu0 0
      %1248 = vmatprep.mubr.bf16.mxu0 0
      %1249 = vmatmul.mubr.bf16.gmra.mrb[0].mxu0 %v1211
      %v1250 = vpop.f32.mrb[0].mxu0
      %v1251 = vadd.f32 0.0, %v1250
      %v1252 = vpop.f32.mrb[0].mxu0
      %v1253 = vpop.f32.mrb[0].mxu0
      %v1254 = vadd.f32 0.0, %v1253
      %v1255 = vpop.f32.mrb[0].mxu0
      %1256 = vdwg.mxu0
      %v1257 = vmul.f32 %v538, %v1251
      %v1258 = vmul.f32 %v543, %v1254
      %v1259 = vadd.f32 %v1205, %v1257
      %v1260 = vadd.f32 %v1206, %v1258
      %v1261 = vld [vmem:[#allocation2 + $0x2] sm:$0xff]
      %v1262 = vld [vmem:[#allocation2 + $0xa] sm:$0xff]
      %v1263 = vpack.c.bf16 %v1262, %v1261
      %v1265 = vsel %vm1137, %v1263, 0
      %v1268 = vand.u32 %v1142, %v1158
      %1270 = vmatprep.subr.bf16.mxu0 0
      %1271 = vmatpush1.bf16.msra.mxu0 %v1268
      %1272 = vmatprep.subr.bf16.mxu0 0
      %1273 = vmatpush1.bf16.msra.mxu0 0
      %1274 = vmatprep.subr.bf16.mxu0 0
      %1275 = vmatpush1.bf16.msra.mxu0 0
      %1276 = vmatprep.subr.bf16.mxu0 0
      %1277 = vmatpush1.bf16.msra.mxu0 0
      %1278 = vmatprep.subr.bf16.mxu0 0
      %1279 = vmatpush1.bf16.msra.mxu0 0
      %1280 = vmatprep.subr.bf16.mxu0 0
      %1281 = vmatpush1.bf16.msra.mxu0 0
      %1282 = vmatprep.subr.bf16.mxu0 0
      %1283 = vmatpush1.bf16.msra.mxu0 0
      %1284 = vmatprep.subr.bf16.mxu0 0
      %1285 = vmatpush1.bf16.msra.mxu0 0
      %1286 = vmatprep.subr.bf16.mxu0 0
      %1287 = vmatpush1.bf16.msra.mxu0 0
      %1288 = vmatprep.subr.bf16.mxu0 0
      %1289 = vmatpush1.bf16.msra.mxu0 0
      %1290 = vmatprep.subr.bf16.mxu0 0
      %1291 = vmatpush1.bf16.msra.mxu0 0
      %1292 = vmatprep.subr.bf16.mxu0 0
      %1293 = vmatpush1.bf16.msra.mxu0 0
      %1294 = vmatprep.subr.bf16.mxu0 0
      %1295 = vmatpush1.bf16.msra.mxu0 0
      %1296 = vmatprep.subr.bf16.mxu0 0
      %1297 = vmatpush1.bf16.msra.mxu0 0
      %1298 = vmatprep.subr.bf16.mxu0 0
      %1299 = vmatpush1.bf16.msra.mxu0 0
      %1300 = vmatprep.subr.bf16.mxu0 0
      %1301 = vmatpush1.bf16.msra.mxu0 0
      %1302 = vmatprep.mubr.bf16.mxu0 0
      %1303 = vmatmul.mubr.bf16.gmra.mrb[0].mxu0 %v1265
      %v1304 = vpop.f32.mrb[0].mxu0
      %v1305 = vadd.f32 0.0, %v1304
      %v1306 = vpop.f32.mrb[0].mxu0
      %v1307 = vpop.f32.mrb[0].mxu0
      %v1308 = vadd.f32 0.0, %v1307
      %v1309 = vpop.f32.mrb[0].mxu0
      %1310 = vdwg.mxu0
      %v1311 = vmul.f32 %v619, %v1305
      %v1312 = vmul.f32 %v624, %v1308
      %v1313 = vadd.f32 %v1259, %v1311
      %v1314 = vadd.f32 %v1260, %v1312
      %v1315 = vld [vmem:[#allocation2 + $0x4] sm:$0xff]
      %v1316 = vld [vmem:[#allocation2 + $0xc] sm:$0xff]
      %v1317 = vpack.c.bf16 %v1316, %v1315
      %v1319 = vsel %vm1137, %v1317, 0
      %v1322 = vand.u32 %v1143, %v1158
      %1324 = vmatprep.subr.bf16.mxu0 0
      %1325 = vmatpush1.bf16.msra.mxu0 %v1322
      %1326 = vmatprep.subr.bf16.mxu0 0
      %1327 = vmatpush1.bf16.msra.mxu0 0
      %1328 = vmatprep.subr.bf16.mxu0 0
      %1329 = vmatpush1.bf16.msra.mxu0 0
      %1330 = vmatprep.subr.bf16.mxu0 0
      %1331 = vmatpush1.bf16.msra.mxu0 0
      %1332 = vmatprep.subr.bf16.mxu0 0
      %1333 = vmatpush1.bf16.msra.mxu0 0
      %1334 = vmatprep.subr.bf16.mxu0 0
      %1335 = vmatpush1.bf16.msra.mxu0 0
      %1336 = vmatprep.subr.bf16.mxu0 0
      %1337 = vmatpush1.bf16.msra.mxu0 0
      %1338 = vmatprep.subr.bf16.mxu0 0
      %1339 = vmatpush1.bf16.msra.mxu0 0
      %1340 = vmatprep.subr.bf16.mxu0 0
      %1341 = vmatpush1.bf16.msra.mxu0 0
      %1342 = vmatprep.subr.bf16.mxu0 0
      %1343 = vmatpush1.bf16.msra.mxu0 0
      %1344 = vmatprep.subr.bf16.mxu0 0
      %1345 = vmatpush1.bf16.msra.mxu0 0
      %1346 = vmatprep.subr.bf16.mxu0 0
      %1347 = vmatpush1.bf16.msra.mxu0 0
      %1348 = vmatprep.subr.bf16.mxu0 0
      %1349 = vmatpush1.bf16.msra.mxu0 0
      %1350 = vmatprep.subr.bf16.mxu0 0
      %1351 = vmatpush1.bf16.msra.mxu0 0
      %1352 = vmatprep.subr.bf16.mxu0 0
      %1353 = vmatpush1.bf16.msra.mxu0 0
      %1354 = vmatprep.subr.bf16.mxu0 0
      %1355 = vmatpush1.bf16.msra.mxu0 0
      %1356 = vmatprep.mubr.bf16.mxu0 0
      %1357 = vmatmul.mubr.bf16.gmra.mrb[0].mxu0 %v1319
      %v1358 = vpop.f32.mrb[0].mxu0
      %v1359 = vadd.f32 0.0, %v1358
      %v1360 = vpop.f32.mrb[0].mxu0
      %v1361 = vpop.f32.mrb[0].mxu0
      %v1362 = vadd.f32 0.0, %v1361
      %v1363 = vpop.f32.mrb[0].mxu0
      %1364 = vdwg.mxu0
      %v1365 = vmul.f32 %v700, %v1359
      %v1366 = vmul.f32 %v705, %v1362
      %v1367 = vadd.f32 %v1313, %v1365
      %v1368 = vadd.f32 %v1314, %v1366
      %v1369 = vld [vmem:[#allocation2 + $0x5] sm:$0xff]
      %v1370 = vld [vmem:[#allocation2 + $0xd] sm:$0xff]
      %v1371 = vpack.c.bf16 %v1370, %v1369
      %v1373 = vsel %vm1137, %v1371, 0
      %v1376 = vand.u32 %v1144, %v1158
      %1378 = vmatprep.subr.bf16.mxu0 0
      %1379 = vmatpush1.bf16.msra.mxu0 %v1376
      %1380 = vmatprep.subr.bf16.mxu0 0
      %1381 = vmatpush1.bf16.msra.mxu0 0
      %1382 = vmatprep.subr.bf16.mxu0 0
      %1383 = vmatpush1.bf16.msra.mxu0 0
      %1384 = vmatprep.subr.bf16.mxu0 0
      %1385 = vmatpush1.bf16.msra.mxu0 0
      %1386 = vmatprep.subr.bf16.mxu0 0
      %1387 = vmatpush1.bf16.msra.mxu0 0
      %1388 = vmatprep.subr.bf16.mxu0 0
      %1389 = vmatpush1.bf16.msra.mxu0 0
      %1390 = vmatprep.subr.bf16.mxu0 0
      %1391 = vmatpush1.bf16.msra.mxu0 0
      %1392 = vmatprep.subr.bf16.mxu0 0
      %1393 = vmatpush1.bf16.msra.mxu0 0
      %1394 = vmatprep.subr.bf16.mxu0 0
      %1395 = vmatpush1.bf16.msra.mxu0 0
      %1396 = vmatprep.subr.bf16.mxu0 0
      %1397 = vmatpush1.bf16.msra.mxu0 0
      %1398 = vmatprep.subr.bf16.mxu0 0
      %1399 = vmatpush1.bf16.msra.mxu0 0
      %1400 = vmatprep.subr.bf16.mxu0 0
      %1401 = vmatpush1.bf16.msra.mxu0 0
      %1402 = vmatprep.subr.bf16.mxu0 0
      %1403 = vmatpush1.bf16.msra.mxu0 0
      %1404 = vmatprep.subr.bf16.mxu0 0
      %1405 = vmatpush1.bf16.msra.mxu0 0
      %1406 = vmatprep.subr.bf16.mxu0 0
      %1407 = vmatpush1.bf16.msra.mxu0 0
      %1408 = vmatprep.subr.bf16.mxu0 0
      %1409 = vmatpush1.bf16.msra.mxu0 0
      %1410 = vmatprep.mubr.bf16.mxu0 0
      %1411 = vmatmul.mubr.bf16.gmra.mrb[0].mxu0 %v1373
      %v1412 = vpop.f32.mrb[0].mxu0
      %v1413 = vadd.f32 0.0, %v1412
      %v1414 = vpop.f32.mrb[0].mxu0
      %v1415 = vpop.f32.mrb[0].mxu0
      %v1416 = vadd.f32 0.0, %v1415
      %v1417 = vpop.f32.mrb[0].mxu0
      %1418 = vdwg.mxu0
      %v1419 = vmul.f32 %v781, %v1413
      %v1420 = vmul.f32 %v786, %v1416
      %v1421 = vadd.f32 %v1367, %v1419
      %v1422 = vadd.f32 %v1368, %v1420
      %v1423 = vld [vmem:[#allocation2 + $0x6] sm:$0xff]
      %v1424 = vld [vmem:[#allocation2 + $0xe] sm:$0xff]
      %v1425 = vpack.c.bf16 %v1424, %v1423
      %v1427 = vsel %vm1137, %v1425, 0
      %v1430 = vand.u32 %v1145, %v1158
      %1432 = vmatprep.subr.bf16.mxu0 0
      %1433 = vmatpush1.bf16.msra.mxu0 %v1430
      %1434 = vmatprep.subr.bf16.mxu0 0
      %1435 = vmatpush1.bf16.msra.mxu0 0
      %1436 = vmatprep.subr.bf16.mxu0 0
      %1437 = vmatpush1.bf16.msra.mxu0 0
      %1438 = vmatprep.subr.bf16.mxu0 0
      %1439 = vmatpush1.bf16.msra.mxu0 0
      %1440 = vmatprep.subr.bf16.mxu0 0
      %1441 = vmatpush1.bf16.msra.mxu0 0
      %1442 = vmatprep.subr.bf16.mxu0 0
      %1443 = vmatpush1.bf16.msra.mxu0 0
      %1444 = vmatprep.subr.bf16.mxu0 0
      %1445 = vmatpush1.bf16.msra.mxu0 0
      %1446 = vmatprep.subr.bf16.mxu0 0
      %1447 = vmatpush1.bf16.msra.mxu0 0
      %1448 = vmatprep.subr.bf16.mxu0 0
      %1449 = vmatpush1.bf16.msra.mxu0 0
      %1450 = vmatprep.subr.bf16.mxu0 0
      %1451 = vmatpush1.bf16.msra.mxu0 0
      %1452 = vmatprep.subr.bf16.mxu0 0
      %1453 = vmatpush1.bf16.msra.mxu0 0
      %1454 = vmatprep.subr.bf16.mxu0 0
      %1455 = vmatpush1.bf16.msra.mxu0 0
      %1456 = vmatprep.subr.bf16.mxu0 0
      %1457 = vmatpush1.bf16.msra.mxu0 0
      %1458 = vmatprep.subr.bf16.mxu0 0
      %1459 = vmatpush1.bf16.msra.mxu0 0
      %1460 = vmatprep.subr.bf16.mxu0 0
      %1461 = vmatpush1.bf16.msra.mxu0 0
      %1462 = vmatprep.subr.bf16.mxu0 0
      %1463 = vmatpush1.bf16.msra.mxu0 0
      %1464 = vmatprep.mubr.bf16.mxu0 0
      %1465 = vmatmul.mubr.bf16.gmra.mrb[0].mxu0 %v1427
      %v1466 = vpop.f32.mrb[0].mxu0
      %v1467 = vadd.f32 0.0, %v1466
      %v1468 = vpop.f32.mrb[0].mxu0
      %v1469 = vpop.f32.mrb[0].mxu0
      %v1470 = vadd.f32 0.0, %v1469
      %v1471 = vpop.f32.mrb[0].mxu0
      %1472 = vdwg.mxu0
      %v1473 = vmul.f32 %v862, %v1467
      %v1474 = vmul.f32 %v867, %v1470
      %v1475 = vadd.f32 %v1421, %v1473
      %v1476 = vadd.f32 %v1422, %v1474
      %v1477 = vld [vmem:[#allocation2 + $0x8] sm:$0xff]
      %v1478 = vld [vmem:[#allocation2 + $0x10] sm:$0xff]
      %v1479 = vpack.c.bf16 %v1478, %v1477
      %v1481 = vsel %vm1137, %v1479, 0
      %v1484 = vand.u32 %v1146, %v1158
      %1486 = vmatprep.subr.bf16.mxu0 0
      %1487 = vmatpush1.bf16.msra.mxu0 %v1484
      %1488 = vmatprep.subr.bf16.mxu0 0
      %1489 = vmatpush1.bf16.msra.mxu0 0
      %1490 = vmatprep.subr.bf16.mxu0 0
      %1491 = vmatpush1.bf16.msra.mxu0 0
      %1492 = vmatprep.subr.bf16.mxu0 0
      %1493 = vmatpush1.bf16.msra.mxu0 0
      %1494 = vmatprep.subr.bf16.mxu0 0
      %1495 = vmatpush1.bf16.msra.mxu0 0
      %1496 = vmatprep.subr.bf16.mxu0 0
      %1497 = vmatpush1.bf16.msra.mxu0 0
      %1498 = vmatprep.subr.bf16.mxu0 0
      %1499 = vmatpush1.bf16.msra.mxu0 0
      %1500 = vmatprep.subr.bf16.mxu0 0
      %1501 = vmatpush1.bf16.msra.mxu0 0
      %1502 = vmatprep.subr.bf16.mxu0 0
      %1503 = vmatpush1.bf16.msra.mxu0 0
      %1504 = vmatprep.subr.bf16.mxu0 0
      %1505 = vmatpush1.bf16.msra.mxu0 0
      %1506 = vmatprep.subr.bf16.mxu0 0
      %1507 = vmatpush1.bf16.msra.mxu0 0
      %1508 = vmatprep.subr.bf16.mxu0 0
      %1509 = vmatpush1.bf16.msra.mxu0 0
      %1510 = vmatprep.subr.bf16.mxu0 0
      %1511 = vmatpush1.bf16.msra.mxu0 0
      %1512 = vmatprep.subr.bf16.mxu0 0
      %1513 = vmatpush1.bf16.msra.mxu0 0
      %1514 = vmatprep.subr.bf16.mxu0 0
      %1515 = vmatpush1.bf16.msra.mxu0 0
      %1516 = vmatprep.subr.bf16.mxu0 0
      %1517 = vmatpush1.bf16.msra.mxu0 0
      %1518 = vmatprep.mubr.bf16.mxu0 0
      %1519 = vmatmul.mubr.bf16.gmra.mrb[0].mxu0 %v1481
      %v1520 = vpop.f32.mrb[0].mxu0
      %v1521 = vadd.f32 0.0, %v1520
      %v1522 = vpop.f32.mrb[0].mxu0
      %v1523 = vpop.f32.mrb[0].mxu0
      %v1524 = vadd.f32 0.0, %v1523
      %v1525 = vpop.f32.mrb[0].mxu0
      %1526 = vdwg.mxu0
      %v1527 = vmul.f32 %v943, %v1521
      %v1528 = vmul.f32 %v948, %v1524
      %v1529 = vadd.f32 %v1475, %v1527
      %v1530 = vadd.f32 %v1476, %v1528
      %v1531 = vld [vmem:[#allocation2 + $0x9] sm:$0xff]
      %v1532 = vld [vmem:[#allocation2 + $0x11] sm:$0xff]
      %v1533 = vpack.c.bf16 %v1532, %v1531
      %v1535 = vsel %vm1137, %v1533, 0
      %v1538 = vand.u32 %v1147, %v1158
      %1540 = vmatprep.subr.bf16.mxu0 0
      %1541 = vmatpush1.bf16.msra.mxu0 %v1538
      %1542 = vmatprep.subr.bf16.mxu0 0
      %1543 = vmatpush1.bf16.msra.mxu0 0
      %1544 = vmatprep.subr.bf16.mxu0 0
      %1545 = vmatpush1.bf16.msra.mxu0 0
      %1546 = vmatprep.subr.bf16.mxu0 0
      %1547 = vmatpush1.bf16.msra.mxu0 0
      %1548 = vmatprep.subr.bf16.mxu0 0
      %1549 = vmatpush1.bf16.msra.mxu0 0
      %1550 = vmatprep.subr.bf16.mxu0 0
      %1551 = vmatpush1.bf16.msra.mxu0 0
      %1552 = vmatprep.subr.bf16.mxu0 0
      %1553 = vmatpush1.bf16.msra.mxu0 0
      %1554 = vmatprep.subr.bf16.mxu0 0
      %1555 = vmatpush1.bf16.msra.mxu0 0
      %1556 = vmatprep.subr.bf16.mxu0 0
      %1557 = vmatpush1.bf16.msra.mxu0 0
      %1558 = vmatprep.subr.bf16.mxu0 0
      %1559 = vmatpush1.bf16.msra.mxu0 0
      %1560 = vmatprep.subr.bf16.mxu0 0
      %1561 = vmatpush1.bf16.msra.mxu0 0
      %1562 = vmatprep.subr.bf16.mxu0 0
      %1563 = vmatpush1.bf16.msra.mxu0 0
      %1564 = vmatprep.subr.bf16.mxu0 0
      %1565 = vmatpush1.bf16.msra.mxu0 0
      %1566 = vmatprep.subr.bf16.mxu0 0
      %1567 = vmatpush1.bf16.msra.mxu0 0
      %1568 = vmatprep.subr.bf16.mxu0 0
      %1569 = vmatpush1.bf16.msra.mxu0 0
      %1570 = vmatprep.subr.bf16.mxu0 0
      %1571 = vmatpush1.bf16.msra.mxu0 0
      %1572 = vmatprep.mubr.bf16.mxu0 0
      %1573 = vmatmul.mubr.bf16.gmra.mrb[0].mxu0 %v1535
      %v1574 = vpop.f32.mrb[0].mxu0
      %v1575 = vadd.f32 0.0, %v1574
      %v1576 = vpop.f32.mrb[0].mxu0
      %v1577 = vpop.f32.mrb[0].mxu0
      %v1578 = vadd.f32 0.0, %v1577
      %v1579 = vpop.f32.mrb[0].mxu0
      %1580 = vdwg.mxu0
      %v1581 = vmul.f32 %v1024, %v1575
      %v1582 = vmul.f32 %v1029, %v1578
      %v1583 = vadd.f32 %v1529, %v1581
      %v1584 = vadd.f32 %v1530, %v1582
      %v1585 = vld [vmem:[#allocation2 + $0xa] sm:$0xff]
      %v1586 = vld [vmem:[#allocation2 + $0x12] sm:$0xff]
      %v1587 = vpack.c.bf16 %v1586, %v1585
      %v1589 = vsel %vm1137, %v1587, 0
      %v1592 = vand.u32 %v1148, %v1158
      %1594 = vmatprep.subr.bf16.mxu0 0
      %1595 = vmatpush1.bf16.msra.mxu0 %v1592
      %1596 = vmatprep.subr.bf16.mxu0 0
      %1597 = vmatpush1.bf16.msra.mxu0 0
      %1598 = vmatprep.subr.bf16.mxu0 0
      %1599 = vmatpush1.bf16.msra.mxu0 0
      %1600 = vmatprep.subr.bf16.mxu0 0
      %1601 = vmatpush1.bf16.msra.mxu0 0
      %1602 = vmatprep.subr.bf16.mxu0 0
      %1603 = vmatpush1.bf16.msra.mxu0 0
      %1604 = vmatprep.subr.bf16.mxu0 0
      %1605 = vmatpush1.bf16.msra.mxu0 0
      %1606 = vmatprep.subr.bf16.mxu0 0
      %1607 = vmatpush1.bf16.msra.mxu0 0
      %1608 = vmatprep.subr.bf16.mxu0 0
      %1609 = vmatpush1.bf16.msra.mxu0 0
      %1610 = vmatprep.subr.bf16.mxu0 0
      %1611 = vmatpush1.bf16.msra.mxu0 0
      %1612 = vmatprep.subr.bf16.mxu0 0
      %1613 = vmatpush1.bf16.msra.mxu0 0
      %1614 = vmatprep.subr.bf16.mxu0 0
      %1615 = vmatpush1.bf16.msra.mxu0 0
      %1616 = vmatprep.subr.bf16.mxu0 0
      %1617 = vmatpush1.bf16.msra.mxu0 0
      %1618 = vmatprep.subr.bf16.mxu0 0
      %1619 = vmatpush1.bf16.msra.mxu0 0
      %1620 = vmatprep.subr.bf16.mxu0 0
      %1621 = vmatpush1.bf16.msra.mxu0 0
      %1622 = vmatprep.subr.bf16.mxu0 0
      %1623 = vmatpush1.bf16.msra.mxu0 0
      %1624 = vmatprep.subr.bf16.mxu0 0
      %1625 = vmatpush1.bf16.msra.mxu0 0
      %1626 = vmatprep.mubr.bf16.mxu0 0
      %1627 = vmatmul.mubr.bf16.gmra.mrb[0].mxu0 %v1589
      %v1628 = vpop.f32.mrb[0].mxu0
      %v1629 = vadd.f32 0.0, %v1628
      %v1630 = vpop.f32.mrb[0].mxu0
      %v1631 = vpop.f32.mrb[0].mxu0
      %v1632 = vadd.f32 0.0, %v1631
      %v1633 = vpop.f32.mrb[0].mxu0
      %1634 = vdwg.mxu0
      %v1635 = vmul.f32 %v1105, %v1629
      %v1636 = vmul.f32 %v1110, %v1632
      %v1637 = vadd.f32 %v1583, %v1635
      %v1638 = vadd.f32 %v1584, %v1636
      %v1639 = vld [vmem:[%s5] sm:$0x1]
      %v1641 = vlaneseq
      %v1642 = vshrl.u32 %v1641, 7
      %v1643 = vsub.s32 0, %v1642
      %v1644 = vrot.slane %v1639, %v1643
      %v1646 = vadd.f32 %v1637, %v1644
      %v1647 = vadd.f32 %v1638, %v1644
      %v1648 = vxor.u32 %v1646, 2147483648
      %v1649 = vxor.u32 %v1647, 2147483648
      %v1650 = vmul.f32 %v1648, 1.442695
      %v1651 = vpow.pop %v1650
      %v1652 = vmul.f32 %v1649, 1.442695
      %v1653 = vpow.pop %v1652
      %v1654 = vadd.f32 %v1651, 1.0
      %v1655 = vadd.f32 %v1653, 1.0
      %v1656 = vrcp.pop %v1654
      %v1657 = vmul.f32 1.0, %v1656
      %v1658 = vrcp.pop %v1655
      %v1659 = vmul.f32 1.0, %v1658
      %v1660 = vmul.f32 %v1657, 2.0
      %v1661 = vmul.f32 %v1659, 2.0
      %v1662 = vsub.f32 %v1660, 1.0
      %v1663 = vsub.f32 %v1661, 1.0
      %v1664 = vmul.f32 %v1662, 1.442695
      %v1665 = vpow.pop %v1664
      %v1666 = vmul.f32 %v1663, 1.442695
      %v1667 = vpow.pop %v1666
      %1670 = vrot.lane.b32.xlu0 %v1665, 3
      %v1671 = vpop.permute.xlu0 %1670
      %1672 = vrot.lane.b32.xlu0 %v1667, 3
      %v1673 = vpop.permute.xlu0 %1672
      %v1676 = vmul.f32 %v317, %v1671
      %v1677 = vmul.f32 %v318, %v1673
      %1680 = vrot.lane.b32.xlu0 %v1646, 86
      %v1681 = vpop.permute.xlu0 %1680
      %1682 = vrot.lane.b32.xlu0 %v1647, 86
      %v1683 = vpop.permute.xlu0 %1682
      %v1686 = vadd.f32 %v1676, %v1681
      %v1687 = vadd.f32 %v1677, %v1683
      %1688 = vst.msk [vmem:[%s286] sm:$0xff] %vm1137, %v1135
      %1689 = vst.msk [vmem:[%s286 + $0x8] sm:$0xff] %vm1137, %v1136
      %vm1690 = vcmask 392216
      %1691 = vst.msk [vmem:[%s286] sm:$0xff] %vm1690, %v1686
      %1692 = vst.msk [vmem:[%s286 + $0x8] sm:$0xff] %vm1690, %v1687
      %1693 = vst.msk [vmem:[%s291] sm:$0xff] %vm1137, %v1125
      %1694 = vst.msk [vmem:[%s291 + $0x8] sm:$0xff] %vm1137, %v1126
      %p1695 = scmp.lt.s32.totalorder %s19, 1
      %s1696 = scalar_select %p1695, %s19, 1
      %s1697 = smul.addr %s1696, 2
      %s1698 = smul.addr %s1697, 8
      %s1699 = scalar_lea.vmem %s6, %s1698
      %p1700 = scmp.lt.s32.totalorder %s19, 1
      %s1701 = scalar_select %p1700, %s19, 1
      %s1702 = smul.addr %s1701, 2
      %s1703 = smul.addr %s1702, 8
      %s1704 = scalar_lea.vmem %s7, %s1703
      // Predicated region
      $region45: #{sainet_forward.16} parent=43 // pred_check
        %p1705 = pneg %p168
      $region46: #{sainet_forward.16} parent=43 // pred_check_branch
        %1707 = sbr.rel (%p1705) target = $region48
      $region47: #{sainet_forward.16} parent=43 // pred_region
        _
      $region48: #{sainet_forward.16} parent=43 // pred_fallthru
        _
      // Predicated region
      $region49: #{sainet_forward.16} parent=43 // pred_check
        %p1708 = pneg %p194
      $region50: #{sainet_forward.16} parent=43 // pred_check_branch
        %1710 = sbr.rel (%p1708) target = $region52
      $region51: #{sainet_forward.16} parent=43 // pred_region
        _
      $region52: #{sainet_forward.16} parent=43 // pred_fallthru
        _
    $region44: #{sainet_forward.16} parent=5 // pred_fallthru
      _
    %p1711 = scmp.le.s32.totalorder 2, %s14
    // Predicated region
    $region53: #{sainet_forward.16} parent=5 // pred_check
      %p1712 = pneg %p1711
    $region54: #{sainet_forward.16} parent=5 // pred_check_branch
      %1714 = sbr.rel (%p1712) target = $region56
    $region55: #{sainet_forward.16} parent=5 // pred_region
      %s1715 = ssub.s32 %s14, 2
      // Predicated region
      $region57: #{sainet_forward.16} parent=55 // pred_check
        %p1716 = pneg %p174
      $region58: #{sainet_forward.16} parent=55 // pred_check_branch
        %1718 = sbr.rel (%p1716) target = $region60
      $region59: #{sainet_forward.16} parent=55 // pred_region
        %p1719 = scmp.lt.s32.totalorder %s20, 1
        %s1720 = scalar_select %p1719, %s20, 1
        %s1721 = smul.addr %s1720, 2
        %s1722 = smul.addr %s1721, 8
        %s1723 = scalar_lea.vmem %s6, %s1722
      $region60: #{sainet_forward.16} parent=55 // pred_fallthru
        _
      // Predicated region
      $region61: #{sainet_forward.16} parent=55 // pred_check
        %p1724 = pneg %p200
      $region62: #{sainet_forward.16} parent=55 // pred_check_branch
        %1726 = sbr.rel (%p1724) target = $region64
      $region63: #{sainet_forward.16} parent=55 // pred_region
        %p1727 = scmp.lt.s32.totalorder %s20, 1
        %s1728 = scalar_select %p1727, %s20, 1
        %s1729 = smul.addr %s1728, 2
        %s1730 = smul.addr %s1729, 8
        %s1731 = scalar_lea.vmem %s7, %s1730
      $region64: #{sainet_forward.16} parent=55 // pred_fallthru
        _
    $region56: #{sainet_forward.16} parent=5 // pred_fallthru
      _
  $region6: #{sainet_forward.16} parent=0 // loop_footer
    %s18 = sadd.s32 1, %s14
  $region7: #{sainet_forward.16} parent=0 // loop_footer_branch
    %13 = sbr.rel target = $region3
  $region8: #{sainet_forward.16} parent=0 // loop_exit
    _

// kernel: sainet_forward.12
$region0: #{sainet_forward.12}
  #allocation0 [shape = 'u32[]', space=smem, size = 0x4, offset = 0x4, fixed_abs, tag = 'smem constant byte address 0x4 - core index']
  #allocation1 [shape = 'u32[144,128]{1,0:T(1,128)}', space=vmem, size = 0x12000, scoped, tag = 'internal scratch']
  #allocation2 [shape = 'f32[26,45]{1,0:T(8,128)}', space=vmem, size = 0x4000, scoped, tag = 'scratch operand']
  %s0 = inlined_call_operand.vmem [shape: f32[2,16,48], index: 0, kind: input, shape index: {}]
  %s1 = inlined_call_operand.vmem [shape: f32[9,16,1], index: 1, kind: input, shape index: {}]
  %s2 = inlined_call_operand.vmem [shape: bf16[9,45,6], index: 2, kind: input, shape index: {}]
  %s3 = inlined_call_operand.vmem [shape: f32[1,6], index: 3, kind: input, shape index: {}]
  %s4 = inlined_call_operand.vmem [shape: bf16[9,3,90], index: 4, kind: input, shape index: {}]
  %s5 = inlined_call_operand.vmem [shape: f32[1,90], index: 5, kind: input, shape index: {}]
  %s6 = inlined_call_operand.vmem [shape: f32[2,16,48], index: 6, kind: output, shape index: {0}]
  %s7 = inlined_call_operand.hbm [shape: f32[2,16,3], index: 7, kind: output, shape index: {1}]
  %8 = xla_tuple %s6, %s7
  %s9 = sld [smem:[#allocation0]]
  $region65: #{sainet_forward.12} parent=0
    _
  %s11 = ssub.s32 1, %s9
  %s12 = scalar_select 0, %s11, %s9
  $region1: #{sainet_forward.12} parent=0
    #allocation3 [shape = 'u8[16384]{0}', space=vmem, size = 0x4000, scoped, tag = 'output window, operand 1']
    #allocation4 [shape = 's32[2]{0}', space=sflag, size = 0x8, scoped, tag = 'scoped memory for sainet_forward.12']
    %13 = vsyncpa [#allocation4], 0
    %s14 = scalar_lea.sflag [#allocation4], 1
    %15 = vsyncpa %s14, 0
    loop: start=0, step=1, limit=4
    $region2: #{sainet_forward.12} parent=1 // loop_pre_header
      _
    $region3: #{sainet_forward.12} parent=1 // loop_header
      %s17 = sphi 0, %s21
      %p18 = scmp.ge.s32.totalorder %s17, 4
      %s27 = sphi 0, %s29
      %s30 = sphi 0, %s27
      %s31 = sphi 0, %s30
      %s47 = sphi 0, %s31
      %s51 = sphi 0, %s51
      %s53 = sphi 0, %s51
      %s54 = sphi 0, %s53
      %s68 = sphi 0, %s54
      %s72 = sphi 0, %s72
      %s74 = sphi 0, %s72
      %s75 = sphi 0, %s74
      %s89 = sphi 0, %s75
      %s93 = sphi 0, %s93
      %s95 = sphi 0, %s93
      %s96 = sphi 0, %s95
      %s110 = sphi 0, %s96
      %s114 = sphi 0, %s114
      %s116 = sphi 0, %s114
      %s117 = sphi 0, %s116
      %s131 = sphi 0, %s117
      %s135 = sphi 0, %s135
      %s137 = sphi 0, %s135
      %s138 = sphi 0, %s137
      %s152 = sphi 0, %s138
      %s158 = sphi 0, %s160
      %s161 = sphi 0, %s158
      %s162 = sphi 0, %s161
      %s178 = sphi 0, %s162
      %s184 = sphi 0, %s186
      %s187 = sphi 0, %s184
      %s188 = sphi 0, %s187
      %s204 = sphi 0, %s188
    $region4: #{sainet_forward.12} parent=1 // loop_header_branch
      %20 = sbr.rel (%p18) target = $region8
    $region5: #{sainet_forward.12} parent=1 // loop_body
      %s22 = ssub.s32 %s17, 1
      %s23 = ssub.s32 %s17, 2
      %s24 = sadd.s32 %s17, 1
      %s25 = ssub.s32 %s17, %s24
      %p26 = scmp.eq.s32.totalorder %s25, 0
      %s28 = sadd.s32 %s27, 1
      %s29 = scalar_select %p26, %s27, %s28
      %p32 = pneg %p26
      %p33 = scmp.eq.s32.totalorder %s17, 1
      %p34 = por %p32, %p33
      %p35 = scmp.ne.s32.totalorder %s27, %s30
      %p36 = scmp.eq.s32.totalorder %s17, 0
      %p37 = por %p35, %p36
      %p38 = scmp.ne.s32.totalorder %s27, %s30
      %p39 = scmp.eq.s32.totalorder %s22, 1
      %p40 = por %p38, %p39
      %p41 = scmp.ne.s32.totalorder %s30, %s31
      %p42 = scmp.eq.s32.totalorder %s22, 0
      %p43 = por %p41, %p42
      %p44 = scmp.ne.s32.totalorder %s30, %s31
      %p45 = scmp.eq.s32.totalorder %s23, 1
      %p46 = por %p44, %p45
      %p48 = scmp.ne.s32.totalorder %s31, %s47
      %p49 = scmp.eq.s32.totalorder %s23, 0
      %p50 = por %p48, %p49
      %s52 = sadd.s32 %s51, 1
      %p55 = scmp.eq.s32.totalorder %s17, 1
      %p56 = scmp.ne.s32.totalorder %s51, %s53
      %p57 = scmp.eq.s32.totalorder %s17, 0
      %p58 = por %p56, %p57
      %p59 = scmp.ne.s32.totalorder %s51, %s53
      %p60 = scmp.eq.s32.totalorder %s22, 1
      %p61 = por %p59, %p60
      %p62 = scmp.ne.s32.totalorder %s53, %s54
      %p63 = scmp.eq.s32.totalorder %s22, 0
      %p64 = por %p62, %p63
      %p65 = scmp.ne.s32.totalorder %s53, %s54
      %p66 = scmp.eq.s32.totalorder %s23, 1
      %p67 = por %p65, %p66
      %p69 = scmp.ne.s32.totalorder %s54, %s68
      %p70 = scmp.eq.s32.totalorder %s23, 0
      %p71 = por %p69, %p70
      %s73 = sadd.s32 %s72, 1
      %p76 = scmp.eq.s32.totalorder %s17, 1
      %p77 = scmp.ne.s32.totalorder %s72, %s74
      %p78 = scmp.eq.s32.totalorder %s17, 0
      %p79 = por %p77, %p78
      %p80 = scmp.ne.s32.totalorder %s72, %s74
      %p81 = scmp.eq.s32.totalorder %s22, 1
      %p82 = por %p80, %p81
      %p83 = scmp.ne.s32.totalorder %s74, %s75
      %p84 = scmp.eq.s32.totalorder %s22, 0
      %p85 = por %p83, %p84
      %p86 = scmp.ne.s32.totalorder %s74, %s75
      %p87 = scmp.eq.s32.totalorder %s23, 1
      %p88 = por %p86, %p87
      %p90 = scmp.ne.s32.totalorder %s75, %s89
      %p91 = scmp.eq.s32.totalorder %s23, 0
      %p92 = por %p90, %p91
      %s94 = sadd.s32 %s93, 1
      %p97 = scmp.eq.s32.totalorder %s17, 1
      %p98 = scmp.ne.s32.totalorder %s93, %s95
      %p99 = scmp.eq.s32.totalorder %s17, 0
      %p100 = por %p98, %p99
      %p101 = scmp.ne.s32.totalorder %s93, %s95
      %p102 = scmp.eq.s32.totalorder %s22, 1
      %p103 = por %p101, %p102
      %p104 = scmp.ne.s32.totalorder %s95, %s96
      %p105 = scmp.eq.s32.totalorder %s22, 0
      %p106 = por %p104, %p105
      %p107 = scmp.ne.s32.totalorder %s95, %s96
      %p108 = scmp.eq.s32.totalorder %s23, 1
      %p109 = por %p107, %p108
      %p111 = scmp.ne.s32.totalorder %s96, %s110
      %p112 = scmp.eq.s32.totalorder %s23, 0
      %p113 = por %p111, %p112
      %s115 = sadd.s32 %s114, 1
      %p118 = scmp.eq.s32.totalorder %s17, 1
      %p119 = scmp.ne.s32.totalorder %s114, %s116
      %p120 = scmp.eq.s32.totalorder %s17, 0
      %p121 = por %p119, %p120
      %p122 = scmp.ne.s32.totalorder %s114, %s116
      %p123 = scmp.eq.s32.totalorder %s22, 1
      %p124 = por %p122, %p123
      %p125 = scmp.ne.s32.totalorder %s116, %s117
      %p126 = scmp.eq.s32.totalorder %s22, 0
      %p127 = por %p125, %p126
      %p128 = scmp.ne.s32.totalorder %s116, %s117
      %p129 = scmp.eq.s32.totalorder %s23, 1
      %p130 = por %p128, %p129
      %p132 = scmp.ne.s32.totalorder %s117, %s131
      %p133 = scmp.eq.s32.totalorder %s23, 0
      %p134 = por %p132, %p133
      %s136 = sadd.s32 %s135, 1
      %p139 = scmp.eq.s32.totalorder %s17, 1
      %p140 = scmp.ne.s32.totalorder %s135, %s137
      %p141 = scmp.eq.s32.totalorder %s17, 0
      %p142 = por %p140, %p141
      %p143 = scmp.ne.s32.totalorder %s135, %s137
      %p144 = scmp.eq.s32.totalorder %s22, 1
      %p145 = por %p143, %p144
      %p146 = scmp.ne.s32.totalorder %s137, %s138
      %p147 = scmp.eq.s32.totalorder %s22, 0
      %p148 = por %p146, %p147
      %p149 = scmp.ne.s32.totalorder %s137, %s138
      %p150 = scmp.eq.s32.totalorder %s23, 1
      %p151 = por %p149, %p150
      %p153 = scmp.ne.s32.totalorder %s138, %s152
      %p154 = scmp.eq.s32.totalorder %s23, 0
      %p155 = por %p153, %p154
      %s156 = ssub.s32 %s17, %s24
      %p157 = scmp.eq.s32.totalorder %s156, 0
      %s159 = sadd.s32 %s158, 1
      %s160 = scalar_select %p157, %s158, %s159
      %p163 = pneg %p157
      %p164 = scmp.eq.s32.totalorder %s17, 1
      %p165 = por %p163, %p164
      %p166 = scmp.ne.s32.totalorder %s158, %s161
      %p167 = scmp.eq.s32.totalorder %s17, 0
      %p168 = por %p166, %p167
      %p169 = scmp.ne.s32.totalorder %s158, %s161
      %p170 = scmp.eq.s32.totalorder %s22, 1
      %p171 = por %p169, %p170
      %p172 = scmp.ne.s32.totalorder %s161, %s162
      %p173 = scmp.eq.s32.totalorder %s22, 0
      %p174 = por %p172, %p173
      %p175 = scmp.ne.s32.totalorder %s161, %s162
      %p176 = scmp.eq.s32.totalorder %s23, 1
      %p177 = por %p175, %p176
      %p179 = scmp.ne.s32.totalorder %s162, %s178
      %p180 = scmp.eq.s32.totalorder %s23, 0
      %p181 = por %p179, %p180
      %s182 = ssub.s32 %s17, %s24
      %p183 = scmp.eq.s32.totalorder %s182, 0
      %s185 = sadd.s32 %s184, 1
      %s186 = scalar_select %p183, %s184, %s185
      %p189 = pneg %p183
      %p190 = scmp.eq.s32.totalorder %s17, 1
      %p191 = por %p189, %p190
      %p192 = scmp.ne.s32.totalorder %s184, %s187
      %p193 = scmp.eq.s32.totalorder %s17, 0
      %p194 = por %p192, %p193
      %p195 = scmp.ne.s32.totalorder %s184, %s187
      %p196 = scmp.eq.s32.totalorder %s22, 1
      %p197 = por %p195, %p196
      %p198 = scmp.ne.s32.totalorder %s187, %s188
      %p199 = scmp.eq.s32.totalorder %s22, 0
      %p200 = por %p198, %p199
      %p201 = scmp.ne.s32.totalorder %s187, %s188
      %p202 = scmp.eq.s32.totalorder %s23, 1
      %p203 = por %p201, %p202
      %p205 = scmp.ne.s32.totalorder %s188, %s204
      %p206 = scmp.eq.s32.totalorder %s23, 0
      %p207 = por %p205, %p206
      %p208 = scmp.le.s32.totalorder 1, %s17
      %p209 = scmp.lt.s32.totalorder %s17, 3
      %p210 = pnand %p208, %p209
      %p211 = pneg %p210
      // Predicated region
      $region9: #{sainet_forward.12} parent=5 // pred_check
        _
      $region10: #{sainet_forward.12} parent=5 // pred_check_branch
        %213 = sbr.rel (%p210) target = $region12
      $region11: #{sainet_forward.12} parent=5 // pred_region
        %s214 = ssub.s32 %s17, 1
        // Predicated region
        $region13: #{sainet_forward.12} parent=11 // pred_check
          %p215 = pneg %p64
        $region14: #{sainet_forward.12} parent=11 // pred_check_branch
          %217 = sbr.rel (%p215) target = $region16
        $region15: #{sainet_forward.12} parent=11 // pred_region
          _
        $region16: #{sainet_forward.12} parent=11 // pred_fallthru
          _
        // Predicated region
        $region17: #{sainet_forward.12} parent=11 // pred_check
          %p218 = pneg %p85
        $region18: #{sainet_forward.12} parent=11 // pred_check_branch
          %220 = sbr.rel (%p218) target = $region20
        $region19: #{sainet_forward.12} parent=11 // pred_region
          _
        $region20: #{sainet_forward.12} parent=11 // pred_fallthru
          _
        // Predicated region
        $region21: #{sainet_forward.12} parent=11 // pred_check
          %p221 = pneg %p106
        $region22: #{sainet_forward.12} parent=11 // pred_check_branch
          %223 = sbr.rel (%p221) target = $region24
        $region23: #{sainet_forward.12} parent=11 // pred_region
          _
        $region24: #{sainet_forward.12} parent=11 // pred_fallthru
          _
        // Predicated region
        $region25: #{sainet_forward.12} parent=11 // pred_check
          %p224 = pneg %p127
        $region26: #{sainet_forward.12} parent=11 // pred_check_branch
          %226 = sbr.rel (%p224) target = $region28
        $region27: #{sainet_forward.12} parent=11 // pred_region
          _
        $region28: #{sainet_forward.12} parent=11 // pred_fallthru
          _
        // Predicated region
        $region29: #{sainet_forward.12} parent=11 // pred_check
          %p227 = pneg %p148
        $region30: #{sainet_forward.12} parent=11 // pred_check_branch
          %229 = sbr.rel (%p227) target = $region32
        $region31: #{sainet_forward.12} parent=11 // pred_region
          _
        $region32: #{sainet_forward.12} parent=11 // pred_fallthru
          _
      $region12: #{sainet_forward.12} parent=5 // pred_fallthru
        _
      %p230 = scmp.lt.s32.totalorder %s17, 2
      // Predicated region
      $region33: #{sainet_forward.12} parent=5 // pred_check
        %p231 = pneg %p230
      $region34: #{sainet_forward.12} parent=5 // pred_check_branch
        %233 = sbr.rel (%p231) target = $region36
      $region35: #{sainet_forward.12} parent=5 // pred_region
        // Predicated region
        $region37: #{sainet_forward.12} parent=35 // pred_check
          %p234 = pneg %p37
        $region38: #{sainet_forward.12} parent=35 // pred_check_branch
          %236 = sbr.rel (%p234) target = $region40
        $region39: #{sainet_forward.12} parent=35 // pred_region
          %p237 = scmp.lt.s32.totalorder %s17, 1
          %s238 = scalar_select %p237, %s17, 1
          %s239 = smul.addr %s238, 2
          %s240 = smul.addr %s239, 8
          %s241 = scalar_lea.vmem %s0, %s240
        $region40: #{sainet_forward.12} parent=35 // pred_fallthru
          _
      $region36: #{sainet_forward.12} parent=5 // pred_fallthru
        _
      %p242 = scmp.le.s32.totalorder 1, %s17
      %p243 = scmp.lt.s32.totalorder %s17, 3
      %p244 = pnand %p242, %p243
      %p245 = pneg %p244
      // Predicated region
      $region41: #{sainet_forward.12} parent=5 // pred_check
        _
      $region42: #{sainet_forward.12} parent=5 // pred_check_branch
        %247 = sbr.rel (%p244) target = $region44
      $region43: #{sainet_forward.12} parent=5 // pred_region
        %s248 = ssub.s32 %s17, 1
        %p249 = scmp.lt.s32.totalorder %s22, 1
        %s250 = scalar_select %p249, %s22, 1
        %s251 = smul.addr %s250, 2
        %s252 = smul.addr %s251, 8
        %s253 = scalar_lea.vmem %s0, %s252
        %p254 = pneg %p43
        %p255 = pneg %p40
        %p256 = pneg %p64
        %p257 = pneg %p61
        %p258 = pneg %p85
        %p259 = pneg %p82
        %p260 = pneg %p106
        %p261 = pneg %p103
        %p262 = pneg %p127
        %p263 = pneg %p124
        %p264 = pneg %p148
        %p265 = pneg %p145
        %p266 = pneg %p174
        %p267 = pneg %p171
        %p268 = scmp.lt.s32.totalorder %s22, 1
        %s269 = scalar_select %p268, %s22, 1
        %s270 = smul.addr %s269, 2
        %s271 = smul.addr %s270, 8
        %s272 = scalar_lea.vmem %s6, %s271
        %p273 = pneg %p200
        %p274 = pneg %p197
        %s275 = sand.u32 %s187, 1
        %s276 = scalar_lea.sflag [#allocation4], %s275
        %s277 = sand.u32 %s187, 1
        %s278 = smul.addr %s277, 16
        %s279 = scalar_lea.vmem [#allocation3], %s278
        %p280 = scmp.lt.s32.totalorder %s22, 1
        %s281 = scalar_select %p280, %s22, 1
        %s282 = smul.addr %s281, 2
        %s283 = smul.addr %s282, 8
        %s284 = scalar_lea.vmem %s0, %s283
        %p285 = scmp.lt.s32.totalorder %s22, 1
        %s286 = scalar_select %p285, %s22, 1
        %s287 = smul.addr %s286, 2
        %s288 = smul.addr %s287, 8
        %s289 = scalar_lea.vmem %s6, %s288
        %vm291 = vcmask 367616
        %292 = vst.msk [vmem:[#allocation2] sm:$0xff] %vm291, 0.0
        %293 = vst.msk [vmem:[#allocation2 + $0x8] sm:$0xff] %vm291, 0.0
        %294 = vst.msk [vmem:[#allocation2 + $0x10] sm:$0xff] %vm291, 0.0
        %vm295 = vcmask 361472
        %296 = vst.msk [vmem:[#allocation2 + $0x18] sm:$0x3] %vm295, 0.0
        %v297 = vld [vmem:[%s1] sm:$0xff]
        %v298 = vld [vmem:[%s1 + $0x8] sm:$0xff]
        %v299 = vld [vmem:[%s1 + $0x10] sm:$0xff]
        %v300 = vld [vmem:[%s1 + $0x18] sm:$0xff]
        %v301 = vld [vmem:[%s1 + $0x20] sm:$0xff]
        %v302 = vld [vmem:[%s1 + $0x28] sm:$0xff]
        %v303 = vld [vmem:[%s1 + $0x30] sm:$0xff]
        %v304 = vld [vmem:[%s1 + $0x38] sm:$0xff]
        %v305 = vld [vmem:[%s1 + $0x40] sm:$0xff]
        %v306 = vld [vmem:[%s1 + $0x48] sm:$0xff]
        %v307 = vld [vmem:[%s1 + $0x50] sm:$0xff]
        %v308 = vld [vmem:[%s1 + $0x58] sm:$0xff]
        %v309 = vld [vmem:[%s1 + $0x60] sm:$0xff]
        %v310 = vld [vmem:[%s1 + $0x68] sm:$0xff]
        %v311 = vld [vmem:[%s1 + $0x70] sm:$0xff]
        %v312 = vld [vmem:[%s1 + $0x78] sm:$0xff]
        %v313 = vld [vmem:[%s1 + $0x80] sm:$0xff]
        %v314 = vld [vmem:[%s1 + $0x88] sm:$0xff]
        %v315 = vld [vmem:[%s284] sm:$0xff]
        %v316 = vld [vmem:[%s284 + $0x8] sm:$0xff]
        %319 = vrot.lane.b32.xlu0 %v315, 125
        %v320 = vpop.permute.xlu0 %319
        %321 = vrot.lane.b32.xlu0 %v316, 125
        %v322 = vpop.permute.xlu0 %321
        %325 = vst.msk [vmem:[#allocation2 + $0x5] sm:$0xff] %vm291, %v320
        %326 = vst.msk [vmem:[#allocation2 + $0xd] sm:$0xff] %vm291, %v322
        %v327 = vld [vmem:[%s2] sm:$0xf]
        %v328 = vld [vmem:[%s2 + $0x4] sm:$0xf]
        %v329 = vld [vmem:[%s2 + $0x8] sm:$0xf]
        %v330 = vld [vmem:[%s2 + $0xc] sm:$0xf]
        %v331 = vld [vmem:[%s2 + $0x10] sm:$0xf]
        %v332 = vld [vmem:[%s2 + $0x14] sm:$0x7]
        %v333 = vld [vmem:[%s2 + $0x18] sm:$0xf]
        %v334 = vld [vmem:[%s2 + $0x1c] sm:$0xf]
        %v335 = vld [vmem:[%s2 + $0x20] sm:$0xf]
        %v336 = vld [vmem:[%s2 + $0x24] sm:$0xf]
        %v337 = vld [vmem:[%s2 + $0x28] sm:$0xf]
        %v338 = vld [vmem:[%s2 + $0x2c] sm:$0x7]
        %v339 = vld [vmem:[%s2 + $0x30] sm:$0xf]
        %v340 = vld [vmem:[%s2 + $0x34] sm:$0xf]
        %v341 = vld [vmem:[%s2 + $0x38] sm:$0xf]
        %v342 = vld [vmem:[%s2 + $0x3c] sm:$0xf]
        %v343 = vld [vmem:[%s2 + $0x40] sm:$0xf]
        %v344 = vld [vmem:[%s2 + $0x44] sm:$0x7]
        %v345 = vld [vmem:[%s2 + $0x48] sm:$0xf]
        %v346 = vld [vmem:[%s2 + $0x4c] sm:$0xf]
        %v347 = vld [vmem:[%s2 + $0x50] sm:$0xf]
        %v348 = vld [vmem:[%s2 + $0x54] sm:$0xf]
        %v349 = vld [vmem:[%s2 + $0x58] sm:$0xf]
        %v350 = vld [vmem:[%s2 + $0x5c] sm:$0x7]
        %v351 = vld [vmem:[%s2 + $0x60] sm:$0xf]
        %v352 = vld [vmem:[%s2 + $0x64] sm:$0xf]
        %v353 = vld [vmem:[%s2 + $0x68] sm:$0xf]
        %v354 = vld [vmem:[%s2 + $0x6c] sm:$0xf]
        %v355 = vld [vmem:[%s2 + $0x70] sm:$0xf]
        %v356 = vld [vmem:[%s2 + $0x74] sm:$0x7]
        %v357 = vld [vmem:[%s2 + $0x78] sm:$0xf]
        %v358 = vld [vmem:[%s2 + $0x7c] sm:$0xf]
        %v359 = vld [vmem:[%s2 + $0x80] sm:$0xf]
        %v360 = vld [vmem:[%s2 + $0x84] sm:$0xf]
        %v361 = vld [vmem:[%s2 + $0x88] sm:$0xf]
        %v362 = vld [vmem:[%s2 + $0x8c] sm:$0x7]
        %v363 = vld [vmem:[%s2 + $0x90] sm:$0xf]
        %v364 = vld [vmem:[%s2 + $0x94] sm:$0xf]
        %v365 = vld [vmem:[%s2 + $0x98] sm:$0xf]
        %v366 = vld [vmem:[%s2 + $0x9c] sm:$0xf]
        %v367 = vld [vmem:[%s2 + $0xa0] sm:$0xf]
        %v368 = vld [vmem:[%s2 + $0xa4] sm:$0x7]
        %v369 = vld [vmem:[%s2 + $0xa8] sm:$0xf]
        %v370 = vld [vmem:[%s2 + $0xac] sm:$0xf]
        %v371 = vld [vmem:[%s2 + $0xb0] sm:$0xf]
        %v372 = vld [vmem:[%s2 + $0xb4] sm:$0xf]
        %v373 = vld [vmem:[%s2 + $0xb8] sm:$0xf]
        %v374 = vld [vmem:[%s2 + $0xbc] sm:$0x7]
        %v375 = vld [vmem:[%s2 + $0xc0] sm:$0xf]
        %v376 = vld [vmem:[%s2 + $0xc4] sm:$0xf]
        %v377 = vld [vmem:[%s2 + $0xc8] sm:$0xf]
        %v378 = vld [vmem:[%s2 + $0xcc] sm:$0xf]
        %v379 = vld [vmem:[%s2 + $0xd0] sm:$0xf]
        %v380 = vld [vmem:[%s2 + $0xd4] sm:$0x7]
        %v381 = vld [vmem:[#allocation2] sm:$0xff]
        %v382 = vld [vmem:[#allocation2 + $0x8] sm:$0xff]
        %v383 = vpack.c.bf16 %v382, %v381
        %v390 = vunpack.c.l.b16 %v327
        %v391 = vunpack.c.l.b16 %v328
        %v392 = vunpack.c.l.b16 %v329
        %v393 = vunpack.c.l.b16 %v330
        %v394 = vunpack.c.l.b16 %v331
        %v395 = vunpack.c.l.b16 %v332
        %v396 = vpack.c.b16 %v391, %v390
        %v397 = vpack.c.b16 %v393, %v392
        %v398 = vpack.c.b16 %v395, %v394
        %v402 = vsel %vm291, %v383, 0
        %vm404 = vcmask 1045504
        %vm405 = vcmask 1046528
        %v406 = vsel %vm404, 4294967295, 65535
        %v407 = vsel %vm405, %v406, 0
        %v409 = vand.u32 %v398, %v407
        %411 = vmatprep.subr.bf16.mxu0 0
        %412 = vmatpush1.bf16.msra.mxu0 %v396
        %413 = vmatprep.subr.bf16.mxu0 0
        %414 = vmatpush1.bf16.msra.mxu0 %v397
        %415 = vmatprep.subr.bf16.mxu0 0
        %416 = vmatpush1.bf16.msra.mxu0 %v409
        %417 = vmatprep.subr.bf16.mxu0 0
        %418 = vmatpush1.bf16.msra.mxu0 0
        %419 = vmatprep.subr.bf16.mxu0 0
        %420 = vmatpush1.bf16.msra.mxu0 0
        %421 = vmatprep.subr.bf16.mxu0 0
        %422 = vmatpush1.bf16.msra.mxu0 0
        %423 = vmatprep.subr.bf16.mxu0 0
        %424 = vmatpush1.bf16.msra.mxu0 0
        %425 = vmatprep.subr.bf16.mxu0 0
        %426 = vmatpush1.bf16.msra.mxu0 0
        %427 = vmatprep.subr.bf16.mxu0 0
        %428 = vmatpush1.bf16.msra.mxu0 0
        %429 = vmatprep.subr.bf16.mxu0 0
        %430 = vmatpush1.bf16.msra.mxu0 0
        %431 = vmatprep.subr.bf16.mxu0 0
        %432 = vmatpush1.bf16.msra.mxu0 0
        %433 = vmatprep.subr.bf16.mxu0 0
        %434 = vmatpush1.bf16.msra.mxu0 0
        %435 = vmatprep.subr.bf16.mxu0 0
        %436 = vmatpush1.bf16.msra.mxu0 0
        %437 = vmatprep.subr.bf16.mxu0 0
        %438 = vmatpush1.bf16.msra.mxu0 0
        %439 = vmatprep.subr.bf16.mxu0 0
        %440 = vmatpush1.bf16.msra.mxu0 0
        %441 = vmatprep.subr.bf16.mxu0 0
        %442 = vmatpush1.bf16.msra.mxu0 0
        %443 = vmatprep.mubr.bf16.mxu0 0
        %444 = vmatmul.mubr.bf16.gmra.mrb[0].mxu0 %v402
        %v445 = vpop.f32.mrb[0].mxu0
        %v446 = vadd.f32 0.0, %v445
        %v447 = vpop.f32.mrb[0].mxu0
        %v448 = vpop.f32.mrb[0].mxu0
        %v449 = vadd.f32 0.0, %v448
        %v450 = vpop.f32.mrb[0].mxu0
        %451 = vdwg.mxu0
        %453 = vset.pattern.permute.xlu0 0
        %454 = vperm.xlu0 %453, %v297
        %v455 = vpop.permute.xlu0 %454
        %458 = vset.pattern.permute.xlu0 0
        %459 = vperm.xlu0 %458, %v298
        %v460 = vpop.permute.xlu0 %459
        %v462 = vmul.f32 %v455, %v446
        %v463 = vmul.f32 %v460, %v449
        %v464 = vadd.f32 %v462, 0.0
        %v465 = vadd.f32 %v463, 0.0
        %v466 = vld [vmem:[#allocation2 + $0x1] sm:$0xff]
        %v467 = vld [vmem:[#allocation2 + $0x9] sm:$0xff]
        %v468 = vpack.c.bf16 %v467, %v466
        %v475 = vunpack.c.l.b16 %v333
        %v476 = vunpack.c.l.b16 %v334
        %v477 = vunpack.c.l.b16 %v335
        %v478 = vunpack.c.l.b16 %v336
        %v479 = vunpack.c.l.b16 %v337
        %v480 = vunpack.c.l.b16 %v338
        %v481 = vpack.c.b16 %v476, %v475
        %v482 = vpack.c.b16 %v478, %v477
        %v483 = vpack.c.b16 %v480, %v479
        %v487 = vsel %vm291, %v468, 0
        %v490 = vand.u32 %v483, %v407
        %492 = vmatprep.subr.bf16.mxu0 0
        %493 = vmatpush1.bf16.msra.mxu0 %v481
        %494 = vmatprep.subr.bf16.mxu0 0
        %495 = vmatpush1.bf16.msra.mxu0 %v482
        %496 = vmatprep.subr.bf16.mxu0 0
        %497 = vmatpush1.bf16.msra.mxu0 %v490
        %498 = vmatprep.subr.bf16.mxu0 0
        %499 = vmatpush1.bf16.msra.mxu0 0
        %500 = vmatprep.subr.bf16.mxu0 0
        %501 = vmatpush1.bf16.msra.mxu0 0
        %502 = vmatprep.subr.bf16.mxu0 0
        %503 = vmatpush1.bf16.msra.mxu0 0
        %504 = vmatprep.subr.bf16.mxu0 0
        %505 = vmatpush1.bf16.msra.mxu0 0
        %506 = vmatprep.subr.bf16.mxu0 0
        %507 = vmatpush1.bf16.msra.mxu0 0
        %508 = vmatprep.subr.bf16.mxu0 0
        %509 = vmatpush1.bf16.msra.mxu0 0
        %510 = vmatprep.subr.bf16.mxu0 0
        %511 = vmatpush1.bf16.msra.mxu0 0
        %512 = vmatprep.subr.bf16.mxu0 0
        %513 = vmatpush1.bf16.msra.mxu0 0
        %514 = vmatprep.subr.bf16.mxu0 0
        %515 = vmatpush1.bf16.msra.mxu0 0
        %516 = vmatprep.subr.bf16.mxu0 0
        %517 = vmatpush1.bf16.msra.mxu0 0
        %518 = vmatprep.subr.bf16.mxu0 0
        %519 = vmatpush1.bf16.msra.mxu0 0
        %520 = vmatprep.subr.bf16.mxu0 0
        %521 = vmatpush1.bf16.msra.mxu0 0
        %522 = vmatprep.subr.bf16.mxu0 0
        %523 = vmatpush1.bf16.msra.mxu0 0
        %524 = vmatprep.mubr.bf16.mxu0 0
        %525 = vmatmul.mubr.bf16.gmra.mrb[0].mxu0 %v487
        %v526 = vpop.f32.mrb[0].mxu0
        %v527 = vadd.f32 0.0, %v526
        %v528 = vpop.f32.mrb[0].mxu0
        %v529 = vpop.f32.mrb[0].mxu0
        %v530 = vadd.f32 0.0, %v529
        %v531 = vpop.f32.mrb[0].mxu0
        %532 = vdwg.mxu0
        %534 = vset.pattern.permute.xlu0 0
        %535 = vperm.xlu0 %534, %v299
        %v536 = vpop.permute.xlu0 %535
        %539 = vset.pattern.permute.xlu0 0
        %540 = vperm.xlu0 %539, %v300
        %v541 = vpop.permute.xlu0 %540
        %v543 = vmul.f32 %v536, %v527
        %v544 = vmul.f32 %v541, %v530
        %v545 = vadd.f32 %v464, %v543
        %v546 = vadd.f32 %v465, %v544
        %v547 = vld [vmem:[#allocation2 + $0x2] sm:$0xff]
        %v548 = vld [vmem:[#allocation2 + $0xa] sm:$0xff]
        %v549 = vpack.c.bf16 %v548, %v547
        %v556 = vunpack.c.l.b16 %v339
        %v557 = vunpack.c.l.b16 %v340
        %v558 = vunpack.c.l.b16 %v341
        %v559 = vunpack.c.l.b16 %v342
        %v560 = vunpack.c.l.b16 %v343
        %v561 = vunpack.c.l.b16 %v344
        %v562 = vpack.c.b16 %v557, %v556
        %v563 = vpack.c.b16 %v559, %v558
        %v564 = vpack.c.b16 %v561, %v560
        %v568 = vsel %vm291, %v549, 0
        %v571 = vand.u32 %v564, %v407
        %573 = vmatprep.subr.bf16.mxu0 0
        %574 = vmatpush1.bf16.msra.mxu0 %v562
        %575 = vmatprep.subr.bf16.mxu0 0
        %576 = vmatpush1.bf16.msra.mxu0 %v563
        %577 = vmatprep.subr.bf16.mxu0 0
        %578 = vmatpush1.bf16.msra.mxu0 %v571
        %579 = vmatprep.subr.bf16.mxu0 0
        %580 = vmatpush1.bf16.msra.mxu0 0
        %581 = vmatprep.subr.bf16.mxu0 0
        %582 = vmatpush1.bf16.msra.mxu0 0
        %583 = vmatprep.subr.bf16.mxu0 0
        %584 = vmatpush1.bf16.msra.mxu0 0
        %585 = vmatprep.subr.bf16.mxu0 0
        %586 = vmatpush1.bf16.msra.mxu0 0
        %587 = vmatprep.subr.bf16.mxu0 0
        %588 = vmatpush1.bf16.msra.mxu0 0
        %589 = vmatprep.subr.bf16.mxu0 0
        %590 = vmatpush1.bf16.msra.mxu0 0
        %591 = vmatprep.subr.bf16.mxu0 0
        %592 = vmatpush1.bf16.msra.mxu0 0
        %593 = vmatprep.subr.bf16.mxu0 0
        %594 = vmatpush1.bf16.msra.mxu0 0
        %595 = vmatprep.subr.bf16.mxu0 0
        %596 = vmatpush1.bf16.msra.mxu0 0
        %597 = vmatprep.subr.bf16.mxu0 0
        %598 = vmatpush1.bf16.msra.mxu0 0
        %599 = vmatprep.subr.bf16.mxu0 0
        %600 = vmatpush1.bf16.msra.mxu0 0
        %601 = vmatprep.subr.bf16.mxu0 0
        %602 = vmatpush1.bf16.msra.mxu0 0
        %603 = vmatprep.subr.bf16.mxu0 0
        %604 = vmatpush1.bf16.msra.mxu0 0
        %605 = vmatprep.mubr.bf16.mxu0 0
        %606 = vmatmul.mubr.bf16.gmra.mrb[0].mxu0 %v568
        %v607 = vpop.f32.mrb[0].mxu0
        %v608 = vadd.f32 0.0, %v607
        %v609 = vpop.f32.mrb[0].mxu0
        %v610 = vpop.f32.mrb[0].mxu0
        %v611 = vadd.f32 0.0, %v610
        %v612 = vpop.f32.mrb[0].mxu0
        %613 = vdwg.mxu0
        %615 = vset.pattern.permute.xlu0 0
        %616 = vperm.xlu0 %615, %v301
        %v617 = vpop.permute.xlu0 %616
        %620 = vset.pattern.permute.xlu0 0
        %621 = vperm.xlu0 %620, %v302
        %v622 = vpop.permute.xlu0 %621
        %v624 = vmul.f32 %v617, %v608
        %v625 = vmul.f32 %v622, %v611
        %v626 = vadd.f32 %v545, %v624
        %v627 = vadd.f32 %v546, %v625
        %v628 = vld [vmem:[#allocation2 + $0x4] sm:$0xff]
        %v629 = vld [vmem:[#allocation2 + $0xc] sm:$0xff]
        %v630 = vpack.c.bf16 %v629, %v628
        %v637 = vunpack.c.l.b16 %v345
        %v638 = vunpack.c.l.b16 %v346
        %v639 = vunpack.c.l.b16 %v347
        %v640 = vunpack.c.l.b16 %v348
        %v641 = vunpack.c.l.b16 %v349
        %v642 = vunpack.c.l.b16 %v350
        %v643 = vpack.c.b16 %v638, %v637
        %v644 = vpack.c.b16 %v640, %v639
        %v645 = vpack.c.b16 %v642, %v641
        %v649 = vsel %vm291, %v630, 0
        %v652 = vand.u32 %v645, %v407
        %654 = vmatprep.subr.bf16.mxu0 0
        %655 = vmatpush1.bf16.msra.mxu0 %v643
        %656 = vmatprep.subr.bf16.mxu0 0
        %657 = vmatpush1.bf16.msra.mxu0 %v644
        %658 = vmatprep.subr.bf16.mxu0 0
        %659 = vmatpush1.bf16.msra.mxu0 %v652
        %660 = vmatprep.subr.bf16.mxu0 0
        %661 = vmatpush1.bf16.msra.mxu0 0
        %662 = vmatprep.subr.bf16.mxu0 0
        %663 = vmatpush1.bf16.msra.mxu0 0
        %664 = vmatprep.subr.bf16.mxu0 0
        %665 = vmatpush1.bf16.msra.mxu0 0
        %666 = vmatprep.subr.bf16.mxu0 0
        %667 = vmatpush1.bf16.msra.mxu0 0
        %668 = vmatprep.subr.bf16.mxu0 0
        %669 = vmatpush1.bf16.msra.mxu0 0
        %670 = vmatprep.subr.bf16.mxu0 0
        %671 = vmatpush1.bf16.msra.mxu0 0
        %672 = vmatprep.subr.bf16.mxu0 0
        %673 = vmatpush1.bf16.msra.mxu0 0
        %674 = vmatprep.subr.bf16.mxu0 0
        %675 = vmatpush1.bf16.msra.mxu0 0
        %676 = vmatprep.subr.bf16.mxu0 0
        %677 = vmatpush1.bf16.msra.mxu0 0
        %678 = vmatprep.subr.bf16.mxu0 0
        %679 = vmatpush1.bf16.msra.mxu0 0
        %680 = vmatprep.subr.bf16.mxu0 0
        %681 = vmatpush1.bf16.msra.mxu0 0
        %682 = vmatprep.subr.bf16.mxu0 0
        %683 = vmatpush1.bf16.msra.mxu0 0
        %684 = vmatprep.subr.bf16.mxu0 0
        %685 = vmatpush1.bf16.msra.mxu0 0
        %686 = vmatprep.mubr.bf16.mxu0 0
        %687 = vmatmul.mubr.bf16.gmra.mrb[0].mxu0 %v649
        %v688 = vpop.f32.mrb[0].mxu0
        %v689 = vadd.f32 0.0, %v688
        %v690 = vpop.f32.mrb[0].mxu0
        %v691 = vpop.f32.mrb[0].mxu0
        %v692 = vadd.f32 0.0, %v691
        %v693 = vpop.f32.mrb[0].mxu0
        %694 = vdwg.mxu0
        %696 = vset.pattern.permute.xlu0 0
        %697 = vperm.xlu0 %696, %v303
        %v698 = vpop.permute.xlu0 %697
        %701 = vset.pattern.permute.xlu0 0
        %702 = vperm.xlu0 %701, %v304
        %v703 = vpop.permute.xlu0 %702
        %v705 = vmul.f32 %v698, %v689
        %v706 = vmul.f32 %v703, %v692
        %v707 = vadd.f32 %v626, %v705
        %v708 = vadd.f32 %v627, %v706
        %v709 = vld [vmem:[#allocation2 + $0x5] sm:$0xff]
        %v710 = vld [vmem:[#allocation2 + $0xd] sm:$0xff]
        %v711 = vpack.c.bf16 %v710, %v709
        %v718 = vunpack.c.l.b16 %v351
        %v719 = vunpack.c.l.b16 %v352
        %v720 = vunpack.c.l.b16 %v353
        %v721 = vunpack.c.l.b16 %v354
        %v722 = vunpack.c.l.b16 %v355
        %v723 = vunpack.c.l.b16 %v356
        %v724 = vpack.c.b16 %v719, %v718
        %v725 = vpack.c.b16 %v721, %v720
        %v726 = vpack.c.b16 %v723, %v722
        %v730 = vsel %vm291, %v711, 0
        %v733 = vand.u32 %v726, %v407
        %735 = vmatprep.subr.bf16.mxu0 0
        %736 = vmatpush1.bf16.msra.mxu0 %v724
        %737 = vmatprep.subr.bf16.mxu0 0
        %738 = vmatpush1.bf16.msra.mxu0 %v725
        %739 = vmatprep.subr.bf16.mxu0 0
        %740 = vmatpush1.bf16.msra.mxu0 %v733
        %741 = vmatprep.subr.bf16.mxu0 0
        %742 = vmatpush1.bf16.msra.mxu0 0
        %743 = vmatprep.subr.bf16.mxu0 0
        %744 = vmatpush1.bf16.msra.mxu0 0
        %745 = vmatprep.subr.bf16.mxu0 0
        %746 = vmatpush1.bf16.msra.mxu0 0
        %747 = vmatprep.subr.bf16.mxu0 0
        %748 = vmatpush1.bf16.msra.mxu0 0
        %749 = vmatprep.subr.bf16.mxu0 0
        %750 = vmatpush1.bf16.msra.mxu0 0
        %751 = vmatprep.subr.bf16.mxu0 0
        %752 = vmatpush1.bf16.msra.mxu0 0
        %753 = vmatprep.subr.bf16.mxu0 0
        %754 = vmatpush1.bf16.msra.mxu0 0
        %755 = vmatprep.subr.bf16.mxu0 0
        %756 = vmatpush1.bf16.msra.mxu0 0
        %757 = vmatprep.subr.bf16.mxu0 0
        %758 = vmatpush1.bf16.msra.mxu0 0
        %759 = vmatprep.subr.bf16.mxu0 0
        %760 = vmatpush1.bf16.msra.mxu0 0
        %761 = vmatprep.subr.bf16.mxu0 0
        %762 = vmatpush1.bf16.msra.mxu0 0
        %763 = vmatprep.subr.bf16.mxu0 0
        %764 = vmatpush1.bf16.msra.mxu0 0
        %765 = vmatprep.subr.bf16.mxu0 0
        %766 = vmatpush1.bf16.msra.mxu0 0
        %767 = vmatprep.mubr.bf16.mxu0 0
        %768 = vmatmul.mubr.bf16.gmra.mrb[0].mxu0 %v730
        %v769 = vpop.f32.mrb[0].mxu0
        %v770 = vadd.f32 0.0, %v769
        %v771 = vpop.f32.mrb[0].mxu0
        %v772 = vpop.f32.mrb[0].mxu0
        %v773 = vadd.f32 0.0, %v772
        %v774 = vpop.f32.mrb[0].mxu0
        %775 = vdwg.mxu0
        %777 = vset.pattern.permute.xlu0 0
        %778 = vperm.xlu0 %777, %v305
        %v779 = vpop.permute.xlu0 %778
        %782 = vset.pattern.permute.xlu0 0
        %783 = vperm.xlu0 %782, %v306
        %v784 = vpop.permute.xlu0 %783
        %v786 = vmul.f32 %v779, %v770
        %v787 = vmul.f32 %v784, %v773
        %v788 = vadd.f32 %v707, %v786
        %v789 = vadd.f32 %v708, %v787
        %v790 = vld [vmem:[#allocation2 + $0x6] sm:$0xff]
        %v791 = vld [vmem:[#allocation2 + $0xe] sm:$0xff]
        %v792 = vpack.c.bf16 %v791, %v790
        %v799 = vunpack.c.l.b16 %v357
        %v800 = vunpack.c.l.b16 %v358
        %v801 = vunpack.c.l.b16 %v359
        %v802 = vunpack.c.l.b16 %v360
        %v803 = vunpack.c.l.b16 %v361
        %v804 = vunpack.c.l.b16 %v362
        %v805 = vpack.c.b16 %v800, %v799
        %v806 = vpack.c.b16 %v802, %v801
        %v807 = vpack.c.b16 %v804, %v803
        %v811 = vsel %vm291, %v792, 0
        %v814 = vand.u32 %v807, %v407
        %816 = vmatprep.subr.bf16.mxu0 0
        %817 = vmatpush1.bf16.msra.mxu0 %v805
        %818 = vmatprep.subr.bf16.mxu0 0
        %819 = vmatpush1.bf16.msra.mxu0 %v806
        %820 = vmatprep.subr.bf16.mxu0 0
        %821 = vmatpush1.bf16.msra.mxu0 %v814
        %822 = vmatprep.subr.bf16.mxu0 0
        %823 = vmatpush1.bf16.msra.mxu0 0
        %824 = vmatprep.subr.bf16.mxu0 0
        %825 = vmatpush1.bf16.msra.mxu0 0
        %826 = vmatprep.subr.bf16.mxu0 0
        %827 = vmatpush1.bf16.msra.mxu0 0
        %828 = vmatprep.subr.bf16.mxu0 0
        %829 = vmatpush1.bf16.msra.mxu0 0
        %830 = vmatprep.subr.bf16.mxu0 0
        %831 = vmatpush1.bf16.msra.mxu0 0
        %832 = vmatprep.subr.bf16.mxu0 0
        %833 = vmatpush1.bf16.msra.mxu0 0
        %834 = vmatprep.subr.bf16.mxu0 0
        %835 = vmatpush1.bf16.msra.mxu0 0
        %836 = vmatprep.subr.bf16.mxu0 0
        %837 = vmatpush1.bf16.msra.mxu0 0
        %838 = vmatprep.subr.bf16.mxu0 0
        %839 = vmatpush1.bf16.msra.mxu0 0
        %840 = vmatprep.subr.bf16.mxu0 0
        %841 = vmatpush1.bf16.msra.mxu0 0
        %842 = vmatprep.subr.bf16.mxu0 0
        %843 = vmatpush1.bf16.msra.mxu0 0
        %844 = vmatprep.subr.bf16.mxu0 0
        %845 = vmatpush1.bf16.msra.mxu0 0
        %846 = vmatprep.subr.bf16.mxu0 0
        %847 = vmatpush1.bf16.msra.mxu0 0
        %848 = vmatprep.mubr.bf16.mxu0 0
        %849 = vmatmul.mubr.bf16.gmra.mrb[0].mxu0 %v811
        %v850 = vpop.f32.mrb[0].mxu0
        %v851 = vadd.f32 0.0, %v850
        %v852 = vpop.f32.mrb[0].mxu0
        %v853 = vpop.f32.mrb[0].mxu0
        %v854 = vadd.f32 0.0, %v853
        %v855 = vpop.f32.mrb[0].mxu0
        %856 = vdwg.mxu0
        %858 = vset.pattern.permute.xlu0 0
        %859 = vperm.xlu0 %858, %v307
        %v860 = vpop.permute.xlu0 %859
        %863 = vset.pattern.permute.xlu0 0
        %864 = vperm.xlu0 %863, %v308
        %v865 = vpop.permute.xlu0 %864
        %v867 = vmul.f32 %v860, %v851
        %v868 = vmul.f32 %v865, %v854
        %v869 = vadd.f32 %v788, %v867
        %v870 = vadd.f32 %v789, %v868
        %v871 = vld [vmem:[#allocation2 + $0x8] sm:$0xff]
        %v872 = vld [vmem:[#allocation2 + $0x10] sm:$0xff]
        %v873 = vpack.c.bf16 %v872, %v871
        %v880 = vunpack.c.l.b16 %v363
        %v881 = vunpack.c.l.b16 %v364
        %v882 = vunpack.c.l.b16 %v365
        %v883 = vunpack.c.l.b16 %v366
        %v884 = vunpack.c.l.b16 %v367
        %v885 = vunpack.c.l.b16 %v368
        %v886 = vpack.c.b16 %v881, %v880
        %v887 = vpack.c.b16 %v883, %v882
        %v888 = vpack.c.b16 %v885, %v884
        %v892 = vsel %vm291, %v873, 0
        %v895 = vand.u32 %v888, %v407
        %897 = vmatprep.subr.bf16.mxu0 0
        %898 = vmatpush1.bf16.msra.mxu0 %v886
        %899 = vmatprep.subr.bf16.mxu0 0
        %900 = vmatpush1.bf16.msra.mxu0 %v887
        %901 = vmatprep.subr.bf16.mxu0 0
        %902 = vmatpush1.bf16.msra.mxu0 %v895
        %903 = vmatprep.subr.bf16.mxu0 0
        %904 = vmatpush1.bf16.msra.mxu0 0
        %905 = vmatprep.subr.bf16.mxu0 0
        %906 = vmatpush1.bf16.msra.mxu0 0
        %907 = vmatprep.subr.bf16.mxu0 0
        %908 = vmatpush1.bf16.msra.mxu0 0
        %909 = vmatprep.subr.bf16.mxu0 0
        %910 = vmatpush1.bf16.msra.mxu0 0
        %911 = vmatprep.subr.bf16.mxu0 0
        %912 = vmatpush1.bf16.msra.mxu0 0
        %913 = vmatprep.subr.bf16.mxu0 0
        %914 = vmatpush1.bf16.msra.mxu0 0
        %915 = vmatprep.subr.bf16.mxu0 0
        %916 = vmatpush1.bf16.msra.mxu0 0
        %917 = vmatprep.subr.bf16.mxu0 0
        %918 = vmatpush1.bf16.msra.mxu0 0
        %919 = vmatprep.subr.bf16.mxu0 0
        %920 = vmatpush1.bf16.msra.mxu0 0
        %921 = vmatprep.subr.bf16.mxu0 0
        %922 = vmatpush1.bf16.msra.mxu0 0
        %923 = vmatprep.subr.bf16.mxu0 0
        %924 = vmatpush1.bf16.msra.mxu0 0
        %925 = vmatprep.subr.bf16.mxu0 0
        %926 = vmatpush1.bf16.msra.mxu0 0
        %927 = vmatprep.subr.bf16.mxu0 0
        %928 = vmatpush1.bf16.msra.mxu0 0
        %929 = vmatprep.mubr.bf16.mxu0 0
        %930 = vmatmul.mubr.bf16.gmra.mrb[0].mxu0 %v892
        %v931 = vpop.f32.mrb[0].mxu0
        %v932 = vadd.f32 0.0, %v931
        %v933 = vpop.f32.mrb[0].mxu0
        %v934 = vpop.f32.mrb[0].mxu0
        %v935 = vadd.f32 0.0, %v934
        %v936 = vpop.f32.mrb[0].mxu0
        %937 = vdwg.mxu0
        %939 = vset.pattern.permute.xlu0 0
        %940 = vperm.xlu0 %939, %v309
        %v941 = vpop.permute.xlu0 %940
        %944 = vset.pattern.permute.xlu0 0
        %945 = vperm.xlu0 %944, %v310
        %v946 = vpop.permute.xlu0 %945
        %v948 = vmul.f32 %v941, %v932
        %v949 = vmul.f32 %v946, %v935
        %v950 = vadd.f32 %v869, %v948
        %v951 = vadd.f32 %v870, %v949
        %v952 = vld [vmem:[#allocation2 + $0x9] sm:$0xff]
        %v953 = vld [vmem:[#allocation2 + $0x11] sm:$0xff]
        %v954 = vpack.c.bf16 %v953, %v952
        %v961 = vunpack.c.l.b16 %v369
        %v962 = vunpack.c.l.b16 %v370
        %v963 = vunpack.c.l.b16 %v371
        %v964 = vunpack.c.l.b16 %v372
        %v965 = vunpack.c.l.b16 %v373
        %v966 = vunpack.c.l.b16 %v374
        %v967 = vpack.c.b16 %v962, %v961
        %v968 = vpack.c.b16 %v964, %v963
        %v969 = vpack.c.b16 %v966, %v965
        %v973 = vsel %vm291, %v954, 0
        %v976 = vand.u32 %v969, %v407
        %978 = vmatprep.subr.bf16.mxu0 0
        %979 = vmatpush1.bf16.msra.mxu0 %v967
        %980 = vmatprep.subr.bf16.mxu0 0
        %981 = vmatpush1.bf16.msra.mxu0 %v968
        %982 = vmatprep.subr.bf16.mxu0 0
        %983 = vmatpush1.bf16.msra.mxu0 %v976
        %984 = vmatprep.subr.bf16.mxu0 0
        %985 = vmatpush1.bf16.msra.mxu0 0
        %986 = vmatprep.subr.bf16.mxu0 0
        %987 = vmatpush1.bf16.msra.mxu0 0
        %988 = vmatprep.subr.bf16.mxu0 0
        %989 = vmatpush1.bf16.msra.mxu0 0
        %990 = vmatprep.subr.bf16.mxu0 0
        %991 = vmatpush1.bf16.msra.mxu0 0
        %992 = vmatprep.subr.bf16.mxu0 0
        %993 = vmatpush1.bf16.msra.mxu0 0
        %994 = vmatprep.subr.bf16.mxu0 0
        %995 = vmatpush1.bf16.msra.mxu0 0
        %996 = vmatprep.subr.bf16.mxu0 0
        %997 = vmatpush1.bf16.msra.mxu0 0
        %998 = vmatprep.subr.bf16.mxu0 0
        %999 = vmatpush1.bf16.msra.mxu0 0
        %1000 = vmatprep.subr.bf16.mxu0 0
        %1001 = vmatpush1.bf16.msra.mxu0 0
        %1002 = vmatprep.subr.bf16.mxu0 0
        %1003 = vmatpush1.bf16.msra.mxu0 0
        %1004 = vmatprep.subr.bf16.mxu0 0
        %1005 = vmatpush1.bf16.msra.mxu0 0
        %1006 = vmatprep.subr.bf16.mxu0 0
        %1007 = vmatpush1.bf16.msra.mxu0 0
        %1008 = vmatprep.subr.bf16.mxu0 0
        %1009 = vmatpush1.bf16.msra.mxu0 0
        %1010 = vmatprep.mubr.bf16.mxu0 0
        %1011 = vmatmul.mubr.bf16.gmra.mrb[0].mxu0 %v973
        %v1012 = vpop.f32.mrb[0].mxu0
        %v1013 = vadd.f32 0.0, %v1012
        %v1014 = vpop.f32.mrb[0].mxu0
        %v1015 = vpop.f32.mrb[0].mxu0
        %v1016 = vadd.f32 0.0, %v1015
        %v1017 = vpop.f32.mrb[0].mxu0
        %1018 = vdwg.mxu0
        %1020 = vset.pattern.permute.xlu0 0
        %1021 = vperm.xlu0 %1020, %v311
        %v1022 = vpop.permute.xlu0 %1021
        %1025 = vset.pattern.permute.xlu0 0
        %1026 = vperm.xlu0 %1025, %v312
        %v1027 = vpop.permute.xlu0 %1026
        %v1029 = vmul.f32 %v1022, %v1013
        %v1030 = vmul.f32 %v1027, %v1016
        %v1031 = vadd.f32 %v950, %v1029
        %v1032 = vadd.f32 %v951, %v1030
        %v1033 = vld [vmem:[#allocation2 + $0xa] sm:$0xff]
        %v1034 = vld [vmem:[#allocation2 + $0x12] sm:$0xff]
        %v1035 = vpack.c.bf16 %v1034, %v1033
        %v1042 = vunpack.c.l.b16 %v375
        %v1043 = vunpack.c.l.b16 %v376
        %v1044 = vunpack.c.l.b16 %v377
        %v1045 = vunpack.c.l.b16 %v378
        %v1046 = vunpack.c.l.b16 %v379
        %v1047 = vunpack.c.l.b16 %v380
        %v1048 = vpack.c.b16 %v1043, %v1042
        %v1049 = vpack.c.b16 %v1045, %v1044
        %v1050 = vpack.c.b16 %v1047, %v1046
        %v1054 = vsel %vm291, %v1035, 0
        %v1057 = vand.u32 %v1050, %v407
        %1059 = vmatprep.subr.bf16.mxu0 0
        %1060 = vmatpush1.bf16.msra.mxu0 %v1048
        %1061 = vmatprep.subr.bf16.mxu0 0
        %1062 = vmatpush1.bf16.msra.mxu0 %v1049
        %1063 = vmatprep.subr.bf16.mxu0 0
        %1064 = vmatpush1.bf16.msra.mxu0 %v1057
        %1065 = vmatprep.subr.bf16.mxu0 0
        %1066 = vmatpush1.bf16.msra.mxu0 0
        %1067 = vmatprep.subr.bf16.mxu0 0
        %1068 = vmatpush1.bf16.msra.mxu0 0
        %1069 = vmatprep.subr.bf16.mxu0 0
        %1070 = vmatpush1.bf16.msra.mxu0 0
        %1071 = vmatprep.subr.bf16.mxu0 0
        %1072 = vmatpush1.bf16.msra.mxu0 0
        %1073 = vmatprep.subr.bf16.mxu0 0
        %1074 = vmatpush1.bf16.msra.mxu0 0
        %1075 = vmatprep.subr.bf16.mxu0 0
        %1076 = vmatpush1.bf16.msra.mxu0 0
        %1077 = vmatprep.subr.bf16.mxu0 0
        %1078 = vmatpush1.bf16.msra.mxu0 0
        %1079 = vmatprep.subr.bf16.mxu0 0
        %1080 = vmatpush1.bf16.msra.mxu0 0
        %1081 = vmatprep.subr.bf16.mxu0 0
        %1082 = vmatpush1.bf16.msra.mxu0 0
        %1083 = vmatprep.subr.bf16.mxu0 0
        %1084 = vmatpush1.bf16.msra.mxu0 0
        %1085 = vmatprep.subr.bf16.mxu0 0
        %1086 = vmatpush1.bf16.msra.mxu0 0
        %1087 = vmatprep.subr.bf16.mxu0 0
        %1088 = vmatpush1.bf16.msra.mxu0 0
        %1089 = vmatprep.subr.bf16.mxu0 0
        %1090 = vmatpush1.bf16.msra.mxu0 0
        %1091 = vmatprep.mubr.bf16.mxu0 0
        %1092 = vmatmul.mubr.bf16.gmra.mrb[0].mxu0 %v1054
        %v1093 = vpop.f32.mrb[0].mxu0
        %v1094 = vadd.f32 0.0, %v1093
        %v1095 = vpop.f32.mrb[0].mxu0
        %v1096 = vpop.f32.mrb[0].mxu0
        %v1097 = vadd.f32 0.0, %v1096
        %v1098 = vpop.f32.mrb[0].mxu0
        %1099 = vdwg.mxu0
        %1101 = vset.pattern.permute.xlu0 0
        %1102 = vperm.xlu0 %1101, %v313
        %v1103 = vpop.permute.xlu0 %1102
        %1106 = vset.pattern.permute.xlu0 0
        %1107 = vperm.xlu0 %1106, %v314
        %v1108 = vpop.permute.xlu0 %1107
        %v1110 = vmul.f32 %v1103, %v1094
        %v1111 = vmul.f32 %v1108, %v1097
        %v1112 = vadd.f32 %v1031, %v1110
        %v1113 = vadd.f32 %v1032, %v1111
        %v1114 = vld [vmem:[%s3] sm:$0x1]
        %v1116 = vlaneseq
        %v1117 = vshrl.u32 %v1116, 7
        %v1118 = vsub.s32 0, %v1117
        %v1119 = vrot.slane %v1114, %v1118
        %v1121 = vadd.f32 %v1112, %v1119
        %v1122 = vadd.f32 %v1113, %v1119
        %v1123 = vadd.f32 %v315, %v1121
        %v1124 = vadd.f32 %v316, %v1122
        %1127 = vrot.lane.b32.xlu0 %v1121, 125
        %v1128 = vpop.permute.xlu0 %1127
        %1129 = vrot.lane.b32.xlu0 %v1122, 125
        %v1130 = vpop.permute.xlu0 %1129
        %v1133 = vsub.f32 %v1123, %v1128
        %v1134 = vsub.f32 %v1124, %v1130
        %vm1135 = vcmask 23552
        %1136 = vst.msk [vmem:[#allocation2 + $0x5] sm:$0xff] %vm1135, %v1133
        %1137 = vst.msk [vmem:[#allocation2 + $0xd] sm:$0xff] %vm1135, %v1134
        %v1138 = vld [vmem:[%s4] sm:$0x3]
        %v1139 = vld [vmem:[%s4 + $0x2] sm:$0x3]
        %v1140 = vld [vmem:[%s4 + $0x4] sm:$0x3]
        %v1141 = vld [vmem:[%s4 + $0x6] sm:$0x3]
        %v1142 = vld [vmem:[%s4 + $0x8] sm:$0x3]
        %v1143 = vld [vmem:[%s4 + $0xa] sm:$0x3]
        %v1144 = vld [vmem:[%s4 + $0xc] sm:$0x3]
        %v1145 = vld [vmem:[%s4 + $0xe] sm:$0x3]
        %v1146 = vld [vmem:[%s4 + $0x10] sm:$0x3]
        %v1147 = vld [vmem:[#allocation2] sm:$0xff]
        %v1148 = vld [vmem:[#allocation2 + $0x8] sm:$0xff]
        %v1149 = vpack.c.bf16 %v1148, %v1147
        %v1151 = vsel %vm1135, %v1149, 0
        %vm1153 = vcmask 1040384
        %vm1154 = vcmask 1041408
        %v1155 = vsel %vm1153, 4294967295, 65535
        %v1156 = vsel %vm1154, %v1155, 0
        %v1158 = vand.u32 %v1138, %v1156
        %1160 = vmatprep.subr.bf16.mxu0 0
        %1161 = vmatpush1.bf16.msra.mxu0 %v1158
        %1162 = vmatprep.subr.bf16.mxu0 0
        %1163 = vmatpush1.bf16.msra.mxu0 0
        %1164 = vmatprep.subr.bf16.mxu0 0
        %1165 = vmatpush1.bf16.msra.mxu0 0
        %1166 = vmatprep.subr.bf16.mxu0 0
        %1167 = vmatpush1.bf16.msra.mxu0 0
        %1168 = vmatprep.subr.bf16.mxu0 0
        %1169 = vmatpush1.bf16.msra.mxu0 0
        %1170 = vmatprep.subr.bf16.mxu0 0
        %1171 = vmatpush1.bf16.msra.mxu0 0
        %1172 = vmatprep.subr.bf16.mxu0 0
        %1173 = vmatpush1.bf16.msra.mxu0 0
        %1174 = vmatprep.subr.bf16.mxu0 0
        %1175 = vmatpush1.bf16.msra.mxu0 0
        %1176 = vmatprep.subr.bf16.mxu0 0
        %1177 = vmatpush1.bf16.msra.mxu0 0
        %1178 = vmatprep.subr.bf16.mxu0 0
        %1179 = vmatpush1.bf16.msra.mxu0 0
        %1180 = vmatprep.subr.bf16.mxu0 0
        %1181 = vmatpush1.bf16.msra.mxu0 0
        %1182 = vmatprep.subr.bf16.mxu0 0
        %1183 = vmatpush1.bf16.msra.mxu0 0
        %1184 = vmatprep.subr.bf16.mxu0 0
        %1185 = vmatpush1.bf16.msra.mxu0 0
        %1186 = vmatprep.subr.bf16.mxu0 0
        %1187 = vmatpush1.bf16.msra.mxu0 0
        %1188 = vmatprep.subr.bf16.mxu0 0
        %1189 = vmatpush1.bf16.msra.mxu0 0
        %1190 = vmatprep.subr.bf16.mxu0 0
        %1191 = vmatpush1.bf16.msra.mxu0 0
        %1192 = vmatprep.mubr.bf16.mxu0 0
        %1193 = vmatmul.mubr.bf16.gmra.mrb[0].mxu0 %v1151
        %v1194 = vpop.f32.mrb[0].mxu0
        %v1195 = vadd.f32 0.0, %v1194
        %v1196 = vpop.f32.mrb[0].mxu0
        %v1197 = vpop.f32.mrb[0].mxu0
        %v1198 = vadd.f32 0.0, %v1197
        %v1199 = vpop.f32.mrb[0].mxu0
        %1200 = vdwg.mxu0
        %v1201 = vmul.f32 %v455, %v1195
        %v1202 = vmul.f32 %v460, %v1198
        %v1203 = vadd.f32 %v1201, 0.0
        %v1204 = vadd.f32 %v1202, 0.0
        %v1205 = vld [vmem:[#allocation2 + $0x1] sm:$0xff]
        %v1206 = vld [vmem:[#allocation2 + $0x9] sm:$0xff]
        %v1207 = vpack.c.bf16 %v1206, %v1205
        %v1209 = vsel %vm1135, %v1207, 0
        %v1212 = vand.u32 %v1139, %v1156
        %1214 = vmatprep.subr.bf16.mxu0 0
        %1215 = vmatpush1.bf16.msra.mxu0 %v1212
        %1216 = vmatprep.subr.bf16.mxu0 0
        %1217 = vmatpush1.bf16.msra.mxu0 0
        %1218 = vmatprep.subr.bf16.mxu0 0
        %1219 = vmatpush1.bf16.msra.mxu0 0
        %1220 = vmatprep.subr.bf16.mxu0 0
        %1221 = vmatpush1.bf16.msra.mxu0 0
        %1222 = vmatprep.subr.bf16.mxu0 0
        %1223 = vmatpush1.bf16.msra.mxu0 0
        %1224 = vmatprep.subr.bf16.mxu0 0
        %1225 = vmatpush1.bf16.msra.mxu0 0
        %1226 = vmatprep.subr.bf16.mxu0 0
        %1227 = vmatpush1.bf16.msra.mxu0 0
        %1228 = vmatprep.subr.bf16.mxu0 0
        %1229 = vmatpush1.bf16.msra.mxu0 0
        %1230 = vmatprep.subr.bf16.mxu0 0
        %1231 = vmatpush1.bf16.msra.mxu0 0
        %1232 = vmatprep.subr.bf16.mxu0 0
        %1233 = vmatpush1.bf16.msra.mxu0 0
        %1234 = vmatprep.subr.bf16.mxu0 0
        %1235 = vmatpush1.bf16.msra.mxu0 0
        %1236 = vmatprep.subr.bf16.mxu0 0
        %1237 = vmatpush1.bf16.msra.mxu0 0
        %1238 = vmatprep.subr.bf16.mxu0 0
        %1239 = vmatpush1.bf16.msra.mxu0 0
        %1240 = vmatprep.subr.bf16.mxu0 0
        %1241 = vmatpush1.bf16.msra.mxu0 0
        %1242 = vmatprep.subr.bf16.mxu0 0
        %1243 = vmatpush1.bf16.msra.mxu0 0
        %1244 = vmatprep.subr.bf16.mxu0 0
        %1245 = vmatpush1.bf16.msra.mxu0 0
        %1246 = vmatprep.mubr.bf16.mxu0 0
        %1247 = vmatmul.mubr.bf16.gmra.mrb[0].mxu0 %v1209
        %v1248 = vpop.f32.mrb[0].mxu0
        %v1249 = vadd.f32 0.0, %v1248
        %v1250 = vpop.f32.mrb[0].mxu0
        %v1251 = vpop.f32.mrb[0].mxu0
        %v1252 = vadd.f32 0.0, %v1251
        %v1253 = vpop.f32.mrb[0].mxu0
        %1254 = vdwg.mxu0
        %v1255 = vmul.f32 %v536, %v1249
        %v1256 = vmul.f32 %v541, %v1252
        %v1257 = vadd.f32 %v1203, %v1255
        %v1258 = vadd.f32 %v1204, %v1256
        %v1259 = vld [vmem:[#allocation2 + $0x2] sm:$0xff]
        %v1260 = vld [vmem:[#allocation2 + $0xa] sm:$0xff]
        %v1261 = vpack.c.bf16 %v1260, %v1259
        %v1263 = vsel %vm1135, %v1261, 0
        %v1266 = vand.u32 %v1140, %v1156
        %1268 = vmatprep.subr.bf16.mxu0 0
        %1269 = vmatpush1.bf16.msra.mxu0 %v1266
        %1270 = vmatprep.subr.bf16.mxu0 0
        %1271 = vmatpush1.bf16.msra.mxu0 0
        %1272 = vmatprep.subr.bf16.mxu0 0
        %1273 = vmatpush1.bf16.msra.mxu0 0
        %1274 = vmatprep.subr.bf16.mxu0 0
        %1275 = vmatpush1.bf16.msra.mxu0 0
        %1276 = vmatprep.subr.bf16.mxu0 0
        %1277 = vmatpush1.bf16.msra.mxu0 0
        %1278 = vmatprep.subr.bf16.mxu0 0
        %1279 = vmatpush1.bf16.msra.mxu0 0
        %1280 = vmatprep.subr.bf16.mxu0 0
        %1281 = vmatpush1.bf16.msra.mxu0 0
        %1282 = vmatprep.subr.bf16.mxu0 0
        %1283 = vmatpush1.bf16.msra.mxu0 0
        %1284 = vmatprep.subr.bf16.mxu0 0
        %1285 = vmatpush1.bf16.msra.mxu0 0
        %1286 = vmatprep.subr.bf16.mxu0 0
        %1287 = vmatpush1.bf16.msra.mxu0 0
        %1288 = vmatprep.subr.bf16.mxu0 0
        %1289 = vmatpush1.bf16.msra.mxu0 0
        %1290 = vmatprep.subr.bf16.mxu0 0
        %1291 = vmatpush1.bf16.msra.mxu0 0
        %1292 = vmatprep.subr.bf16.mxu0 0
        %1293 = vmatpush1.bf16.msra.mxu0 0
        %1294 = vmatprep.subr.bf16.mxu0 0
        %1295 = vmatpush1.bf16.msra.mxu0 0
        %1296 = vmatprep.subr.bf16.mxu0 0
        %1297 = vmatpush1.bf16.msra.mxu0 0
        %1298 = vmatprep.subr.bf16.mxu0 0
        %1299 = vmatpush1.bf16.msra.mxu0 0
        %1300 = vmatprep.mubr.bf16.mxu0 0
        %1301 = vmatmul.mubr.bf16.gmra.mrb[0].mxu0 %v1263
        %v1302 = vpop.f32.mrb[0].mxu0
        %v1303 = vadd.f32 0.0, %v1302
        %v1304 = vpop.f32.mrb[0].mxu0
        %v1305 = vpop.f32.mrb[0].mxu0
        %v1306 = vadd.f32 0.0, %v1305
        %v1307 = vpop.f32.mrb[0].mxu0
        %1308 = vdwg.mxu0
        %v1309 = vmul.f32 %v617, %v1303
        %v1310 = vmul.f32 %v622, %v1306
        %v1311 = vadd.f32 %v1257, %v1309
        %v1312 = vadd.f32 %v1258, %v1310
        %v1313 = vld [vmem:[#allocation2 + $0x4] sm:$0xff]
        %v1314 = vld [vmem:[#allocation2 + $0xc] sm:$0xff]
        %v1315 = vpack.c.bf16 %v1314, %v1313
        %v1317 = vsel %vm1135, %v1315, 0
        %v1320 = vand.u32 %v1141, %v1156
        %1322 = vmatprep.subr.bf16.mxu0 0
        %1323 = vmatpush1.bf16.msra.mxu0 %v1320
        %1324 = vmatprep.subr.bf16.mxu0 0
        %1325 = vmatpush1.bf16.msra.mxu0 0
        %1326 = vmatprep.subr.bf16.mxu0 0
        %1327 = vmatpush1.bf16.msra.mxu0 0
        %1328 = vmatprep.subr.bf16.mxu0 0
        %1329 = vmatpush1.bf16.msra.mxu0 0
        %1330 = vmatprep.subr.bf16.mxu0 0
        %1331 = vmatpush1.bf16.msra.mxu0 0
        %1332 = vmatprep.subr.bf16.mxu0 0
        %1333 = vmatpush1.bf16.msra.mxu0 0
        %1334 = vmatprep.subr.bf16.mxu0 0
        %1335 = vmatpush1.bf16.msra.mxu0 0
        %1336 = vmatprep.subr.bf16.mxu0 0
        %1337 = vmatpush1.bf16.msra.mxu0 0
        %1338 = vmatprep.subr.bf16.mxu0 0
        %1339 = vmatpush1.bf16.msra.mxu0 0
        %1340 = vmatprep.subr.bf16.mxu0 0
        %1341 = vmatpush1.bf16.msra.mxu0 0
        %1342 = vmatprep.subr.bf16.mxu0 0
        %1343 = vmatpush1.bf16.msra.mxu0 0
        %1344 = vmatprep.subr.bf16.mxu0 0
        %1345 = vmatpush1.bf16.msra.mxu0 0
        %1346 = vmatprep.subr.bf16.mxu0 0
        %1347 = vmatpush1.bf16.msra.mxu0 0
        %1348 = vmatprep.subr.bf16.mxu0 0
        %1349 = vmatpush1.bf16.msra.mxu0 0
        %1350 = vmatprep.subr.bf16.mxu0 0
        %1351 = vmatpush1.bf16.msra.mxu0 0
        %1352 = vmatprep.subr.bf16.mxu0 0
        %1353 = vmatpush1.bf16.msra.mxu0 0
        %1354 = vmatprep.mubr.bf16.mxu0 0
        %1355 = vmatmul.mubr.bf16.gmra.mrb[0].mxu0 %v1317
        %v1356 = vpop.f32.mrb[0].mxu0
        %v1357 = vadd.f32 0.0, %v1356
        %v1358 = vpop.f32.mrb[0].mxu0
        %v1359 = vpop.f32.mrb[0].mxu0
        %v1360 = vadd.f32 0.0, %v1359
        %v1361 = vpop.f32.mrb[0].mxu0
        %1362 = vdwg.mxu0
        %v1363 = vmul.f32 %v698, %v1357
        %v1364 = vmul.f32 %v703, %v1360
        %v1365 = vadd.f32 %v1311, %v1363
        %v1366 = vadd.f32 %v1312, %v1364
        %v1367 = vld [vmem:[#allocation2 + $0x5] sm:$0xff]
        %v1368 = vld [vmem:[#allocation2 + $0xd] sm:$0xff]
        %v1369 = vpack.c.bf16 %v1368, %v1367
        %v1371 = vsel %vm1135, %v1369, 0
        %v1374 = vand.u32 %v1142, %v1156
        %1376 = vmatprep.subr.bf16.mxu0 0
        %1377 = vmatpush1.bf16.msra.mxu0 %v1374
        %1378 = vmatprep.subr.bf16.mxu0 0
        %1379 = vmatpush1.bf16.msra.mxu0 0
        %1380 = vmatprep.subr.bf16.mxu0 0
        %1381 = vmatpush1.bf16.msra.mxu0 0
        %1382 = vmatprep.subr.bf16.mxu0 0
        %1383 = vmatpush1.bf16.msra.mxu0 0
        %1384 = vmatprep.subr.bf16.mxu0 0
        %1385 = vmatpush1.bf16.msra.mxu0 0
        %1386 = vmatprep.subr.bf16.mxu0 0
        %1387 = vmatpush1.bf16.msra.mxu0 0
        %1388 = vmatprep.subr.bf16.mxu0 0
        %1389 = vmatpush1.bf16.msra.mxu0 0
        %1390 = vmatprep.subr.bf16.mxu0 0
        %1391 = vmatpush1.bf16.msra.mxu0 0
        %1392 = vmatprep.subr.bf16.mxu0 0
        %1393 = vmatpush1.bf16.msra.mxu0 0
        %1394 = vmatprep.subr.bf16.mxu0 0
        %1395 = vmatpush1.bf16.msra.mxu0 0
        %1396 = vmatprep.subr.bf16.mxu0 0
        %1397 = vmatpush1.bf16.msra.mxu0 0
        %1398 = vmatprep.subr.bf16.mxu0 0
        %1399 = vmatpush1.bf16.msra.mxu0 0
        %1400 = vmatprep.subr.bf16.mxu0 0
        %1401 = vmatpush1.bf16.msra.mxu0 0
        %1402 = vmatprep.subr.bf16.mxu0 0
        %1403 = vmatpush1.bf16.msra.mxu0 0
        %1404 = vmatprep.subr.bf16.mxu0 0
        %1405 = vmatpush1.bf16.msra.mxu0 0
        %1406 = vmatprep.subr.bf16.mxu0 0
        %1407 = vmatpush1.bf16.msra.mxu0 0
        %1408 = vmatprep.mubr.bf16.mxu0 0
        %1409 = vmatmul.mubr.bf16.gmra.mrb[0].mxu0 %v1371
        %v1410 = vpop.f32.mrb[0].mxu0
        %v1411 = vadd.f32 0.0, %v1410
        %v1412 = vpop.f32.mrb[0].mxu0
        %v1413 = vpop.f32.mrb[0].mxu0
        %v1414 = vadd.f32 0.0, %v1413
        %v1415 = vpop.f32.mrb[0].mxu0
        %1416 = vdwg.mxu0
        %v1417 = vmul.f32 %v779, %v1411
        %v1418 = vmul.f32 %v784, %v1414
        %v1419 = vadd.f32 %v1365, %v1417
        %v1420 = vadd.f32 %v1366, %v1418
        %v1421 = vld [vmem:[#allocation2 + $0x6] sm:$0xff]
        %v1422 = vld [vmem:[#allocation2 + $0xe] sm:$0xff]
        %v1423 = vpack.c.bf16 %v1422, %v1421
        %v1425 = vsel %vm1135, %v1423, 0
        %v1428 = vand.u32 %v1143, %v1156
        %1430 = vmatprep.subr.bf16.mxu0 0
        %1431 = vmatpush1.bf16.msra.mxu0 %v1428
        %1432 = vmatprep.subr.bf16.mxu0 0
        %1433 = vmatpush1.bf16.msra.mxu0 0
        %1434 = vmatprep.subr.bf16.mxu0 0
        %1435 = vmatpush1.bf16.msra.mxu0 0
        %1436 = vmatprep.subr.bf16.mxu0 0
        %1437 = vmatpush1.bf16.msra.mxu0 0
        %1438 = vmatprep.subr.bf16.mxu0 0
        %1439 = vmatpush1.bf16.msra.mxu0 0
        %1440 = vmatprep.subr.bf16.mxu0 0
        %1441 = vmatpush1.bf16.msra.mxu0 0
        %1442 = vmatprep.subr.bf16.mxu0 0
        %1443 = vmatpush1.bf16.msra.mxu0 0
        %1444 = vmatprep.subr.bf16.mxu0 0
        %1445 = vmatpush1.bf16.msra.mxu0 0
        %1446 = vmatprep.subr.bf16.mxu0 0
        %1447 = vmatpush1.bf16.msra.mxu0 0
        %1448 = vmatprep.subr.bf16.mxu0 0
        %1449 = vmatpush1.bf16.msra.mxu0 0
        %1450 = vmatprep.subr.bf16.mxu0 0
        %1451 = vmatpush1.bf16.msra.mxu0 0
        %1452 = vmatprep.subr.bf16.mxu0 0
        %1453 = vmatpush1.bf16.msra.mxu0 0
        %1454 = vmatprep.subr.bf16.mxu0 0
        %1455 = vmatpush1.bf16.msra.mxu0 0
        %1456 = vmatprep.subr.bf16.mxu0 0
        %1457 = vmatpush1.bf16.msra.mxu0 0
        %1458 = vmatprep.subr.bf16.mxu0 0
        %1459 = vmatpush1.bf16.msra.mxu0 0
        %1460 = vmatprep.subr.bf16.mxu0 0
        %1461 = vmatpush1.bf16.msra.mxu0 0
        %1462 = vmatprep.mubr.bf16.mxu0 0
        %1463 = vmatmul.mubr.bf16.gmra.mrb[0].mxu0 %v1425
        %v1464 = vpop.f32.mrb[0].mxu0
        %v1465 = vadd.f32 0.0, %v1464
        %v1466 = vpop.f32.mrb[0].mxu0
        %v1467 = vpop.f32.mrb[0].mxu0
        %v1468 = vadd.f32 0.0, %v1467
        %v1469 = vpop.f32.mrb[0].mxu0
        %1470 = vdwg.mxu0
        %v1471 = vmul.f32 %v860, %v1465
        %v1472 = vmul.f32 %v865, %v1468
        %v1473 = vadd.f32 %v1419, %v1471
        %v1474 = vadd.f32 %v1420, %v1472
        %v1475 = vld [vmem:[#allocation2 + $0x8] sm:$0xff]
        %v1476 = vld [vmem:[#allocation2 + $0x10] sm:$0xff]
        %v1477 = vpack.c.bf16 %v1476, %v1475
        %v1479 = vsel %vm1135, %v1477, 0
        %v1482 = vand.u32 %v1144, %v1156
        %1484 = vmatprep.subr.bf16.mxu0 0
        %1485 = vmatpush1.bf16.msra.mxu0 %v1482
        %1486 = vmatprep.subr.bf16.mxu0 0
        %1487 = vmatpush1.bf16.msra.mxu0 0
        %1488 = vmatprep.subr.bf16.mxu0 0
        %1489 = vmatpush1.bf16.msra.mxu0 0
        %1490 = vmatprep.subr.bf16.mxu0 0
        %1491 = vmatpush1.bf16.msra.mxu0 0
        %1492 = vmatprep.subr.bf16.mxu0 0
        %1493 = vmatpush1.bf16.msra.mxu0 0
        %1494 = vmatprep.subr.bf16.mxu0 0
        %1495 = vmatpush1.bf16.msra.mxu0 0
        %1496 = vmatprep.subr.bf16.mxu0 0
        %1497 = vmatpush1.bf16.msra.mxu0 0
        %1498 = vmatprep.subr.bf16.mxu0 0
        %1499 = vmatpush1.bf16.msra.mxu0 0
        %1500 = vmatprep.subr.bf16.mxu0 0
        %1501 = vmatpush1.bf16.msra.mxu0 0
        %1502 = vmatprep.subr.bf16.mxu0 0
        %1503 = vmatpush1.bf16.msra.mxu0 0
        %1504 = vmatprep.subr.bf16.mxu0 0
        %1505 = vmatpush1.bf16.msra.mxu0 0
        %1506 = vmatprep.subr.bf16.mxu0 0
        %1507 = vmatpush1.bf16.msra.mxu0 0
        %1508 = vmatprep.subr.bf16.mxu0 0
        %1509 = vmatpush1.bf16.msra.mxu0 0
        %1510 = vmatprep.subr.bf16.mxu0 0
        %1511 = vmatpush1.bf16.msra.mxu0 0
        %1512 = vmatprep.subr.bf16.mxu0 0
        %1513 = vmatpush1.bf16.msra.mxu0 0
        %1514 = vmatprep.subr.bf16.mxu0 0
        %1515 = vmatpush1.bf16.msra.mxu0 0
        %1516 = vmatprep.mubr.bf16.mxu0 0
        %1517 = vmatmul.mubr.bf16.gmra.mrb[0].mxu0 %v1479
        %v1518 = vpop.f32.mrb[0].mxu0
        %v1519 = vadd.f32 0.0, %v1518
        %v1520 = vpop.f32.mrb[0].mxu0
        %v1521 = vpop.f32.mrb[0].mxu0
        %v1522 = vadd.f32 0.0, %v1521
        %v1523 = vpop.f32.mrb[0].mxu0
        %1524 = vdwg.mxu0
        %v1525 = vmul.f32 %v941, %v1519
        %v1526 = vmul.f32 %v946, %v1522
        %v1527 = vadd.f32 %v1473, %v1525
        %v1528 = vadd.f32 %v1474, %v1526
        %v1529 = vld [vmem:[#allocation2 + $0x9] sm:$0xff]
        %v1530 = vld [vmem:[#allocation2 + $0x11] sm:$0xff]
        %v1531 = vpack.c.bf16 %v1530, %v1529
        %v1533 = vsel %vm1135, %v1531, 0
        %v1536 = vand.u32 %v1145, %v1156
        %1538 = vmatprep.subr.bf16.mxu0 0
        %1539 = vmatpush1.bf16.msra.mxu0 %v1536
        %1540 = vmatprep.subr.bf16.mxu0 0
        %1541 = vmatpush1.bf16.msra.mxu0 0
        %1542 = vmatprep.subr.bf16.mxu0 0
        %1543 = vmatpush1.bf16.msra.mxu0 0
        %1544 = vmatprep.subr.bf16.mxu0 0
        %1545 = vmatpush1.bf16.msra.mxu0 0
        %1546 = vmatprep.subr.bf16.mxu0 0
        %1547 = vmatpush1.bf16.msra.mxu0 0
        %1548 = vmatprep.subr.bf16.mxu0 0
        %1549 = vmatpush1.bf16.msra.mxu0 0
        %1550 = vmatprep.subr.bf16.mxu0 0
        %1551 = vmatpush1.bf16.msra.mxu0 0
        %1552 = vmatprep.subr.bf16.mxu0 0
        %1553 = vmatpush1.bf16.msra.mxu0 0
        %1554 = vmatprep.subr.bf16.mxu0 0
        %1555 = vmatpush1.bf16.msra.mxu0 0
        %1556 = vmatprep.subr.bf16.mxu0 0
        %1557 = vmatpush1.bf16.msra.mxu0 0
        %1558 = vmatprep.subr.bf16.mxu0 0
        %1559 = vmatpush1.bf16.msra.mxu0 0
        %1560 = vmatprep.subr.bf16.mxu0 0
        %1561 = vmatpush1.bf16.msra.mxu0 0
        %1562 = vmatprep.subr.bf16.mxu0 0
        %1563 = vmatpush1.bf16.msra.mxu0 0
        %1564 = vmatprep.subr.bf16.mxu0 0
        %1565 = vmatpush1.bf16.msra.mxu0 0
        %1566 = vmatprep.subr.bf16.mxu0 0
        %1567 = vmatpush1.bf16.msra.mxu0 0
        %1568 = vmatprep.subr.bf16.mxu0 0
        %1569 = vmatpush1.bf16.msra.mxu0 0
        %1570 = vmatprep.mubr.bf16.mxu0 0
        %1571 = vmatmul.mubr.bf16.gmra.mrb[0].mxu0 %v1533
        %v1572 = vpop.f32.mrb[0].mxu0
        %v1573 = vadd.f32 0.0, %v1572
        %v1574 = vpop.f32.mrb[0].mxu0
        %v1575 = vpop.f32.mrb[0].mxu0
        %v1576 = vadd.f32 0.0, %v1575
        %v1577 = vpop.f32.mrb[0].mxu0
        %1578 = vdwg.mxu0
        %v1579 = vmul.f32 %v1022, %v1573
        %v1580 = vmul.f32 %v1027, %v1576
        %v1581 = vadd.f32 %v1527, %v1579
        %v1582 = vadd.f32 %v1528, %v1580
        %v1583 = vld [vmem:[#allocation2 + $0xa] sm:$0xff]
        %v1584 = vld [vmem:[#allocation2 + $0x12] sm:$0xff]
        %v1585 = vpack.c.bf16 %v1584, %v1583
        %v1587 = vsel %vm1135, %v1585, 0
        %v1590 = vand.u32 %v1146, %v1156
        %1592 = vmatprep.subr.bf16.mxu0 0
        %1593 = vmatpush1.bf16.msra.mxu0 %v1590
        %1594 = vmatprep.subr.bf16.mxu0 0
        %1595 = vmatpush1.bf16.msra.mxu0 0
        %1596 = vmatprep.subr.bf16.mxu0 0
        %1597 = vmatpush1.bf16.msra.mxu0 0
        %1598 = vmatprep.subr.bf16.mxu0 0
        %1599 = vmatpush1.bf16.msra.mxu0 0
        %1600 = vmatprep.subr.bf16.mxu0 0
        %1601 = vmatpush1.bf16.msra.mxu0 0
        %1602 = vmatprep.subr.bf16.mxu0 0
        %1603 = vmatpush1.bf16.msra.mxu0 0
        %1604 = vmatprep.subr.bf16.mxu0 0
        %1605 = vmatpush1.bf16.msra.mxu0 0
        %1606 = vmatprep.subr.bf16.mxu0 0
        %1607 = vmatpush1.bf16.msra.mxu0 0
        %1608 = vmatprep.subr.bf16.mxu0 0
        %1609 = vmatpush1.bf16.msra.mxu0 0
        %1610 = vmatprep.subr.bf16.mxu0 0
        %1611 = vmatpush1.bf16.msra.mxu0 0
        %1612 = vmatprep.subr.bf16.mxu0 0
        %1613 = vmatpush1.bf16.msra.mxu0 0
        %1614 = vmatprep.subr.bf16.mxu0 0
        %1615 = vmatpush1.bf16.msra.mxu0 0
        %1616 = vmatprep.subr.bf16.mxu0 0
        %1617 = vmatpush1.bf16.msra.mxu0 0
        %1618 = vmatprep.subr.bf16.mxu0 0
        %1619 = vmatpush1.bf16.msra.mxu0 0
        %1620 = vmatprep.subr.bf16.mxu0 0
        %1621 = vmatpush1.bf16.msra.mxu0 0
        %1622 = vmatprep.subr.bf16.mxu0 0
        %1623 = vmatpush1.bf16.msra.mxu0 0
        %1624 = vmatprep.mubr.bf16.mxu0 0
        %1625 = vmatmul.mubr.bf16.gmra.mrb[0].mxu0 %v1587
        %v1626 = vpop.f32.mrb[0].mxu0
        %v1627 = vadd.f32 0.0, %v1626
        %v1628 = vpop.f32.mrb[0].mxu0
        %v1629 = vpop.f32.mrb[0].mxu0
        %v1630 = vadd.f32 0.0, %v1629
        %v1631 = vpop.f32.mrb[0].mxu0
        %1632 = vdwg.mxu0
        %v1633 = vmul.f32 %v1103, %v1627
        %v1634 = vmul.f32 %v1108, %v1630
        %v1635 = vadd.f32 %v1581, %v1633
        %v1636 = vadd.f32 %v1582, %v1634
        %v1637 = vld [vmem:[%s5] sm:$0x1]
        %v1639 = vlaneseq
        %v1640 = vshrl.u32 %v1639, 7
        %v1641 = vsub.s32 0, %v1640
        %v1642 = vrot.slane %v1637, %v1641
        %v1644 = vadd.f32 %v1635, %v1642
        %v1645 = vadd.f32 %v1636, %v1642
        %v1646 = vxor.u32 %v1644, 2147483648
        %v1647 = vxor.u32 %v1645, 2147483648
        %v1648 = vmul.f32 %v1646, 1.442695
        %v1649 = vpow.pop %v1648
        %v1650 = vmul.f32 %v1647, 1.442695
        %v1651 = vpow.pop %v1650
        %v1652 = vadd.f32 %v1649, 1.0
        %v1653 = vadd.f32 %v1651, 1.0
        %v1654 = vrcp.pop %v1652
        %v1655 = vmul.f32 1.0, %v1654
        %v1656 = vrcp.pop %v1653
        %v1657 = vmul.f32 1.0, %v1656
        %v1658 = vmul.f32 %v1655, 2.0
        %v1659 = vmul.f32 %v1657, 2.0
        %v1660 = vsub.f32 %v1658, 1.0
        %v1661 = vsub.f32 %v1659, 1.0
        %v1662 = vmul.f32 %v1660, 1.442695
        %v1663 = vpow.pop %v1662
        %v1664 = vmul.f32 %v1661, 1.442695
        %v1665 = vpow.pop %v1664
        %1668 = vrot.lane.b32.xlu0 %v1663, 3
        %v1669 = vpop.permute.xlu0 %1668
        %1670 = vrot.lane.b32.xlu0 %v1665, 3
        %v1671 = vpop.permute.xlu0 %1670
        %v1674 = vmul.f32 %v315, %v1669
        %v1675 = vmul.f32 %v316, %v1671
        %1678 = vrot.lane.b32.xlu0 %v1644, 86
        %v1679 = vpop.permute.xlu0 %1678
        %1680 = vrot.lane.b32.xlu0 %v1645, 86
        %v1681 = vpop.permute.xlu0 %1680
        %v1684 = vadd.f32 %v1674, %v1679
        %v1685 = vadd.f32 %v1675, %v1681
        %1686 = vst.msk [vmem:[%s289] sm:$0xff] %vm1135, %v1133
        %1687 = vst.msk [vmem:[%s289 + $0x8] sm:$0xff] %vm1135, %v1134
        %vm1688 = vcmask 392216
        %1689 = vst.msk [vmem:[%s289] sm:$0xff] %vm1688, %v1684
        %1690 = vst.msk [vmem:[%s289 + $0x8] sm:$0xff] %vm1688, %v1685
        %1691 = vst.msk [vmem:[%s279] sm:$0xff] %vm1135, %v1123
        %1692 = vst.msk [vmem:[%s279 + $0x8] sm:$0xff] %vm1135, %v1124
        %p1693 = scmp.lt.s32.totalorder %s22, 1
        %s1694 = scalar_select %p1693, %s22, 1
        %s1695 = smul.addr %s1694, 2
        %s1696 = smul.addr %s1695, 8
        %s1697 = scalar_lea.vmem %s6, %s1696
        %s1698 = sand.u32 %s187, 1
        %s1699 = scalar_lea.sflag [#allocation4], %s1698
        %s1700 = sand.u32 %s187, 1
        %s1701 = smul.addr %s1700, 16
        %s1702 = scalar_lea.vmem [#allocation3], %s1701
        // Predicated region
        $region45: #{sainet_forward.12} parent=43 // pred_check
          %p1703 = pneg %p171
        $region46: #{sainet_forward.12} parent=43 // pred_check_branch
          %1705 = sbr.rel (%p1703) target = $region48
        $region47: #{sainet_forward.12} parent=43 // pred_region
          _
        $region48: #{sainet_forward.12} parent=43 // pred_fallthru
          _
        // Predicated region
        $region49: #{sainet_forward.12} parent=43 // pred_check
          %p1706 = pneg %p197
        $region50: #{sainet_forward.12} parent=43 // pred_check_branch
          %1708 = sbr.rel (%p1706) target = $region52
        $region51: #{sainet_forward.12} parent=43 // pred_region
          %s1710 = ssub.s32 256, 256
          %1711 = vsyncadd %s1699, %s1710
          %s1712 = smul.addr %s22, 2
          %s1713 = smul.addr %s1712, 128
          %s1714 = scalar_lea.hbm %s7, %s1713
          %s1715 = sshll.u32 %s1702, 4
          %s1716 = int_to_ptr.vmem [resolvable:$true] %s1715
          %1721 = dma.vmem_to_hbm [thread:$0]  %s1716, 256, %s1714, %s1699, 128, 128, 8
        $region52: #{sainet_forward.12} parent=43 // pred_fallthru
          _
      $region44: #{sainet_forward.12} parent=5 // pred_fallthru
        _
      %p1722 = scmp.le.s32.totalorder 2, %s17
      // Predicated region
      $region53: #{sainet_forward.12} parent=5 // pred_check
        %p1723 = pneg %p1722
      $region54: #{sainet_forward.12} parent=5 // pred_check_branch
        %1725 = sbr.rel (%p1723) target = $region56
      $region55: #{sainet_forward.12} parent=5 // pred_region
        %s1726 = ssub.s32 %s17, 2
        // Predicated region
        $region57: #{sainet_forward.12} parent=55 // pred_check
          %p1727 = pneg %p177
        $region58: #{sainet_forward.12} parent=55 // pred_check_branch
          %1729 = sbr.rel (%p1727) target = $region60
        $region59: #{sainet_forward.12} parent=55 // pred_region
          %p1730 = scmp.lt.s32.totalorder %s23, 1
          %s1731 = scalar_select %p1730, %s23, 1
          %s1732 = smul.addr %s1731, 2
          %s1733 = smul.addr %s1732, 8
          %s1734 = scalar_lea.vmem %s6, %s1733
        $region60: #{sainet_forward.12} parent=55 // pred_fallthru
          _
        // Predicated region
        $region61: #{sainet_forward.12} parent=55 // pred_check
          %p1735 = pneg %p203
        $region62: #{sainet_forward.12} parent=55 // pred_check_branch
          %1737 = sbr.rel (%p1735) target = $region64
        $region63: #{sainet_forward.12} parent=55 // pred_region
          %s1738 = sand.u32 %s188, 1
          %s1739 = scalar_lea.sflag [#allocation4], %s1738
          %s1740 = sand.u32 %s188, 1
          %s1741 = smul.addr %s1740, 16
          %s1742 = scalar_lea.vmem [#allocation3], %s1741
          %1743 = dma.done %s1739, 256
        $region64: #{sainet_forward.12} parent=55 // pred_fallthru
          _
      $region56: #{sainet_forward.12} parent=5 // pred_fallthru
        _
    $region6: #{sainet_forward.12} parent=1 // loop_footer
      %s21 = sadd.s32 1, %s17
    $region7: #{sainet_forward.12} parent=1 // loop_footer_branch
      %16 = sbr.rel target = $region3
    $region8: #{sainet_forward.12} parent=1 // loop_exit
      _
    %1744 = vsyncpa [#allocation4], 1
    %s1745 = scalar_lea.sflag [#allocation4], 1
    %1746 = vsyncpa %s1745, 1

// kernel: sainet_forward.17
$region0: #{sainet_forward.17}
  #allocation0 [shape = 'u32[]', space=smem, size = 0x4, offset = 0x4, fixed_abs, tag = 'smem constant byte address 0x4 - core index']
  #allocation1 [shape = 'u32[144,128]{1,0:T(1,128)}', space=vmem, size = 0x12000, scoped, tag = 'internal scratch']
  #allocation2 [shape = 'f32[26,45]{1,0:T(8,128)}', space=vmem, size = 0x4000, scoped, tag = 'scratch operand']
  %s0 = inlined_call_operand.vmem [shape: f32[2,16,48], index: 0, kind: input, shape index: {}]
  %s1 = inlined_call_operand.vmem [shape: f32[9,16,1], index: 1, kind: input, shape index: {}]
  %s2 = inlined_call_operand.vmem [shape: bf16[9,45,3], index: 2, kind: input, shape index: {}]
  %s3 = inlined_call_operand.vmem [shape: f32[1,3], index: 3, kind: input, shape index: {}]
  %s4 = inlined_call_operand.vmem [shape: bf16[9,3,90], index: 4, kind: input, shape index: {}]
  %s5 = inlined_call_operand.vmem [shape: f32[1,90], index: 5, kind: input, shape index: {}]
  %s6 = inlined_call_operand.vmem [shape: f32[2,16,48], index: 6, kind: output, shape index: {}]
  %s7 = sld [smem:[#allocation0]]
  $region57: #{sainet_forward.17} parent=0
    _
  %s9 = ssub.s32 1, %s7
  %s10 = scalar_select 0, %s9, %s7
  loop: start=0, step=1, limit=4
  $region2: #{sainet_forward.17} parent=0 // loop_pre_header
    _
  $region3: #{sainet_forward.17} parent=0 // loop_header
    %s12 = sphi 0, %s16
    %p13 = scmp.ge.s32.totalorder %s12, 4
    %s22 = sphi 0, %s24
    %s25 = sphi 0, %s22
    %s26 = sphi 0, %s25
    %s42 = sphi 0, %s26
    %s46 = sphi 0, %s46
    %s48 = sphi 0, %s46
    %s49 = sphi 0, %s48
    %s63 = sphi 0, %s49
    %s67 = sphi 0, %s67
    %s69 = sphi 0, %s67
    %s70 = sphi 0, %s69
    %s84 = sphi 0, %s70
    %s88 = sphi 0, %s88
    %s90 = sphi 0, %s88
    %s91 = sphi 0, %s90
    %s105 = sphi 0, %s91
    %s109 = sphi 0, %s109
    %s111 = sphi 0, %s109
    %s112 = sphi 0, %s111
    %s126 = sphi 0, %s112
    %s130 = sphi 0, %s130
    %s132 = sphi 0, %s130
    %s133 = sphi 0, %s132
    %s147 = sphi 0, %s133
    %s153 = sphi 0, %s155
    %s156 = sphi 0, %s153
    %s157 = sphi 0, %s156
    %s173 = sphi 0, %s157
  $region4: #{sainet_forward.17} parent=0 // loop_header_branch
    %15 = sbr.rel (%p13) target = $region8
  $region5: #{sainet_forward.17} parent=0 // loop_body
    %s17 = ssub.s32 %s12, 1
    %s18 = ssub.s32 %s12, 2
    %s19 = sadd.s32 %s12, 1
    %s20 = ssub.s32 %s12, %s19
    %p21 = scmp.eq.s32.totalorder %s20, 0
    %s23 = sadd.s32 %s22, 1
    %s24 = scalar_select %p21, %s22, %s23
    %p27 = pneg %p21
    %p28 = scmp.eq.s32.totalorder %s12, 1
    %p29 = por %p27, %p28
    %p30 = scmp.ne.s32.totalorder %s22, %s25
    %p31 = scmp.eq.s32.totalorder %s12, 0
    %p32 = por %p30, %p31
    %p33 = scmp.ne.s32.totalorder %s22, %s25
    %p34 = scmp.eq.s32.totalorder %s17, 1
    %p35 = por %p33, %p34
    %p36 = scmp.ne.s32.totalorder %s25, %s26
    %p37 = scmp.eq.s32.totalorder %s17, 0
    %p38 = por %p36, %p37
    %p39 = scmp.ne.s32.totalorder %s25, %s26
    %p40 = scmp.eq.s32.totalorder %s18, 1
    %p41 = por %p39, %p40
    %p43 = scmp.ne.s32.totalorder %s26, %s42
    %p44 = scmp.eq.s32.totalorder %s18, 0
    %p45 = por %p43, %p44
    %s47 = sadd.s32 %s46, 1
    %p50 = scmp.eq.s32.totalorder %s12, 1
    %p51 = scmp.ne.s32.totalorder %s46, %s48
    %p52 = scmp.eq.s32.totalorder %s12, 0
    %p53 = por %p51, %p52
    %p54 = scmp.ne.s32.totalorder %s46, %s48
    %p55 = scmp.eq.s32.totalorder %s17, 1
    %p56 = por %p54, %p55
    %p57 = scmp.ne.s32.totalorder %s48, %s49
    %p58 = scmp.eq.s32.totalorder %s17, 0
    %p59 = por %p57, %p58
    %p60 = scmp.ne.s32.totalorder %s48, %s49
    %p61 = scmp.eq.s32.totalorder %s18, 1
    %p62 = por %p60, %p61
    %p64 = scmp.ne.s32.totalorder %s49, %s63
    %p65 = scmp.eq.s32.totalorder %s18, 0
    %p66 = por %p64, %p65
    %s68 = sadd.s32 %s67, 1
    %p71 = scmp.eq.s32.totalorder %s12, 1
    %p72 = scmp.ne.s32.totalorder %s67, %s69
    %p73 = scmp.eq.s32.totalorder %s12, 0
    %p74 = por %p72, %p73
    %p75 = scmp.ne.s32.totalorder %s67, %s69
    %p76 = scmp.eq.s32.totalorder %s17, 1
    %p77 = por %p75, %p76
    %p78 = scmp.ne.s32.totalorder %s69, %s70
    %p79 = scmp.eq.s32.totalorder %s17, 0
    %p80 = por %p78, %p79
    %p81 = scmp.ne.s32.totalorder %s69, %s70
    %p82 = scmp.eq.s32.totalorder %s18, 1
    %p83 = por %p81, %p82
    %p85 = scmp.ne.s32.totalorder %s70, %s84
    %p86 = scmp.eq.s32.totalorder %s18, 0
    %p87 = por %p85, %p86
    %s89 = sadd.s32 %s88, 1
    %p92 = scmp.eq.s32.totalorder %s12, 1
    %p93 = scmp.ne.s32.totalorder %s88, %s90
    %p94 = scmp.eq.s32.totalorder %s12, 0
    %p95 = por %p93, %p94
    %p96 = scmp.ne.s32.totalorder %s88, %s90
    %p97 = scmp.eq.s32.totalorder %s17, 1
    %p98 = por %p96, %p97
    %p99 = scmp.ne.s32.totalorder %s90, %s91
    %p100 = scmp.eq.s32.totalorder %s17, 0
    %p101 = por %p99, %p100
    %p102 = scmp.ne.s32.totalorder %s90, %s91
    %p103 = scmp.eq.s32.totalorder %s18, 1
    %p104 = por %p102, %p103
    %p106 = scmp.ne.s32.totalorder %s91, %s105
    %p107 = scmp.eq.s32.totalorder %s18, 0
    %p108 = por %p106, %p107
    %s110 = sadd.s32 %s109, 1
    %p113 = scmp.eq.s32.totalorder %s12, 1
    %p114 = scmp.ne.s32.totalorder %s109, %s111
    %p115 = scmp.eq.s32.totalorder %s12, 0
    %p116 = por %p114, %p115
    %p117 = scmp.ne.s32.totalorder %s109, %s111
    %p118 = scmp.eq.s32.totalorder %s17, 1
    %p119 = por %p117, %p118
    %p120 = scmp.ne.s32.totalorder %s111, %s112
    %p121 = scmp.eq.s32.totalorder %s17, 0
    %p122 = por %p120, %p121
    %p123 = scmp.ne.s32.totalorder %s111, %s112
    %p124 = scmp.eq.s32.totalorder %s18, 1
    %p125 = por %p123, %p124
    %p127 = scmp.ne.s32.totalorder %s112, %s126
    %p128 = scmp.eq.s32.totalorder %s18, 0
    %p129 = por %p127, %p128
    %s131 = sadd.s32 %s130, 1
    %p134 = scmp.eq.s32.totalorder %s12, 1
    %p135 = scmp.ne.s32.totalorder %s130, %s132
    %p136 = scmp.eq.s32.totalorder %s12, 0
    %p137 = por %p135, %p136
    %p138 = scmp.ne.s32.totalorder %s130, %s132
    %p139 = scmp.eq.s32.totalorder %s17, 1
    %p140 = por %p138, %p139
    %p141 = scmp.ne.s32.totalorder %s132, %s133
    %p142 = scmp.eq.s32.totalorder %s17, 0
    %p143 = por %p141, %p142
    %p144 = scmp.ne.s32.totalorder %s132, %s133
    %p145 = scmp.eq.s32.totalorder %s18, 1
    %p146 = por %p144, %p145
    %p148 = scmp.ne.s32.totalorder %s133, %s147
    %p149 = scmp.eq.s32.totalorder %s18, 0
    %p150 = por %p148, %p149
    %s151 = ssub.s32 %s12, %s19
    %p152 = scmp.eq.s32.totalorder %s151, 0
    %s154 = sadd.s32 %s153, 1
    %s155 = scalar_select %p152, %s153, %s154
    %p158 = pneg %p152
    %p159 = scmp.eq.s32.totalorder %s12, 1
    %p160 = por %p158, %p159
    %p161 = scmp.ne.s32.totalorder %s153, %s156
    %p162 = scmp.eq.s32.totalorder %s12, 0
    %p163 = por %p161, %p162
    %p164 = scmp.ne.s32.totalorder %s153, %s156
    %p165 = scmp.eq.s32.totalorder %s17, 1
    %p166 = por %p164, %p165
    %p167 = scmp.ne.s32.totalorder %s156, %s157
    %p168 = scmp.eq.s32.totalorder %s17, 0
    %p169 = por %p167, %p168
    %p170 = scmp.ne.s32.totalorder %s156, %s157
    %p171 = scmp.eq.s32.totalorder %s18, 1
    %p172 = por %p170, %p171
    %p174 = scmp.ne.s32.totalorder %s157, %s173
    %p175 = scmp.eq.s32.totalorder %s18, 0
    %p176 = por %p174, %p175
    %p177 = scmp.le.s32.totalorder 1, %s12
    %p178 = scmp.lt.s32.totalorder %s12, 3
    %p179 = pnand %p177, %p178
    %p180 = pneg %p179
    // Predicated region
    $region9: #{sainet_forward.17} parent=5 // pred_check
      _
    $region10: #{sainet_forward.17} parent=5 // pred_check_branch
      %182 = sbr.rel (%p179) target = $region12
    $region11: #{sainet_forward.17} parent=5 // pred_region
      %s183 = ssub.s32 %s12, 1
      // Predicated region
      $region13: #{sainet_forward.17} parent=11 // pred_check
        %p184 = pneg %p59
      $region14: #{sainet_forward.17} parent=11 // pred_check_branch
        %186 = sbr.rel (%p184) target = $region16
      $region15: #{sainet_forward.17} parent=11 // pred_region
        _
      $region16: #{sainet_forward.17} parent=11 // pred_fallthru
        _
      // Predicated region
      $region17: #{sainet_forward.17} parent=11 // pred_check
        %p187 = pneg %p80
      $region18: #{sainet_forward.17} parent=11 // pred_check_branch
        %189 = sbr.rel (%p187) target = $region20
      $region19: #{sainet_forward.17} parent=11 // pred_region
        _
      $region20: #{sainet_forward.17} parent=11 // pred_fallthru
        _
      // Predicated region
      $region21: #{sainet_forward.17} parent=11 // pred_check
        %p190 = pneg %p101
      $region22: #{sainet_forward.17} parent=11 // pred_check_branch
        %192 = sbr.rel (%p190) target = $region24
      $region23: #{sainet_forward.17} parent=11 // pred_region
        _
      $region24: #{sainet_forward.17} parent=11 // pred_fallthru
        _
      // Predicated region
      $region25: #{sainet_forward.17} parent=11 // pred_check
        %p193 = pneg %p122
      $region26: #{sainet_forward.17} parent=11 // pred_check_branch
        %195 = sbr.rel (%p193) target = $region28
      $region27: #{sainet_forward.17} parent=11 // pred_region
        _
      $region28: #{sainet_forward.17} parent=11 // pred_fallthru
        _
      // Predicated region
      $region29: #{sainet_forward.17} parent=11 // pred_check
        %p196 = pneg %p143
      $region30: #{sainet_forward.17} parent=11 // pred_check_branch
        %198 = sbr.rel (%p196) target = $region32
      $region31: #{sainet_forward.17} parent=11 // pred_region
        _
      $region32: #{sainet_forward.17} parent=11 // pred_fallthru
        _
    $region12: #{sainet_forward.17} parent=5 // pred_fallthru
      _
    %p199 = scmp.lt.s32.totalorder %s12, 2
    // Predicated region
    $region33: #{sainet_forward.17} parent=5 // pred_check
      %p200 = pneg %p199
    $region34: #{sainet_forward.17} parent=5 // pred_check_branch
      %202 = sbr.rel (%p200) target = $region36
    $region35: #{sainet_forward.17} parent=5 // pred_region
      // Predicated region
      $region37: #{sainet_forward.17} parent=35 // pred_check
        %p203 = pneg %p32
      $region38: #{sainet_forward.17} parent=35 // pred_check_branch
        %205 = sbr.rel (%p203) target = $region40
      $region39: #{sainet_forward.17} parent=35 // pred_region
        %p206 = scmp.lt.s32.totalorder %s12, 1
        %s207 = scalar_select %p206, %s12, 1
        %s208 = smul.addr %s207, 2
        %s209 = smul.addr %s208, 8
        %s210 = scalar_lea.vmem %s0, %s209
      $region40: #{sainet_forward.17} parent=35 // pred_fallthru
        _
    $region36: #{sainet_forward.17} parent=5 // pred_fallthru
      _
    %p211 = scmp.le.s32.totalorder 1, %s12
    %p212 = scmp.lt.s32.totalorder %s12, 3
    %p213 = pnand %p211, %p212
    %p214 = pneg %p213
    // Predicated region
    $region41: #{sainet_forward.17} parent=5 // pred_check
      _
    $region42: #{sainet_forward.17} parent=5 // pred_check_branch
      %216 = sbr.rel (%p213) target = $region44
    $region43: #{sainet_forward.17} parent=5 // pred_region
      %s217 = ssub.s32 %s12, 1
      %p218 = scmp.lt.s32.totalorder %s17, 1
      %s219 = scalar_select %p218, %s17, 1
      %s220 = smul.addr %s219, 2
      %s221 = smul.addr %s220, 8
      %s222 = scalar_lea.vmem %s0, %s221
      %p223 = pneg %p38
      %p224 = pneg %p35
      %p225 = pneg %p59
      %p226 = pneg %p56
      %p227 = pneg %p80
      %p228 = pneg %p77
      %p229 = pneg %p101
      %p230 = pneg %p98
      %p231 = pneg %p122
      %p232 = pneg %p119
      %p233 = pneg %p143
      %p234 = pneg %p140
      %p235 = pneg %p169
      %p236 = pneg %p166
      %p237 = scmp.lt.s32.totalorder %s17, 1
      %s238 = scalar_select %p237, %s17, 1
      %s239 = smul.addr %s238, 2
      %s240 = smul.addr %s239, 8
      %s241 = scalar_lea.vmem %s6, %s240
      %p242 = scmp.lt.s32.totalorder %s17, 1
      %s243 = scalar_select %p242, %s17, 1
      %s244 = smul.addr %s243, 2
      %s245 = smul.addr %s244, 8
      %s246 = scalar_lea.vmem %s0, %s245
      %p247 = scmp.lt.s32.totalorder %s17, 1
      %s248 = scalar_select %p247, %s17, 1
      %s249 = smul.addr %s248, 2
      %s250 = smul.addr %s249, 8
      %s251 = scalar_lea.vmem %s6, %s250
      %vm253 = vcmask 367616
      %254 = vst.msk [vmem:[#allocation2] sm:$0xff] %vm253, 0.0
      %255 = vst.msk [vmem:[#allocation2 + $0x8] sm:$0xff] %vm253, 0.0
      %256 = vst.msk [vmem:[#allocation2 + $0x10] sm:$0xff] %vm253, 0.0
      %vm257 = vcmask 361472
      %258 = vst.msk [vmem:[#allocation2 + $0x18] sm:$0x3] %vm257, 0.0
      %v259 = vld [vmem:[%s1] sm:$0xff]
      %v260 = vld [vmem:[%s1 + $0x8] sm:$0xff]
      %v261 = vld [vmem:[%s1 + $0x10] sm:$0xff]
      %v262 = vld [vmem:[%s1 + $0x18] sm:$0xff]
      %v263 = vld [vmem:[%s1 + $0x20] sm:$0xff]
      %v264 = vld [vmem:[%s1 + $0x28] sm:$0xff]
      %v265 = vld [vmem:[%s1 + $0x30] sm:$0xff]
      %v266 = vld [vmem:[%s1 + $0x38] sm:$0xff]
      %v267 = vld [vmem:[%s1 + $0x40] sm:$0xff]
      %v268 = vld [vmem:[%s1 + $0x48] sm:$0xff]
      %v269 = vld [vmem:[%s1 + $0x50] sm:$0xff]
      %v270 = vld [vmem:[%s1 + $0x58] sm:$0xff]
      %v271 = vld [vmem:[%s1 + $0x60] sm:$0xff]
      %v272 = vld [vmem:[%s1 + $0x68] sm:$0xff]
      %v273 = vld [vmem:[%s1 + $0x70] sm:$0xff]
      %v274 = vld [vmem:[%s1 + $0x78] sm:$0xff]
      %v275 = vld [vmem:[%s1 + $0x80] sm:$0xff]
      %v276 = vld [vmem:[%s1 + $0x88] sm:$0xff]
      %v277 = vld [vmem:[%s246] sm:$0xff]
      %v278 = vld [vmem:[%s246 + $0x8] sm:$0xff]
      %281 = vrot.lane.b32.xlu0 %v277, 125
      %v282 = vpop.permute.xlu0 %281
      %283 = vrot.lane.b32.xlu0 %v278, 125
      %v284 = vpop.permute.xlu0 %283
      %287 = vst.msk [vmem:[#allocation2 + $0x5] sm:$0xff] %vm253, %v282
      %288 = vst.msk [vmem:[#allocation2 + $0xd] sm:$0xff] %vm253, %v284
      %v289 = vld [vmem:[%s2] sm:$0xf]
      %v290 = vld [vmem:[%s2 + $0x4] sm:$0xf]
      %v291 = vld [vmem:[%s2 + $0x8] sm:$0xf]
      %v292 = vld [vmem:[%s2 + $0xc] sm:$0xf]
      %v293 = vld [vmem:[%s2 + $0x10] sm:$0xf]
      %v294 = vld [vmem:[%s2 + $0x14] sm:$0x7]
      %v295 = vld [vmem:[%s2 + $0x18] sm:$0xf]
      %v296 = vld [vmem:[%s2 + $0x1c] sm:$0xf]
      %v297 = vld [vmem:[%s2 + $0x20] sm:$0xf]
      %v298 = vld [vmem:[%s2 + $0x24] sm:$0xf]
      %v299 = vld [vmem:[%s2 + $0x28] sm:$0xf]
      %v300 = vld [vmem:[%s2 + $0x2c] sm:$0x7]
      %v301 = vld [vmem:[%s2 + $0x30] sm:$0xf]
      %v302 = vld [vmem:[%s2 + $0x34] sm:$0xf]
      %v303 = vld [vmem:[%s2 + $0x38] sm:$0xf]
      %v304 = vld [vmem:[%s2 + $0x3c] sm:$0xf]
      %v305 = vld [vmem:[%s2 + $0x40] sm:$0xf]
      %v306 = vld [vmem:[%s2 + $0x44] sm:$0x7]
      %v307 = vld [vmem:[%s2 + $0x48] sm:$0xf]
      %v308 = vld [vmem:[%s2 + $0x4c] sm:$0xf]
      %v309 = vld [vmem:[%s2 + $0x50] sm:$0xf]
      %v310 = vld [vmem:[%s2 + $0x54] sm:$0xf]
      %v311 = vld [vmem:[%s2 + $0x58] sm:$0xf]
      %v312 = vld [vmem:[%s2 + $0x5c] sm:$0x7]
      %v313 = vld [vmem:[%s2 + $0x60] sm:$0xf]
      %v314 = vld [vmem:[%s2 + $0x64] sm:$0xf]
      %v315 = vld [vmem:[%s2 + $0x68] sm:$0xf]
      %v316 = vld [vmem:[%s2 + $0x6c] sm:$0xf]
      %v317 = vld [vmem:[%s2 + $0x70] sm:$0xf]
      %v318 = vld [vmem:[%s2 + $0x74] sm:$0x7]
      %v319 = vld [vmem:[%s2 + $0x78] sm:$0xf]
      %v320 = vld [vmem:[%s2 + $0x7c] sm:$0xf]
      %v321 = vld [vmem:[%s2 + $0x80] sm:$0xf]
      %v322 = vld [vmem:[%s2 + $0x84] sm:$0xf]
      %v323 = vld [vmem:[%s2 + $0x88] sm:$0xf]
      %v324 = vld [vmem:[%s2 + $0x8c] sm:$0x7]
      %v325 = vld [vmem:[%s2 + $0x90] sm:$0xf]
      %v326 = vld [vmem:[%s2 + $0x94] sm:$0xf]
      %v327 = vld [vmem:[%s2 + $0x98] sm:$0xf]
      %v328 = vld [vmem:[%s2 + $0x9c] sm:$0xf]
      %v329 = vld [vmem:[%s2 + $0xa0] sm:$0xf]
      %v330 = vld [vmem:[%s2 + $0xa4] sm:$0x7]
      %v331 = vld [vmem:[%s2 + $0xa8] sm:$0xf]
      %v332 = vld [vmem:[%s2 + $0xac] sm:$0xf]
      %v333 = vld [vmem:[%s2 + $0xb0] sm:$0xf]
      %v334 = vld [vmem:[%s2 + $0xb4] sm:$0xf]
      %v335 = vld [vmem:[%s2 + $0xb8] sm:$0xf]
      %v336 = vld [vmem:[%s2 + $0xbc] sm:$0x7]
      %v337 = vld [vmem:[%s2 + $0xc0] sm:$0xf]
      %v338 = vld [vmem:[%s2 + $0xc4] sm:$0xf]
      %v339 = vld [vmem:[%s2 + $0xc8] sm:$0xf]
      %v340 = vld [vmem:[%s2 + $0xcc] sm:$0xf]
      %v341 = vld [vmem:[%s2 + $0xd0] sm:$0xf]
      %v342 = vld [vmem:[%s2 + $0xd4] sm:$0x7]
      %v343 = vld [vmem:[#allocation2] sm:$0xff]
      %v344 = vld [vmem:[#allocation2 + $0x8] sm:$0xff]
      %v345 = vpack.c.bf16 %v344, %v343
      %v352 = vunpack.c.l.b16 %v289
      %v353 = vunpack.c.l.b16 %v290
      %v354 = vunpack.c.l.b16 %v291
      %v355 = vunpack.c.l.b16 %v292
      %v356 = vunpack.c.l.b16 %v293
      %v357 = vunpack.c.l.b16 %v294
      %v358 = vpack.c.b16 %v353, %v352
      %v359 = vpack.c.b16 %v355, %v354
      %v360 = vpack.c.b16 %v357, %v356
      %v364 = vsel %vm253, %v345, 0
      %vm366 = vcmask 1045504
      %vm367 = vcmask 1046528
      %v368 = vsel %vm366, 4294967295, 65535
      %v369 = vsel %vm367, %v368, 0
      %v371 = vand.u32 %v360, %v369
      %373 = vmatprep.subr.bf16.mxu0 0
      %374 = vmatpush1.bf16.msra.mxu0 %v358
      %375 = vmatprep.subr.bf16.mxu0 0
      %376 = vmatpush1.bf16.msra.mxu0 %v359
      %377 = vmatprep.subr.bf16.mxu0 0
      %378 = vmatpush1.bf16.msra.mxu0 %v371
      %379 = vmatprep.subr.bf16.mxu0 0
      %380 = vmatpush1.bf16.msra.mxu0 0
      %381 = vmatprep.subr.bf16.mxu0 0
      %382 = vmatpush1.bf16.msra.mxu0 0
      %383 = vmatprep.subr.bf16.mxu0 0
      %384 = vmatpush1.bf16.msra.mxu0 0
      %385 = vmatprep.subr.bf16.mxu0 0
      %386 = vmatpush1.bf16.msra.mxu0 0
      %387 = vmatprep.subr.bf16.mxu0 0
      %388 = vmatpush1.bf16.msra.mxu0 0
      %389 = vmatprep.subr.bf16.mxu0 0
      %390 = vmatpush1.bf16.msra.mxu0 0
      %391 = vmatprep.subr.bf16.mxu0 0
      %392 = vmatpush1.bf16.msra.mxu0 0
      %393 = vmatprep.subr.bf16.mxu0 0
      %394 = vmatpush1.bf16.msra.mxu0 0
      %395 = vmatprep.subr.bf16.mxu0 0
      %396 = vmatpush1.bf16.msra.mxu0 0
      %397 = vmatprep.subr.bf16.mxu0 0
      %398 = vmatpush1.bf16.msra.mxu0 0
      %399 = vmatprep.subr.bf16.mxu0 0
      %400 = vmatpush1.bf16.msra.mxu0 0
      %401 = vmatprep.subr.bf16.mxu0 0
      %402 = vmatpush1.bf16.msra.mxu0 0
      %403 = vmatprep.subr.bf16.mxu0 0
      %404 = vmatpush1.bf16.msra.mxu0 0
      %405 = vmatprep.mubr.bf16.mxu0 0
      %406 = vmatmul.mubr.bf16.gmra.mrb[0].mxu0 %v364
      %v407 = vpop.f32.mrb[0].mxu0
      %v408 = vadd.f32 0.0, %v407
      %v409 = vpop.f32.mrb[0].mxu0
      %v410 = vpop.f32.mrb[0].mxu0
      %v411 = vadd.f32 0.0, %v410
      %v412 = vpop.f32.mrb[0].mxu0
      %413 = vdwg.mxu0
      %415 = vset.pattern.permute.xlu0 0
      %416 = vperm.xlu0 %415, %v259
      %v417 = vpop.permute.xlu0 %416
      %420 = vset.pattern.permute.xlu0 0
      %421 = vperm.xlu0 %420, %v260
      %v422 = vpop.permute.xlu0 %421
      %v424 = vmul.f32 %v417, %v408
      %v425 = vmul.f32 %v422, %v411
      %v426 = vadd.f32 %v424, 0.0
      %v427 = vadd.f32 %v425, 0.0
      %v428 = vld [vmem:[#allocation2 + $0x1] sm:$0xff]
      %v429 = vld [vmem:[#allocation2 + $0x9] sm:$0xff]
      %v430 = vpack.c.bf16 %v429, %v428
      %v437 = vunpack.c.l.b16 %v295
      %v438 = vunpack.c.l.b16 %v296
      %v439 = vunpack.c.l.b16 %v297
      %v440 = vunpack.c.l.b16 %v298
      %v441 = vunpack.c.l.b16 %v299
      %v442 = vunpack.c.l.b16 %v300
      %v443 = vpack.c.b16 %v438, %v437
      %v444 = vpack.c.b16 %v440, %v439
      %v445 = vpack.c.b16 %v442, %v441
      %v449 = vsel %vm253, %v430, 0
      %v452 = vand.u32 %v445, %v369
      %454 = vmatprep.subr.bf16.mxu0 0
      %455 = vmatpush1.bf16.msra.mxu0 %v443
      %456 = vmatprep.subr.bf16.mxu0 0
      %457 = vmatpush1.bf16.msra.mxu0 %v444
      %458 = vmatprep.subr.bf16.mxu0 0
      %459 = vmatpush1.bf16.msra.mxu0 %v452
      %460 = vmatprep.subr.bf16.mxu0 0
      %461 = vmatpush1.bf16.msra.mxu0 0
      %462 = vmatprep.subr.bf16.mxu0 0
      %463 = vmatpush1.bf16.msra.mxu0 0
      %464 = vmatprep.subr.bf16.mxu0 0
      %465 = vmatpush1.bf16.msra.mxu0 0
      %466 = vmatprep.subr.bf16.mxu0 0
      %467 = vmatpush1.bf16.msra.mxu0 0
      %468 = vmatprep.subr.bf16.mxu0 0
      %469 = vmatpush1.bf16.msra.mxu0 0
      %470 = vmatprep.subr.bf16.mxu0 0
      %471 = vmatpush1.bf16.msra.mxu0 0
      %472 = vmatprep.subr.bf16.mxu0 0
      %473 = vmatpush1.bf16.msra.mxu0 0
      %474 = vmatprep.subr.bf16.mxu0 0
      %475 = vmatpush1.bf16.msra.mxu0 0
      %476 = vmatprep.subr.bf16.mxu0 0
      %477 = vmatpush1.bf16.msra.mxu0 0
      %478 = vmatprep.subr.bf16.mxu0 0
      %479 = vmatpush1.bf16.msra.mxu0 0
      %480 = vmatprep.subr.bf16.mxu0 0
      %481 = vmatpush1.bf16.msra.mxu0 0
      %482 = vmatprep.subr.bf16.mxu0 0
      %483 = vmatpush1.bf16.msra.mxu0 0
      %484 = vmatprep.subr.bf16.mxu0 0
      %485 = vmatpush1.bf16.msra.mxu0 0
      %486 = vmatprep.mubr.bf16.mxu0 0
      %487 = vmatmul.mubr.bf16.gmra.mrb[0].mxu0 %v449
      %v488 = vpop.f32.mrb[0].mxu0
      %v489 = vadd.f32 0.0, %v488
      %v490 = vpop.f32.mrb[0].mxu0
      %v491 = vpop.f32.mrb[0].mxu0
      %v492 = vadd.f32 0.0, %v491
      %v493 = vpop.f32.mrb[0].mxu0
      %494 = vdwg.mxu0
      %496 = vset.pattern.permute.xlu0 0
      %497 = vperm.xlu0 %496, %v261
      %v498 = vpop.permute.xlu0 %497
      %501 = vset.pattern.permute.xlu0 0
      %502 = vperm.xlu0 %501, %v262
      %v503 = vpop.permute.xlu0 %502
      %v505 = vmul.f32 %v498, %v489
      %v506 = vmul.f32 %v503, %v492
      %v507 = vadd.f32 %v426, %v505
      %v508 = vadd.f32 %v427, %v506
      %v509 = vld [vmem:[#allocation2 + $0x2] sm:$0xff]
      %v510 = vld [vmem:[#allocation2 + $0xa] sm:$0xff]
      %v511 = vpack.c.bf16 %v510, %v509
      %v518 = vunpack.c.l.b16 %v301
      %v519 = vunpack.c.l.b16 %v302
      %v520 = vunpack.c.l.b16 %v303
      %v521 = vunpack.c.l.b16 %v304
      %v522 = vunpack.c.l.b16 %v305
      %v523 = vunpack.c.l.b16 %v306
      %v524 = vpack.c.b16 %v519, %v518
      %v525 = vpack.c.b16 %v521, %v520
      %v526 = vpack.c.b16 %v523, %v522
      %v530 = vsel %vm253, %v511, 0
      %v533 = vand.u32 %v526, %v369
      %535 = vmatprep.subr.bf16.mxu0 0
      %536 = vmatpush1.bf16.msra.mxu0 %v524
      %537 = vmatprep.subr.bf16.mxu0 0
      %538 = vmatpush1.bf16.msra.mxu0 %v525
      %539 = vmatprep.subr.bf16.mxu0 0
      %540 = vmatpush1.bf16.msra.mxu0 %v533
      %541 = vmatprep.subr.bf16.mxu0 0
      %542 = vmatpush1.bf16.msra.mxu0 0
      %543 = vmatprep.subr.bf16.mxu0 0
      %544 = vmatpush1.bf16.msra.mxu0 0
      %545 = vmatprep.subr.bf16.mxu0 0
      %546 = vmatpush1.bf16.msra.mxu0 0
      %547 = vmatprep.subr.bf16.mxu0 0
      %548 = vmatpush1.bf16.msra.mxu0 0
      %549 = vmatprep.subr.bf16.mxu0 0
      %550 = vmatpush1.bf16.msra.mxu0 0
      %551 = vmatprep.subr.bf16.mxu0 0
      %552 = vmatpush1.bf16.msra.mxu0 0
      %553 = vmatprep.subr.bf16.mxu0 0
      %554 = vmatpush1.bf16.msra.mxu0 0
      %555 = vmatprep.subr.bf16.mxu0 0
      %556 = vmatpush1.bf16.msra.mxu0 0
      %557 = vmatprep.subr.bf16.mxu0 0
      %558 = vmatpush1.bf16.msra.mxu0 0
      %559 = vmatprep.subr.bf16.mxu0 0
      %560 = vmatpush1.bf16.msra.mxu0 0
      %561 = vmatprep.subr.bf16.mxu0 0
      %562 = vmatpush1.bf16.msra.mxu0 0
      %563 = vmatprep.subr.bf16.mxu0 0
      %564 = vmatpush1.bf16.msra.mxu0 0
      %565 = vmatprep.subr.bf16.mxu0 0
      %566 = vmatpush1.bf16.msra.mxu0 0
      %567 = vmatprep.mubr.bf16.mxu0 0
      %568 = vmatmul.mubr.bf16.gmra.mrb[0].mxu0 %v530
      %v569 = vpop.f32.mrb[0].mxu0
      %v570 = vadd.f32 0.0, %v569
      %v571 = vpop.f32.mrb[0].mxu0
      %v572 = vpop.f32.mrb[0].mxu0
      %v573 = vadd.f32 0.0, %v572
      %v574 = vpop.f32.mrb[0].mxu0
      %575 = vdwg.mxu0
      %577 = vset.pattern.permute.xlu0 0
      %578 = vperm.xlu0 %577, %v263
      %v579 = vpop.permute.xlu0 %578
      %582 = vset.pattern.permute.xlu0 0
      %583 = vperm.xlu0 %582, %v264
      %v584 = vpop.permute.xlu0 %583
      %v586 = vmul.f32 %v579, %v570
      %v587 = vmul.f32 %v584, %v573
      %v588 = vadd.f32 %v507, %v586
      %v589 = vadd.f32 %v508, %v587
      %v590 = vld [vmem:[#allocation2 + $0x4] sm:$0xff]
      %v591 = vld [vmem:[#allocation2 + $0xc] sm:$0xff]
      %v592 = vpack.c.bf16 %v591, %v590
      %v599 = vunpack.c.l.b16 %v307
      %v600 = vunpack.c.l.b16 %v308
      %v601 = vunpack.c.l.b16 %v309
      %v602 = vunpack.c.l.b16 %v310
      %v603 = vunpack.c.l.b16 %v311
      %v604 = vunpack.c.l.b16 %v312
      %v605 = vpack.c.b16 %v600, %v599
      %v606 = vpack.c.b16 %v602, %v601
      %v607 = vpack.c.b16 %v604, %v603
      %v611 = vsel %vm253, %v592, 0
      %v614 = vand.u32 %v607, %v369
      %616 = vmatprep.subr.bf16.mxu0 0
      %617 = vmatpush1.bf16.msra.mxu0 %v605
      %618 = vmatprep.subr.bf16.mxu0 0
      %619 = vmatpush1.bf16.msra.mxu0 %v606
      %620 = vmatprep.subr.bf16.mxu0 0
      %621 = vmatpush1.bf16.msra.mxu0 %v614
      %622 = vmatprep.subr.bf16.mxu0 0
      %623 = vmatpush1.bf16.msra.mxu0 0
      %624 = vmatprep.subr.bf16.mxu0 0
      %625 = vmatpush1.bf16.msra.mxu0 0
      %626 = vmatprep.subr.bf16.mxu0 0
      %627 = vmatpush1.bf16.msra.mxu0 0
      %628 = vmatprep.subr.bf16.mxu0 0
      %629 = vmatpush1.bf16.msra.mxu0 0
      %630 = vmatprep.subr.bf16.mxu0 0
      %631 = vmatpush1.bf16.msra.mxu0 0
      %632 = vmatprep.subr.bf16.mxu0 0
      %633 = vmatpush1.bf16.msra.mxu0 0
      %634 = vmatprep.subr.bf16.mxu0 0
      %635 = vmatpush1.bf16.msra.mxu0 0
      %636 = vmatprep.subr.bf16.mxu0 0
      %637 = vmatpush1.bf16.msra.mxu0 0
      %638 = vmatprep.subr.bf16.mxu0 0
      %639 = vmatpush1.bf16.msra.mxu0 0
      %640 = vmatprep.subr.bf16.mxu0 0
      %641 = vmatpush1.bf16.msra.mxu0 0
      %642 = vmatprep.subr.bf16.mxu0 0
      %643 = vmatpush1.bf16.msra.mxu0 0
      %644 = vmatprep.subr.bf16.mxu0 0
      %645 = vmatpush1.bf16.msra.mxu0 0
      %646 = vmatprep.subr.bf16.mxu0 0
      %647 = vmatpush1.bf16.msra.mxu0 0
      %648 = vmatprep.mubr.bf16.mxu0 0
      %649 = vmatmul.mubr.bf16.gmra.mrb[0].mxu0 %v611
      %v650 = vpop.f32.mrb[0].mxu0
      %v651 = vadd.f32 0.0, %v650
      %v652 = vpop.f32.mrb[0].mxu0
      %v653 = vpop.f32.mrb[0].mxu0
      %v654 = vadd.f32 0.0, %v653
      %v655 = vpop.f32.mrb[0].mxu0
      %656 = vdwg.mxu0
      %658 = vset.pattern.permute.xlu0 0
      %659 = vperm.xlu0 %658, %v265
      %v660 = vpop.permute.xlu0 %659
      %663 = vset.pattern.permute.xlu0 0
      %664 = vperm.xlu0 %663, %v266
      %v665 = vpop.permute.xlu0 %664
      %v667 = vmul.f32 %v660, %v651
      %v668 = vmul.f32 %v665, %v654
      %v669 = vadd.f32 %v588, %v667
      %v670 = vadd.f32 %v589, %v668
      %v671 = vld [vmem:[#allocation2 + $0x5] sm:$0xff]
      %v672 = vld [vmem:[#allocation2 + $0xd] sm:$0xff]
      %v673 = vpack.c.bf16 %v672, %v671
      %v680 = vunpack.c.l.b16 %v313
      %v681 = vunpack.c.l.b16 %v314
      %v682 = vunpack.c.l.b16 %v315
      %v683 = vunpack.c.l.b16 %v316
      %v684 = vunpack.c.l.b16 %v317
      %v685 = vunpack.c.l.b16 %v318
      %v686 = vpack.c.b16 %v681, %v680
      %v687 = vpack.c.b16 %v683, %v682
      %v688 = vpack.c.b16 %v685, %v684
      %v692 = vsel %vm253, %v673, 0
      %v695 = vand.u32 %v688, %v369
      %697 = vmatprep.subr.bf16.mxu0 0
      %698 = vmatpush1.bf16.msra.mxu0 %v686
      %699 = vmatprep.subr.bf16.mxu0 0
      %700 = vmatpush1.bf16.msra.mxu0 %v687
      %701 = vmatprep.subr.bf16.mxu0 0
      %702 = vmatpush1.bf16.msra.mxu0 %v695
      %703 = vmatprep.subr.bf16.mxu0 0
      %704 = vmatpush1.bf16.msra.mxu0 0
      %705 = vmatprep.subr.bf16.mxu0 0
      %706 = vmatpush1.bf16.msra.mxu0 0
      %707 = vmatprep.subr.bf16.mxu0 0
      %708 = vmatpush1.bf16.msra.mxu0 0
      %709 = vmatprep.subr.bf16.mxu0 0
      %710 = vmatpush1.bf16.msra.mxu0 0
      %711 = vmatprep.subr.bf16.mxu0 0
      %712 = vmatpush1.bf16.msra.mxu0 0
      %713 = vmatprep.subr.bf16.mxu0 0
      %714 = vmatpush1.bf16.msra.mxu0 0
      %715 = vmatprep.subr.bf16.mxu0 0
      %716 = vmatpush1.bf16.msra.mxu0 0
      %717 = vmatprep.subr.bf16.mxu0 0
      %718 = vmatpush1.bf16.msra.mxu0 0
      %719 = vmatprep.subr.bf16.mxu0 0
      %720 = vmatpush1.bf16.msra.mxu0 0
      %721 = vmatprep.subr.bf16.mxu0 0
      %722 = vmatpush1.bf16.msra.mxu0 0
      %723 = vmatprep.subr.bf16.mxu0 0
      %724 = vmatpush1.bf16.msra.mxu0 0
      %725 = vmatprep.subr.bf16.mxu0 0
      %726 = vmatpush1.bf16.msra.mxu0 0
      %727 = vmatprep.subr.bf16.mxu0 0
      %728 = vmatpush1.bf16.msra.mxu0 0
      %729 = vmatprep.mubr.bf16.mxu0 0
      %730 = vmatmul.mubr.bf16.gmra.mrb[0].mxu0 %v692
      %v731 = vpop.f32.mrb[0].mxu0
      %v732 = vadd.f32 0.0, %v731
      %v733 = vpop.f32.mrb[0].mxu0
      %v734 = vpop.f32.mrb[0].mxu0
      %v735 = vadd.f32 0.0, %v734
      %v736 = vpop.f32.mrb[0].mxu0
      %737 = vdwg.mxu0
      %739 = vset.pattern.permute.xlu0 0
      %740 = vperm.xlu0 %739, %v267
      %v741 = vpop.permute.xlu0 %740
      %744 = vset.pattern.permute.xlu0 0
      %745 = vperm.xlu0 %744, %v268
      %v746 = vpop.permute.xlu0 %745
      %v748 = vmul.f32 %v741, %v732
      %v749 = vmul.f32 %v746, %v735
      %v750 = vadd.f32 %v669, %v748
      %v751 = vadd.f32 %v670, %v749
      %v752 = vld [vmem:[#allocation2 + $0x6] sm:$0xff]
      %v753 = vld [vmem:[#allocation2 + $0xe] sm:$0xff]
      %v754 = vpack.c.bf16 %v753, %v752
      %v761 = vunpack.c.l.b16 %v319
      %v762 = vunpack.c.l.b16 %v320
      %v763 = vunpack.c.l.b16 %v321
      %v764 = vunpack.c.l.b16 %v322
      %v765 = vunpack.c.l.b16 %v323
      %v766 = vunpack.c.l.b16 %v324
      %v767 = vpack.c.b16 %v762, %v761
      %v768 = vpack.c.b16 %v764, %v763
      %v769 = vpack.c.b16 %v766, %v765
      %v773 = vsel %vm253, %v754, 0
      %v776 = vand.u32 %v769, %v369
      %778 = vmatprep.subr.bf16.mxu0 0
      %779 = vmatpush1.bf16.msra.mxu0 %v767
      %780 = vmatprep.subr.bf16.mxu0 0
      %781 = vmatpush1.bf16.msra.mxu0 %v768
      %782 = vmatprep.subr.bf16.mxu0 0
      %783 = vmatpush1.bf16.msra.mxu0 %v776
      %784 = vmatprep.subr.bf16.mxu0 0
      %785 = vmatpush1.bf16.msra.mxu0 0
      %786 = vmatprep.subr.bf16.mxu0 0
      %787 = vmatpush1.bf16.msra.mxu0 0
      %788 = vmatprep.subr.bf16.mxu0 0
      %789 = vmatpush1.bf16.msra.mxu0 0
      %790 = vmatprep.subr.bf16.mxu0 0
      %791 = vmatpush1.bf16.msra.mxu0 0
      %792 = vmatprep.subr.bf16.mxu0 0
      %793 = vmatpush1.bf16.msra.mxu0 0
      %794 = vmatprep.subr.bf16.mxu0 0
      %795 = vmatpush1.bf16.msra.mxu0 0
      %796 = vmatprep.subr.bf16.mxu0 0
      %797 = vmatpush1.bf16.msra.mxu0 0
      %798 = vmatprep.subr.bf16.mxu0 0
      %799 = vmatpush1.bf16.msra.mxu0 0
      %800 = vmatprep.subr.bf16.mxu0 0
      %801 = vmatpush1.bf16.msra.mxu0 0
      %802 = vmatprep.subr.bf16.mxu0 0
      %803 = vmatpush1.bf16.msra.mxu0 0
      %804 = vmatprep.subr.bf16.mxu0 0
      %805 = vmatpush1.bf16.msra.mxu0 0
      %806 = vmatprep.subr.bf16.mxu0 0
      %807 = vmatpush1.bf16.msra.mxu0 0
      %808 = vmatprep.subr.bf16.mxu0 0
      %809 = vmatpush1.bf16.msra.mxu0 0
      %810 = vmatprep.mubr.bf16.mxu0 0
      %811 = vmatmul.mubr.bf16.gmra.mrb[0].mxu0 %v773
      %v812 = vpop.f32.mrb[0].mxu0
      %v813 = vadd.f32 0.0, %v812
      %v814 = vpop.f32.mrb[0].mxu0
      %v815 = vpop.f32.mrb[0].mxu0
      %v816 = vadd.f32 0.0, %v815
      %v817 = vpop.f32.mrb[0].mxu0
      %818 = vdwg.mxu0
      %820 = vset.pattern.permute.xlu0 0
      %821 = vperm.xlu0 %820, %v269
      %v822 = vpop.permute.xlu0 %821
      %825 = vset.pattern.permute.xlu0 0
      %826 = vperm.xlu0 %825, %v270
      %v827 = vpop.permute.xlu0 %826
      %v829 = vmul.f32 %v822, %v813
      %v830 = vmul.f32 %v827, %v816
      %v831 = vadd.f32 %v750, %v829
      %v832 = vadd.f32 %v751, %v830
      %v833 = vld [vmem:[#allocation2 + $0x8] sm:$0xff]
      %v834 = vld [vmem:[#allocation2 + $0x10] sm:$0xff]
      %v835 = vpack.c.bf16 %v834, %v833
      %v842 = vunpack.c.l.b16 %v325
      %v843 = vunpack.c.l.b16 %v326
      %v844 = vunpack.c.l.b16 %v327
      %v845 = vunpack.c.l.b16 %v328
      %v846 = vunpack.c.l.b16 %v329
      %v847 = vunpack.c.l.b16 %v330
      %v848 = vpack.c.b16 %v843, %v842
      %v849 = vpack.c.b16 %v845, %v844
      %v850 = vpack.c.b16 %v847, %v846
      %v854 = vsel %vm253, %v835, 0
      %v857 = vand.u32 %v850, %v369
      %859 = vmatprep.subr.bf16.mxu0 0
      %860 = vmatpush1.bf16.msra.mxu0 %v848
      %861 = vmatprep.subr.bf16.mxu0 0
      %862 = vmatpush1.bf16.msra.mxu0 %v849
      %863 = vmatprep.subr.bf16.mxu0 0
      %864 = vmatpush1.bf16.msra.mxu0 %v857
      %865 = vmatprep.subr.bf16.mxu0 0
      %866 = vmatpush1.bf16.msra.mxu0 0
      %867 = vmatprep.subr.bf16.mxu0 0
      %868 = vmatpush1.bf16.msra.mxu0 0
      %869 = vmatprep.subr.bf16.mxu0 0
      %870 = vmatpush1.bf16.msra.mxu0 0
      %871 = vmatprep.subr.bf16.mxu0 0
      %872 = vmatpush1.bf16.msra.mxu0 0
      %873 = vmatprep.subr.bf16.mxu0 0
      %874 = vmatpush1.bf16.msra.mxu0 0
      %875 = vmatprep.subr.bf16.mxu0 0
      %876 = vmatpush1.bf16.msra.mxu0 0
      %877 = vmatprep.subr.bf16.mxu0 0
      %878 = vmatpush1.bf16.msra.mxu0 0
      %879 = vmatprep.subr.bf16.mxu0 0
      %880 = vmatpush1.bf16.msra.mxu0 0
      %881 = vmatprep.subr.bf16.mxu0 0
      %882 = vmatpush1.bf16.msra.mxu0 0
      %883 = vmatprep.subr.bf16.mxu0 0
      %884 = vmatpush1.bf16.msra.mxu0 0
      %885 = vmatprep.subr.bf16.mxu0 0
      %886 = vmatpush1.bf16.msra.mxu0 0
      %887 = vmatprep.subr.bf16.mxu0 0
      %888 = vmatpush1.bf16.msra.mxu0 0
      %889 = vmatprep.subr.bf16.mxu0 0
      %890 = vmatpush1.bf16.msra.mxu0 0
      %891 = vmatprep.mubr.bf16.mxu0 0
      %892 = vmatmul.mubr.bf16.gmra.mrb[0].mxu0 %v854
      %v893 = vpop.f32.mrb[0].mxu0
      %v894 = vadd.f32 0.0, %v893
      %v895 = vpop.f32.mrb[0].mxu0
      %v896 = vpop.f32.mrb[0].mxu0
      %v897 = vadd.f32 0.0, %v896
      %v898 = vpop.f32.mrb[0].mxu0
      %899 = vdwg.mxu0
      %901 = vset.pattern.permute.xlu0 0
      %902 = vperm.xlu0 %901, %v271
      %v903 = vpop.permute.xlu0 %902
      %906 = vset.pattern.permute.xlu0 0
      %907 = vperm.xlu0 %906, %v272
      %v908 = vpop.permute.xlu0 %907
      %v910 = vmul.f32 %v903, %v894
      %v911 = vmul.f32 %v908, %v897
      %v912 = vadd.f32 %v831, %v910
      %v913 = vadd.f32 %v832, %v911
      %v914 = vld [vmem:[#allocation2 + $0x9] sm:$0xff]
      %v915 = vld [vmem:[#allocation2 + $0x11] sm:$0xff]
      %v916 = vpack.c.bf16 %v915, %v914
      %v923 = vunpack.c.l.b16 %v331
      %v924 = vunpack.c.l.b16 %v332
      %v925 = vunpack.c.l.b16 %v333
      %v926 = vunpack.c.l.b16 %v334
      %v927 = vunpack.c.l.b16 %v335
      %v928 = vunpack.c.l.b16 %v336
      %v929 = vpack.c.b16 %v924, %v923
      %v930 = vpack.c.b16 %v926, %v925
      %v931 = vpack.c.b16 %v928, %v927
      %v935 = vsel %vm253, %v916, 0
      %v938 = vand.u32 %v931, %v369
      %940 = vmatprep.subr.bf16.mxu0 0
      %941 = vmatpush1.bf16.msra.mxu0 %v929
      %942 = vmatprep.subr.bf16.mxu0 0
      %943 = vmatpush1.bf16.msra.mxu0 %v930
      %944 = vmatprep.subr.bf16.mxu0 0
      %945 = vmatpush1.bf16.msra.mxu0 %v938
      %946 = vmatprep.subr.bf16.mxu0 0
      %947 = vmatpush1.bf16.msra.mxu0 0
      %948 = vmatprep.subr.bf16.mxu0 0
      %949 = vmatpush1.bf16.msra.mxu0 0
      %950 = vmatprep.subr.bf16.mxu0 0
      %951 = vmatpush1.bf16.msra.mxu0 0
      %952 = vmatprep.subr.bf16.mxu0 0
      %953 = vmatpush1.bf16.msra.mxu0 0
      %954 = vmatprep.subr.bf16.mxu0 0
      %955 = vmatpush1.bf16.msra.mxu0 0
      %956 = vmatprep.subr.bf16.mxu0 0
      %957 = vmatpush1.bf16.msra.mxu0 0
      %958 = vmatprep.subr.bf16.mxu0 0
      %959 = vmatpush1.bf16.msra.mxu0 0
      %960 = vmatprep.subr.bf16.mxu0 0
      %961 = vmatpush1.bf16.msra.mxu0 0
      %962 = vmatprep.subr.bf16.mxu0 0
      %963 = vmatpush1.bf16.msra.mxu0 0
      %964 = vmatprep.subr.bf16.mxu0 0
      %965 = vmatpush1.bf16.msra.mxu0 0
      %966 = vmatprep.subr.bf16.mxu0 0
      %967 = vmatpush1.bf16.msra.mxu0 0
      %968 = vmatprep.subr.bf16.mxu0 0
      %969 = vmatpush1.bf16.msra.mxu0 0
      %970 = vmatprep.subr.bf16.mxu0 0
      %971 = vmatpush1.bf16.msra.mxu0 0
      %972 = vmatprep.mubr.bf16.mxu0 0
      %973 = vmatmul.mubr.bf16.gmra.mrb[0].mxu0 %v935
      %v974 = vpop.f32.mrb[0].mxu0
      %v975 = vadd.f32 0.0, %v974
      %v976 = vpop.f32.mrb[0].mxu0
      %v977 = vpop.f32.mrb[0].mxu0
      %v978 = vadd.f32 0.0, %v977
      %v979 = vpop.f32.mrb[0].mxu0
      %980 = vdwg.mxu0
      %982 = vset.pattern.permute.xlu0 0
      %983 = vperm.xlu0 %982, %v273
      %v984 = vpop.permute.xlu0 %983
      %987 = vset.pattern.permute.xlu0 0
      %988 = vperm.xlu0 %987, %v274
      %v989 = vpop.permute.xlu0 %988
      %v991 = vmul.f32 %v984, %v975
      %v992 = vmul.f32 %v989, %v978
      %v993 = vadd.f32 %v912, %v991
      %v994 = vadd.f32 %v913, %v992
      %v995 = vld [vmem:[#allocation2 + $0xa] sm:$0xff]
      %v996 = vld [vmem:[#allocation2 + $0x12] sm:$0xff]
      %v997 = vpack.c.bf16 %v996, %v995
      %v1004 = vunpack.c.l.b16 %v337
      %v1005 = vunpack.c.l.b16 %v338
      %v1006 = vunpack.c.l.b16 %v339
      %v1007 = vunpack.c.l.b16 %v340
      %v1008 = vunpack.c.l.b16 %v341
      %v1009 = vunpack.c.l.b16 %v342
      %v1010 = vpack.c.b16 %v1005, %v1004
      %v1011 = vpack.c.b16 %v1007, %v1006
      %v1012 = vpack.c.b16 %v1009, %v1008
      %v1016 = vsel %vm253, %v997, 0
      %v1019 = vand.u32 %v1012, %v369
      %1021 = vmatprep.subr.bf16.mxu0 0
      %1022 = vmatpush1.bf16.msra.mxu0 %v1010
      %1023 = vmatprep.subr.bf16.mxu0 0
      %1024 = vmatpush1.bf16.msra.mxu0 %v1011
      %1025 = vmatprep.subr.bf16.mxu0 0
      %1026 = vmatpush1.bf16.msra.mxu0 %v1019
      %1027 = vmatprep.subr.bf16.mxu0 0
      %1028 = vmatpush1.bf16.msra.mxu0 0
      %1029 = vmatprep.subr.bf16.mxu0 0
      %1030 = vmatpush1.bf16.msra.mxu0 0
      %1031 = vmatprep.subr.bf16.mxu0 0
      %1032 = vmatpush1.bf16.msra.mxu0 0
      %1033 = vmatprep.subr.bf16.mxu0 0
      %1034 = vmatpush1.bf16.msra.mxu0 0
      %1035 = vmatprep.subr.bf16.mxu0 0
      %1036 = vmatpush1.bf16.msra.mxu0 0
      %1037 = vmatprep.subr.bf16.mxu0 0
      %1038 = vmatpush1.bf16.msra.mxu0 0
      %1039 = vmatprep.subr.bf16.mxu0 0
      %1040 = vmatpush1.bf16.msra.mxu0 0
      %1041 = vmatprep.subr.bf16.mxu0 0
      %1042 = vmatpush1.bf16.msra.mxu0 0
      %1043 = vmatprep.subr.bf16.mxu0 0
      %1044 = vmatpush1.bf16.msra.mxu0 0
      %1045 = vmatprep.subr.bf16.mxu0 0
      %1046 = vmatpush1.bf16.msra.mxu0 0
      %1047 = vmatprep.subr.bf16.mxu0 0
      %1048 = vmatpush1.bf16.msra.mxu0 0
      %1049 = vmatprep.subr.bf16.mxu0 0
      %1050 = vmatpush1.bf16.msra.mxu0 0
      %1051 = vmatprep.subr.bf16.mxu0 0
      %1052 = vmatpush1.bf16.msra.mxu0 0
      %1053 = vmatprep.mubr.bf16.mxu0 0
      %1054 = vmatmul.mubr.bf16.gmra.mrb[0].mxu0 %v1016
      %v1055 = vpop.f32.mrb[0].mxu0
      %v1056 = vadd.f32 0.0, %v1055
      %v1057 = vpop.f32.mrb[0].mxu0
      %v1058 = vpop.f32.mrb[0].mxu0
      %v1059 = vadd.f32 0.0, %v1058
      %v1060 = vpop.f32.mrb[0].mxu0
      %1061 = vdwg.mxu0
      %1063 = vset.pattern.permute.xlu0 0
      %1064 = vperm.xlu0 %1063, %v275
      %v1065 = vpop.permute.xlu0 %1064
      %1068 = vset.pattern.permute.xlu0 0
      %1069 = vperm.xlu0 %1068, %v276
      %v1070 = vpop.permute.xlu0 %1069
      %v1072 = vmul.f32 %v1065, %v1056
      %v1073 = vmul.f32 %v1070, %v1059
      %v1074 = vadd.f32 %v993, %v1072
      %v1075 = vadd.f32 %v994, %v1073
      %v1076 = vld [vmem:[%s3] sm:$0x1]
      %v1078 = vlaneseq
      %v1079 = vshrl.u32 %v1078, 7
      %v1080 = vsub.s32 0, %v1079
      %v1081 = vrot.slane %v1076, %v1080
      %v1083 = vadd.f32 %v1074, %v1081
      %v1084 = vadd.f32 %v1075, %v1081
      %v1085 = vadd.f32 %v277, %v1083
      %v1086 = vadd.f32 %v278, %v1084
      %vm1087 = vcmask 23552
      %1088 = vst.msk [vmem:[#allocation2 + $0x5] sm:$0xff] %vm1087, %v1085
      %1089 = vst.msk [vmem:[#allocation2 + $0xd] sm:$0xff] %vm1087, %v1086
      %v1090 = vld [vmem:[%s4] sm:$0x3]
      %v1091 = vld [vmem:[%s4 + $0x2] sm:$0x3]
      %v1092 = vld [vmem:[%s4 + $0x4] sm:$0x3]
      %v1093 = vld [vmem:[%s4 + $0x6] sm:$0x3]
      %v1094 = vld [vmem:[%s4 + $0x8] sm:$0x3]
      %v1095 = vld [vmem:[%s4 + $0xa] sm:$0x3]
      %v1096 = vld [vmem:[%s4 + $0xc] sm:$0x3]
      %v1097 = vld [vmem:[%s4 + $0xe] sm:$0x3]
      %v1098 = vld [vmem:[%s4 + $0x10] sm:$0x3]
      %v1099 = vld [vmem:[#allocation2] sm:$0xff]
      %v1100 = vld [vmem:[#allocation2 + $0x8] sm:$0xff]
      %v1101 = vpack.c.bf16 %v1100, %v1099
      %v1103 = vsel %vm1087, %v1101, 0
      %vm1105 = vcmask 1040384
      %vm1106 = vcmask 1041408
      %v1107 = vsel %vm1105, 4294967295, 65535
      %v1108 = vsel %vm1106, %v1107, 0
      %v1110 = vand.u32 %v1090, %v1108
      %1112 = vmatprep.subr.bf16.mxu0 0
      %1113 = vmatpush1.bf16.msra.mxu0 %v1110
      %1114 = vmatprep.subr.bf16.mxu0 0
      %1115 = vmatpush1.bf16.msra.mxu0 0
      %1116 = vmatprep.subr.bf16.mxu0 0
      %1117 = vmatpush1.bf16.msra.mxu0 0
      %1118 = vmatprep.subr.bf16.mxu0 0
      %1119 = vmatpush1.bf16.msra.mxu0 0
      %1120 = vmatprep.subr.bf16.mxu0 0
      %1121 = vmatpush1.bf16.msra.mxu0 0
      %1122 = vmatprep.subr.bf16.mxu0 0
      %1123 = vmatpush1.bf16.msra.mxu0 0
      %1124 = vmatprep.subr.bf16.mxu0 0
      %1125 = vmatpush1.bf16.msra.mxu0 0
      %1126 = vmatprep.subr.bf16.mxu0 0
      %1127 = vmatpush1.bf16.msra.mxu0 0
      %1128 = vmatprep.subr.bf16.mxu0 0
      %1129 = vmatpush1.bf16.msra.mxu0 0
      %1130 = vmatprep.subr.bf16.mxu0 0
      %1131 = vmatpush1.bf16.msra.mxu0 0
      %1132 = vmatprep.subr.bf16.mxu0 0
      %1133 = vmatpush1.bf16.msra.mxu0 0
      %1134 = vmatprep.subr.bf16.mxu0 0
      %1135 = vmatpush1.bf16.msra.mxu0 0
      %1136 = vmatprep.subr.bf16.mxu0 0
      %1137 = vmatpush1.bf16.msra.mxu0 0
      %1138 = vmatprep.subr.bf16.mxu0 0
      %1139 = vmatpush1.bf16.msra.mxu0 0
      %1140 = vmatprep.subr.bf16.mxu0 0
      %1141 = vmatpush1.bf16.msra.mxu0 0
      %1142 = vmatprep.subr.bf16.mxu0 0
      %1143 = vmatpush1.bf16.msra.mxu0 0
      %1144 = vmatprep.mubr.bf16.mxu0 0
      %1145 = vmatmul.mubr.bf16.gmra.mrb[0].mxu0 %v1103
      %v1146 = vpop.f32.mrb[0].mxu0
      %v1147 = vadd.f32 0.0, %v1146
      %v1148 = vpop.f32.mrb[0].mxu0
      %v1149 = vpop.f32.mrb[0].mxu0
      %v1150 = vadd.f32 0.0, %v1149
      %v1151 = vpop.f32.mrb[0].mxu0
      %1152 = vdwg.mxu0
      %v1153 = vmul.f32 %v417, %v1147
      %v1154 = vmul.f32 %v422, %v1150
      %v1155 = vadd.f32 %v1153, 0.0
      %v1156 = vadd.f32 %v1154, 0.0
      %v1157 = vld [vmem:[#allocation2 + $0x1] sm:$0xff]
      %v1158 = vld [vmem:[#allocation2 + $0x9] sm:$0xff]
      %v1159 = vpack.c.bf16 %v1158, %v1157
      %v1161 = vsel %vm1087, %v1159, 0
      %v1164 = vand.u32 %v1091, %v1108
      %1166 = vmatprep.subr.bf16.mxu0 0
      %1167 = vmatpush1.bf16.msra.mxu0 %v1164
      %1168 = vmatprep.subr.bf16.mxu0 0
      %1169 = vmatpush1.bf16.msra.mxu0 0
      %1170 = vmatprep.subr.bf16.mxu0 0
      %1171 = vmatpush1.bf16.msra.mxu0 0
      %1172 = vmatprep.subr.bf16.mxu0 0
      %1173 = vmatpush1.bf16.msra.mxu0 0
      %1174 = vmatprep.subr.bf16.mxu0 0
      %1175 = vmatpush1.bf16.msra.mxu0 0
      %1176 = vmatprep.subr.bf16.mxu0 0
      %1177 = vmatpush1.bf16.msra.mxu0 0
      %1178 = vmatprep.subr.bf16.mxu0 0
      %1179 = vmatpush1.bf16.msra.mxu0 0
      %1180 = vmatprep.subr.bf16.mxu0 0
      %1181 = vmatpush1.bf16.msra.mxu0 0
      %1182 = vmatprep.subr.bf16.mxu0 0
      %1183 = vmatpush1.bf16.msra.mxu0 0
      %1184 = vmatprep.subr.bf16.mxu0 0
      %1185 = vmatpush1.bf16.msra.mxu0 0
      %1186 = vmatprep.subr.bf16.mxu0 0
      %1187 = vmatpush1.bf16.msra.mxu0 0
      %1188 = vmatprep.subr.bf16.mxu0 0
      %1189 = vmatpush1.bf16.msra.mxu0 0
      %1190 = vmatprep.subr.bf16.mxu0 0
      %1191 = vmatpush1.bf16.msra.mxu0 0
      %1192 = vmatprep.subr.bf16.mxu0 0
      %1193 = vmatpush1.bf16.msra.mxu0 0
      %1194 = vmatprep.subr.bf16.mxu0 0
      %1195 = vmatpush1.bf16.msra.mxu0 0
      %1196 = vmatprep.subr.bf16.mxu0 0
      %1197 = vmatpush1.bf16.msra.mxu0 0
      %1198 = vmatprep.mubr.bf16.mxu0 0
      %1199 = vmatmul.mubr.bf16.gmra.mrb[0].mxu0 %v1161
      %v1200 = vpop.f32.mrb[0].mxu0
      %v1201 = vadd.f32 0.0, %v1200
      %v1202 = vpop.f32.mrb[0].mxu0
      %v1203 = vpop.f32.mrb[0].mxu0
      %v1204 = vadd.f32 0.0, %v1203
      %v1205 = vpop.f32.mrb[0].mxu0
      %1206 = vdwg.mxu0
      %v1207 = vmul.f32 %v498, %v1201
      %v1208 = vmul.f32 %v503, %v1204
      %v1209 = vadd.f32 %v1155, %v1207
      %v1210 = vadd.f32 %v1156, %v1208
      %v1211 = vld [vmem:[#allocation2 + $0x2] sm:$0xff]
      %v1212 = vld [vmem:[#allocation2 + $0xa] sm:$0xff]
      %v1213 = vpack.c.bf16 %v1212, %v1211
      %v1215 = vsel %vm1087, %v1213, 0
      %v1218 = vand.u32 %v1092, %v1108
      %1220 = vmatprep.subr.bf16.mxu0 0
      %1221 = vmatpush1.bf16.msra.mxu0 %v1218
      %1222 = vmatprep.subr.bf16.mxu0 0
      %1223 = vmatpush1.bf16.msra.mxu0 0
      %1224 = vmatprep.subr.bf16.mxu0 0
      %1225 = vmatpush1.bf16.msra.mxu0 0
      %1226 = vmatprep.subr.bf16.mxu0 0
      %1227 = vmatpush1.bf16.msra.mxu0 0
      %1228 = vmatprep.subr.bf16.mxu0 0
      %1229 = vmatpush1.bf16.msra.mxu0 0
      %1230 = vmatprep.subr.bf16.mxu0 0
      %1231 = vmatpush1.bf16.msra.mxu0 0
      %1232 = vmatprep.subr.bf16.mxu0 0
      %1233 = vmatpush1.bf16.msra.mxu0 0
      %1234 = vmatprep.subr.bf16.mxu0 0
      %1235 = vmatpush1.bf16.msra.mxu0 0
      %1236 = vmatprep.subr.bf16.mxu0 0
      %1237 = vmatpush1.bf16.msra.mxu0 0
      %1238 = vmatprep.subr.bf16.mxu0 0
      %1239 = vmatpush1.bf16.msra.mxu0 0
      %1240 = vmatprep.subr.bf16.mxu0 0
      %1241 = vmatpush1.bf16.msra.mxu0 0
      %1242 = vmatprep.subr.bf16.mxu0 0
      %1243 = vmatpush1.bf16.msra.mxu0 0
      %1244 = vmatprep.subr.bf16.mxu0 0
      %1245 = vmatpush1.bf16.msra.mxu0 0
      %1246 = vmatprep.subr.bf16.mxu0 0
      %1247 = vmatpush1.bf16.msra.mxu0 0
      %1248 = vmatprep.subr.bf16.mxu0 0
      %1249 = vmatpush1.bf16.msra.mxu0 0
      %1250 = vmatprep.subr.bf16.mxu0 0
      %1251 = vmatpush1.bf16.msra.mxu0 0
      %1252 = vmatprep.mubr.bf16.mxu0 0
      %1253 = vmatmul.mubr.bf16.gmra.mrb[0].mxu0 %v1215
      %v1254 = vpop.f32.mrb[0].mxu0
      %v1255 = vadd.f32 0.0, %v1254
      %v1256 = vpop.f32.mrb[0].mxu0
      %v1257 = vpop.f32.mrb[0].mxu0
      %v1258 = vadd.f32 0.0, %v1257
      %v1259 = vpop.f32.mrb[0].mxu0
      %1260 = vdwg.mxu0
      %v1261 = vmul.f32 %v579, %v1255
      %v1262 = vmul.f32 %v584, %v1258
      %v1263 = vadd.f32 %v1209, %v1261
      %v1264 = vadd.f32 %v1210, %v1262
      %v1265 = vld [vmem:[#allocation2 + $0x4] sm:$0xff]
      %v1266 = vld [vmem:[#allocation2 + $0xc] sm:$0xff]
      %v1267 = vpack.c.bf16 %v1266, %v1265
      %v1269 = vsel %vm1087, %v1267, 0
      %v1272 = vand.u32 %v1093, %v1108
      %1274 = vmatprep.subr.bf16.mxu0 0
      %1275 = vmatpush1.bf16.msra.mxu0 %v1272
      %1276 = vmatprep.subr.bf16.mxu0 0
      %1277 = vmatpush1.bf16.msra.mxu0 0
      %1278 = vmatprep.subr.bf16.mxu0 0
      %1279 = vmatpush1.bf16.msra.mxu0 0
      %1280 = vmatprep.subr.bf16.mxu0 0
      %1281 = vmatpush1.bf16.msra.mxu0 0
      %1282 = vmatprep.subr.bf16.mxu0 0
      %1283 = vmatpush1.bf16.msra.mxu0 0
      %1284 = vmatprep.subr.bf16.mxu0 0
      %1285 = vmatpush1.bf16.msra.mxu0 0
      %1286 = vmatprep.subr.bf16.mxu0 0
      %1287 = vmatpush1.bf16.msra.mxu0 0
      %1288 = vmatprep.subr.bf16.mxu0 0
      %1289 = vmatpush1.bf16.msra.mxu0 0
      %1290 = vmatprep.subr.bf16.mxu0 0
      %1291 = vmatpush1.bf16.msra.mxu0 0
      %1292 = vmatprep.subr.bf16.mxu0 0
      %1293 = vmatpush1.bf16.msra.mxu0 0
      %1294 = vmatprep.subr.bf16.mxu0 0
      %1295 = vmatpush1.bf16.msra.mxu0 0
      %1296 = vmatprep.subr.bf16.mxu0 0
      %1297 = vmatpush1.bf16.msra.mxu0 0
      %1298 = vmatprep.subr.bf16.mxu0 0
      %1299 = vmatpush1.bf16.msra.mxu0 0
      %1300 = vmatprep.subr.bf16.mxu0 0
      %1301 = vmatpush1.bf16.msra.mxu0 0
      %1302 = vmatprep.subr.bf16.mxu0 0
      %1303 = vmatpush1.bf16.msra.mxu0 0
      %1304 = vmatprep.subr.bf16.mxu0 0
      %1305 = vmatpush1.bf16.msra.mxu0 0
      %1306 = vmatprep.mubr.bf16.mxu0 0
      %1307 = vmatmul.mubr.bf16.gmra.mrb[0].mxu0 %v1269
      %v1308 = vpop.f32.mrb[0].mxu0
      %v1309 = vadd.f32 0.0, %v1308
      %v1310 = vpop.f32.mrb[0].mxu0
      %v1311 = vpop.f32.mrb[0].mxu0
      %v1312 = vadd.f32 0.0, %v1311
      %v1313 = vpop.f32.mrb[0].mxu0
      %1314 = vdwg.mxu0
      %v1315 = vmul.f32 %v660, %v1309
      %v1316 = vmul.f32 %v665, %v1312
      %v1317 = vadd.f32 %v1263, %v1315
      %v1318 = vadd.f32 %v1264, %v1316
      %v1319 = vld [vmem:[#allocation2 + $0x5] sm:$0xff]
      %v1320 = vld [vmem:[#allocation2 + $0xd] sm:$0xff]
      %v1321 = vpack.c.bf16 %v1320, %v1319
      %v1323 = vsel %vm1087, %v1321, 0
      %v1326 = vand.u32 %v1094, %v1108
      %1328 = vmatprep.subr.bf16.mxu0 0
      %1329 = vmatpush1.bf16.msra.mxu0 %v1326
      %1330 = vmatprep.subr.bf16.mxu0 0
      %1331 = vmatpush1.bf16.msra.mxu0 0
      %1332 = vmatprep.subr.bf16.mxu0 0
      %1333 = vmatpush1.bf16.msra.mxu0 0
      %1334 = vmatprep.subr.bf16.mxu0 0
      %1335 = vmatpush1.bf16.msra.mxu0 0
      %1336 = vmatprep.subr.bf16.mxu0 0
      %1337 = vmatpush1.bf16.msra.mxu0 0
      %1338 = vmatprep.subr.bf16.mxu0 0
      %1339 = vmatpush1.bf16.msra.mxu0 0
      %1340 = vmatprep.subr.bf16.mxu0 0
      %1341 = vmatpush1.bf16.msra.mxu0 0
      %1342 = vmatprep.subr.bf16.mxu0 0
      %1343 = vmatpush1.bf16.msra.mxu0 0
      %1344 = vmatprep.subr.bf16.mxu0 0
      %1345 = vmatpush1.bf16.msra.mxu0 0
      %1346 = vmatprep.subr.bf16.mxu0 0
      %1347 = vmatpush1.bf16.msra.mxu0 0
      %1348 = vmatprep.subr.bf16.mxu0 0
      %1349 = vmatpush1.bf16.msra.mxu0 0
      %1350 = vmatprep.subr.bf16.mxu0 0
      %1351 = vmatpush1.bf16.msra.mxu0 0
      %1352 = vmatprep.subr.bf16.mxu0 0
      %1353 = vmatpush1.bf16.msra.mxu0 0
      %1354 = vmatprep.subr.bf16.mxu0 0
      %1355 = vmatpush1.bf16.msra.mxu0 0
      %1356 = vmatprep.subr.bf16.mxu0 0
      %1357 = vmatpush1.bf16.msra.mxu0 0
      %1358 = vmatprep.subr.bf16.mxu0 0
      %1359 = vmatpush1.bf16.msra.mxu0 0
      %1360 = vmatprep.mubr.bf16.mxu0 0
      %1361 = vmatmul.mubr.bf16.gmra.mrb[0].mxu0 %v1323
      %v1362 = vpop.f32.mrb[0].mxu0
      %v1363 = vadd.f32 0.0, %v1362
      %v1364 = vpop.f32.mrb[0].mxu0
      %v1365 = vpop.f32.mrb[0].mxu0
      %v1366 = vadd.f32 0.0, %v1365
      %v1367 = vpop.f32.mrb[0].mxu0
      %1368 = vdwg.mxu0
      %v1369 = vmul.f32 %v741, %v1363
      %v1370 = vmul.f32 %v746, %v1366
      %v1371 = vadd.f32 %v1317, %v1369
      %v1372 = vadd.f32 %v1318, %v1370
      %v1373 = vld [vmem:[#allocation2 + $0x6] sm:$0xff]
      %v1374 = vld [vmem:[#allocation2 + $0xe] sm:$0xff]
      %v1375 = vpack.c.bf16 %v1374, %v1373
      %v1377 = vsel %vm1087, %v1375, 0
      %v1380 = vand.u32 %v1095, %v1108
      %1382 = vmatprep.subr.bf16.mxu0 0
      %1383 = vmatpush1.bf16.msra.mxu0 %v1380
      %1384 = vmatprep.subr.bf16.mxu0 0
      %1385 = vmatpush1.bf16.msra.mxu0 0
      %1386 = vmatprep.subr.bf16.mxu0 0
      %1387 = vmatpush1.bf16.msra.mxu0 0
      %1388 = vmatprep.subr.bf16.mxu0 0
      %1389 = vmatpush1.bf16.msra.mxu0 0
      %1390 = vmatprep.subr.bf16.mxu0 0
      %1391 = vmatpush1.bf16.msra.mxu0 0
      %1392 = vmatprep.subr.bf16.mxu0 0
      %1393 = vmatpush1.bf16.msra.mxu0 0
      %1394 = vmatprep.subr.bf16.mxu0 0
      %1395 = vmatpush1.bf16.msra.mxu0 0
      %1396 = vmatprep.subr.bf16.mxu0 0
      %1397 = vmatpush1.bf16.msra.mxu0 0
      %1398 = vmatprep.subr.bf16.mxu0 0
      %1399 = vmatpush1.bf16.msra.mxu0 0
      %1400 = vmatprep.subr.bf16.mxu0 0
      %1401 = vmatpush1.bf16.msra.mxu0 0
      %1402 = vmatprep.subr.bf16.mxu0 0
      %1403 = vmatpush1.bf16.msra.mxu0 0
      %1404 = vmatprep.subr.bf16.mxu0 0
      %1405 = vmatpush1.bf16.msra.mxu0 0
      %1406 = vmatprep.subr.bf16.mxu0 0
      %1407 = vmatpush1.bf16.msra.mxu0 0
      %1408 = vmatprep.subr.bf16.mxu0 0
      %1409 = vmatpush1.bf16.msra.mxu0 0
      %1410 = vmatprep.subr.bf16.mxu0 0
      %1411 = vmatpush1.bf16.msra.mxu0 0
      %1412 = vmatprep.subr.bf16.mxu0 0
      %1413 = vmatpush1.bf16.msra.mxu0 0
      %1414 = vmatprep.mubr.bf16.mxu0 0
      %1415 = vmatmul.mubr.bf16.gmra.mrb[0].mxu0 %v1377
      %v1416 = vpop.f32.mrb[0].mxu0
      %v1417 = vadd.f32 0.0, %v1416
      %v1418 = vpop.f32.mrb[0].mxu0
      %v1419 = vpop.f32.mrb[0].mxu0
      %v1420 = vadd.f32 0.0, %v1419
      %v1421 = vpop.f32.mrb[0].mxu0
      %1422 = vdwg.mxu0
      %v1423 = vmul.f32 %v822, %v1417
      %v1424 = vmul.f32 %v827, %v1420
      %v1425 = vadd.f32 %v1371, %v1423
      %v1426 = vadd.f32 %v1372, %v1424
      %v1427 = vld [vmem:[#allocation2 + $0x8] sm:$0xff]
      %v1428 = vld [vmem:[#allocation2 + $0x10] sm:$0xff]
      %v1429 = vpack.c.bf16 %v1428, %v1427
      %v1431 = vsel %vm1087, %v1429, 0
      %v1434 = vand.u32 %v1096, %v1108
      %1436 = vmatprep.subr.bf16.mxu0 0
      %1437 = vmatpush1.bf16.msra.mxu0 %v1434
      %1438 = vmatprep.subr.bf16.mxu0 0
      %1439 = vmatpush1.bf16.msra.mxu0 0
      %1440 = vmatprep.subr.bf16.mxu0 0
      %1441 = vmatpush1.bf16.msra.mxu0 0
      %1442 = vmatprep.subr.bf16.mxu0 0
      %1443 = vmatpush1.bf16.msra.mxu0 0
      %1444 = vmatprep.subr.bf16.mxu0 0
      %1445 = vmatpush1.bf16.msra.mxu0 0
      %1446 = vmatprep.subr.bf16.mxu0 0
      %1447 = vmatpush1.bf16.msra.mxu0 0
      %1448 = vmatprep.subr.bf16.mxu0 0
      %1449 = vmatpush1.bf16.msra.mxu0 0
      %1450 = vmatprep.subr.bf16.mxu0 0
      %1451 = vmatpush1.bf16.msra.mxu0 0
      %1452 = vmatprep.subr.bf16.mxu0 0
      %1453 = vmatpush1.bf16.msra.mxu0 0
      %1454 = vmatprep.subr.bf16.mxu0 0
      %1455 = vmatpush1.bf16.msra.mxu0 0
      %1456 = vmatprep.subr.bf16.mxu0 0
      %1457 = vmatpush1.bf16.msra.mxu0 0
      %1458 = vmatprep.subr.bf16.mxu0 0
      %1459 = vmatpush1.bf16.msra.mxu0 0
      %1460 = vmatprep.subr.bf16.mxu0 0
      %1461 = vmatpush1.bf16.msra.mxu0 0
      %1462 = vmatprep.subr.bf16.mxu0 0
      %1463 = vmatpush1.bf16.msra.mxu0 0
      %1464 = vmatprep.subr.bf16.mxu0 0
      %1465 = vmatpush1.bf16.msra.mxu0 0
      %1466 = vmatprep.subr.bf16.mxu0 0
      %1467 = vmatpush1.bf16.msra.mxu0 0
      %1468 = vmatprep.mubr.bf16.mxu0 0
      %1469 = vmatmul.mubr.bf16.gmra.mrb[0].mxu0 %v1431
      %v1470 = vpop.f32.mrb[0].mxu0
      %v1471 = vadd.f32 0.0, %v1470
      %v1472 = vpop.f32.mrb[0].mxu0
      %v1473 = vpop.f32.mrb[0].mxu0
      %v1474 = vadd.f32 0.0, %v1473
      %v1475 = vpop.f32.mrb[0].mxu0
      %1476 = vdwg.mxu0
      %v1477 = vmul.f32 %v903, %v1471
      %v1478 = vmul.f32 %v908, %v1474
      %v1479 = vadd.f32 %v1425, %v1477
      %v1480 = vadd.f32 %v1426, %v1478
      %v1481 = vld [vmem:[#allocation2 + $0x9] sm:$0xff]
      %v1482 = vld [vmem:[#allocation2 + $0x11] sm:$0xff]
      %v1483 = vpack.c.bf16 %v1482, %v1481
      %v1485 = vsel %vm1087, %v1483, 0
      %v1488 = vand.u32 %v1097, %v1108
      %1490 = vmatprep.subr.bf16.mxu0 0
      %1491 = vmatpush1.bf16.msra.mxu0 %v1488
      %1492 = vmatprep.subr.bf16.mxu0 0
      %1493 = vmatpush1.bf16.msra.mxu0 0
      %1494 = vmatprep.subr.bf16.mxu0 0
      %1495 = vmatpush1.bf16.msra.mxu0 0
      %1496 = vmatprep.subr.bf16.mxu0 0
      %1497 = vmatpush1.bf16.msra.mxu0 0
      %1498 = vmatprep.subr.bf16.mxu0 0
      %1499 = vmatpush1.bf16.msra.mxu0 0
      %1500 = vmatprep.subr.bf16.mxu0 0
      %1501 = vmatpush1.bf16.msra.mxu0 0
      %1502 = vmatprep.subr.bf16.mxu0 0
      %1503 = vmatpush1.bf16.msra.mxu0 0
      %1504 = vmatprep.subr.bf16.mxu0 0
      %1505 = vmatpush1.bf16.msra.mxu0 0
      %1506 = vmatprep.subr.bf16.mxu0 0
      %1507 = vmatpush1.bf16.msra.mxu0 0
      %1508 = vmatprep.subr.bf16.mxu0 0
      %1509 = vmatpush1.bf16.msra.mxu0 0
      %1510 = vmatprep.subr.bf16.mxu0 0
      %1511 = vmatpush1.bf16.msra.mxu0 0
      %1512 = vmatprep.subr.bf16.mxu0 0
      %1513 = vmatpush1.bf16.msra.mxu0 0
      %1514 = vmatprep.subr.bf16.mxu0 0
      %1515 = vmatpush1.bf16.msra.mxu0 0
      %1516 = vmatprep.subr.bf16.mxu0 0
      %1517 = vmatpush1.bf16.msra.mxu0 0
      %1518 = vmatprep.subr.bf16.mxu0 0
      %1519 = vmatpush1.bf16.msra.mxu0 0
      %1520 = vmatprep.subr.bf16.mxu0 0
      %1521 = vmatpush1.bf16.msra.mxu0 0
      %1522 = vmatprep.mubr.bf16.mxu0 0
      %1523 = vmatmul.mubr.bf16.gmra.mrb[0].mxu0 %v1485
      %v1524 = vpop.f32.mrb[0].mxu0
      %v1525 = vadd.f32 0.0, %v1524
      %v1526 = vpop.f32.mrb[0].mxu0
      %v1527 = vpop.f32.mrb[0].mxu0
      %v1528 = vadd.f32 0.0, %v1527
      %v1529 = vpop.f32.mrb[0].mxu0
      %1530 = vdwg.mxu0
      %v1531 = vmul.f32 %v984, %v1525
      %v1532 = vmul.f32 %v989, %v1528
      %v1533 = vadd.f32 %v1479, %v1531
      %v1534 = vadd.f32 %v1480, %v1532
      %v1535 = vld [vmem:[#allocation2 + $0xa] sm:$0xff]
      %v1536 = vld [vmem:[#allocation2 + $0x12] sm:$0xff]
      %v1537 = vpack.c.bf16 %v1536, %v1535
      %v1539 = vsel %vm1087, %v1537, 0
      %v1542 = vand.u32 %v1098, %v1108
      %1544 = vmatprep.subr.bf16.mxu0 0
      %1545 = vmatpush1.bf16.msra.mxu0 %v1542
      %1546 = vmatprep.subr.bf16.mxu0 0
      %1547 = vmatpush1.bf16.msra.mxu0 0
      %1548 = vmatprep.subr.bf16.mxu0 0
      %1549 = vmatpush1.bf16.msra.mxu0 0
      %1550 = vmatprep.subr.bf16.mxu0 0
      %1551 = vmatpush1.bf16.msra.mxu0 0
      %1552 = vmatprep.subr.bf16.mxu0 0
      %1553 = vmatpush1.bf16.msra.mxu0 0
      %1554 = vmatprep.subr.bf16.mxu0 0
      %1555 = vmatpush1.bf16.msra.mxu0 0
      %1556 = vmatprep.subr.bf16.mxu0 0
      %1557 = vmatpush1.bf16.msra.mxu0 0
      %1558 = vmatprep.subr.bf16.mxu0 0
      %1559 = vmatpush1.bf16.msra.mxu0 0
      %1560 = vmatprep.subr.bf16.mxu0 0
      %1561 = vmatpush1.bf16.msra.mxu0 0
      %1562 = vmatprep.subr.bf16.mxu0 0
      %1563 = vmatpush1.bf16.msra.mxu0 0
      %1564 = vmatprep.subr.bf16.mxu0 0
      %1565 = vmatpush1.bf16.msra.mxu0 0
      %1566 = vmatprep.subr.bf16.mxu0 0
      %1567 = vmatpush1.bf16.msra.mxu0 0
      %1568 = vmatprep.subr.bf16.mxu0 0
      %1569 = vmatpush1.bf16.msra.mxu0 0
      %1570 = vmatprep.subr.bf16.mxu0 0
      %1571 = vmatpush1.bf16.msra.mxu0 0
      %1572 = vmatprep.subr.bf16.mxu0 0
      %1573 = vmatpush1.bf16.msra.mxu0 0
      %1574 = vmatprep.subr.bf16.mxu0 0
      %1575 = vmatpush1.bf16.msra.mxu0 0
      %1576 = vmatprep.mubr.bf16.mxu0 0
      %1577 = vmatmul.mubr.bf16.gmra.mrb[0].mxu0 %v1539
      %v1578 = vpop.f32.mrb[0].mxu0
      %v1579 = vadd.f32 0.0, %v1578
      %v1580 = vpop.f32.mrb[0].mxu0
      %v1581 = vpop.f32.mrb[0].mxu0
      %v1582 = vadd.f32 0.0, %v1581
      %v1583 = vpop.f32.mrb[0].mxu0
      %1584 = vdwg.mxu0
      %v1585 = vmul.f32 %v1065, %v1579
      %v1586 = vmul.f32 %v1070, %v1582
      %v1587 = vadd.f32 %v1533, %v1585
      %v1588 = vadd.f32 %v1534, %v1586
      %v1589 = vld [vmem:[%s5] sm:$0x1]
      %v1591 = vlaneseq
      %v1592 = vshrl.u32 %v1591, 7
      %v1593 = vsub.s32 0, %v1592
      %v1594 = vrot.slane %v1589, %v1593
      %v1596 = vadd.f32 %v1587, %v1594
      %v1597 = vadd.f32 %v1588, %v1594
      %v1598 = vxor.u32 %v1596, 2147483648
      %v1599 = vxor.u32 %v1597, 2147483648
      %v1600 = vmul.f32 %v1598, 1.442695
      %v1601 = vpow.pop %v1600
      %v1602 = vmul.f32 %v1599, 1.442695
      %v1603 = vpow.pop %v1602
      %v1604 = vadd.f32 %v1601, 1.0
      %v1605 = vadd.f32 %v1603, 1.0
      %v1606 = vrcp.pop %v1604
      %v1607 = vmul.f32 1.0, %v1606
      %v1608 = vrcp.pop %v1605
      %v1609 = vmul.f32 1.0, %v1608
      %v1610 = vmul.f32 %v1607, 2.0
      %v1611 = vmul.f32 %v1609, 2.0
      %v1612 = vsub.f32 %v1610, 1.0
      %v1613 = vsub.f32 %v1611, 1.0
      %v1614 = vmul.f32 %v1612, 1.442695
      %v1615 = vpow.pop %v1614
      %v1616 = vmul.f32 %v1613, 1.442695
      %v1617 = vpow.pop %v1616
      %1620 = vrot.lane.b32.xlu0 %v1615, 3
      %v1621 = vpop.permute.xlu0 %1620
      %1622 = vrot.lane.b32.xlu0 %v1617, 3
      %v1623 = vpop.permute.xlu0 %1622
      %v1626 = vmul.f32 %v277, %v1621
      %v1627 = vmul.f32 %v278, %v1623
      %1630 = vrot.lane.b32.xlu0 %v1596, 86
      %v1631 = vpop.permute.xlu0 %1630
      %1632 = vrot.lane.b32.xlu0 %v1597, 86
      %v1633 = vpop.permute.xlu0 %1632
      %v1636 = vadd.f32 %v1626, %v1631
      %v1637 = vadd.f32 %v1627, %v1633
      %1638 = vst.msk [vmem:[%s251] sm:$0xff] %vm1087, %v1085
      %1639 = vst.msk [vmem:[%s251 + $0x8] sm:$0xff] %vm1087, %v1086
      %vm1640 = vcmask 392216
      %1641 = vst.msk [vmem:[%s251] sm:$0xff] %vm1640, %v1636
      %1642 = vst.msk [vmem:[%s251 + $0x8] sm:$0xff] %vm1640, %v1637
      %p1643 = scmp.lt.s32.totalorder %s17, 1
      %s1644 = scalar_select %p1643, %s17, 1
      %s1645 = smul.addr %s1644, 2
      %s1646 = smul.addr %s1645, 8
      %s1647 = scalar_lea.vmem %s6, %s1646
      // Predicated region
      $region45: #{sainet_forward.17} parent=43 // pred_check
        %p1648 = pneg %p166
      $region46: #{sainet_forward.17} parent=43 // pred_check_branch
        %1650 = sbr.rel (%p1648) target = $region48
      $region47: #{sainet_forward.17} parent=43 // pred_region
        _
      $region48: #{sainet_forward.17} parent=43 // pred_fallthru
        _
    $region44: #{sainet_forward.17} parent=5 // pred_fallthru
      _
    %p1651 = scmp.le.s32.totalorder 2, %s12
    // Predicated region
    $region49: #{sainet_forward.17} parent=5 // pred_check
      %p1652 = pneg %p1651
    $region50: #{sainet_forward.17} parent=5 // pred_check_branch
      %1654 = sbr.rel (%p1652) target = $region52
    $region51: #{sainet_forward.17} parent=5 // pred_region
      %s1655 = ssub.s32 %s12, 2
      // Predicated region
      $region53: #{sainet_forward.17} parent=51 // pred_check
        %p1656 = pneg %p172
      $region54: #{sainet_forward.17} parent=51 // pred_check_branch
        %1658 = sbr.rel (%p1656) target = $region56
      $region55: #{sainet_forward.17} parent=51 // pred_region
        %p1659 = scmp.lt.s32.totalorder %s18, 1
        %s1660 = scalar_select %p1659, %s18, 1
        %s1661 = smul.addr %s1660, 2
        %s1662 = smul.addr %s1661, 8
        %s1663 = scalar_lea.vmem %s6, %s1662
      $region56: #{sainet_forward.17} parent=51 // pred_fallthru
        _
    $region52: #{sainet_forward.17} parent=5 // pred_fallthru
      _
  $region6: #{sainet_forward.17} parent=0 // loop_footer
    %s16 = sadd.s32 1, %s12
  $region7: #{sainet_forward.17} parent=0 // loop_footer_branch
    %11 = sbr.rel target = $region3
  $region8: #{sainet_forward.17} parent=0 // loop_exit
    _

// kernel: sainet_forward.19
$region0: #{sainet_forward.19}
  #allocation0 [shape = 'u32[]', space=smem, size = 0x4, offset = 0x4, fixed_abs, tag = 'smem constant byte address 0x4 - core index']
  #allocation1 [shape = 'u32[144,128]{1,0:T(1,128)}', space=vmem, size = 0x12000, scoped, tag = 'internal scratch']
  #allocation2 [shape = 'f32[26,45]{1,0:T(8,128)}', space=vmem, size = 0x4000, scoped, tag = 'scratch operand']
  %s0 = inlined_call_operand.vmem [shape: f32[2,16,48], index: 0, kind: input, shape index: {}]
  %s1 = inlined_call_operand.vmem [shape: f32[9,16,1], index: 1, kind: input, shape index: {}]
  %s2 = inlined_call_operand.vmem [shape: bf16[9,45,3], index: 2, kind: input, shape index: {}]
  %s3 = inlined_call_operand.vmem [shape: f32[1,3], index: 3, kind: input, shape index: {}]
  %s4 = inlined_call_operand.vmem [shape: bf16[9,3,90], index: 4, kind: input, shape index: {}]
  %s5 = inlined_call_operand.vmem [shape: f32[1,90], index: 5, kind: input, shape index: {}]
  %s6 = inlined_call_operand.hbm [shape: f32[2,16,48], index: 6, kind: output, shape index: {}]
  %s7 = sld [smem:[#allocation0]]
  $region57: #{sainet_forward.19} parent=0
    _
  %s9 = ssub.s32 1, %s7
  %s10 = scalar_select 0, %s9, %s7
  $region1: #{sainet_forward.19} parent=0
    #allocation3 [shape = 'u8[16384]{0}', space=vmem, size = 0x4000, scoped, tag = 'output window, operand 0']
    #allocation4 [shape = 's32[2]{0}', space=sflag, size = 0x8, scoped, tag = 'scoped memory for sainet_forward.19']
    %11 = vsyncpa [#allocation4], 0
    %s12 = scalar_lea.sflag [#allocation4], 1
    %13 = vsyncpa %s12, 0
    loop: start=0, step=1, limit=4
    $region2: #{sainet_forward.19} parent=1 // loop_pre_header
      _
    $region3: #{sainet_forward.19} parent=1 // loop_header
      %s15 = sphi 0, %s19
      %p16 = scmp.ge.s32.totalorder %s15, 4
      %s25 = sphi 0, %s27
      %s28 = sphi 0, %s25
      %s29 = sphi 0, %s28
      %s45 = sphi 0, %s29
      %s49 = sphi 0, %s49
      %s51 = sphi 0, %s49
      %s52 = sphi 0, %s51
      %s66 = sphi 0, %s52
      %s70 = sphi 0, %s70
      %s72 = sphi 0, %s70
      %s73 = sphi 0, %s72
      %s87 = sphi 0, %s73
      %s91 = sphi 0, %s91
      %s93 = sphi 0, %s91
      %s94 = sphi 0, %s93
      %s108 = sphi 0, %s94
      %s112 = sphi 0, %s112
      %s114 = sphi 0, %s112
      %s115 = sphi 0, %s114
      %s129 = sphi 0, %s115
      %s133 = sphi 0, %s133
      %s135 = sphi 0, %s133
      %s136 = sphi 0, %s135
      %s150 = sphi 0, %s136
      %s156 = sphi 0, %s158
      %s159 = sphi 0, %s156
      %s160 = sphi 0, %s159
      %s176 = sphi 0, %s160
    $region4: #{sainet_forward.19} parent=1 // loop_header_branch
      %18 = sbr.rel (%p16) target = $region8
    $region5: #{sainet_forward.19} parent=1 // loop_body
      %s20 = ssub.s32 %s15, 1
      %s21 = ssub.s32 %s15, 2
      %s22 = sadd.s32 %s15, 1
      %s23 = ssub.s32 %s15, %s22
      %p24 = scmp.eq.s32.totalorder %s23, 0
      %s26 = sadd.s32 %s25, 1
      %s27 = scalar_select %p24, %s25, %s26
      %p30 = pneg %p24
      %p31 = scmp.eq.s32.totalorder %s15, 1
      %p32 = por %p30, %p31
      %p33 = scmp.ne.s32.totalorder %s25, %s28
      %p34 = scmp.eq.s32.totalorder %s15, 0
      %p35 = por %p33, %p34
      %p36 = scmp.ne.s32.totalorder %s25, %s28
      %p37 = scmp.eq.s32.totalorder %s20, 1
      %p38 = por %p36, %p37
      %p39 = scmp.ne.s32.totalorder %s28, %s29
      %p40 = scmp.eq.s32.totalorder %s20, 0
      %p41 = por %p39, %p40
      %p42 = scmp.ne.s32.totalorder %s28, %s29
      %p43 = scmp.eq.s32.totalorder %s21, 1
      %p44 = por %p42, %p43
      %p46 = scmp.ne.s32.totalorder %s29, %s45
      %p47 = scmp.eq.s32.totalorder %s21, 0
      %p48 = por %p46, %p47
      %s50 = sadd.s32 %s49, 1
      %p53 = scmp.eq.s32.totalorder %s15, 1
      %p54 = scmp.ne.s32.totalorder %s49, %s51
      %p55 = scmp.eq.s32.totalorder %s15, 0
      %p56 = por %p54, %p55
      %p57 = scmp.ne.s32.totalorder %s49, %s51
      %p58 = scmp.eq.s32.totalorder %s20, 1
      %p59 = por %p57, %p58
      %p60 = scmp.ne.s32.totalorder %s51, %s52
      %p61 = scmp.eq.s32.totalorder %s20, 0
      %p62 = por %p60, %p61
      %p63 = scmp.ne.s32.totalorder %s51, %s52
      %p64 = scmp.eq.s32.totalorder %s21, 1
      %p65 = por %p63, %p64
      %p67 = scmp.ne.s32.totalorder %s52, %s66
      %p68 = scmp.eq.s32.totalorder %s21, 0
      %p69 = por %p67, %p68
      %s71 = sadd.s32 %s70, 1
      %p74 = scmp.eq.s32.totalorder %s15, 1
      %p75 = scmp.ne.s32.totalorder %s70, %s72
      %p76 = scmp.eq.s32.totalorder %s15, 0
      %p77 = por %p75, %p76
      %p78 = scmp.ne.s32.totalorder %s70, %s72
      %p79 = scmp.eq.s32.totalorder %s20, 1
      %p80 = por %p78, %p79
      %p81 = scmp.ne.s32.totalorder %s72, %s73
      %p82 = scmp.eq.s32.totalorder %s20, 0
      %p83 = por %p81, %p82
      %p84 = scmp.ne.s32.totalorder %s72, %s73
      %p85 = scmp.eq.s32.totalorder %s21, 1
      %p86 = por %p84, %p85
      %p88 = scmp.ne.s32.totalorder %s73, %s87
      %p89 = scmp.eq.s32.totalorder %s21, 0
      %p90 = por %p88, %p89
      %s92 = sadd.s32 %s91, 1
      %p95 = scmp.eq.s32.totalorder %s15, 1
      %p96 = scmp.ne.s32.totalorder %s91, %s93
      %p97 = scmp.eq.s32.totalorder %s15, 0
      %p98 = por %p96, %p97
      %p99 = scmp.ne.s32.totalorder %s91, %s93
      %p100 = scmp.eq.s32.totalorder %s20, 1
      %p101 = por %p99, %p100
      %p102 = scmp.ne.s32.totalorder %s93, %s94
      %p103 = scmp.eq.s32.totalorder %s20, 0
      %p104 = por %p102, %p103
      %p105 = scmp.ne.s32.totalorder %s93, %s94
      %p106 = scmp.eq.s32.totalorder %s21, 1
      %p107 = por %p105, %p106
      %p109 = scmp.ne.s32.totalorder %s94, %s108
      %p110 = scmp.eq.s32.totalorder %s21, 0
      %p111 = por %p109, %p110
      %s113 = sadd.s32 %s112, 1
      %p116 = scmp.eq.s32.totalorder %s15, 1
      %p117 = scmp.ne.s32.totalorder %s112, %s114
      %p118 = scmp.eq.s32.totalorder %s15, 0
      %p119 = por %p117, %p118
      %p120 = scmp.ne.s32.totalorder %s112, %s114
      %p121 = scmp.eq.s32.totalorder %s20, 1
      %p122 = por %p120, %p121
      %p123 = scmp.ne.s32.totalorder %s114, %s115
      %p124 = scmp.eq.s32.totalorder %s20, 0
      %p125 = por %p123, %p124
      %p126 = scmp.ne.s32.totalorder %s114, %s115
      %p127 = scmp.eq.s32.totalorder %s21, 1
      %p128 = por %p126, %p127
      %p130 = scmp.ne.s32.totalorder %s115, %s129
      %p131 = scmp.eq.s32.totalorder %s21, 0
      %p132 = por %p130, %p131
      %s134 = sadd.s32 %s133, 1
      %p137 = scmp.eq.s32.totalorder %s15, 1
      %p138 = scmp.ne.s32.totalorder %s133, %s135
      %p139 = scmp.eq.s32.totalorder %s15, 0
      %p140 = por %p138, %p139
      %p141 = scmp.ne.s32.totalorder %s133, %s135
      %p142 = scmp.eq.s32.totalorder %s20, 1
      %p143 = por %p141, %p142
      %p144 = scmp.ne.s32.totalorder %s135, %s136
      %p145 = scmp.eq.s32.totalorder %s20, 0
      %p146 = por %p144, %p145
      %p147 = scmp.ne.s32.totalorder %s135, %s136
      %p148 = scmp.eq.s32.totalorder %s21, 1
      %p149 = por %p147, %p148
      %p151 = scmp.ne.s32.totalorder %s136, %s150
      %p152 = scmp.eq.s32.totalorder %s21, 0
      %p153 = por %p151, %p152
      %s154 = ssub.s32 %s15, %s22
      %p155 = scmp.eq.s32.totalorder %s154, 0
      %s157 = sadd.s32 %s156, 1
      %s158 = scalar_select %p155, %s156, %s157
      %p161 = pneg %p155
      %p162 = scmp.eq.s32.totalorder %s15, 1
      %p163 = por %p161, %p162
      %p164 = scmp.ne.s32.totalorder %s156, %s159
      %p165 = scmp.eq.s32.totalorder %s15, 0
      %p166 = por %p164, %p165
      %p167 = scmp.ne.s32.totalorder %s156, %s159
      %p168 = scmp.eq.s32.totalorder %s20, 1
      %p169 = por %p167, %p168
      %p170 = scmp.ne.s32.totalorder %s159, %s160
      %p171 = scmp.eq.s32.totalorder %s20, 0
      %p172 = por %p170, %p171
      %p173 = scmp.ne.s32.totalorder %s159, %s160
      %p174 = scmp.eq.s32.totalorder %s21, 1
      %p175 = por %p173, %p174
      %p177 = scmp.ne.s32.totalorder %s160, %s176
      %p178 = scmp.eq.s32.totalorder %s21, 0
      %p179 = por %p177, %p178
      %p180 = scmp.le.s32.totalorder 1, %s15
      %p181 = scmp.lt.s32.totalorder %s15, 3
      %p182 = pnand %p180, %p181
      %p183 = pneg %p182
      // Predicated region
      $region9: #{sainet_forward.19} parent=5 // pred_check
        _
      $region10: #{sainet_forward.19} parent=5 // pred_check_branch
        %185 = sbr.rel (%p182) target = $region12
      $region11: #{sainet_forward.19} parent=5 // pred_region
        %s186 = ssub.s32 %s15, 1
        // Predicated region
        $region13: #{sainet_forward.19} parent=11 // pred_check
          %p187 = pneg %p62
        $region14: #{sainet_forward.19} parent=11 // pred_check_branch
          %189 = sbr.rel (%p187) target = $region16
        $region15: #{sainet_forward.19} parent=11 // pred_region
          _
        $region16: #{sainet_forward.19} parent=11 // pred_fallthru
          _
        // Predicated region
        $region17: #{sainet_forward.19} parent=11 // pred_check
          %p190 = pneg %p83
        $region18: #{sainet_forward.19} parent=11 // pred_check_branch
          %192 = sbr.rel (%p190) target = $region20
        $region19: #{sainet_forward.19} parent=11 // pred_region
          _
        $region20: #{sainet_forward.19} parent=11 // pred_fallthru
          _
        // Predicated region
        $region21: #{sainet_forward.19} parent=11 // pred_check
          %p193 = pneg %p104
        $region22: #{sainet_forward.19} parent=11 // pred_check_branch
          %195 = sbr.rel (%p193) target = $region24
        $region23: #{sainet_forward.19} parent=11 // pred_region
          _
        $region24: #{sainet_forward.19} parent=11 // pred_fallthru
          _
        // Predicated region
        $region25: #{sainet_forward.19} parent=11 // pred_check
          %p196 = pneg %p125
        $region26: #{sainet_forward.19} parent=11 // pred_check_branch
          %198 = sbr.rel (%p196) target = $region28
        $region27: #{sainet_forward.19} parent=11 // pred_region
          _
        $region28: #{sainet_forward.19} parent=11 // pred_fallthru
          _
        // Predicated region
        $region29: #{sainet_forward.19} parent=11 // pred_check
          %p199 = pneg %p146
        $region30: #{sainet_forward.19} parent=11 // pred_check_branch
          %201 = sbr.rel (%p199) target = $region32
        $region31: #{sainet_forward.19} parent=11 // pred_region
          _
        $region32: #{sainet_forward.19} parent=11 // pred_fallthru
          _
      $region12: #{sainet_forward.19} parent=5 // pred_fallthru
        _
      %p202 = scmp.lt.s32.totalorder %s15, 2
      // Predicated region
      $region33: #{sainet_forward.19} parent=5 // pred_check
        %p203 = pneg %p202
      $region34: #{sainet_forward.19} parent=5 // pred_check_branch
        %205 = sbr.rel (%p203) target = $region36
      $region35: #{sainet_forward.19} parent=5 // pred_region
        // Predicated region
        $region37: #{sainet_forward.19} parent=35 // pred_check
          %p206 = pneg %p35
        $region38: #{sainet_forward.19} parent=35 // pred_check_branch
          %208 = sbr.rel (%p206) target = $region40
        $region39: #{sainet_forward.19} parent=35 // pred_region
          %p209 = scmp.lt.s32.totalorder %s15, 1
          %s210 = scalar_select %p209, %s15, 1
          %s211 = smul.addr %s210, 2
          %s212 = smul.addr %s211, 8
          %s213 = scalar_lea.vmem %s0, %s212
        $region40: #{sainet_forward.19} parent=35 // pred_fallthru
          _
      $region36: #{sainet_forward.19} parent=5 // pred_fallthru
        _
      %p214 = scmp.le.s32.totalorder 1, %s15
      %p215 = scmp.lt.s32.totalorder %s15, 3
      %p216 = pnand %p214, %p215
      %p217 = pneg %p216
      // Predicated region
      $region41: #{sainet_forward.19} parent=5 // pred_check
        _
      $region42: #{sainet_forward.19} parent=5 // pred_check_branch
        %219 = sbr.rel (%p216) target = $region44
      $region43: #{sainet_forward.19} parent=5 // pred_region
        %s220 = ssub.s32 %s15, 1
        %p221 = scmp.lt.s32.totalorder %s20, 1
        %s222 = scalar_select %p221, %s20, 1
        %s223 = smul.addr %s222, 2
        %s224 = smul.addr %s223, 8
        %s225 = scalar_lea.vmem %s0, %s224
        %p226 = pneg %p41
        %p227 = pneg %p38
        %p228 = pneg %p62
        %p229 = pneg %p59
        %p230 = pneg %p83
        %p231 = pneg %p80
        %p232 = pneg %p104
        %p233 = pneg %p101
        %p234 = pneg %p125
        %p235 = pneg %p122
        %p236 = pneg %p146
        %p237 = pneg %p143
        %p238 = pneg %p172
        %p239 = pneg %p169
        %s240 = sand.u32 %s159, 1
        %s241 = scalar_lea.sflag [#allocation4], %s240
        %s242 = sand.u32 %s159, 1
        %s243 = smul.addr %s242, 16
        %s244 = scalar_lea.vmem [#allocation3], %s243
        %p245 = scmp.lt.s32.totalorder %s20, 1
        %s246 = scalar_select %p245, %s20, 1
        %s247 = smul.addr %s246, 2
        %s248 = smul.addr %s247, 8
        %s249 = scalar_lea.vmem %s0, %s248
        %vm251 = vcmask 367616
        %252 = vst.msk [vmem:[#allocation2] sm:$0xff] %vm251, 0.0
        %253 = vst.msk [vmem:[#allocation2 + $0x8] sm:$0xff] %vm251, 0.0
        %254 = vst.msk [vmem:[#allocation2 + $0x10] sm:$0xff] %vm251, 0.0
        %vm255 = vcmask 361472
        %256 = vst.msk [vmem:[#allocation2 + $0x18] sm:$0x3] %vm255, 0.0
        %v257 = vld [vmem:[%s1] sm:$0xff]
        %v258 = vld [vmem:[%s1 + $0x8] sm:$0xff]
        %v259 = vld [vmem:[%s1 + $0x10] sm:$0xff]
        %v260 = vld [vmem:[%s1 + $0x18] sm:$0xff]
        %v261 = vld [vmem:[%s1 + $0x20] sm:$0xff]
        %v262 = vld [vmem:[%s1 + $0x28] sm:$0xff]
        %v263 = vld [vmem:[%s1 + $0x30] sm:$0xff]
        %v264 = vld [vmem:[%s1 + $0x38] sm:$0xff]
        %v265 = vld [vmem:[%s1 + $0x40] sm:$0xff]
        %v266 = vld [vmem:[%s1 + $0x48] sm:$0xff]
        %v267 = vld [vmem:[%s1 + $0x50] sm:$0xff]
        %v268 = vld [vmem:[%s1 + $0x58] sm:$0xff]
        %v269 = vld [vmem:[%s1 + $0x60] sm:$0xff]
        %v270 = vld [vmem:[%s1 + $0x68] sm:$0xff]
        %v271 = vld [vmem:[%s1 + $0x70] sm:$0xff]
        %v272 = vld [vmem:[%s1 + $0x78] sm:$0xff]
        %v273 = vld [vmem:[%s1 + $0x80] sm:$0xff]
        %v274 = vld [vmem:[%s1 + $0x88] sm:$0xff]
        %v275 = vld [vmem:[%s249] sm:$0xff]
        %v276 = vld [vmem:[%s249 + $0x8] sm:$0xff]
        %279 = vrot.lane.b32.xlu0 %v275, 125
        %v280 = vpop.permute.xlu0 %279
        %281 = vrot.lane.b32.xlu0 %v276, 125
        %v282 = vpop.permute.xlu0 %281
        %285 = vst.msk [vmem:[#allocation2 + $0x5] sm:$0xff] %vm251, %v280
        %286 = vst.msk [vmem:[#allocation2 + $0xd] sm:$0xff] %vm251, %v282
        %v287 = vld [vmem:[%s2] sm:$0xf]
        %v288 = vld [vmem:[%s2 + $0x4] sm:$0xf]
        %v289 = vld [vmem:[%s2 + $0x8] sm:$0xf]
        %v290 = vld [vmem:[%s2 + $0xc] sm:$0xf]
        %v291 = vld [vmem:[%s2 + $0x10] sm:$0xf]
        %v292 = vld [vmem:[%s2 + $0x14] sm:$0x7]
        %v293 = vld [vmem:[%s2 + $0x18] sm:$0xf]
        %v294 = vld [vmem:[%s2 + $0x1c] sm:$0xf]
        %v295 = vld [vmem:[%s2 + $0x20] sm:$0xf]
        %v296 = vld [vmem:[%s2 + $0x24] sm:$0xf]
        %v297 = vld [vmem:[%s2 + $0x28] sm:$0xf]
        %v298 = vld [vmem:[%s2 + $0x2c] sm:$0x7]
        %v299 = vld [vmem:[%s2 + $0x30] sm:$0xf]
        %v300 = vld [vmem:[%s2 + $0x34] sm:$0xf]
        %v301 = vld [vmem:[%s2 + $0x38] sm:$0xf]
        %v302 = vld [vmem:[%s2 + $0x3c] sm:$0xf]
        %v303 = vld [vmem:[%s2 + $0x40] sm:$0xf]
        %v304 = vld [vmem:[%s2 + $0x44] sm:$0x7]
        %v305 = vld [vmem:[%s2 + $0x48] sm:$0xf]
        %v306 = vld [vmem:[%s2 + $0x4c] sm:$0xf]
        %v307 = vld [vmem:[%s2 + $0x50] sm:$0xf]
        %v308 = vld [vmem:[%s2 + $0x54] sm:$0xf]
        %v309 = vld [vmem:[%s2 + $0x58] sm:$0xf]
        %v310 = vld [vmem:[%s2 + $0x5c] sm:$0x7]
        %v311 = vld [vmem:[%s2 + $0x60] sm:$0xf]
        %v312 = vld [vmem:[%s2 + $0x64] sm:$0xf]
        %v313 = vld [vmem:[%s2 + $0x68] sm:$0xf]
        %v314 = vld [vmem:[%s2 + $0x6c] sm:$0xf]
        %v315 = vld [vmem:[%s2 + $0x70] sm:$0xf]
        %v316 = vld [vmem:[%s2 + $0x74] sm:$0x7]
        %v317 = vld [vmem:[%s2 + $0x78] sm:$0xf]
        %v318 = vld [vmem:[%s2 + $0x7c] sm:$0xf]
        %v319 = vld [vmem:[%s2 + $0x80] sm:$0xf]
        %v320 = vld [vmem:[%s2 + $0x84] sm:$0xf]
        %v321 = vld [vmem:[%s2 + $0x88] sm:$0xf]
        %v322 = vld [vmem:[%s2 + $0x8c] sm:$0x7]
        %v323 = vld [vmem:[%s2 + $0x90] sm:$0xf]
        %v324 = vld [vmem:[%s2 + $0x94] sm:$0xf]
        %v325 = vld [vmem:[%s2 + $0x98] sm:$0xf]
        %v326 = vld [vmem:[%s2 + $0x9c] sm:$0xf]
        %v327 = vld [vmem:[%s2 + $0xa0] sm:$0xf]
        %v328 = vld [vmem:[%s2 + $0xa4] sm:$0x7]
        %v329 = vld [vmem:[%s2 + $0xa8] sm:$0xf]
        %v330 = vld [vmem:[%s2 + $0xac] sm:$0xf]
        %v331 = vld [vmem:[%s2 + $0xb0] sm:$0xf]
        %v332 = vld [vmem:[%s2 + $0xb4] sm:$0xf]
        %v333 = vld [vmem:[%s2 + $0xb8] sm:$0xf]
        %v334 = vld [vmem:[%s2 + $0xbc] sm:$0x7]
        %v335 = vld [vmem:[%s2 + $0xc0] sm:$0xf]
        %v336 = vld [vmem:[%s2 + $0xc4] sm:$0xf]
        %v337 = vld [vmem:[%s2 + $0xc8] sm:$0xf]
        %v338 = vld [vmem:[%s2 + $0xcc] sm:$0xf]
        %v339 = vld [vmem:[%s2 + $0xd0] sm:$0xf]
        %v340 = vld [vmem:[%s2 + $0xd4] sm:$0x7]
        %v341 = vld [vmem:[#allocation2] sm:$0xff]
        %v342 = vld [vmem:[#allocation2 + $0x8] sm:$0xff]
        %v343 = vpack.c.bf16 %v342, %v341
        %v350 = vunpack.c.l.b16 %v287
        %v351 = vunpack.c.l.b16 %v288
        %v352 = vunpack.c.l.b16 %v289
        %v353 = vunpack.c.l.b16 %v290
        %v354 = vunpack.c.l.b16 %v291
        %v355 = vunpack.c.l.b16 %v292
        %v356 = vpack.c.b16 %v351, %v350
        %v357 = vpack.c.b16 %v353, %v352
        %v358 = vpack.c.b16 %v355, %v354
        %v362 = vsel %vm251, %v343, 0
        %vm364 = vcmask 1045504
        %vm365 = vcmask 1046528
        %v366 = vsel %vm364, 4294967295, 65535
        %v367 = vsel %vm365, %v366, 0
        %v369 = vand.u32 %v358, %v367
        %371 = vmatprep.subr.bf16.mxu0 0
        %372 = vmatpush1.bf16.msra.mxu0 %v356
        %373 = vmatprep.subr.bf16.mxu0 0
        %374 = vmatpush1.bf16.msra.mxu0 %v357
        %375 = vmatprep.subr.bf16.mxu0 0
        %376 = vmatpush1.bf16.msra.mxu0 %v369
        %377 = vmatprep.subr.bf16.mxu0 0
        %378 = vmatpush1.bf16.msra.mxu0 0
        %379 = vmatprep.subr.bf16.mxu0 0
        %380 = vmatpush1.bf16.msra.mxu0 0
        %381 = vmatprep.subr.bf16.mxu0 0
        %382 = vmatpush1.bf16.msra.mxu0 0
        %383 = vmatprep.subr.bf16.mxu0 0
        %384 = vmatpush1.bf16.msra.mxu0 0
        %385 = vmatprep.subr.bf16.mxu0 0
        %386 = vmatpush1.bf16.msra.mxu0 0
        %387 = vmatprep.subr.bf16.mxu0 0
        %388 = vmatpush1.bf16.msra.mxu0 0
        %389 = vmatprep.subr.bf16.mxu0 0
        %390 = vmatpush1.bf16.msra.mxu0 0
        %391 = vmatprep.subr.bf16.mxu0 0
        %392 = vmatpush1.bf16.msra.mxu0 0
        %393 = vmatprep.subr.bf16.mxu0 0
        %394 = vmatpush1.bf16.msra.mxu0 0
        %395 = vmatprep.subr.bf16.mxu0 0
        %396 = vmatpush1.bf16.msra.mxu0 0
        %397 = vmatprep.subr.bf16.mxu0 0
        %398 = vmatpush1.bf16.msra.mxu0 0
        %399 = vmatprep.subr.bf16.mxu0 0
        %400 = vmatpush1.bf16.msra.mxu0 0
        %401 = vmatprep.subr.bf16.mxu0 0
        %402 = vmatpush1.bf16.msra.mxu0 0
        %403 = vmatprep.mubr.bf16.mxu0 0
        %404 = vmatmul.mubr.bf16.gmra.mrb[0].mxu0 %v362
        %v405 = vpop.f32.mrb[0].mxu0
        %v406 = vadd.f32 0.0, %v405
        %v407 = vpop.f32.mrb[0].mxu0
        %v408 = vpop.f32.mrb[0].mxu0
        %v409 = vadd.f32 0.0, %v408
        %v410 = vpop.f32.mrb[0].mxu0
        %411 = vdwg.mxu0
        %413 = vset.pattern.permute.xlu0 0
        %414 = vperm.xlu0 %413, %v257
        %v415 = vpop.permute.xlu0 %414
        %418 = vset.pattern.permute.xlu0 0
        %419 = vperm.xlu0 %418, %v258
        %v420 = vpop.permute.xlu0 %419
        %v422 = vmul.f32 %v415, %v406
        %v423 = vmul.f32 %v420, %v409
        %v424 = vadd.f32 %v422, 0.0
        %v425 = vadd.f32 %v423, 0.0
        %v426 = vld [vmem:[#allocation2 + $0x1] sm:$0xff]
        %v427 = vld [vmem:[#allocation2 + $0x9] sm:$0xff]
        %v428 = vpack.c.bf16 %v427, %v426
        %v435 = vunpack.c.l.b16 %v293
        %v436 = vunpack.c.l.b16 %v294
        %v437 = vunpack.c.l.b16 %v295
        %v438 = vunpack.c.l.b16 %v296
        %v439 = vunpack.c.l.b16 %v297
        %v440 = vunpack.c.l.b16 %v298
        %v441 = vpack.c.b16 %v436, %v435
        %v442 = vpack.c.b16 %v438, %v437
        %v443 = vpack.c.b16 %v440, %v439
        %v447 = vsel %vm251, %v428, 0
        %v450 = vand.u32 %v443, %v367
        %452 = vmatprep.subr.bf16.mxu0 0
        %453 = vmatpush1.bf16.msra.mxu0 %v441
        %454 = vmatprep.subr.bf16.mxu0 0
        %455 = vmatpush1.bf16.msra.mxu0 %v442
        %456 = vmatprep.subr.bf16.mxu0 0
        %457 = vmatpush1.bf16.msra.mxu0 %v450
        %458 = vmatprep.subr.bf16.mxu0 0
        %459 = vmatpush1.bf16.msra.mxu0 0
        %460 = vmatprep.subr.bf16.mxu0 0
        %461 = vmatpush1.bf16.msra.mxu0 0
        %462 = vmatprep.subr.bf16.mxu0 0
        %463 = vmatpush1.bf16.msra.mxu0 0
        %464 = vmatprep.subr.bf16.mxu0 0
        %465 = vmatpush1.bf16.msra.mxu0 0
        %466 = vmatprep.subr.bf16.mxu0 0
        %467 = vmatpush1.bf16.msra.mxu0 0
        %468 = vmatprep.subr.bf16.mxu0 0
        %469 = vmatpush1.bf16.msra.mxu0 0
        %470 = vmatprep.subr.bf16.mxu0 0
        %471 = vmatpush1.bf16.msra.mxu0 0
        %472 = vmatprep.subr.bf16.mxu0 0
        %473 = vmatpush1.bf16.msra.mxu0 0
        %474 = vmatprep.subr.bf16.mxu0 0
        %475 = vmatpush1.bf16.msra.mxu0 0
        %476 = vmatprep.subr.bf16.mxu0 0
        %477 = vmatpush1.bf16.msra.mxu0 0
        %478 = vmatprep.subr.bf16.mxu0 0
        %479 = vmatpush1.bf16.msra.mxu0 0
        %480 = vmatprep.subr.bf16.mxu0 0
        %481 = vmatpush1.bf16.msra.mxu0 0
        %482 = vmatprep.subr.bf16.mxu0 0
        %483 = vmatpush1.bf16.msra.mxu0 0
        %484 = vmatprep.mubr.bf16.mxu0 0
        %485 = vmatmul.mubr.bf16.gmra.mrb[0].mxu0 %v447
        %v486 = vpop.f32.mrb[0].mxu0
        %v487 = vadd.f32 0.0, %v486
        %v488 = vpop.f32.mrb[0].mxu0
        %v489 = vpop.f32.mrb[0].mxu0
        %v490 = vadd.f32 0.0, %v489
        %v491 = vpop.f32.mrb[0].mxu0
        %492 = vdwg.mxu0
        %494 = vset.pattern.permute.xlu0 0
        %495 = vperm.xlu0 %494, %v259
        %v496 = vpop.permute.xlu0 %495
        %499 = vset.pattern.permute.xlu0 0
        %500 = vperm.xlu0 %499, %v260
        %v501 = vpop.permute.xlu0 %500
        %v503 = vmul.f32 %v496, %v487
        %v504 = vmul.f32 %v501, %v490
        %v505 = vadd.f32 %v424, %v503
        %v506 = vadd.f32 %v425, %v504
        %v507 = vld [vmem:[#allocation2 + $0x2] sm:$0xff]
        %v508 = vld [vmem:[#allocation2 + $0xa] sm:$0xff]
        %v509 = vpack.c.bf16 %v508, %v507
        %v516 = vunpack.c.l.b16 %v299
        %v517 = vunpack.c.l.b16 %v300
        %v518 = vunpack.c.l.b16 %v301
        %v519 = vunpack.c.l.b16 %v302
        %v520 = vunpack.c.l.b16 %v303
        %v521 = vunpack.c.l.b16 %v304
        %v522 = vpack.c.b16 %v517, %v516
        %v523 = vpack.c.b16 %v519, %v518
        %v524 = vpack.c.b16 %v521, %v520
        %v528 = vsel %vm251, %v509, 0
        %v531 = vand.u32 %v524, %v367
        %533 = vmatprep.subr.bf16.mxu0 0
        %534 = vmatpush1.bf16.msra.mxu0 %v522
        %535 = vmatprep.subr.bf16.mxu0 0
        %536 = vmatpush1.bf16.msra.mxu0 %v523
        %537 = vmatprep.subr.bf16.mxu0 0
        %538 = vmatpush1.bf16.msra.mxu0 %v531
        %539 = vmatprep.subr.bf16.mxu0 0
        %540 = vmatpush1.bf16.msra.mxu0 0
        %541 = vmatprep.subr.bf16.mxu0 0
        %542 = vmatpush1.bf16.msra.mxu0 0
        %543 = vmatprep.subr.bf16.mxu0 0
        %544 = vmatpush1.bf16.msra.mxu0 0
        %545 = vmatprep.subr.bf16.mxu0 0
        %546 = vmatpush1.bf16.msra.mxu0 0
        %547 = vmatprep.subr.bf16.mxu0 0
        %548 = vmatpush1.bf16.msra.mxu0 0
        %549 = vmatprep.subr.bf16.mxu0 0
        %550 = vmatpush1.bf16.msra.mxu0 0
        %551 = vmatprep.subr.bf16.mxu0 0
        %552 = vmatpush1.bf16.msra.mxu0 0
        %553 = vmatprep.subr.bf16.mxu0 0
        %554 = vmatpush1.bf16.msra.mxu0 0
        %555 = vmatprep.subr.bf16.mxu0 0
        %556 = vmatpush1.bf16.msra.mxu0 0
        %557 = vmatprep.subr.bf16.mxu0 0
        %558 = vmatpush1.bf16.msra.mxu0 0
        %559 = vmatprep.subr.bf16.mxu0 0
        %560 = vmatpush1.bf16.msra.mxu0 0
        %561 = vmatprep.subr.bf16.mxu0 0
        %562 = vmatpush1.bf16.msra.mxu0 0
        %563 = vmatprep.subr.bf16.mxu0 0
        %564 = vmatpush1.bf16.msra.mxu0 0
        %565 = vmatprep.mubr.bf16.mxu0 0
        %566 = vmatmul.mubr.bf16.gmra.mrb[0].mxu0 %v528
        %v567 = vpop.f32.mrb[0].mxu0
        %v568 = vadd.f32 0.0, %v567
        %v569 = vpop.f32.mrb[0].mxu0
        %v570 = vpop.f32.mrb[0].mxu0
        %v571 = vadd.f32 0.0, %v570
        %v572 = vpop.f32.mrb[0].mxu0
        %573 = vdwg.mxu0
        %575 = vset.pattern.permute.xlu0 0
        %576 = vperm.xlu0 %575, %v261
        %v577 = vpop.permute.xlu0 %576
        %580 = vset.pattern.permute.xlu0 0
        %581 = vperm.xlu0 %580, %v262
        %v582 = vpop.permute.xlu0 %581
        %v584 = vmul.f32 %v577, %v568
        %v585 = vmul.f32 %v582, %v571
        %v586 = vadd.f32 %v505, %v584
        %v587 = vadd.f32 %v506, %v585
        %v588 = vld [vmem:[#allocation2 + $0x4] sm:$0xff]
        %v589 = vld [vmem:[#allocation2 + $0xc] sm:$0xff]
        %v590 = vpack.c.bf16 %v589, %v588
        %v597 = vunpack.c.l.b16 %v305
        %v598 = vunpack.c.l.b16 %v306
        %v599 = vunpack.c.l.b16 %v307
        %v600 = vunpack.c.l.b16 %v308
        %v601 = vunpack.c.l.b16 %v309
        %v602 = vunpack.c.l.b16 %v310
        %v603 = vpack.c.b16 %v598, %v597
        %v604 = vpack.c.b16 %v600, %v599
        %v605 = vpack.c.b16 %v602, %v601
        %v609 = vsel %vm251, %v590, 0
        %v612 = vand.u32 %v605, %v367
        %614 = vmatprep.subr.bf16.mxu0 0
        %615 = vmatpush1.bf16.msra.mxu0 %v603
        %616 = vmatprep.subr.bf16.mxu0 0
        %617 = vmatpush1.bf16.msra.mxu0 %v604
        %618 = vmatprep.subr.bf16.mxu0 0
        %619 = vmatpush1.bf16.msra.mxu0 %v612
        %620 = vmatprep.subr.bf16.mxu0 0
        %621 = vmatpush1.bf16.msra.mxu0 0
        %622 = vmatprep.subr.bf16.mxu0 0
        %623 = vmatpush1.bf16.msra.mxu0 0
        %624 = vmatprep.subr.bf16.mxu0 0
        %625 = vmatpush1.bf16.msra.mxu0 0
        %626 = vmatprep.subr.bf16.mxu0 0
        %627 = vmatpush1.bf16.msra.mxu0 0
        %628 = vmatprep.subr.bf16.mxu0 0
        %629 = vmatpush1.bf16.msra.mxu0 0
        %630 = vmatprep.subr.bf16.mxu0 0
        %631 = vmatpush1.bf16.msra.mxu0 0
        %632 = vmatprep.subr.bf16.mxu0 0
        %633 = vmatpush1.bf16.msra.mxu0 0
        %634 = vmatprep.subr.bf16.mxu0 0
        %635 = vmatpush1.bf16.msra.mxu0 0
        %636 = vmatprep.subr.bf16.mxu0 0
        %637 = vmatpush1.bf16.msra.mxu0 0
        %638 = vmatprep.subr.bf16.mxu0 0
        %639 = vmatpush1.bf16.msra.mxu0 0
        %640 = vmatprep.subr.bf16.mxu0 0
        %641 = vmatpush1.bf16.msra.mxu0 0
        %642 = vmatprep.subr.bf16.mxu0 0
        %643 = vmatpush1.bf16.msra.mxu0 0
        %644 = vmatprep.subr.bf16.mxu0 0
        %645 = vmatpush1.bf16.msra.mxu0 0
        %646 = vmatprep.mubr.bf16.mxu0 0
        %647 = vmatmul.mubr.bf16.gmra.mrb[0].mxu0 %v609
        %v648 = vpop.f32.mrb[0].mxu0
        %v649 = vadd.f32 0.0, %v648
        %v650 = vpop.f32.mrb[0].mxu0
        %v651 = vpop.f32.mrb[0].mxu0
        %v652 = vadd.f32 0.0, %v651
        %v653 = vpop.f32.mrb[0].mxu0
        %654 = vdwg.mxu0
        %656 = vset.pattern.permute.xlu0 0
        %657 = vperm.xlu0 %656, %v263
        %v658 = vpop.permute.xlu0 %657
        %661 = vset.pattern.permute.xlu0 0
        %662 = vperm.xlu0 %661, %v264
        %v663 = vpop.permute.xlu0 %662
        %v665 = vmul.f32 %v658, %v649
        %v666 = vmul.f32 %v663, %v652
        %v667 = vadd.f32 %v586, %v665
        %v668 = vadd.f32 %v587, %v666
        %v669 = vld [vmem:[#allocation2 + $0x5] sm:$0xff]
        %v670 = vld [vmem:[#allocation2 + $0xd] sm:$0xff]
        %v671 = vpack.c.bf16 %v670, %v669
        %v678 = vunpack.c.l.b16 %v311
        %v679 = vunpack.c.l.b16 %v312
        %v680 = vunpack.c.l.b16 %v313
        %v681 = vunpack.c.l.b16 %v314
        %v682 = vunpack.c.l.b16 %v315
        %v683 = vunpack.c.l.b16 %v316
        %v684 = vpack.c.b16 %v679, %v678
        %v685 = vpack.c.b16 %v681, %v680
        %v686 = vpack.c.b16 %v683, %v682
        %v690 = vsel %vm251, %v671, 0
        %v693 = vand.u32 %v686, %v367
        %695 = vmatprep.subr.bf16.mxu0 0
        %696 = vmatpush1.bf16.msra.mxu0 %v684
        %697 = vmatprep.subr.bf16.mxu0 0
        %698 = vmatpush1.bf16.msra.mxu0 %v685
        %699 = vmatprep.subr.bf16.mxu0 0
        %700 = vmatpush1.bf16.msra.mxu0 %v693
        %701 = vmatprep.subr.bf16.mxu0 0
        %702 = vmatpush1.bf16.msra.mxu0 0
        %703 = vmatprep.subr.bf16.mxu0 0
        %704 = vmatpush1.bf16.msra.mxu0 0
        %705 = vmatprep.subr.bf16.mxu0 0
        %706 = vmatpush1.bf16.msra.mxu0 0
        %707 = vmatprep.subr.bf16.mxu0 0
        %708 = vmatpush1.bf16.msra.mxu0 0
        %709 = vmatprep.subr.bf16.mxu0 0
        %710 = vmatpush1.bf16.msra.mxu0 0
        %711 = vmatprep.subr.bf16.mxu0 0
        %712 = vmatpush1.bf16.msra.mxu0 0
        %713 = vmatprep.subr.bf16.mxu0 0
        %714 = vmatpush1.bf16.msra.mxu0 0
        %715 = vmatprep.subr.bf16.mxu0 0
        %716 = vmatpush1.bf16.msra.mxu0 0
        %717 = vmatprep.subr.bf16.mxu0 0
        %718 = vmatpush1.bf16.msra.mxu0 0
        %719 = vmatprep.subr.bf16.mxu0 0
        %720 = vmatpush1.bf16.msra.mxu0 0
        %721 = vmatprep.subr.bf16.mxu0 0
        %722 = vmatpush1.bf16.msra.mxu0 0
        %723 = vmatprep.subr.bf16.mxu0 0
        %724 = vmatpush1.bf16.msra.mxu0 0
        %725 = vmatprep.subr.bf16.mxu0 0
        %726 = vmatpush1.bf16.msra.mxu0 0
        %727 = vmatprep.mubr.bf16.mxu0 0
        %728 = vmatmul.mubr.bf16.gmra.mrb[0].mxu0 %v690
        %v729 = vpop.f32.mrb[0].mxu0
        %v730 = vadd.f32 0.0, %v729
        %v731 = vpop.f32.mrb[0].mxu0
        %v732 = vpop.f32.mrb[0].mxu0
        %v733 = vadd.f32 0.0, %v732
        %v734 = vpop.f32.mrb[0].mxu0
        %735 = vdwg.mxu0
        %737 = vset.pattern.permute.xlu0 0
        %738 = vperm.xlu0 %737, %v265
        %v739 = vpop.permute.xlu0 %738
        %742 = vset.pattern.permute.xlu0 0
        %743 = vperm.xlu0 %742, %v266
        %v744 = vpop.permute.xlu0 %743
        %v746 = vmul.f32 %v739, %v730
        %v747 = vmul.f32 %v744, %v733
        %v748 = vadd.f32 %v667, %v746
        %v749 = vadd.f32 %v668, %v747
        %v750 = vld [vmem:[#allocation2 + $0x6] sm:$0xff]
        %v751 = vld [vmem:[#allocation2 + $0xe] sm:$0xff]
        %v752 = vpack.c.bf16 %v751, %v750
        %v759 = vunpack.c.l.b16 %v317
        %v760 = vunpack.c.l.b16 %v318
        %v761 = vunpack.c.l.b16 %v319
        %v762 = vunpack.c.l.b16 %v320
        %v763 = vunpack.c.l.b16 %v321
        %v764 = vunpack.c.l.b16 %v322
        %v765 = vpack.c.b16 %v760, %v759
        %v766 = vpack.c.b16 %v762, %v761
        %v767 = vpack.c.b16 %v764, %v763
        %v771 = vsel %vm251, %v752, 0
        %v774 = vand.u32 %v767, %v367
        %776 = vmatprep.subr.bf16.mxu0 0
        %777 = vmatpush1.bf16.msra.mxu0 %v765
        %778 = vmatprep.subr.bf16.mxu0 0
        %779 = vmatpush1.bf16.msra.mxu0 %v766
        %780 = vmatprep.subr.bf16.mxu0 0
        %781 = vmatpush1.bf16.msra.mxu0 %v774
        %782 = vmatprep.subr.bf16.mxu0 0
        %783 = vmatpush1.bf16.msra.mxu0 0
        %784 = vmatprep.subr.bf16.mxu0 0
        %785 = vmatpush1.bf16.msra.mxu0 0
        %786 = vmatprep.subr.bf16.mxu0 0
        %787 = vmatpush1.bf16.msra.mxu0 0
        %788 = vmatprep.subr.bf16.mxu0 0
        %789 = vmatpush1.bf16.msra.mxu0 0
        %790 = vmatprep.subr.bf16.mxu0 0
        %791 = vmatpush1.bf16.msra.mxu0 0
        %792 = vmatprep.subr.bf16.mxu0 0
        %793 = vmatpush1.bf16.msra.mxu0 0
        %794 = vmatprep.subr.bf16.mxu0 0
        %795 = vmatpush1.bf16.msra.mxu0 0
        %796 = vmatprep.subr.bf16.mxu0 0
        %797 = vmatpush1.bf16.msra.mxu0 0
        %798 = vmatprep.subr.bf16.mxu0 0
        %799 = vmatpush1.bf16.msra.mxu0 0
        %800 = vmatprep.subr.bf16.mxu0 0
        %801 = vmatpush1.bf16.msra.mxu0 0
        %802 = vmatprep.subr.bf16.mxu0 0
        %803 = vmatpush1.bf16.msra.mxu0 0
        %804 = vmatprep.subr.bf16.mxu0 0
        %805 = vmatpush1.bf16.msra.mxu0 0
        %806 = vmatprep.subr.bf16.mxu0 0
        %807 = vmatpush1.bf16.msra.mxu0 0
        %808 = vmatprep.mubr.bf16.mxu0 0
        %809 = vmatmul.mubr.bf16.gmra.mrb[0].mxu0 %v771
        %v810 = vpop.f32.mrb[0].mxu0
        %v811 = vadd.f32 0.0, %v810
        %v812 = vpop.f32.mrb[0].mxu0
        %v813 = vpop.f32.mrb[0].mxu0
        %v814 = vadd.f32 0.0, %v813
        %v815 = vpop.f32.mrb[0].mxu0
        %816 = vdwg.mxu0
        %818 = vset.pattern.permute.xlu0 0
        %819 = vperm.xlu0 %818, %v267
        %v820 = vpop.permute.xlu0 %819
        %823 = vset.pattern.permute.xlu0 0
        %824 = vperm.xlu0 %823, %v268
        %v825 = vpop.permute.xlu0 %824
        %v827 = vmul.f32 %v820, %v811
        %v828 = vmul.f32 %v825, %v814
        %v829 = vadd.f32 %v748, %v827
        %v830 = vadd.f32 %v749, %v828
        %v831 = vld [vmem:[#allocation2 + $0x8] sm:$0xff]
        %v832 = vld [vmem:[#allocation2 + $0x10] sm:$0xff]
        %v833 = vpack.c.bf16 %v832, %v831
        %v840 = vunpack.c.l.b16 %v323
        %v841 = vunpack.c.l.b16 %v324
        %v842 = vunpack.c.l.b16 %v325
        %v843 = vunpack.c.l.b16 %v326
        %v844 = vunpack.c.l.b16 %v327
        %v845 = vunpack.c.l.b16 %v328
        %v846 = vpack.c.b16 %v841, %v840
        %v847 = vpack.c.b16 %v843, %v842
        %v848 = vpack.c.b16 %v845, %v844
        %v852 = vsel %vm251, %v833, 0
        %v855 = vand.u32 %v848, %v367
        %857 = vmatprep.subr.bf16.mxu0 0
        %858 = vmatpush1.bf16.msra.mxu0 %v846
        %859 = vmatprep.subr.bf16.mxu0 0
        %860 = vmatpush1.bf16.msra.mxu0 %v847
        %861 = vmatprep.subr.bf16.mxu0 0
        %862 = vmatpush1.bf16.msra.mxu0 %v855
        %863 = vmatprep.subr.bf16.mxu0 0
        %864 = vmatpush1.bf16.msra.mxu0 0
        %865 = vmatprep.subr.bf16.mxu0 0
        %866 = vmatpush1.bf16.msra.mxu0 0
        %867 = vmatprep.subr.bf16.mxu0 0
        %868 = vmatpush1.bf16.msra.mxu0 0
        %869 = vmatprep.subr.bf16.mxu0 0
        %870 = vmatpush1.bf16.msra.mxu0 0
        %871 = vmatprep.subr.bf16.mxu0 0
        %872 = vmatpush1.bf16.msra.mxu0 0
        %873 = vmatprep.subr.bf16.mxu0 0
        %874 = vmatpush1.bf16.msra.mxu0 0
        %875 = vmatprep.subr.bf16.mxu0 0
        %876 = vmatpush1.bf16.msra.mxu0 0
        %877 = vmatprep.subr.bf16.mxu0 0
        %878 = vmatpush1.bf16.msra.mxu0 0
        %879 = vmatprep.subr.bf16.mxu0 0
        %880 = vmatpush1.bf16.msra.mxu0 0
        %881 = vmatprep.subr.bf16.mxu0 0
        %882 = vmatpush1.bf16.msra.mxu0 0
        %883 = vmatprep.subr.bf16.mxu0 0
        %884 = vmatpush1.bf16.msra.mxu0 0
        %885 = vmatprep.subr.bf16.mxu0 0
        %886 = vmatpush1.bf16.msra.mxu0 0
        %887 = vmatprep.subr.bf16.mxu0 0
        %888 = vmatpush1.bf16.msra.mxu0 0
        %889 = vmatprep.mubr.bf16.mxu0 0
        %890 = vmatmul.mubr.bf16.gmra.mrb[0].mxu0 %v852
        %v891 = vpop.f32.mrb[0].mxu0
        %v892 = vadd.f32 0.0, %v891
        %v893 = vpop.f32.mrb[0].mxu0
        %v894 = vpop.f32.mrb[0].mxu0
        %v895 = vadd.f32 0.0, %v894
        %v896 = vpop.f32.mrb[0].mxu0
        %897 = vdwg.mxu0
        %899 = vset.pattern.permute.xlu0 0
        %900 = vperm.xlu0 %899, %v269
        %v901 = vpop.permute.xlu0 %900
        %904 = vset.pattern.permute.xlu0 0
        %905 = vperm.xlu0 %904, %v270
        %v906 = vpop.permute.xlu0 %905
        %v908 = vmul.f32 %v901, %v892
        %v909 = vmul.f32 %v906, %v895
        %v910 = vadd.f32 %v829, %v908
        %v911 = vadd.f32 %v830, %v909
        %v912 = vld [vmem:[#allocation2 + $0x9] sm:$0xff]
        %v913 = vld [vmem:[#allocation2 + $0x11] sm:$0xff]
        %v914 = vpack.c.bf16 %v913, %v912
        %v921 = vunpack.c.l.b16 %v329
        %v922 = vunpack.c.l.b16 %v330
        %v923 = vunpack.c.l.b16 %v331
        %v924 = vunpack.c.l.b16 %v332
        %v925 = vunpack.c.l.b16 %v333
        %v926 = vunpack.c.l.b16 %v334
        %v927 = vpack.c.b16 %v922, %v921
        %v928 = vpack.c.b16 %v924, %v923
        %v929 = vpack.c.b16 %v926, %v925
        %v933 = vsel %vm251, %v914, 0
        %v936 = vand.u32 %v929, %v367
        %938 = vmatprep.subr.bf16.mxu0 0
        %939 = vmatpush1.bf16.msra.mxu0 %v927
        %940 = vmatprep.subr.bf16.mxu0 0
        %941 = vmatpush1.bf16.msra.mxu0 %v928
        %942 = vmatprep.subr.bf16.mxu0 0
        %943 = vmatpush1.bf16.msra.mxu0 %v936
        %944 = vmatprep.subr.bf16.mxu0 0
        %945 = vmatpush1.bf16.msra.mxu0 0
        %946 = vmatprep.subr.bf16.mxu0 0
        %947 = vmatpush1.bf16.msra.mxu0 0
        %948 = vmatprep.subr.bf16.mxu0 0
        %949 = vmatpush1.bf16.msra.mxu0 0
        %950 = vmatprep.subr.bf16.mxu0 0
        %951 = vmatpush1.bf16.msra.mxu0 0
        %952 = vmatprep.subr.bf16.mxu0 0
        %953 = vmatpush1.bf16.msra.mxu0 0
        %954 = vmatprep.subr.bf16.mxu0 0
        %955 = vmatpush1.bf16.msra.mxu0 0
        %956 = vmatprep.subr.bf16.mxu0 0
        %957 = vmatpush1.bf16.msra.mxu0 0
        %958 = vmatprep.subr.bf16.mxu0 0
        %959 = vmatpush1.bf16.msra.mxu0 0
        %960 = vmatprep.subr.bf16.mxu0 0
        %961 = vmatpush1.bf16.msra.mxu0 0
        %962 = vmatprep.subr.bf16.mxu0 0
        %963 = vmatpush1.bf16.msra.mxu0 0
        %964 = vmatprep.subr.bf16.mxu0 0
        %965 = vmatpush1.bf16.msra.mxu0 0
        %966 = vmatprep.subr.bf16.mxu0 0
        %967 = vmatpush1.bf16.msra.mxu0 0
        %968 = vmatprep.subr.bf16.mxu0 0
        %969 = vmatpush1.bf16.msra.mxu0 0
        %970 = vmatprep.mubr.bf16.mxu0 0
        %971 = vmatmul.mubr.bf16.gmra.mrb[0].mxu0 %v933
        %v972 = vpop.f32.mrb[0].mxu0
        %v973 = vadd.f32 0.0, %v972
        %v974 = vpop.f32.mrb[0].mxu0
        %v975 = vpop.f32.mrb[0].mxu0
        %v976 = vadd.f32 0.0, %v975
        %v977 = vpop.f32.mrb[0].mxu0
        %978 = vdwg.mxu0
        %980 = vset.pattern.permute.xlu0 0
        %981 = vperm.xlu0 %980, %v271
        %v982 = vpop.permute.xlu0 %981
        %985 = vset.pattern.permute.xlu0 0
        %986 = vperm.xlu0 %985, %v272
        %v987 = vpop.permute.xlu0 %986
        %v989 = vmul.f32 %v982, %v973
        %v990 = vmul.f32 %v987, %v976
        %v991 = vadd.f32 %v910, %v989
        %v992 = vadd.f32 %v911, %v990
        %v993 = vld [vmem:[#allocation2 + $0xa] sm:$0xff]
        %v994 = vld [vmem:[#allocation2 + $0x12] sm:$0xff]
        %v995 = vpack.c.bf16 %v994, %v993
        %v1002 = vunpack.c.l.b16 %v335
        %v1003 = vunpack.c.l.b16 %v336
        %v1004 = vunpack.c.l.b16 %v337
        %v1005 = vunpack.c.l.b16 %v338
        %v1006 = vunpack.c.l.b16 %v339
        %v1007 = vunpack.c.l.b16 %v340
        %v1008 = vpack.c.b16 %v1003, %v1002
        %v1009 = vpack.c.b16 %v1005, %v1004
        %v1010 = vpack.c.b16 %v1007, %v1006
        %v1014 = vsel %vm251, %v995, 0
        %v1017 = vand.u32 %v1010, %v367
        %1019 = vmatprep.subr.bf16.mxu0 0
        %1020 = vmatpush1.bf16.msra.mxu0 %v1008
        %1021 = vmatprep.subr.bf16.mxu0 0
        %1022 = vmatpush1.bf16.msra.mxu0 %v1009
        %1023 = vmatprep.subr.bf16.mxu0 0
        %1024 = vmatpush1.bf16.msra.mxu0 %v1017
        %1025 = vmatprep.subr.bf16.mxu0 0
        %1026 = vmatpush1.bf16.msra.mxu0 0
        %1027 = vmatprep.subr.bf16.mxu0 0
        %1028 = vmatpush1.bf16.msra.mxu0 0
        %1029 = vmatprep.subr.bf16.mxu0 0
        %1030 = vmatpush1.bf16.msra.mxu0 0
        %1031 = vmatprep.subr.bf16.mxu0 0
        %1032 = vmatpush1.bf16.msra.mxu0 0
        %1033 = vmatprep.subr.bf16.mxu0 0
        %1034 = vmatpush1.bf16.msra.mxu0 0
        %1035 = vmatprep.subr.bf16.mxu0 0
        %1036 = vmatpush1.bf16.msra.mxu0 0
        %1037 = vmatprep.subr.bf16.mxu0 0
        %1038 = vmatpush1.bf16.msra.mxu0 0
        %1039 = vmatprep.subr.bf16.mxu0 0
        %1040 = vmatpush1.bf16.msra.mxu0 0
        %1041 = vmatprep.subr.bf16.mxu0 0
        %1042 = vmatpush1.bf16.msra.mxu0 0
        %1043 = vmatprep.subr.bf16.mxu0 0
        %1044 = vmatpush1.bf16.msra.mxu0 0
        %1045 = vmatprep.subr.bf16.mxu0 0
        %1046 = vmatpush1.bf16.msra.mxu0 0
        %1047 = vmatprep.subr.bf16.mxu0 0
        %1048 = vmatpush1.bf16.msra.mxu0 0
        %1049 = vmatprep.subr.bf16.mxu0 0
        %1050 = vmatpush1.bf16.msra.mxu0 0
        %1051 = vmatprep.mubr.bf16.mxu0 0
        %1052 = vmatmul.mubr.bf16.gmra.mrb[0].mxu0 %v1014
        %v1053 = vpop.f32.mrb[0].mxu0
        %v1054 = vadd.f32 0.0, %v1053
        %v1055 = vpop.f32.mrb[0].mxu0
        %v1056 = vpop.f32.mrb[0].mxu0
        %v1057 = vadd.f32 0.0, %v1056
        %v1058 = vpop.f32.mrb[0].mxu0
        %1059 = vdwg.mxu0
        %1061 = vset.pattern.permute.xlu0 0
        %1062 = vperm.xlu0 %1061, %v273
        %v1063 = vpop.permute.xlu0 %1062
        %1066 = vset.pattern.permute.xlu0 0
        %1067 = vperm.xlu0 %1066, %v274
        %v1068 = vpop.permute.xlu0 %1067
        %v1070 = vmul.f32 %v1063, %v1054
        %v1071 = vmul.f32 %v1068, %v1057
        %v1072 = vadd.f32 %v991, %v1070
        %v1073 = vadd.f32 %v992, %v1071
        %v1074 = vld [vmem:[%s3] sm:$0x1]
        %v1076 = vlaneseq
        %v1077 = vshrl.u32 %v1076, 7
        %v1078 = vsub.s32 0, %v1077
        %v1079 = vrot.slane %v1074, %v1078
        %v1081 = vadd.f32 %v1072, %v1079
        %v1082 = vadd.f32 %v1073, %v1079
        %v1083 = vadd.f32 %v275, %v1081
        %v1084 = vadd.f32 %v276, %v1082
        %vm1085 = vcmask 23552
        %1086 = vst.msk [vmem:[#allocation2 + $0x5] sm:$0xff] %vm1085, %v1083
        %1087 = vst.msk [vmem:[#allocation2 + $0xd] sm:$0xff] %vm1085, %v1084
        %v1088 = vld [vmem:[%s4] sm:$0x3]
        %v1089 = vld [vmem:[%s4 + $0x2] sm:$0x3]
        %v1090 = vld [vmem:[%s4 + $0x4] sm:$0x3]
        %v1091 = vld [vmem:[%s4 + $0x6] sm:$0x3]
        %v1092 = vld [vmem:[%s4 + $0x8] sm:$0x3]
        %v1093 = vld [vmem:[%s4 + $0xa] sm:$0x3]
        %v1094 = vld [vmem:[%s4 + $0xc] sm:$0x3]
        %v1095 = vld [vmem:[%s4 + $0xe] sm:$0x3]
        %v1096 = vld [vmem:[%s4 + $0x10] sm:$0x3]
        %v1097 = vld [vmem:[#allocation2] sm:$0xff]
        %v1098 = vld [vmem:[#allocation2 + $0x8] sm:$0xff]
        %v1099 = vpack.c.bf16 %v1098, %v1097
        %v1101 = vsel %vm1085, %v1099, 0
        %vm1103 = vcmask 1040384
        %vm1104 = vcmask 1041408
        %v1105 = vsel %vm1103, 4294967295, 65535
        %v1106 = vsel %vm1104, %v1105, 0
        %v1108 = vand.u32 %v1088, %v1106
        %1110 = vmatprep.subr.bf16.mxu0 0
        %1111 = vmatpush1.bf16.msra.mxu0 %v1108
        %1112 = vmatprep.subr.bf16.mxu0 0
        %1113 = vmatpush1.bf16.msra.mxu0 0
        %1114 = vmatprep.subr.bf16.mxu0 0
        %1115 = vmatpush1.bf16.msra.mxu0 0
        %1116 = vmatprep.subr.bf16.mxu0 0
        %1117 = vmatpush1.bf16.msra.mxu0 0
        %1118 = vmatprep.subr.bf16.mxu0 0
        %1119 = vmatpush1.bf16.msra.mxu0 0
        %1120 = vmatprep.subr.bf16.mxu0 0
        %1121 = vmatpush1.bf16.msra.mxu0 0
        %1122 = vmatprep.subr.bf16.mxu0 0
        %1123 = vmatpush1.bf16.msra.mxu0 0
        %1124 = vmatprep.subr.bf16.mxu0 0
        %1125 = vmatpush1.bf16.msra.mxu0 0
        %1126 = vmatprep.subr.bf16.mxu0 0
        %1127 = vmatpush1.bf16.msra.mxu0 0
        %1128 = vmatprep.subr.bf16.mxu0 0
        %1129 = vmatpush1.bf16.msra.mxu0 0
        %1130 = vmatprep.subr.bf16.mxu0 0
        %1131 = vmatpush1.bf16.msra.mxu0 0
        %1132 = vmatprep.subr.bf16.mxu0 0
        %1133 = vmatpush1.bf16.msra.mxu0 0
        %1134 = vmatprep.subr.bf16.mxu0 0
        %1135 = vmatpush1.bf16.msra.mxu0 0
        %1136 = vmatprep.subr.bf16.mxu0 0
        %1137 = vmatpush1.bf16.msra.mxu0 0
        %1138 = vmatprep.subr.bf16.mxu0 0
        %1139 = vmatpush1.bf16.msra.mxu0 0
        %1140 = vmatprep.subr.bf16.mxu0 0
        %1141 = vmatpush1.bf16.msra.mxu0 0
        %1142 = vmatprep.mubr.bf16.mxu0 0
        %1143 = vmatmul.mubr.bf16.gmra.mrb[0].mxu0 %v1101
        %v1144 = vpop.f32.mrb[0].mxu0
        %v1145 = vadd.f32 0.0, %v1144
        %v1146 = vpop.f32.mrb[0].mxu0
        %v1147 = vpop.f32.mrb[0].mxu0
        %v1148 = vadd.f32 0.0, %v1147
        %v1149 = vpop.f32.mrb[0].mxu0
        %1150 = vdwg.mxu0
        %v1151 = vmul.f32 %v415, %v1145
        %v1152 = vmul.f32 %v420, %v1148
        %v1153 = vadd.f32 %v1151, 0.0
        %v1154 = vadd.f32 %v1152, 0.0
        %v1155 = vld [vmem:[#allocation2 + $0x1] sm:$0xff]
        %v1156 = vld [vmem:[#allocation2 + $0x9] sm:$0xff]
        %v1157 = vpack.c.bf16 %v1156, %v1155
        %v1159 = vsel %vm1085, %v1157, 0
        %v1162 = vand.u32 %v1089, %v1106
        %1164 = vmatprep.subr.bf16.mxu0 0
        %1165 = vmatpush1.bf16.msra.mxu0 %v1162
        %1166 = vmatprep.subr.bf16.mxu0 0
        %1167 = vmatpush1.bf16.msra.mxu0 0
        %1168 = vmatprep.subr.bf16.mxu0 0
        %1169 = vmatpush1.bf16.msra.mxu0 0
        %1170 = vmatprep.subr.bf16.mxu0 0
        %1171 = vmatpush1.bf16.msra.mxu0 0
        %1172 = vmatprep.subr.bf16.mxu0 0
        %1173 = vmatpush1.bf16.msra.mxu0 0
        %1174 = vmatprep.subr.bf16.mxu0 0
        %1175 = vmatpush1.bf16.msra.mxu0 0
        %1176 = vmatprep.subr.bf16.mxu0 0
        %1177 = vmatpush1.bf16.msra.mxu0 0
        %1178 = vmatprep.subr.bf16.mxu0 0
        %1179 = vmatpush1.bf16.msra.mxu0 0
        %1180 = vmatprep.subr.bf16.mxu0 0
        %1181 = vmatpush1.bf16.msra.mxu0 0
        %1182 = vmatprep.subr.bf16.mxu0 0
        %1183 = vmatpush1.bf16.msra.mxu0 0
        %1184 = vmatprep.subr.bf16.mxu0 0
        %1185 = vmatpush1.bf16.msra.mxu0 0
        %1186 = vmatprep.subr.bf16.mxu0 0
        %1187 = vmatpush1.bf16.msra.mxu0 0
        %1188 = vmatprep.subr.bf16.mxu0 0
        %1189 = vmatpush1.bf16.msra.mxu0 0
        %1190 = vmatprep.subr.bf16.mxu0 0
        %1191 = vmatpush1.bf16.msra.mxu0 0
        %1192 = vmatprep.subr.bf16.mxu0 0
        %1193 = vmatpush1.bf16.msra.mxu0 0
        %1194 = vmatprep.subr.bf16.mxu0 0
        %1195 = vmatpush1.bf16.msra.mxu0 0
        %1196 = vmatprep.mubr.bf16.mxu0 0
        %1197 = vmatmul.mubr.bf16.gmra.mrb[0].mxu0 %v1159
        %v1198 = vpop.f32.mrb[0].mxu0
        %v1199 = vadd.f32 0.0, %v1198
        %v1200 = vpop.f32.mrb[0].mxu0
        %v1201 = vpop.f32.mrb[0].mxu0
        %v1202 = vadd.f32 0.0, %v1201
        %v1203 = vpop.f32.mrb[0].mxu0
        %1204 = vdwg.mxu0
        %v1205 = vmul.f32 %v496, %v1199
        %v1206 = vmul.f32 %v501, %v1202
        %v1207 = vadd.f32 %v1153, %v1205
        %v1208 = vadd.f32 %v1154, %v1206
        %v1209 = vld [vmem:[#allocation2 + $0x2] sm:$0xff]
        %v1210 = vld [vmem:[#allocation2 + $0xa] sm:$0xff]
        %v1211 = vpack.c.bf16 %v1210, %v1209
        %v1213 = vsel %vm1085, %v1211, 0
        %v1216 = vand.u32 %v1090, %v1106
        %1218 = vmatprep.subr.bf16.mxu0 0
        %1219 = vmatpush1.bf16.msra.mxu0 %v1216
        %1220 = vmatprep.subr.bf16.mxu0 0
        %1221 = vmatpush1.bf16.msra.mxu0 0
        %1222 = vmatprep.subr.bf16.mxu0 0
        %1223 = vmatpush1.bf16.msra.mxu0 0
        %1224 = vmatprep.subr.bf16.mxu0 0
        %1225 = vmatpush1.bf16.msra.mxu0 0
        %1226 = vmatprep.subr.bf16.mxu0 0
        %1227 = vmatpush1.bf16.msra.mxu0 0
        %1228 = vmatprep.subr.bf16.mxu0 0
        %1229 = vmatpush1.bf16.msra.mxu0 0
        %1230 = vmatprep.subr.bf16.mxu0 0
        %1231 = vmatpush1.bf16.msra.mxu0 0
        %1232 = vmatprep.subr.bf16.mxu0 0
        %1233 = vmatpush1.bf16.msra.mxu0 0
        %1234 = vmatprep.subr.bf16.mxu0 0
        %1235 = vmatpush1.bf16.msra.mxu0 0
        %1236 = vmatprep.subr.bf16.mxu0 0
        %1237 = vmatpush1.bf16.msra.mxu0 0
        %1238 = vmatprep.subr.bf16.mxu0 0
        %1239 = vmatpush1.bf16.msra.mxu0 0
        %1240 = vmatprep.subr.bf16.mxu0 0
        %1241 = vmatpush1.bf16.msra.mxu0 0
        %1242 = vmatprep.subr.bf16.mxu0 0
        %1243 = vmatpush1.bf16.msra.mxu0 0
        %1244 = vmatprep.subr.bf16.mxu0 0
        %1245 = vmatpush1.bf16.msra.mxu0 0
        %1246 = vmatprep.subr.bf16.mxu0 0
        %1247 = vmatpush1.bf16.msra.mxu0 0
        %1248 = vmatprep.subr.bf16.mxu0 0
        %1249 = vmatpush1.bf16.msra.mxu0 0
        %1250 = vmatprep.mubr.bf16.mxu0 0
        %1251 = vmatmul.mubr.bf16.gmra.mrb[0].mxu0 %v1213
        %v1252 = vpop.f32.mrb[0].mxu0
        %v1253 = vadd.f32 0.0, %v1252
        %v1254 = vpop.f32.mrb[0].mxu0
        %v1255 = vpop.f32.mrb[0].mxu0
        %v1256 = vadd.f32 0.0, %v1255
        %v1257 = vpop.f32.mrb[0].mxu0
        %1258 = vdwg.mxu0
        %v1259 = vmul.f32 %v577, %v1253
        %v1260 = vmul.f32 %v582, %v1256
        %v1261 = vadd.f32 %v1207, %v1259
        %v1262 = vadd.f32 %v1208, %v1260
        %v1263 = vld [vmem:[#allocation2 + $0x4] sm:$0xff]
        %v1264 = vld [vmem:[#allocation2 + $0xc] sm:$0xff]
        %v1265 = vpack.c.bf16 %v1264, %v1263
        %v1267 = vsel %vm1085, %v1265, 0
        %v1270 = vand.u32 %v1091, %v1106
        %1272 = vmatprep.subr.bf16.mxu0 0
        %1273 = vmatpush1.bf16.msra.mxu0 %v1270
        %1274 = vmatprep.subr.bf16.mxu0 0
        %1275 = vmatpush1.bf16.msra.mxu0 0
        %1276 = vmatprep.subr.bf16.mxu0 0
        %1277 = vmatpush1.bf16.msra.mxu0 0
        %1278 = vmatprep.subr.bf16.mxu0 0
        %1279 = vmatpush1.bf16.msra.mxu0 0
        %1280 = vmatprep.subr.bf16.mxu0 0
        %1281 = vmatpush1.bf16.msra.mxu0 0
        %1282 = vmatprep.subr.bf16.mxu0 0
        %1283 = vmatpush1.bf16.msra.mxu0 0
        %1284 = vmatprep.subr.bf16.mxu0 0
        %1285 = vmatpush1.bf16.msra.mxu0 0
        %1286 = vmatprep.subr.bf16.mxu0 0
        %1287 = vmatpush1.bf16.msra.mxu0 0
        %1288 = vmatprep.subr.bf16.mxu0 0
        %1289 = vmatpush1.bf16.msra.mxu0 0
        %1290 = vmatprep.subr.bf16.mxu0 0
        %1291 = vmatpush1.bf16.msra.mxu0 0
        %1292 = vmatprep.subr.bf16.mxu0 0
        %1293 = vmatpush1.bf16.msra.mxu0 0
        %1294 = vmatprep.subr.bf16.mxu0 0
        %1295 = vmatpush1.bf16.msra.mxu0 0
        %1296 = vmatprep.subr.bf16.mxu0 0
        %1297 = vmatpush1.bf16.msra.mxu0 0
        %1298 = vmatprep.subr.bf16.mxu0 0
        %1299 = vmatpush1.bf16.msra.mxu0 0
        %1300 = vmatprep.subr.bf16.mxu0 0
        %1301 = vmatpush1.bf16.msra.mxu0 0
        %1302 = vmatprep.subr.bf16.mxu0 0
        %1303 = vmatpush1.bf16.msra.mxu0 0
        %1304 = vmatprep.mubr.bf16.mxu0 0
        %1305 = vmatmul.mubr.bf16.gmra.mrb[0].mxu0 %v1267
        %v1306 = vpop.f32.mrb[0].mxu0
        %v1307 = vadd.f32 0.0, %v1306
        %v1308 = vpop.f32.mrb[0].mxu0
        %v1309 = vpop.f32.mrb[0].mxu0
        %v1310 = vadd.f32 0.0, %v1309
        %v1311 = vpop.f32.mrb[0].mxu0
        %1312 = vdwg.mxu0
        %v1313 = vmul.f32 %v658, %v1307
        %v1314 = vmul.f32 %v663, %v1310
        %v1315 = vadd.f32 %v1261, %v1313
        %v1316 = vadd.f32 %v1262, %v1314
        %v1317 = vld [vmem:[#allocation2 + $0x5] sm:$0xff]
        %v1318 = vld [vmem:[#allocation2 + $0xd] sm:$0xff]
        %v1319 = vpack.c.bf16 %v1318, %v1317
        %v1321 = vsel %vm1085, %v1319, 0
        %v1324 = vand.u32 %v1092, %v1106
        %1326 = vmatprep.subr.bf16.mxu0 0
        %1327 = vmatpush1.bf16.msra.mxu0 %v1324
        %1328 = vmatprep.subr.bf16.mxu0 0
        %1329 = vmatpush1.bf16.msra.mxu0 0
        %1330 = vmatprep.subr.bf16.mxu0 0
        %1331 = vmatpush1.bf16.msra.mxu0 0
        %1332 = vmatprep.subr.bf16.mxu0 0
        %1333 = vmatpush1.bf16.msra.mxu0 0
        %1334 = vmatprep.subr.bf16.mxu0 0
        %1335 = vmatpush1.bf16.msra.mxu0 0
        %1336 = vmatprep.subr.bf16.mxu0 0
        %1337 = vmatpush1.bf16.msra.mxu0 0
        %1338 = vmatprep.subr.bf16.mxu0 0
        %1339 = vmatpush1.bf16.msra.mxu0 0
        %1340 = vmatprep.subr.bf16.mxu0 0
        %1341 = vmatpush1.bf16.msra.mxu0 0
        %1342 = vmatprep.subr.bf16.mxu0 0
        %1343 = vmatpush1.bf16.msra.mxu0 0
        %1344 = vmatprep.subr.bf16.mxu0 0
        %1345 = vmatpush1.bf16.msra.mxu0 0
        %1346 = vmatprep.subr.bf16.mxu0 0
        %1347 = vmatpush1.bf16.msra.mxu0 0
        %1348 = vmatprep.subr.bf16.mxu0 0
        %1349 = vmatpush1.bf16.msra.mxu0 0
        %1350 = vmatprep.subr.bf16.mxu0 0
        %1351 = vmatpush1.bf16.msra.mxu0 0
        %1352 = vmatprep.subr.bf16.mxu0 0
        %1353 = vmatpush1.bf16.msra.mxu0 0
        %1354 = vmatprep.subr.bf16.mxu0 0
        %1355 = vmatpush1.bf16.msra.mxu0 0
        %1356 = vmatprep.subr.bf16.mxu0 0
        %1357 = vmatpush1.bf16.msra.mxu0 0
        %1358 = vmatprep.mubr.bf16.mxu0 0
        %1359 = vmatmul.mubr.bf16.gmra.mrb[0].mxu0 %v1321
        %v1360 = vpop.f32.mrb[0].mxu0
        %v1361 = vadd.f32 0.0, %v1360
        %v1362 = vpop.f32.mrb[0].mxu0
        %v1363 = vpop.f32.mrb[0].mxu0
        %v1364 = vadd.f32 0.0, %v1363
        %v1365 = vpop.f32.mrb[0].mxu0
        %1366 = vdwg.mxu0
        %v1367 = vmul.f32 %v739, %v1361
        %v1368 = vmul.f32 %v744, %v1364
        %v1369 = vadd.f32 %v1315, %v1367
        %v1370 = vadd.f32 %v1316, %v1368
        %v1371 = vld [vmem:[#allocation2 + $0x6] sm:$0xff]
        %v1372 = vld [vmem:[#allocation2 + $0xe] sm:$0xff]
        %v1373 = vpack.c.bf16 %v1372, %v1371
        %v1375 = vsel %vm1085, %v1373, 0
        %v1378 = vand.u32 %v1093, %v1106
        %1380 = vmatprep.subr.bf16.mxu0 0
        %1381 = vmatpush1.bf16.msra.mxu0 %v1378
        %1382 = vmatprep.subr.bf16.mxu0 0
        %1383 = vmatpush1.bf16.msra.mxu0 0
        %1384 = vmatprep.subr.bf16.mxu0 0
        %1385 = vmatpush1.bf16.msra.mxu0 0
        %1386 = vmatprep.subr.bf16.mxu0 0
        %1387 = vmatpush1.bf16.msra.mxu0 0
        %1388 = vmatprep.subr.bf16.mxu0 0
        %1389 = vmatpush1.bf16.msra.mxu0 0
        %1390 = vmatprep.subr.bf16.mxu0 0
        %1391 = vmatpush1.bf16.msra.mxu0 0
        %1392 = vmatprep.subr.bf16.mxu0 0
        %1393 = vmatpush1.bf16.msra.mxu0 0
        %1394 = vmatprep.subr.bf16.mxu0 0
        %1395 = vmatpush1.bf16.msra.mxu0 0
        %1396 = vmatprep.subr.bf16.mxu0 0
        %1397 = vmatpush1.bf16.msra.mxu0 0
        %1398 = vmatprep.subr.bf16.mxu0 0
        %1399 = vmatpush1.bf16.msra.mxu0 0
        %1400 = vmatprep.subr.bf16.mxu0 0
        %1401 = vmatpush1.bf16.msra.mxu0 0
        %1402 = vmatprep.subr.bf16.mxu0 0
        %1403 = vmatpush1.bf16.msra.mxu0 0
        %1404 = vmatprep.subr.bf16.mxu0 0
        %1405 = vmatpush1.bf16.msra.mxu0 0
        %1406 = vmatprep.subr.bf16.mxu0 0
        %1407 = vmatpush1.bf16.msra.mxu0 0
        %1408 = vmatprep.subr.bf16.mxu0 0
        %1409 = vmatpush1.bf16.msra.mxu0 0
        %1410 = vmatprep.subr.bf16.mxu0 0
        %1411 = vmatpush1.bf16.msra.mxu0 0
        %1412 = vmatprep.mubr.bf16.mxu0 0
        %1413 = vmatmul.mubr.bf16.gmra.mrb[0].mxu0 %v1375
        %v1414 = vpop.f32.mrb[0].mxu0
        %v1415 = vadd.f32 0.0, %v1414
        %v1416 = vpop.f32.mrb[0].mxu0
        %v1417 = vpop.f32.mrb[0].mxu0
        %v1418 = vadd.f32 0.0, %v1417
        %v1419 = vpop.f32.mrb[0].mxu0
        %1420 = vdwg.mxu0
        %v1421 = vmul.f32 %v820, %v1415
        %v1422 = vmul.f32 %v825, %v1418
        %v1423 = vadd.f32 %v1369, %v1421
        %v1424 = vadd.f32 %v1370, %v1422
        %v1425 = vld [vmem:[#allocation2 + $0x8] sm:$0xff]
        %v1426 = vld [vmem:[#allocation2 + $0x10] sm:$0xff]
        %v1427 = vpack.c.bf16 %v1426, %v1425
        %v1429 = vsel %vm1085, %v1427, 0
        %v1432 = vand.u32 %v1094, %v1106
        %1434 = vmatprep.subr.bf16.mxu0 0
        %1435 = vmatpush1.bf16.msra.mxu0 %v1432
        %1436 = vmatprep.subr.bf16.mxu0 0
        %1437 = vmatpush1.bf16.msra.mxu0 0
        %1438 = vmatprep.subr.bf16.mxu0 0
        %1439 = vmatpush1.bf16.msra.mxu0 0
        %1440 = vmatprep.subr.bf16.mxu0 0
        %1441 = vmatpush1.bf16.msra.mxu0 0
        %1442 = vmatprep.subr.bf16.mxu0 0
        %1443 = vmatpush1.bf16.msra.mxu0 0
        %1444 = vmatprep.subr.bf16.mxu0 0
        %1445 = vmatpush1.bf16.msra.mxu0 0
        %1446 = vmatprep.subr.bf16.mxu0 0
        %1447 = vmatpush1.bf16.msra.mxu0 0
        %1448 = vmatprep.subr.bf16.mxu0 0
        %1449 = vmatpush1.bf16.msra.mxu0 0
        %1450 = vmatprep.subr.bf16.mxu0 0
        %1451 = vmatpush1.bf16.msra.mxu0 0
        %1452 = vmatprep.subr.bf16.mxu0 0
        %1453 = vmatpush1.bf16.msra.mxu0 0
        %1454 = vmatprep.subr.bf16.mxu0 0
        %1455 = vmatpush1.bf16.msra.mxu0 0
        %1456 = vmatprep.subr.bf16.mxu0 0
        %1457 = vmatpush1.bf16.msra.mxu0 0
        %1458 = vmatprep.subr.bf16.mxu0 0
        %1459 = vmatpush1.bf16.msra.mxu0 0
        %1460 = vmatprep.subr.bf16.mxu0 0
        %1461 = vmatpush1.bf16.msra.mxu0 0
        %1462 = vmatprep.subr.bf16.mxu0 0
        %1463 = vmatpush1.bf16.msra.mxu0 0
        %1464 = vmatprep.subr.bf16.mxu0 0
        %1465 = vmatpush1.bf16.msra.mxu0 0
        %1466 = vmatprep.mubr.bf16.mxu0 0
        %1467 = vmatmul.mubr.bf16.gmra.mrb[0].mxu0 %v1429
        %v1468 = vpop.f32.mrb[0].mxu0
        %v1469 = vadd.f32 0.0, %v1468
        %v1470 = vpop.f32.mrb[0].mxu0
        %v1471 = vpop.f32.mrb[0].mxu0
        %v1472 = vadd.f32 0.0, %v1471
        %v1473 = vpop.f32.mrb[0].mxu0
        %1474 = vdwg.mxu0
        %v1475 = vmul.f32 %v901, %v1469
        %v1476 = vmul.f32 %v906, %v1472
        %v1477 = vadd.f32 %v1423, %v1475
        %v1478 = vadd.f32 %v1424, %v1476
        %v1479 = vld [vmem:[#allocation2 + $0x9] sm:$0xff]
        %v1480 = vld [vmem:[#allocation2 + $0x11] sm:$0xff]
        %v1481 = vpack.c.bf16 %v1480, %v1479
        %v1483 = vsel %vm1085, %v1481, 0
        %v1486 = vand.u32 %v1095, %v1106
        %1488 = vmatprep.subr.bf16.mxu0 0
        %1489 = vmatpush1.bf16.msra.mxu0 %v1486
        %1490 = vmatprep.subr.bf16.mxu0 0
        %1491 = vmatpush1.bf16.msra.mxu0 0
        %1492 = vmatprep.subr.bf16.mxu0 0
        %1493 = vmatpush1.bf16.msra.mxu0 0
        %1494 = vmatprep.subr.bf16.mxu0 0
        %1495 = vmatpush1.bf16.msra.mxu0 0
        %1496 = vmatprep.subr.bf16.mxu0 0
        %1497 = vmatpush1.bf16.msra.mxu0 0
        %1498 = vmatprep.subr.bf16.mxu0 0
        %1499 = vmatpush1.bf16.msra.mxu0 0
        %1500 = vmatprep.subr.bf16.mxu0 0
        %1501 = vmatpush1.bf16.msra.mxu0 0
        %1502 = vmatprep.subr.bf16.mxu0 0
        %1503 = vmatpush1.bf16.msra.mxu0 0
        %1504 = vmatprep.subr.bf16.mxu0 0
        %1505 = vmatpush1.bf16.msra.mxu0 0
        %1506 = vmatprep.subr.bf16.mxu0 0
        %1507 = vmatpush1.bf16.msra.mxu0 0
        %1508 = vmatprep.subr.bf16.mxu0 0
        %1509 = vmatpush1.bf16.msra.mxu0 0
        %1510 = vmatprep.subr.bf16.mxu0 0
        %1511 = vmatpush1.bf16.msra.mxu0 0
        %1512 = vmatprep.subr.bf16.mxu0 0
        %1513 = vmatpush1.bf16.msra.mxu0 0
        %1514 = vmatprep.subr.bf16.mxu0 0
        %1515 = vmatpush1.bf16.msra.mxu0 0
        %1516 = vmatprep.subr.bf16.mxu0 0
        %1517 = vmatpush1.bf16.msra.mxu0 0
        %1518 = vmatprep.subr.bf16.mxu0 0
        %1519 = vmatpush1.bf16.msra.mxu0 0
        %1520 = vmatprep.mubr.bf16.mxu0 0
        %1521 = vmatmul.mubr.bf16.gmra.mrb[0].mxu0 %v1483
        %v1522 = vpop.f32.mrb[0].mxu0
        %v1523 = vadd.f32 0.0, %v1522
        %v1524 = vpop.f32.mrb[0].mxu0
        %v1525 = vpop.f32.mrb[0].mxu0
        %v1526 = vadd.f32 0.0, %v1525
        %v1527 = vpop.f32.mrb[0].mxu0
        %1528 = vdwg.mxu0
        %v1529 = vmul.f32 %v982, %v1523
        %v1530 = vmul.f32 %v987, %v1526
        %v1531 = vadd.f32 %v1477, %v1529
        %v1532 = vadd.f32 %v1478, %v1530
        %v1533 = vld [vmem:[#allocation2 + $0xa] sm:$0xff]
        %v1534 = vld [vmem:[#allocation2 + $0x12] sm:$0xff]
        %v1535 = vpack.c.bf16 %v1534, %v1533
        %v1537 = vsel %vm1085, %v1535, 0
        %v1540 = vand.u32 %v1096, %v1106
        %1542 = vmatprep.subr.bf16.mxu0 0
        %1543 = vmatpush1.bf16.msra.mxu0 %v1540
        %1544 = vmatprep.subr.bf16.mxu0 0
        %1545 = vmatpush1.bf16.msra.mxu0 0
        %1546 = vmatprep.subr.bf16.mxu0 0
        %1547 = vmatpush1.bf16.msra.mxu0 0
        %1548 = vmatprep.subr.bf16.mxu0 0
        %1549 = vmatpush1.bf16.msra.mxu0 0
        %1550 = vmatprep.subr.bf16.mxu0 0
        %1551 = vmatpush1.bf16.msra.mxu0 0
        %1552 = vmatprep.subr.bf16.mxu0 0
        %1553 = vmatpush1.bf16.msra.mxu0 0
        %1554 = vmatprep.subr.bf16.mxu0 0
        %1555 = vmatpush1.bf16.msra.mxu0 0
        %1556 = vmatprep.subr.bf16.mxu0 0
        %1557 = vmatpush1.bf16.msra.mxu0 0
        %1558 = vmatprep.subr.bf16.mxu0 0
        %1559 = vmatpush1.bf16.msra.mxu0 0
        %1560 = vmatprep.subr.bf16.mxu0 0
        %1561 = vmatpush1.bf16.msra.mxu0 0
        %1562 = vmatprep.subr.bf16.mxu0 0
        %1563 = vmatpush1.bf16.msra.mxu0 0
        %1564 = vmatprep.subr.bf16.mxu0 0
        %1565 = vmatpush1.bf16.msra.mxu0 0
        %1566 = vmatprep.subr.bf16.mxu0 0
        %1567 = vmatpush1.bf16.msra.mxu0 0
        %1568 = vmatprep.subr.bf16.mxu0 0
        %1569 = vmatpush1.bf16.msra.mxu0 0
        %1570 = vmatprep.subr.bf16.mxu0 0
        %1571 = vmatpush1.bf16.msra.mxu0 0
        %1572 = vmatprep.subr.bf16.mxu0 0
        %1573 = vmatpush1.bf16.msra.mxu0 0
        %1574 = vmatprep.mubr.bf16.mxu0 0
        %1575 = vmatmul.mubr.bf16.gmra.mrb[0].mxu0 %v1537
        %v1576 = vpop.f32.mrb[0].mxu0
        %v1577 = vadd.f32 0.0, %v1576
        %v1578 = vpop.f32.mrb[0].mxu0
        %v1579 = vpop.f32.mrb[0].mxu0
        %v1580 = vadd.f32 0.0, %v1579
        %v1581 = vpop.f32.mrb[0].mxu0
        %1582 = vdwg.mxu0
        %v1583 = vmul.f32 %v1063, %v1577
        %v1584 = vmul.f32 %v1068, %v1580
        %v1585 = vadd.f32 %v1531, %v1583
        %v1586 = vadd.f32 %v1532, %v1584
        %v1587 = vld [vmem:[%s5] sm:$0x1]
        %v1589 = vlaneseq
        %v1590 = vshrl.u32 %v1589, 7
        %v1591 = vsub.s32 0, %v1590
        %v1592 = vrot.slane %v1587, %v1591
        %v1594 = vadd.f32 %v1585, %v1592
        %v1595 = vadd.f32 %v1586, %v1592
        %v1596 = vxor.u32 %v1594, 2147483648
        %v1597 = vxor.u32 %v1595, 2147483648
        %v1598 = vmul.f32 %v1596, 1.442695
        %v1599 = vpow.pop %v1598
        %v1600 = vmul.f32 %v1597, 1.442695
        %v1601 = vpow.pop %v1600
        %v1602 = vadd.f32 %v1599, 1.0
        %v1603 = vadd.f32 %v1601, 1.0
        %v1604 = vrcp.pop %v1602
        %v1605 = vmul.f32 1.0, %v1604
        %v1606 = vrcp.pop %v1603
        %v1607 = vmul.f32 1.0, %v1606
        %v1608 = vmul.f32 %v1605, 2.0
        %v1609 = vmul.f32 %v1607, 2.0
        %v1610 = vsub.f32 %v1608, 1.0
        %v1611 = vsub.f32 %v1609, 1.0
        %v1612 = vmul.f32 %v1610, 1.442695
        %v1613 = vpow.pop %v1612
        %v1614 = vmul.f32 %v1611, 1.442695
        %v1615 = vpow.pop %v1614
        %1618 = vrot.lane.b32.xlu0 %v1613, 3
        %v1619 = vpop.permute.xlu0 %1618
        %1620 = vrot.lane.b32.xlu0 %v1615, 3
        %v1621 = vpop.permute.xlu0 %1620
        %v1624 = vmul.f32 %v275, %v1619
        %v1625 = vmul.f32 %v276, %v1621
        %1628 = vrot.lane.b32.xlu0 %v1594, 86
        %v1629 = vpop.permute.xlu0 %1628
        %1630 = vrot.lane.b32.xlu0 %v1595, 86
        %v1631 = vpop.permute.xlu0 %1630
        %v1634 = vadd.f32 %v1624, %v1629
        %v1635 = vadd.f32 %v1625, %v1631
        %1636 = vst.msk [vmem:[%s244] sm:$0xff] %vm1085, %v1083
        %1637 = vst.msk [vmem:[%s244 + $0x8] sm:$0xff] %vm1085, %v1084
        %vm1638 = vcmask 392216
        %1639 = vst.msk [vmem:[%s244] sm:$0xff] %vm1638, %v1634
        %1640 = vst.msk [vmem:[%s244 + $0x8] sm:$0xff] %vm1638, %v1635
        %s1641 = sand.u32 %s159, 1
        %s1642 = scalar_lea.sflag [#allocation4], %s1641
        %s1643 = sand.u32 %s159, 1
        %s1644 = smul.addr %s1643, 16
        %s1645 = scalar_lea.vmem [#allocation3], %s1644
        // Predicated region
        $region45: #{sainet_forward.19} parent=43 // pred_check
          %p1646 = pneg %p169
        $region46: #{sainet_forward.19} parent=43 // pred_check_branch
          %1648 = sbr.rel (%p1646) target = $region48
        $region47: #{sainet_forward.19} parent=43 // pred_region
          %s1650 = ssub.s32 256, 256
          %1651 = vsyncadd %s1642, %s1650
          %s1652 = smul.addr %s20, 2
          %s1653 = smul.addr %s1652, 128
          %s1654 = scalar_lea.hbm %s6, %s1653
          %s1655 = sshll.u32 %s1645, 4
          %s1656 = int_to_ptr.vmem [resolvable:$true] %s1655
          %1661 = dma.vmem_to_hbm [thread:$0]  %s1656, 256, %s1654, %s1642, 128, 128, 8
        $region48: #{sainet_forward.19} parent=43 // pred_fallthru
          _
      $region44: #{sainet_forward.19} parent=5 // pred_fallthru
        _
      %p1662 = scmp.le.s32.totalorder 2, %s15
      // Predicated region
      $region49: #{sainet_forward.19} parent=5 // pred_check
        %p1663 = pneg %p1662
      $region50: #{sainet_forward.19} parent=5 // pred_check_branch
        %1665 = sbr.rel (%p1663) target = $region52
      $region51: #{sainet_forward.19} parent=5 // pred_region
        %s1666 = ssub.s32 %s15, 2
        // Predicated region
        $region53: #{sainet_forward.19} parent=51 // pred_check
          %p1667 = pneg %p175
        $region54: #{sainet_forward.19} parent=51 // pred_check_branch
          %1669 = sbr.rel (%p1667) target = $region56
        $region55: #{sainet_forward.19} parent=51 // pred_region
          %s1670 = sand.u32 %s160, 1
          %s1671 = scalar_lea.sflag [#allocation4], %s1670
          %s1672 = sand.u32 %s160, 1
          %s1673 = smul.addr %s1672, 16
          %s1674 = scalar_lea.vmem [#allocation3], %s1673
          %1675 = dma.done %s1671, 256
        $region56: #{sainet_forward.19} parent=51 // pred_fallthru
          _
      $region52: #{sainet_forward.19} parent=5 // pred_fallthru
        _
    $region6: #{sainet_forward.19} parent=1 // loop_footer
      %s19 = sadd.s32 1, %s15
    $region7: #{sainet_forward.19} parent=1 // loop_footer_branch
      %14 = sbr.rel target = $region3
    $region8: #{sainet_forward.19} parent=1 // loop_exit
      _
    %1676 = vsyncpa [#allocation4], 1
    %s1677 = scalar_lea.sflag [#allocation4], 1
    %1678 = vsyncpa %s1677, 1

</llo_original>
